<compile_context>
chip_gen: v6e
topology: v6e:2x2x1
jax: 0.10.0
libtpu: 0.0.40
codegen_flags: <defaults>
</compile_context>

<pallas_src>
import functools

import jax
import jax.numpy as jnp
from jax.experimental import pallas as pl
from jax.experimental.pallas import tpu as pltpu


# ------------------------------ configuration ------------------------------

CONV_CFG = [(1, 8, 2, 2), (8, 16, 2, 2), (16, 24, 2, 2),
            (24, 32, 2, 2), (32, 48, 2, 2), (48, 56, 1, 1)]   # (Cin,Cout,kh,kw)
POOL_AFTER = (1, 3)     # 2x2/2 max-pool + ReLU follow conv2 and conv4
H0, W0 = 254, 14        # smallest NCHW spatial size giving lstm_input_size 3416
S0 = 256                # padded row stride between batch blocks (mult of 4, >= H0)
HIDDEN, N_CLASSES = 64, 35
BN_EPS = 1e-5


def conv_geometry(h0, w0):
    """Static per-layer geometry of the conv/pool stack."""
    geoms, H, W = [], h0, w0
    for idx, (cin, cout, kh, kw) in enumerate(CONV_CFG):
        ho, wo = H - kh + 1, W - kw + 1
        pooled = idx in POOL_AFTER
        geoms.append(dict(cin=cin, cout=cout, kh=kh, kw=kw, W=W, Wo=wo,
                          H=H, Ho=ho, pooled=pooled,
                          Wp=(wo // 2 if pooled else wo)))
        H, W = (ho // 2, wo // 2) if pooled else (ho, wo)
    return geoms, (H, W)


def _stack_shapes(batch, geoms):
    """Row-count chain of the batch-stacked layout; returns pool scratch shapes."""
    m, scratch = batch * S0, []
    for g in geoms:
        m = m - (g["kh"] - 1)
        if g["pooled"]:
            rows, cols = m - 1, g["Wp"] * g["cout"]
            scratch.append((((rows + 7) // 8) * 8, cols))   # round rows up
            m = (m - 2) // 2 + 1
    return scratch


# ----------------------- kernel 1: fused conv / pool / BN -------------------
#
# Activations: one (B*S, W*C) f32 matrix, W folded next to channels on lanes,
# batch blocks stacked on rows with stride S.  A conv's kh-tap is a 1-row
# shifted full-width slice matmul'ed with a banded block-Toeplitz weight (the
# kw taps and, for pooled layers, the pool's even/odd W-selection are folded
# into the weight host-side).  Garbage rows between batch blocks never feed a
# valid output row and are simply ignored.

def _conv_stack_kernel(x_ref, w1, w2, w3, w4, w5, w6,
                       b1, b2, b3, b4, b5, b6,
                       gamma_ref, beta_ref, o_ref, scr1, scr2,
                       *, geoms, batch, hf, stride_f, eps):
    w_refs = (w1, w2, w3, w4, w5, w6)
    b_refs = (b1, b2, b3, b4, b5, b6)
    scr_refs = (scr1, scr2)

    a = x_ref[...]                              # (B*S0, W0) f32, batch-stacked
    pool_i = 0
    for l, g in enumerate(geoms):
        kh = g["kh"]
        mo = a.shape[0] - (kh - 1)
        a16 = a.astype(jnp.bfloat16)            # bf16 only on the MXU path
        acc = jnp.dot(a16[0:mo, :], w_refs[l][0],
                      preferred_element_type=jnp.float32)
        for dh in range(1, kh):
            acc = acc + jnp.dot(a16[dh:dh + mo, :], w_refs[l][dh],
                                preferred_element_type=jnp.float32)
        x = acc + b_refs[l][...]                # f32 (mo, N_l)

        if g["pooled"]:                         # 2x2/2 max-pool + ReLU
            half = x.shape[1] // 2              # [even-w | odd-w] column halves
            xc = jnp.maximum(x[:, :half], x[:, half:])
            rp = jnp.maximum(xc[:-1, :], xc[1:, :])        # adjacent row pairs
            rp = jnp.maximum(rp, 0.0)                      # ReLU (commutes w/ max)
            scr = scr_refs[pool_i]
            scr[0:rp.shape[0], :] = rp
            n_cmp = (rp.shape[0] - 1) // 2 + 1
            a = scr[pl.ds(0, n_cmp, stride=2), :]          # keep even rows only
            pool_i += 1
        elif l == len(geoms) - 1:
            a = jnp.maximum(x, 0.0)                        # ReLU after conv6
        else:
            a = x

    # BatchNorm2d(56), training mode: biased batch statistics over B*H'*W'.
    # TODO(synk): running_mean / running_var buffer updates are stateful and
    # do not affect the returned forward value; they are not modelled.
    cnt = float(batch * hf)
    blocks = [a[b * stride_f: b * stride_f + hf, :] for b in range(batch)]
    mean = sum(jnp.sum(blk, axis=0, keepdims=True) for blk in blocks) * (1.0 / cnt)
    cents = [blk - mean for blk in blocks]
    var = sum(jnp.sum(c * c, axis=0, keepdims=True) for c in cents) * (1.0 / cnt)
    scale = jax.lax.rsqrt(var + eps) * gamma_ref[...]
    shift = beta_ref[...]
    for b in range(batch):
        o_ref[b, :, :] = cents[b] * scale + shift


def conv_stack(x_stack, params, geoms, batch):
    """x_stack: (B*S0, W0) f32 batch-stacked rows -> (B, 61, 56) post-BN feats."""
    # TODO(synk): for large batches, grid over B with dimension_semantics
    # ("parallel",) (two v7x TensorCores) and two-pass BN stats; B==2 fits one
    # grid-less invocation well inside VMEM.
    scratch_shapes = _stack_shapes(batch, geoms)
    hf, cf = geoms[-1]["Ho"], geoms[-1]["cout"]
    stride_f = S0 // (2 ** len(POOL_AFTER))
    kernel = functools.partial(_conv_stack_kernel, geoms=geoms, batch=batch,
                               hf=hf, stride_f=stride_f, eps=BN_EPS)
    return pl.pallas_call(
        kernel,
        out_shape=jax.ShapeDtypeStruct((batch, hf, cf), jnp.float32),
        scratch_shapes=[pltpu.VMEM(s, jnp.float32) for s in scratch_shapes],
    )(x_stack, *params["conv_w"], *params["conv_b"],
      params["bn_gamma"], params["bn_beta"])


# ----------------------- kernel 2: LSTM cell + Linear -----------------------
# Single-step LSTM with zero initial (h, c): the forget gate multiplies c0==0
# and W_hh multiplies h0==0, so both are mathematically inert and omitted.
# TODO(synk): valid only for seq_len == 1 (true here); loading a real PyTorch
# checkpoint would require consuming the 4-gate (i,f,g,o) layout and dropping f.

def _lstm_linear_kernel(x_ref, wg_ref, bg_ref, wl_ref, bl_ref, o_ref, *, hidden):
    x = x_ref[...].astype(jnp.bfloat16)                 # bf16 only on MXU path
    z = jnp.dot(x, wg_ref[...], preferred_element_type=jnp.float32) + bg_ref[...]
    sig = jax.nn.sigmoid(z[:, :2 * hidden])             # (i|o): one 128-lane pass
    i_g = sig[:, :hidden]
    o_g = sig[:, hidden:2 * hidden]
    g_g = jnp.tanh(z[:, 2 * hidden:])
    h = o_g * jnp.tanh(i_g * g_g)                       # c1 = i*g  (f*c0 == 0)
    o_ref[...] = (jnp.dot(h, wl_ref[...], preferred_element_type=jnp.float32)
                  + bl_ref[...])


def lstm_linear(x_seq, lstm):
    # TODO(synk): fusing this into kernel 1 and/or int8/fp8-quantizing wg are
    # further latency levers (feedback items 1/6/7), skipped for robustness.
    B = x_seq.shape[0]
    return pl.pallas_call(
        functools.partial(_lstm_linear_kernel, hidden=HIDDEN),
        out_shape=jax.ShapeDtypeStruct((B, N_CLASSES), jnp.float32),
    )(x_seq, lstm["wg"], lstm["bg"], lstm["wl"], lstm["bl"])


# ---------------------------- parameter setup ------------------------------

def _xavier_uniform(key, shape, fan_in, fan_out, gain):
    bound = gain * (6.0 / (fan_in + fan_out)) ** 0.5
    return jax.random.uniform(key, shape, jnp.float32, -bound, bound)


def _conv_layer_weight(w_raw, g):
    """Raw (kh,kw,cin,cout) conv weight -> per-dh banded block-Toeplitz matmul
    weights in the lane-folded (w*cin)->(wo*cout) basis; for pooled layers the
    2x2 max-pool's even/odd W-column selection is folded in ([even|odd] on N)."""
    kh, kw, cin, cout = w_raw.shape
    W, Wo = g["W"], g["Wo"]
    w_idx, wo_idx = jnp.arange(W), jnp.arange(Wo)
    mats = []
    for dh in range(kh):
        t = jnp.zeros((W * cin, Wo * cout), jnp.float32)
        for dw in range(kw):
            sel = (w_idx[:, None] == wo_idx[None, :] + dw).astype(jnp.float32)
            t = t + jnp.kron(sel, w_raw[dh, dw])
        if g["pooled"]:
            wp_idx = jnp.arange(g["Wp"])
            eye_c = jnp.eye(cout, dtype=jnp.float32)
            even = (wo_idx[:, None] == 2 * wp_idx[None, :]).astype(jnp.float32)
            odd = (wo_idx[:, None] == 2 * wp_idx[None, :] + 1).astype(jnp.float32)
            t = jnp.concatenate([t @ jnp.kron(even, eye_c),
                                 t @ jnp.kron(odd, eye_c)], axis=1)
        mats.append(t)
    return jnp.stack(mats).astype(jnp.bfloat16)         # (kh, W*cin, Nout) bf16


def init_params(key, geoms):
    gain = 2.0 ** 0.5
    hf, cf = geoms[-1]["Ho"], geoms[-1]["cout"]
    in_dim = hf * cf
    assert in_dim == 3416, "geometry must match lstm_input_size"

    keys = jax.random.split(key, 20)
    params = {"conv_w": [], "conv_b": []}
    for idx, g in enumerate(geoms):
        cin, cout, kh, kw = g["cin"], g["cout"], g["kh"], g["kw"]
        fan_in, fan_out = cin * kh * kw, cout * kh * kw
        # Raw conv weight (kh, kw, cin, cout); random init, so exact transpose
        # correspondence with torch's (cout, cin, kh, kw) layout is moot.
        w_raw = _xavier_uniform(keys[idx], (kh, kw, cin, cout), fan_in, fan_out, gain)
        params["conv_w"].append(_conv_layer_weight(w_raw, g))
        reps = 2 * g["Wp"] if g["pooled"] else g["Wo"]
        params["conv_b"].append(
            jnp.tile(jnp.full((cout,), 0.1, jnp.float32), reps)[None, :])

    # BatchNorm2d(56): default gamma=1, beta=0.
    params["bn_gamma"] = jnp.ones((1, cf), jnp.float32)
    params["bn_beta"] = jnp.zeros((1, cf), jnp.float32)

    # LSTM(3416 -> 64): gates packed lane-dense as (i | o | g) in one bf16
    # (3416, 192) matrix; per-gate bias = b_ih + b_hh (independent draws).
    # PyTorch default init U(-1/sqrt(H), 1/sqrt(H)); bf16 weight deviates from
    # f32 torch math by ~1e-3 relative (acceptable for random-init checks).
    stdv = 1.0 / (HIDDEN ** 0.5)
    lk = jax.random.split(keys[6], 12)
    wg, bg = [], []
    for n in range(3):                                   # gate order: i, o, g
        wg.append(jax.random.uniform(lk[n], (in_dim, HIDDEN), jnp.float32, -stdv, stdv))
        b_ih = jax.random.uniform(lk[3 + n], (HIDDEN,), jnp.float32, -stdv, stdv)
        b_hh = jax.random.uniform(lk[6 + n], (HIDDEN,), jnp.float32, -stdv, stdv)
        bg.append(b_ih + b_hh)
    params["lstm"] = {
        "wg": jnp.concatenate(wg, axis=1).astype(jnp.bfloat16),   # (3416, 192)
        "bg": jnp.concatenate(bg)[None, :],                       # (1, 192) f32
        "wl": _xavier_uniform(lk[9], (HIDDEN, N_CLASSES), HIDDEN, N_CLASSES, gain),
        "bl": jnp.full((1, N_CLASSES), 0.1, jnp.float32),
    }
    return params


# ------------------------------- forward -----------------------------------

def forward(x_nchw, params, geoms):
    B = x_nchw.shape[0]
    # Cin == 1, so per-batch (H, W*Cin) layout is simply (H, W).
    x = x_nchw[:, 0, :, :].astype(jnp.float32)              # (B, 254, 14)
    # Batch-stack rows with zero padding to stride S0 so every conv/pool step
    # is a single whole-matrix op for all batch elements.
    x_pad = jnp.zeros((B, S0, W0), jnp.float32).at[:, :H0, :].set(x)
    x_stack = x_pad.reshape(B * S0, W0)
    feat = conv_stack(x_stack, params, geoms, B)            # (B, 61, 56)
    # torch: NCHW (B,56,61,1).permute(0,3,2,1).reshape(B,-1,3416); with W'==1
    # that is exactly the row-major flatten of (H', C): index h*56 + c.  The
    # reshape below is a free metadata op on the row-major (B, 61, 56) output.
    seq = feat.reshape(B, feat.shape[1] * feat.shape[2])    # (B, 3416), seq_len==1
    return lstm_linear(seq, params["lstm"])                 # (B, 35)


# --------------------------------- main -------------------------------------

if __name__ == "__main__":
    key = jax.random.PRNGKey(0)
    pkey, xkey = jax.random.split(key)
    geoms, (hfin, wfin) = conv_geometry(H0, W0)
    assert hfin * wfin * CONV_CFG[-1][1] == 3416
    params = init_params(pkey, geoms)

    # Smallest NCHW input consistent with lstm_input_size = 3416 (H'=61, W'=1).
    x = jax.random.normal(xkey, (2, 1, H0, W0), jnp.float32)

    fwd = jax.jit(lambda xx: forward(xx, params, geoms))
    out = jax.block_until_ready(fwd(x))

    assert out.shape == (2, 35)
    assert bool(jnp.all(jnp.isfinite(out)))
    print("KERNEL_OK")
</pallas_src>

<mosaic_0001>
module attributes {stable_mosaic.version = 11 : i64} {
  func.func @_conv_stack_kernel(%arg0: memref<512x14xf32, #tpu.memory_space<vmem>>, %arg1: memref<2x14x104xbf16, #tpu.memory_space<vmem>>, %arg2: memref<2x104x192xbf16, #tpu.memory_space<vmem>>, %arg3: memref<2x96x120xbf16, #tpu.memory_space<vmem>>, %arg4: memref<2x120x128xbf16, #tpu.memory_space<vmem>>, %arg5: memref<2x64x48xbf16, #tpu.memory_space<vmem>>, %arg6: memref<1x48x56xbf16, #tpu.memory_space<vmem>>, %arg7: memref<1x104xf32, #tpu.memory_space<vmem>>, %arg8: memref<1x192xf32, #tpu.memory_space<vmem>>, %arg9: memref<1x120xf32, #tpu.memory_space<vmem>>, %arg10: memref<1x128xf32, #tpu.memory_space<vmem>>, %arg11: memref<1x48xf32, #tpu.memory_space<vmem>>, %arg12: memref<1x56xf32, #tpu.memory_space<vmem>>, %arg13: memref<1x56xf32, #tpu.memory_space<vmem>>, %arg14: memref<1x56xf32, #tpu.memory_space<vmem>>, %arg15: memref<2x61x56xf32, #tpu.memory_space<vmem>>, %arg16: memref<512x96xf32, #tpu.memory_space<vmem>>, %arg17: memref<256x64xf32, #tpu.memory_space<vmem>>) attributes {dimension_semantics = [], scalar_prefetch = 0 : i64, scratch_operands = 2 : i64, tpu.core_type = #tpu.core_type<tc>} {
    %c0 = arith.constant 0 : index
    %c0_0 = arith.constant 0 : index
    %0 = vector.load %arg0[%c0, %c0_0] : memref<512x14xf32, #tpu.memory_space<vmem>>, vector<512x14xf32>
    %1 = arith.truncf %0 : vector<512x14xf32> to vector<512x14xbf16>
    %2 = vector.extract_strided_slice %1 {offsets = [0, 0], sizes = [511, 14], strides = [1, 1]} : vector<512x14xbf16> to vector<511x14xbf16>
    %c0_1 = arith.constant 0 : index
    %c0_2 = arith.constant 0 : index
    %c0_3 = arith.constant 0 : index
    %3 = vector.load %arg1[%c0_1, %c0_2, %c0_3] : memref<2x14x104xbf16, #tpu.memory_space<vmem>>, vector<1x14x104xbf16>
    %4 = vector.shape_cast %3 : vector<1x14x104xbf16> to vector<14x104xbf16>
    %cst = arith.constant dense<0.000000e+00> : vector<511x104xf32>
    %5 = tpu.matmul %2, %4, %cst {dimension_numbers = #tpu.dot_dimension_numbers<[1], [0], [0], [1], [0, 0, 1, 1], [], []>} : vector<511x14xbf16>, vector<14x104xbf16>, vector<511x104xf32> -> vector<511x104xf32>
    %6 = vector.extract_strided_slice %1 {offsets = [1, 0], sizes = [511, 14], strides = [1, 1]} : vector<512x14xbf16> to vector<511x14xbf16>
    %c1 = arith.constant 1 : index
    %c0_4 = arith.constant 0 : index
    %c0_5 = arith.constant 0 : index
    %7 = vector.load %arg1[%c1, %c0_4, %c0_5] : memref<2x14x104xbf16, #tpu.memory_space<vmem>>, vector<1x14x104xbf16>
    %8 = vector.shape_cast %7 : vector<1x14x104xbf16> to vector<14x104xbf16>
    %cst_6 = arith.constant dense<0.000000e+00> : vector<511x104xf32>
    %9 = tpu.matmul %6, %8, %cst_6 {dimension_numbers = #tpu.dot_dimension_numbers<[1], [0], [0], [1], [0, 0, 1, 1], [], []>} : vector<511x14xbf16>, vector<14x104xbf16>, vector<511x104xf32> -> vector<511x104xf32>
    %10 = arith.addf %5, %9 : vector<511x104xf32>
    %c0_7 = arith.constant 0 : index
    %c0_8 = arith.constant 0 : index
    %11 = vector.load %arg7[%c0_7, %c0_8] : memref<1x104xf32, #tpu.memory_space<vmem>>, vector<1x104xf32>
    %12 = vector.broadcast %11 : vector<1x104xf32> to vector<511x104xf32>
    %13 = arith.addf %10, %12 : vector<511x104xf32>
    %14 = arith.truncf %13 : vector<511x104xf32> to vector<511x104xbf16>
    %15 = vector.extract_strided_slice %14 {offsets = [0, 0], sizes = [510, 104], strides = [1, 1]} : vector<511x104xbf16> to vector<510x104xbf16>
    %c0_9 = arith.constant 0 : index
    %c0_10 = arith.constant 0 : index
    %c0_11 = arith.constant 0 : index
    %16 = vector.load %arg2[%c0_9, %c0_10, %c0_11] : memref<2x104x192xbf16, #tpu.memory_space<vmem>>, vector<1x104x192xbf16>
    %17 = vector.shape_cast %16 : vector<1x104x192xbf16> to vector<104x192xbf16>
    %cst_12 = arith.constant dense<0.000000e+00> : vector<510x192xf32>
    %18 = tpu.matmul %15, %17, %cst_12 {dimension_numbers = #tpu.dot_dimension_numbers<[1], [0], [0], [1], [0, 0, 1, 1], [], []>} : vector<510x104xbf16>, vector<104x192xbf16>, vector<510x192xf32> -> vector<510x192xf32>
    %19 = vector.extract_strided_slice %14 {offsets = [1, 0], sizes = [510, 104], strides = [1, 1]} : vector<511x104xbf16> to vector<510x104xbf16>
    %c1_13 = arith.constant 1 : index
    %c0_14 = arith.constant 0 : index
    %c0_15 = arith.constant 0 : index
    %20 = vector.load %arg2[%c1_13, %c0_14, %c0_15] : memref<2x104x192xbf16, #tpu.memory_space<vmem>>, vector<1x104x192xbf16>
    %21 = vector.shape_cast %20 : vector<1x104x192xbf16> to vector<104x192xbf16>
    %cst_16 = arith.constant dense<0.000000e+00> : vector<510x192xf32>
    %22 = tpu.matmul %19, %21, %cst_16 {dimension_numbers = #tpu.dot_dimension_numbers<[1], [0], [0], [1], [0, 0, 1, 1], [], []>} : vector<510x104xbf16>, vector<104x192xbf16>, vector<510x192xf32> -> vector<510x192xf32>
    %23 = arith.addf %18, %22 : vector<510x192xf32>
    %c0_17 = arith.constant 0 : index
    %c0_18 = arith.constant 0 : index
    %24 = vector.load %arg8[%c0_17, %c0_18] : memref<1x192xf32, #tpu.memory_space<vmem>>, vector<1x192xf32>
    %25 = vector.broadcast %24 : vector<1x192xf32> to vector<510x192xf32>
    %26 = arith.addf %23, %25 : vector<510x192xf32>
    %27 = vector.extract_strided_slice %26 {offsets = [0, 0], sizes = [510, 96], strides = [1, 1]} : vector<510x192xf32> to vector<510x96xf32>
    %28 = vector.extract_strided_slice %26 {offsets = [0, 96], sizes = [510, 96], strides = [1, 1]} : vector<510x192xf32> to vector<510x96xf32>
    %29 = arith.maximumf %27, %28 : vector<510x96xf32>
    %30 = vector.extract_strided_slice %29 {offsets = [0, 0], sizes = [509, 96], strides = [1, 1]} : vector<510x96xf32> to vector<509x96xf32>
    %31 = vector.extract_strided_slice %29 {offsets = [1, 0], sizes = [509, 96], strides = [1, 1]} : vector<510x96xf32> to vector<509x96xf32>
    %32 = arith.maximumf %30, %31 : vector<509x96xf32>
    %cst_19 = arith.constant 0.000000e+00 : f32
    %33 = vector.broadcast %cst_19 : f32 to vector<509x96xf32>
    %34 = arith.maximumf %32, %33 : vector<509x96xf32>
    %c0_20 = arith.constant 0 : index
    %c0_21 = arith.constant 0 : index
    %35 = vector.load %arg16[%c0_20, %c0_21] : memref<512x96xf32, #tpu.memory_space<vmem>>, vector<509x96xf32>
    tpu.vector_store %arg16[%c0_20, %c0_21], %34 {strides = array<i32>} : memref<512x96xf32, #tpu.memory_space<vmem>>, vector<509x96xf32>,
    %c0_22 = arith.constant 0 : index
    %c0_23 = arith.constant 0 : index
    %36 = tpu.strided_load %arg16[%c0_22, %c0_23] {strides = array<i32: 2, 1>} : memref<512x96xf32, #tpu.memory_space<vmem>>, vector<255x96xf32>
    %37 = arith.truncf %36 : vector<255x96xf32> to vector<255x96xbf16>
    %38 = vector.extract_strided_slice %37 {offsets = [0, 0], sizes = [254, 96], strides = [1, 1]} : vector<255x96xbf16> to vector<254x96xbf16>
    %c0_24 = arith.constant 0 : index
    %c0_25 = arith.constant 0 : index
    %c0_26 = arith.constant 0 : index
    %39 = vector.load %arg3[%c0_24, %c0_25, %c0_26] : memref<2x96x120xbf16, #tpu.memory_space<vmem>>, vector<1x96x120xbf16>
    %40 = vector.shape_cast %39 : vector<1x96x120xbf16> to vector<96x120xbf16>
    %cst_27 = arith.constant dense<0.000000e+00> : vector<254x120xf32>
    %41 = tpu.matmul %38, %40, %cst_27 {dimension_numbers = #tpu.dot_dimension_numbers<[1], [0], [0], [1], [0, 0, 1, 1], [], []>} : vector<254x96xbf16>, vector<96x120xbf16>, vector<254x120xf32> -> vector<254x120xf32>
    %42 = vector.extract_strided_slice %37 {offsets = [1, 0], sizes = [254, 96], strides = [1, 1]} : vector<255x96xbf16> to vector<254x96xbf16>
    %c1_28 = arith.constant 1 : index
    %c0_29 = arith.constant 0 : index
    %c0_30 = arith.constant 0 : index
    %43 = vector.load %arg3[%c1_28, %c0_29, %c0_30] : memref<2x96x120xbf16, #tpu.memory_space<vmem>>, vector<1x96x120xbf16>
    %44 = vector.shape_cast %43 : vector<1x96x120xbf16> to vector<96x120xbf16>
    %cst_31 = arith.constant dense<0.000000e+00> : vector<254x120xf32>
    %45 = tpu.matmul %42, %44, %cst_31 {dimension_numbers = #tpu.dot_dimension_numbers<[1], [0], [0], [1], [0, 0, 1, 1], [], []>} : vector<254x96xbf16>, vector<96x120xbf16>, vector<254x120xf32> -> vector<254x120xf32>
    %46 = arith.addf %41, %45 : vector<254x120xf32>
    %c0_32 = arith.constant 0 : index
    %c0_33 = arith.constant 0 : index
    %47 = vector.load %arg9[%c0_32, %c0_33] : memref<1x120xf32, #tpu.memory_space<vmem>>, vector<1x120xf32>
    %48 = vector.broadcast %47 : vector<1x120xf32> to vector<254x120xf32>
    %49 = arith.addf %46, %48 : vector<254x120xf32>
    %50 = arith.truncf %49 : vector<254x120xf32> to vector<254x120xbf16>
    %51 = vector.extract_strided_slice %50 {offsets = [0, 0], sizes = [253, 120], strides = [1, 1]} : vector<254x120xbf16> to vector<253x120xbf16>
    %c0_34 = arith.constant 0 : index
    %c0_35 = arith.constant 0 : index
    %c0_36 = arith.constant 0 : index
    %52 = vector.load %arg4[%c0_34, %c0_35, %c0_36] : memref<2x120x128xbf16, #tpu.memory_space<vmem>>, vector<1x120x128xbf16>
    %53 = vector.shape_cast %52 : vector<1x120x128xbf16> to vector<120x128xbf16>
    %cst_37 = arith.constant dense<0.000000e+00> : vector<253x128xf32>
    %54 = tpu.matmul %51, %53, %cst_37 {dimension_numbers = #tpu.dot_dimension_numbers<[1], [0], [0], [1], [0, 0, 1, 1], [], []>} : vector<253x120xbf16>, vector<120x128xbf16>, vector<253x128xf32> -> vector<253x128xf32>
    %55 = vector.extract_strided_slice %50 {offsets = [1, 0], sizes = [253, 120], strides = [1, 1]} : vector<254x120xbf16> to vector<253x120xbf16>
    %c1_38 = arith.constant 1 : index
    %c0_39 = arith.constant 0 : index
    %c0_40 = arith.constant 0 : index
    %56 = vector.load %arg4[%c1_38, %c0_39, %c0_40] : memref<2x120x128xbf16, #tpu.memory_space<vmem>>, vector<1x120x128xbf16>
    %57 = vector.shape_cast %56 : vector<1x120x128xbf16> to vector<120x128xbf16>
    %cst_41 = arith.constant dense<0.000000e+00> : vector<253x128xf32>
    %58 = tpu.matmul %55, %57, %cst_41 {dimension_numbers = #tpu.dot_dimension_numbers<[1], [0], [0], [1], [0, 0, 1, 1], [], []>} : vector<253x120xbf16>, vector<120x128xbf16>, vector<253x128xf32> -> vector<253x128xf32>
    %59 = arith.addf %54, %58 : vector<253x128xf32>
    %c0_42 = arith.constant 0 : index
    %c0_43 = arith.constant 0 : index
    %60 = vector.load %arg10[%c0_42, %c0_43] : memref<1x128xf32, #tpu.memory_space<vmem>>, vector<1x128xf32>
    %61 = vector.broadcast %60 : vector<1x128xf32> to vector<253x128xf32>
    %62 = arith.addf %59, %61 : vector<253x128xf32>
    %63 = vector.extract_strided_slice %62 {offsets = [0, 0], sizes = [253, 64], strides = [1, 1]} : vector<253x128xf32> to vector<253x64xf32>
    %64 = vector.extract_strided_slice %62 {offsets = [0, 64], sizes = [253, 64], strides = [1, 1]} : vector<253x128xf32> to vector<253x64xf32>
    %65 = arith.maximumf %63, %64 : vector<253x64xf32>
    %66 = vector.extract_strided_slice %65 {offsets = [0, 0], sizes = [252, 64], strides = [1, 1]} : vector<253x64xf32> to vector<252x64xf32>
    %67 = vector.extract_strided_slice %65 {offsets = [1, 0], sizes = [252, 64], strides = [1, 1]} : vector<253x64xf32> to vector<252x64xf32>
    %68 = arith.maximumf %66, %67 : vector<252x64xf32>
    %cst_44 = arith.constant 0.000000e+00 : f32
    %69 = vector.broadcast %cst_44 : f32 to vector<252x64xf32>
    %70 = arith.maximumf %68, %69 : vector<252x64xf32>
    %c0_45 = arith.constant 0 : index
    %c0_46 = arith.constant 0 : index
    %71 = vector.load %arg17[%c0_45, %c0_46] : memref<256x64xf32, #tpu.memory_space<vmem>>, vector<252x64xf32>
    tpu.vector_store %arg17[%c0_45, %c0_46], %70 {strides = array<i32>} : memref<256x64xf32, #tpu.memory_space<vmem>>, vector<252x64xf32>,
    %c0_47 = arith.constant 0 : index
    %c0_48 = arith.constant 0 : index
    %72 = tpu.strided_load %arg17[%c0_47, %c0_48] {strides = array<i32: 2, 1>} : memref<256x64xf32, #tpu.memory_space<vmem>>, vector<126x64xf32>
    %73 = arith.truncf %72 : vector<126x64xf32> to vector<126x64xbf16>
    %74 = vector.extract_strided_slice %73 {offsets = [0, 0], sizes = [125, 64], strides = [1, 1]} : vector<126x64xbf16> to vector<125x64xbf16>
    %c0_49 = arith.constant 0 : index
    %c0_50 = arith.constant 0 : index
    %c0_51 = arith.constant 0 : index
    %75 = vector.load %arg5[%c0_49, %c0_50, %c0_51] : memref<2x64x48xbf16, #tpu.memory_space<vmem>>, vector<1x64x48xbf16>
    %76 = vector.shape_cast %75 : vector<1x64x48xbf16> to vector<64x48xbf16>
    %cst_52 = arith.constant dense<0.000000e+00> : vector<125x48xf32>
    %77 = tpu.matmul %74, %76, %cst_52 {dimension_numbers = #tpu.dot_dimension_numbers<[1], [0], [0], [1], [0, 0, 1, 1], [], []>} : vector<125x64xbf16>, vector<64x48xbf16>, vector<125x48xf32> -> vector<125x48xf32>
    %78 = vector.extract_strided_slice %73 {offsets = [1, 0], sizes = [125, 64], strides = [1, 1]} : vector<126x64xbf16> to vector<125x64xbf16>
    %c1_53 = arith.constant 1 : index
    %c0_54 = arith.constant 0 : index
    %c0_55 = arith.constant 0 : index
    %79 = vector.load %arg5[%c1_53, %c0_54, %c0_55] : memref<2x64x48xbf16, #tpu.memory_space<vmem>>, vector<1x64x48xbf16>
    %80 = vector.shape_cast %79 : vector<1x64x48xbf16> to vector<64x48xbf16>
    %cst_56 = arith.constant dense<0.000000e+00> : vector<125x48xf32>
    %81 = tpu.matmul %78, %80, %cst_56 {dimension_numbers = #tpu.dot_dimension_numbers<[1], [0], [0], [1], [0, 0, 1, 1], [], []>} : vector<125x64xbf16>, vector<64x48xbf16>, vector<125x48xf32> -> vector<125x48xf32>
    %82 = arith.addf %77, %81 : vector<125x48xf32>
    %c0_57 = arith.constant 0 : index
    %c0_58 = arith.constant 0 : index
    %83 = vector.load %arg11[%c0_57, %c0_58] : memref<1x48xf32, #tpu.memory_space<vmem>>, vector<1x48xf32>
    %84 = vector.broadcast %83 : vector<1x48xf32> to vector<125x48xf32>
    %85 = arith.addf %82, %84 : vector<125x48xf32>
    %86 = arith.truncf %85 : vector<125x48xf32> to vector<125x48xbf16>
    %c0_59 = arith.constant 0 : index
    %c0_60 = arith.constant 0 : index
    %c0_61 = arith.constant 0 : index
    %87 = vector.load %arg6[%c0_59, %c0_60, %c0_61] : memref<1x48x56xbf16, #tpu.memory_space<vmem>>, vector<1x48x56xbf16>
    %88 = vector.shape_cast %87 : vector<1x48x56xbf16> to vector<48x56xbf16>
    %cst_62 = arith.constant dense<0.000000e+00> : vector<125x56xf32>
    %89 = tpu.matmul %86, %88, %cst_62 {dimension_numbers = #tpu.dot_dimension_numbers<[1], [0], [0], [1], [0, 0, 1, 1], [], []>} : vector<125x48xbf16>, vector<48x56xbf16>, vector<125x56xf32> -> vector<125x56xf32>
    %c0_63 = arith.constant 0 : index
    %c0_64 = arith.constant 0 : index
    %90 = vector.load %arg12[%c0_63, %c0_64] : memref<1x56xf32, #tpu.memory_space<vmem>>, vector<1x56xf32>
    %91 = vector.broadcast %90 : vector<1x56xf32> to vector<125x56xf32>
    %92 = arith.addf %89, %91 : vector<125x56xf32>
    %cst_65 = arith.constant 0.000000e+00 : f32
    %93 = vector.broadcast %cst_65 : f32 to vector<125x56xf32>
    %94 = arith.maximumf %92, %93 : vector<125x56xf32>
    %95 = vector.extract_strided_slice %94 {offsets = [0, 0], sizes = [61, 56], strides = [1, 1]} : vector<125x56xf32> to vector<61x56xf32>
    %96 = vector.extract_strided_slice %94 {offsets = [64, 0], sizes = [61, 56], strides = [1, 1]} : vector<125x56xf32> to vector<61x56xf32>
    %cst_66 = arith.constant dense<0.000000e+00> : vector<56xf32>
    %97 = vector.multi_reduction <add>, %95, %cst_66 [0] : vector<61x56xf32> to vector<56xf32>
    %98 = vector.shape_cast %97 : vector<56xf32> to vector<1x56xf32>
    %cst_67 = arith.constant 0.000000e+00 : f32
    %99 = vector.broadcast %cst_67 : f32 to vector<1x56xf32>
    %100 = arith.addf %99, %98 : vector<1x56xf32>
    %cst_68 = arith.constant dense<0.000000e+00> : vector<56xf32>
    %101 = vector.multi_reduction <add>, %96, %cst_68 [0] : vector<61x56xf32> to vector<56xf32>
    %102 = vector.shape_cast %101 : vector<56xf32> to vector<1x56xf32>
    %103 = arith.addf %100, %102 : vector<1x56xf32>
    %cst_69 = arith.constant 0.00819672085 : f32
    %104 = vector.broadcast %cst_69 : f32 to vector<1x56xf32>
    %105 = arith.mulf %103, %104 : vector<1x56xf32>
    %106 = vector.broadcast %105 : vector<1x56xf32> to vector<61x56xf32>
    %107 = arith.subf %95, %106 : vector<61x56xf32>
    %108 = vector.broadcast %105 : vector<1x56xf32> to vector<61x56xf32>
    %109 = arith.subf %96, %108 : vector<61x56xf32>
    %110 = arith.mulf %107, %107 : vector<61x56xf32>
    %cst_70 = arith.constant dense<0.000000e+00> : vector<56xf32>
    %111 = vector.multi_reduction <add>, %110, %cst_70 [0] : vector<61x56xf32> to vector<56xf32>
    %112 = vector.shape_cast %111 : vector<56xf32> to vector<1x56xf32>
    %cst_71 = arith.constant 0.000000e+00 : f32
    %113 = vector.broadcast %cst_71 : f32 to vector<1x56xf32>
    %114 = arith.addf %113, %112 : vector<1x56xf32>
    %115 = arith.mulf %109, %109 : vector<61x56xf32>
    %cst_72 = arith.constant dense<0.000000e+00> : vector<56xf32>
    %116 = vector.multi_reduction <add>, %115, %cst_72 [0] : vector<61x56xf32> to vector<56xf32>
    %117 = vector.shape_cast %116 : vector<56xf32> to vector<1x56xf32>
    %118 = arith.addf %114, %117 : vector<1x56xf32>
    %cst_73 = arith.constant 0.00819672085 : f32
    %119 = vector.broadcast %cst_73 : f32 to vector<1x56xf32>
    %120 = arith.mulf %118, %119 : vector<1x56xf32>
    %cst_74 = arith.constant 9.99999974E-6 : f32
    %121 = vector.broadcast %cst_74 : f32 to vector<1x56xf32>
    %122 = arith.addf %120, %121 : vector<1x56xf32>
    %123 = math.rsqrt %122 : vector<1x56xf32>
    %c0_75 = arith.constant 0 : index
    %c0_76 = arith.constant 0 : index
    %124 = vector.load %arg13[%c0_75, %c0_76] : memref<1x56xf32, #tpu.memory_space<vmem>>, vector<1x56xf32>
    %125 = arith.mulf %123, %124 : vector<1x56xf32>
    %c0_77 = arith.constant 0 : index
    %c0_78 = arith.constant 0 : index
    %126 = vector.load %arg14[%c0_77, %c0_78] : memref<1x56xf32, #tpu.memory_space<vmem>>, vector<1x56xf32>
    %127 = vector.broadcast %125 : vector<1x56xf32> to vector<61x56xf32>
    %128 = arith.mulf %107, %127 : vector<61x56xf32>
    %129 = vector.broadcast %126 : vector<1x56xf32> to vector<61x56xf32>
    %130 = arith.addf %128, %129 : vector<61x56xf32>
    %c0_79 = arith.constant 0 : index
    %c0_80 = arith.constant 0 : index
    %c0_81 = arith.constant 0 : index
    %131 = vector.load %arg15[%c0_79, %c0_80, %c0_81] : memref<2x61x56xf32, #tpu.memory_space<vmem>>, vector<1x61x56xf32>
    %132 = vector.shape_cast %131 : vector<1x61x56xf32> to vector<61x56xf32>
    %133 = vector.shape_cast %130 : vector<61x56xf32> to vector<1x61x56xf32>
    tpu.vector_store %arg15[%c0_79, %c0_80, %c0_81], %133 {strides = array<i32>} : memref<2x61x56xf32, #tpu.memory_space<vmem>>, vector<1x61x56xf32>,
    %134 = vector.broadcast %125 : vector<1x56xf32> to vector<61x56xf32>
    %135 = arith.mulf %109, %134 : vector<61x56xf32>
    %136 = vector.broadcast %126 : vector<1x56xf32> to vector<61x56xf32>
    %137 = arith.addf %135, %136 : vector<61x56xf32>
    %c1_82 = arith.constant 1 : index
    %c0_83 = arith.constant 0 : index
    %c0_84 = arith.constant 0 : index
    %138 = vector.load %arg15[%c1_82, %c0_83, %c0_84] : memref<2x61x56xf32, #tpu.memory_space<vmem>>, vector<1x61x56xf32>
    %139 = vector.shape_cast %138 : vector<1x61x56xf32> to vector<61x56xf32>
    %140 = vector.shape_cast %137 : vector<61x56xf32> to vector<1x61x56xf32>
    tpu.vector_store %arg15[%c1_82, %c0_83, %c0_84], %140 {strides = array<i32>} : memref<2x61x56xf32, #tpu.memory_space<vmem>>, vector<1x61x56xf32>,
    return
  }
}

module attributes {stable_mosaic.version = 11 : i64} {
  func.func @_lstm_linear_kernel(%arg0: memref<2x3416xf32, #tpu.memory_space<vmem>>, %arg1: memref<3416x192xbf16, #tpu.memory_space<vmem>>, %arg2: memref<1x192xf32, #tpu.memory_space<vmem>>, %arg3: memref<64x35xf32, #tpu.memory_space<vmem>>, %arg4: memref<1x35xf32, #tpu.memory_space<vmem>>, %arg5: memref<2x35xf32, #tpu.memory_space<vmem>>) attributes {dimension_semantics = [], scalar_prefetch = 0 : i64, scratch_operands = 0 : i64, tpu.core_type = #tpu.core_type<tc>} {
    %c0 = arith.constant 0 : index
    %c0_0 = arith.constant 0 : index
    %0 = vector.load %arg0[%c0, %c0_0] : memref<2x3416xf32, #tpu.memory_space<vmem>>, vector<2x3416xf32>
    %1 = arith.truncf %0 : vector<2x3416xf32> to vector<2x3416xbf16>
    %c0_1 = arith.constant 0 : index
    %c0_2 = arith.constant 0 : index
    %2 = vector.load %arg1[%c0_1, %c0_2] : memref<3416x192xbf16, #tpu.memory_space<vmem>>, vector<3416x192xbf16>
    %cst = arith.constant dense<0.000000e+00> : vector<2x192xf32>
    %3 = tpu.matmul %1, %2, %cst {dimension_numbers = #tpu.dot_dimension_numbers<[1], [0], [0], [1], [0, 0, 1, 1], [], []>} : vector<2x3416xbf16>, vector<3416x192xbf16>, vector<2x192xf32> -> vector<2x192xf32>
    %c0_3 = arith.constant 0 : index
    %c0_4 = arith.constant 0 : index
    %4 = vector.load %arg2[%c0_3, %c0_4] : memref<1x192xf32, #tpu.memory_space<vmem>>, vector<1x192xf32>
    %5 = vector.broadcast %4 : vector<1x192xf32> to vector<2x192xf32>
    %6 = arith.addf %3, %5 : vector<2x192xf32>
    %7 = vector.extract_strided_slice %6 {offsets = [0, 0], sizes = [2, 128], strides = [1, 1]} : vector<2x192xf32> to vector<2x128xf32>
    %8 = arith.negf %7 : vector<2x128xf32>
    %9 = math.exp %8 : vector<2x128xf32>
    %cst_5 = arith.constant 1.000000e+00 : f32
    %10 = vector.broadcast %cst_5 : f32 to vector<2x128xf32>
    %11 = arith.addf %10, %9 : vector<2x128xf32>
    %12 = arith.divf %10, %11 : vector<2x128xf32>
    %13 = vector.extract_strided_slice %12 {offsets = [0, 0], sizes = [2, 64], strides = [1, 1]} : vector<2x128xf32> to vector<2x64xf32>
    %14 = vector.extract_strided_slice %12 {offsets = [0, 64], sizes = [2, 64], strides = [1, 1]} : vector<2x128xf32> to vector<2x64xf32>
    %15 = vector.extract_strided_slice %6 {offsets = [0, 128], sizes = [2, 64], strides = [1, 1]} : vector<2x192xf32> to vector<2x64xf32>
    %16 = math.tanh %15 : vector<2x64xf32>
    %17 = arith.mulf %13, %16 : vector<2x64xf32>
    %18 = math.tanh %17 : vector<2x64xf32>
    %19 = arith.mulf %14, %18 : vector<2x64xf32>
    %c0_6 = arith.constant 0 : index
    %c0_7 = arith.constant 0 : index
    %20 = vector.load %arg3[%c0_6, %c0_7] : memref<64x35xf32, #tpu.memory_space<vmem>>, vector<64x35xf32>
    %cst_8 = arith.constant dense<0.000000e+00> : vector<2x35xf32>
    %21 = tpu.matmul %19, %20, %cst_8 {dimension_numbers = #tpu.dot_dimension_numbers<[1], [0], [0], [1], [0, 0, 1, 1], [], []>} : vector<2x64xf32>, vector<64x35xf32>, vector<2x35xf32> -> vector<2x35xf32>
    %c0_9 = arith.constant 0 : index
    %c0_10 = arith.constant 0 : index
    %22 = vector.load %arg4[%c0_9, %c0_10] : memref<1x35xf32, #tpu.memory_space<vmem>>, vector<1x35xf32>
    %23 = vector.broadcast %22 : vector<1x35xf32> to vector<2x35xf32>
    %24 = arith.addf %21, %23 : vector<2x35xf32>
    %c0_11 = arith.constant 0 : index
    %c0_12 = arith.constant 0 : index
    %25 = vector.load %arg5[%c0_11, %c0_12] : memref<2x35xf32, #tpu.memory_space<vmem>>, vector<2x35xf32>
    tpu.vector_store %arg5[%c0_11, %c0_12], %24 {strides = array<i32>} : memref<2x35xf32, #tpu.memory_space<vmem>>, vector<2x35xf32>,
    return
  }
}

</mosaic_0001>

<llo_original>
// kernel: _lambda_.3
$region0: #{_lambda_.3}
  #allocation0 [shape = 'u32[]', space=smem, size = 0x4, offset = 0x4, fixed_abs, tag = 'smem constant byte address 0x4 - core index']
  #allocation1 [shape = 'u32[144,128]{1,0:T(1,128)}', space=vmem, size = 0x12000, scoped, tag = 'internal scratch']
  %s0 = inlined_call_operand.vmem [shape: f32[2,3416], index: 0, kind: input, shape index: {}]
  %s1 = inlined_call_operand.hbm [shape: bf16[3416,192], index: 1, kind: input, shape index: {}]
  %s2 = inlined_call_operand.hbm [shape: f32[1,192], index: 2, kind: input, shape index: {}]
  %s3 = inlined_call_operand.hbm [shape: f32[64,35], index: 3, kind: input, shape index: {}]
  %s4 = inlined_call_operand.vmem [shape: f32[1,35], index: 4, kind: input, shape index: {}]
  %s5 = inlined_call_operand.hbm [shape: f32[2,35], index: 5, kind: output, shape index: {}]
  %s6 = sld [smem:[#allocation0]]
  $region42: #{_lambda_.3} parent=0
    _
  %s8 = ssub.s32 1, %s6
  %s9 = scalar_select 0, %s8, %s6
  $region1: #{_lambda_.3} parent=0
    #allocation2 [shape = 'u8[1748992]{0}', space=vmem, size = 0x1ab000, scoped, tag = 'input window, operand 1, single buffered']
    #allocation3 [shape = 's32[1]{0}', space=sflag, size = 0x4, scoped, tag = 'scoped memory for _lambda_.3']
    #allocation4 [shape = 's32[1]{0}', space=sflag, size = 0x4, scoped, tag = 'scoped memory for _lambda_.3']
    #allocation5 [shape = 'u8[1024]{0}', space=vmem, size = 0x400, scoped, tag = 'input window, operand 2, single buffered']
    #allocation6 [shape = 's32[1]{0}', space=sflag, size = 0x4, scoped, tag = 'scoped memory for _lambda_.3']
    #allocation7 [shape = 'u8[32768]{0}', space=vmem, size = 0x8000, scoped, tag = 'input window, operand 3, single buffered']
    #allocation8 [shape = 'u8[1024]{0}', space=vmem, size = 0x400, scoped, tag = 'output window, operand 0, single buffered']
    %10 = vsyncpa [#allocation3], 0
    %11 = vsyncpa [#allocation6], 0
    %12 = vsyncpa [#allocation4], 0
    // Predicated region
    $region2: #{_lambda_.3} parent=1 // pred_check
      _
    $region3: #{_lambda_.3} parent=1 // pred_check_branch
      %14 = sbr.rel (0) target = $region5
    $region4: #{_lambda_.3} parent=1 // pred_region
      _
    $region5: #{_lambda_.3} parent=1 // pred_fallthru
      _
    // Predicated region
    $region6: #{_lambda_.3} parent=1 // pred_check
      _
    $region7: #{_lambda_.3} parent=1 // pred_check_branch
      %16 = sbr.rel (0) target = $region9
    $region8: #{_lambda_.3} parent=1 // pred_region
      %s18 = ssub.s32 54656, 54656
      %19 = vsyncadd [#allocation3], %s18
      %s20 = sshll.u32 [#allocation2], 4
      %s21 = int_to_ptr.vmem [resolvable:$true] %s20
      %26 = dma.hbm_to_vmem [thread:$0]  %s1, 54656, %s21, [#allocation3], 128, 128, 8
    $region9: #{_lambda_.3} parent=1 // pred_fallthru
      _
    // Predicated region
    $region10: #{_lambda_.3} parent=1 // pred_check
      _
    $region11: #{_lambda_.3} parent=1 // pred_check_branch
      %28 = sbr.rel (0) target = $region13
    $region12: #{_lambda_.3} parent=1 // pred_region
      %s30 = ssub.s32 32, 32
      %31 = vsyncadd [#allocation6], %s30
      %s33 = sshll.u32 [#allocation5], 4
      %s34 = int_to_ptr.vmem [resolvable:$true] %s33
      %36 = dma.hbm_to_vmem [thread:$0]  %s2, 32, %s34, [#allocation6]
    $region13: #{_lambda_.3} parent=1 // pred_fallthru
      _
    // Predicated region
    $region14: #{_lambda_.3} parent=1 // pred_check
      _
    $region15: #{_lambda_.3} parent=1 // pred_check_branch
      %38 = sbr.rel (0) target = $region17
    $region16: #{_lambda_.3} parent=1 // pred_region
      %s40 = ssub.s32 1024, 1024
      %41 = vsyncadd [#allocation6], %s40
      %s42 = sshll.u32 [#allocation7], 4
      %s43 = int_to_ptr.vmem [resolvable:$true] %s42
      %48 = dma.hbm_to_vmem [thread:$0]  %s3, 1024, %s43, [#allocation6], 128, 128, 8
    $region17: #{_lambda_.3} parent=1 // pred_fallthru
      _
    // Predicated region
    $region18: #{_lambda_.3} parent=1 // pred_check
      _
    $region19: #{_lambda_.3} parent=1 // pred_check_branch
      %50 = sbr.rel (0) target = $region21
    $region20: #{_lambda_.3} parent=1 // pred_region
      _
    $region21: #{_lambda_.3} parent=1 // pred_fallthru
      _
    // Predicated region
    $region22: #{_lambda_.3} parent=1 // pred_check
      _
    $region23: #{_lambda_.3} parent=1 // pred_check_branch
      %52 = sbr.rel (0) target = $region25
    $region24: #{_lambda_.3} parent=1 // pred_region
      %53 = dma.done [#allocation3], 54656
    $region25: #{_lambda_.3} parent=1 // pred_fallthru
      _
    // Predicated region
    $region26: #{_lambda_.3} parent=1 // pred_check
      _
    $region27: #{_lambda_.3} parent=1 // pred_check_branch
      %55 = sbr.rel (0) target = $region29
    $region28: #{_lambda_.3} parent=1 // pred_region
      %56 = dma.done [#allocation6], 32
    $region29: #{_lambda_.3} parent=1 // pred_fallthru
      _
    // Predicated region
    $region30: #{_lambda_.3} parent=1 // pred_check
      _
    $region31: #{_lambda_.3} parent=1 // pred_check_branch
      %58 = sbr.rel (0) target = $region33
    $region32: #{_lambda_.3} parent=1 // pred_region
      %59 = dma.done [#allocation6], 1024
    $region33: #{_lambda_.3} parent=1 // pred_fallthru
      _
    %v61 = vld [vmem:[%s0] sm:$0xff]
    %v62 = vld [vmem:[%s0 + $0x8] sm:$0xff]
    %v63 = vld [vmem:[%s0 + $0x10] sm:$0xff]
    %v64 = vld [vmem:[%s0 + $0x18] sm:$0xff]
    %v65 = vld [vmem:[%s0 + $0x20] sm:$0xff]
    %v66 = vld [vmem:[%s0 + $0x28] sm:$0xff]
    %v67 = vld [vmem:[%s0 + $0x30] sm:$0x3f]
    %v75 = vcombine.high %v61, %v61
    %v77 = vunpack.c.l.s4 1983009808
    %v78 = vunpack.c.0.s8 %v77
    %v79 = vlaneseq
    %v80 = vshrl.u32 %v79, 7
    %v81 = vsub.s32 %v78, %v80
    %v82 = vrot.slane %v61, %v81
    %v84 = vunpack.c.l.s4 1983009808
    %v85 = vunpack.c.0.s8 %v84
    %v86 = vlaneseq
    %v87 = vshrl.u32 %v86, 7
    %v88 = vsub.s32 %v85, %v87
    %v89 = vrot.slane %v75, %v88
    %v90 = vcombine.high %v82, %v82
    %v91 = vcombine.high %v89, %v89
    %v92 = vcombine.high %v62, %v62
    %v94 = vunpack.c.l.s4 1983009808
    %v95 = vunpack.c.0.s8 %v94
    %v96 = vlaneseq
    %v97 = vshrl.u32 %v96, 7
    %v98 = vsub.s32 %v95, %v97
    %v99 = vrot.slane %v62, %v98
    %v101 = vunpack.c.l.s4 1983009808
    %v102 = vunpack.c.0.s8 %v101
    %v103 = vlaneseq
    %v104 = vshrl.u32 %v103, 7
    %v105 = vsub.s32 %v102, %v104
    %v106 = vrot.slane %v92, %v105
    %v107 = vcombine.high %v99, %v99
    %v108 = vcombine.high %v106, %v106
    %v109 = vcombine.high %v63, %v63
    %v111 = vunpack.c.l.s4 1983009808
    %v112 = vunpack.c.0.s8 %v111
    %v113 = vlaneseq
    %v114 = vshrl.u32 %v113, 7
    %v115 = vsub.s32 %v112, %v114
    %v116 = vrot.slane %v63, %v115
    %v118 = vunpack.c.l.s4 1983009808
    %v119 = vunpack.c.0.s8 %v118
    %v120 = vlaneseq
    %v121 = vshrl.u32 %v120, 7
    %v122 = vsub.s32 %v119, %v121
    %v123 = vrot.slane %v109, %v122
    %v124 = vcombine.high %v116, %v116
    %v125 = vcombine.high %v123, %v123
    %v126 = vcombine.high %v64, %v64
    %v128 = vunpack.c.l.s4 1983009808
    %v129 = vunpack.c.0.s8 %v128
    %v130 = vlaneseq
    %v131 = vshrl.u32 %v130, 7
    %v132 = vsub.s32 %v129, %v131
    %v133 = vrot.slane %v64, %v132
    %v135 = vunpack.c.l.s4 1983009808
    %v136 = vunpack.c.0.s8 %v135
    %v137 = vlaneseq
    %v138 = vshrl.u32 %v137, 7
    %v139 = vsub.s32 %v136, %v138
    %v140 = vrot.slane %v126, %v139
    %v141 = vcombine.high %v133, %v133
    %v142 = vcombine.high %v140, %v140
    %v143 = vcombine.high %v65, %v65
    %v145 = vunpack.c.l.s4 1983009808
    %v146 = vunpack.c.0.s8 %v145
    %v147 = vlaneseq
    %v148 = vshrl.u32 %v147, 7
    %v149 = vsub.s32 %v146, %v148
    %v150 = vrot.slane %v65, %v149
    %v152 = vunpack.c.l.s4 1983009808
    %v153 = vunpack.c.0.s8 %v152
    %v154 = vlaneseq
    %v155 = vshrl.u32 %v154, 7
    %v156 = vsub.s32 %v153, %v155
    %v157 = vrot.slane %v143, %v156
    %v158 = vcombine.high %v150, %v150
    %v159 = vcombine.high %v157, %v157
    %v160 = vcombine.high %v66, %v66
    %v162 = vunpack.c.l.s4 1983009808
    %v163 = vunpack.c.0.s8 %v162
    %v164 = vlaneseq
    %v165 = vshrl.u32 %v164, 7
    %v166 = vsub.s32 %v163, %v165
    %v167 = vrot.slane %v66, %v166
    %v169 = vunpack.c.l.s4 1983009808
    %v170 = vunpack.c.0.s8 %v169
    %v171 = vlaneseq
    %v172 = vshrl.u32 %v171, 7
    %v173 = vsub.s32 %v170, %v172
    %v174 = vrot.slane %v160, %v173
    %v175 = vcombine.high %v167, %v167
    %v176 = vcombine.high %v174, %v174
    %v177 = vcombine.high %v67, %v67
    %v179 = vunpack.c.l.s4 1983009808
    %v180 = vunpack.c.0.s8 %v179
    %v181 = vlaneseq
    %v182 = vshrl.u32 %v181, 7
    %v183 = vsub.s32 %v180, %v182
    %v184 = vrot.slane %v67, %v183
    %v186 = vunpack.c.l.s4 1983009808
    %v187 = vunpack.c.0.s8 %v186
    %v188 = vlaneseq
    %v189 = vshrl.u32 %v188, 7
    %v190 = vsub.s32 %v187, %v189
    %v191 = vrot.slane %v177, %v190
    %v192 = vcombine.high %v184, %v184
    %v220 = vpack.c.bf16 %v82, %v82
    %v221 = vpack.c.bf16 %v90, %v90
    %v222 = vpack.c.bf16 %v89, %v89
    %v223 = vpack.c.bf16 %v91, %v91
    %v224 = vpack.c.bf16 %v99, %v99
    %v225 = vpack.c.bf16 %v107, %v107
    %v226 = vpack.c.bf16 %v106, %v106
    %v227 = vpack.c.bf16 %v108, %v108
    %v228 = vpack.c.bf16 %v116, %v116
    %v229 = vpack.c.bf16 %v124, %v124
    %v230 = vpack.c.bf16 %v123, %v123
    %v231 = vpack.c.bf16 %v125, %v125
    %v232 = vpack.c.bf16 %v133, %v133
    %v233 = vpack.c.bf16 %v141, %v141
    %v234 = vpack.c.bf16 %v140, %v140
    %v235 = vpack.c.bf16 %v142, %v142
    %v236 = vpack.c.bf16 %v150, %v150
    %v237 = vpack.c.bf16 %v158, %v158
    %v238 = vpack.c.bf16 %v157, %v157
    %v239 = vpack.c.bf16 %v159, %v159
    %v240 = vpack.c.bf16 %v167, %v167
    %v241 = vpack.c.bf16 %v175, %v175
    %v242 = vpack.c.bf16 %v174, %v174
    %v243 = vpack.c.bf16 %v176, %v176
    %v244 = vpack.c.bf16 %v184, %v184
    %v245 = vpack.c.bf16 %v192, %v192
    %v246 = vpack.c.bf16 %v191, %v191
    %v247 = vld [vmem:[#allocation2] sm:$0xff]
    %v248 = vld [vmem:[#allocation2 + $0x8] sm:$0xff]
    %v249 = vld [vmem:[#allocation2 + $0x10] sm:$0xff]
    %v250 = vld [vmem:[#allocation2 + $0x18] sm:$0xff]
    %v251 = vld [vmem:[#allocation2 + $0x20] sm:$0xff]
    %v252 = vld [vmem:[#allocation2 + $0x28] sm:$0xff]
    %v253 = vld [vmem:[#allocation2 + $0x30] sm:$0xff]
    %v254 = vld [vmem:[#allocation2 + $0x38] sm:$0xff]
    %v255 = vld [vmem:[#allocation2 + $0x40] sm:$0xff]
    %v256 = vld [vmem:[#allocation2 + $0x48] sm:$0xff]
    %v257 = vld [vmem:[#allocation2 + $0x50] sm:$0xff]
    %v258 = vld [vmem:[#allocation2 + $0x58] sm:$0xff]
    %v259 = vld [vmem:[#allocation2 + $0x60] sm:$0xff]
    %v260 = vld [vmem:[#allocation2 + $0x68] sm:$0xff]
    %v261 = vld [vmem:[#allocation2 + $0x70] sm:$0xff]
    %v262 = vld [vmem:[#allocation2 + $0x78] sm:$0xff]
    %v263 = vld [vmem:[#allocation2 + $0x80] sm:$0xff]
    %v264 = vld [vmem:[#allocation2 + $0x88] sm:$0xff]
    %v265 = vld [vmem:[#allocation2 + $0x90] sm:$0xff]
    %v266 = vld [vmem:[#allocation2 + $0x98] sm:$0xff]
    %v267 = vld [vmem:[#allocation2 + $0xa0] sm:$0xff]
    %v268 = vld [vmem:[#allocation2 + $0xa8] sm:$0xff]
    %v269 = vld [vmem:[#allocation2 + $0xb0] sm:$0xff]
    %v270 = vld [vmem:[#allocation2 + $0xb8] sm:$0xff]
    %v271 = vld [vmem:[#allocation2 + $0xc0] sm:$0xff]
    %v272 = vld [vmem:[#allocation2 + $0xc8] sm:$0xff]
    %v273 = vld [vmem:[#allocation2 + $0xd0] sm:$0xff]
    %v274 = vld [vmem:[#allocation2 + $0xd8] sm:$0xff]
    %v275 = vld [vmem:[#allocation2 + $0xe0] sm:$0xff]
    %v276 = vld [vmem:[#allocation2 + $0xe8] sm:$0xff]
    %v277 = vld [vmem:[#allocation2 + $0xf0] sm:$0xff]
    %v278 = vld [vmem:[#allocation2 + $0xf8] sm:$0xff]
    %v279 = vld [vmem:[#allocation2 + $0x100] sm:$0xff]
    %v280 = vld [vmem:[#allocation2 + $0x108] sm:$0xff]
    %v281 = vld [vmem:[#allocation2 + $0x110] sm:$0xff]
    %v282 = vld [vmem:[#allocation2 + $0x118] sm:$0xff]
    %v283 = vld [vmem:[#allocation2 + $0x120] sm:$0xff]
    %v284 = vld [vmem:[#allocation2 + $0x128] sm:$0xff]
    %v285 = vld [vmem:[#allocation2 + $0x130] sm:$0xff]
    %v286 = vld [vmem:[#allocation2 + $0x138] sm:$0xff]
    %v287 = vld [vmem:[#allocation2 + $0x140] sm:$0xff]
    %v288 = vld [vmem:[#allocation2 + $0x148] sm:$0xff]
    %v289 = vld [vmem:[#allocation2 + $0x150] sm:$0xff]
    %v290 = vld [vmem:[#allocation2 + $0x158] sm:$0xff]
    %v291 = vld [vmem:[#allocation2 + $0x160] sm:$0xff]
    %v292 = vld [vmem:[#allocation2 + $0x168] sm:$0xff]
    %v293 = vld [vmem:[#allocation2 + $0x170] sm:$0xff]
    %v294 = vld [vmem:[#allocation2 + $0x178] sm:$0xff]
    %v295 = vld [vmem:[#allocation2 + $0x180] sm:$0xff]
    %v296 = vld [vmem:[#allocation2 + $0x188] sm:$0xff]
    %v297 = vld [vmem:[#allocation2 + $0x190] sm:$0xff]
    %v298 = vld [vmem:[#allocation2 + $0x198] sm:$0xff]
    %v299 = vld [vmem:[#allocation2 + $0x1a0] sm:$0xff]
    %v300 = vld [vmem:[#allocation2 + $0x1a8] sm:$0xff]
    %v301 = vld [vmem:[#allocation2 + $0x1b0] sm:$0xff]
    %v302 = vld [vmem:[#allocation2 + $0x1b8] sm:$0xff]
    %v303 = vld [vmem:[#allocation2 + $0x1c0] sm:$0xff]
    %v304 = vld [vmem:[#allocation2 + $0x1c8] sm:$0xff]
    %v305 = vld [vmem:[#allocation2 + $0x1d0] sm:$0xff]
    %v306 = vld [vmem:[#allocation2 + $0x1d8] sm:$0xff]
    %v307 = vld [vmem:[#allocation2 + $0x1e0] sm:$0xff]
    %v308 = vld [vmem:[#allocation2 + $0x1e8] sm:$0xff]
    %v309 = vld [vmem:[#allocation2 + $0x1f0] sm:$0xff]
    %v310 = vld [vmem:[#allocation2 + $0x1f8] sm:$0xff]
    %v311 = vld [vmem:[#allocation2 + $0x200] sm:$0xff]
    %v312 = vld [vmem:[#allocation2 + $0x208] sm:$0xff]
    %v313 = vld [vmem:[#allocation2 + $0x210] sm:$0xff]
    %v314 = vld [vmem:[#allocation2 + $0x218] sm:$0xff]
    %v315 = vld [vmem:[#allocation2 + $0x220] sm:$0xff]
    %v316 = vld [vmem:[#allocation2 + $0x228] sm:$0xff]
    %v317 = vld [vmem:[#allocation2 + $0x230] sm:$0xff]
    %v318 = vld [vmem:[#allocation2 + $0x238] sm:$0xff]
    %v319 = vld [vmem:[#allocation2 + $0x240] sm:$0xff]
    %v320 = vld [vmem:[#allocation2 + $0x248] sm:$0xff]
    %v321 = vld [vmem:[#allocation2 + $0x250] sm:$0xff]
    %v322 = vld [vmem:[#allocation2 + $0x258] sm:$0xff]
    %v323 = vld [vmem:[#allocation2 + $0x260] sm:$0xff]
    %v324 = vld [vmem:[#allocation2 + $0x268] sm:$0xff]
    %v325 = vld [vmem:[#allocation2 + $0x270] sm:$0xff]
    %v326 = vld [vmem:[#allocation2 + $0x278] sm:$0xff]
    %v327 = vld [vmem:[#allocation2 + $0x280] sm:$0xff]
    %v328 = vld [vmem:[#allocation2 + $0x288] sm:$0xff]
    %v329 = vld [vmem:[#allocation2 + $0x290] sm:$0xff]
    %v330 = vld [vmem:[#allocation2 + $0x298] sm:$0xff]
    %v331 = vld [vmem:[#allocation2 + $0x2a0] sm:$0xff]
    %v332 = vld [vmem:[#allocation2 + $0x2a8] sm:$0xff]
    %v333 = vld [vmem:[#allocation2 + $0x2b0] sm:$0xff]
    %v334 = vld [vmem:[#allocation2 + $0x2b8] sm:$0xff]
    %v335 = vld [vmem:[#allocation2 + $0x2c0] sm:$0xff]
    %v336 = vld [vmem:[#allocation2 + $0x2c8] sm:$0xff]
    %v337 = vld [vmem:[#allocation2 + $0x2d0] sm:$0xff]
    %v338 = vld [vmem:[#allocation2 + $0x2d8] sm:$0xff]
    %v339 = vld [vmem:[#allocation2 + $0x2e0] sm:$0xff]
    %v340 = vld [vmem:[#allocation2 + $0x2e8] sm:$0xff]
    %v341 = vld [vmem:[#allocation2 + $0x2f0] sm:$0xff]
    %v342 = vld [vmem:[#allocation2 + $0x2f8] sm:$0xff]
    %v343 = vld [vmem:[#allocation2 + $0x300] sm:$0xff]
    %v344 = vld [vmem:[#allocation2 + $0x308] sm:$0xff]
    %v345 = vld [vmem:[#allocation2 + $0x310] sm:$0xff]
    %v346 = vld [vmem:[#allocation2 + $0x318] sm:$0xff]
    %v347 = vld [vmem:[#allocation2 + $0x320] sm:$0xff]
    %v348 = vld [vmem:[#allocation2 + $0x328] sm:$0xff]
    %v349 = vld [vmem:[#allocation2 + $0x330] sm:$0xff]
    %v350 = vld [vmem:[#allocation2 + $0x338] sm:$0xff]
    %v351 = vld [vmem:[#allocation2 + $0x340] sm:$0xff]
    %v352 = vld [vmem:[#allocation2 + $0x348] sm:$0xff]
    %v353 = vld [vmem:[#allocation2 + $0x350] sm:$0xff]
    %v354 = vld [vmem:[#allocation2 + $0x358] sm:$0xff]
    %v355 = vld [vmem:[#allocation2 + $0x360] sm:$0xff]
    %v356 = vld [vmem:[#allocation2 + $0x368] sm:$0xff]
    %v357 = vld [vmem:[#allocation2 + $0x370] sm:$0xff]
    %v358 = vld [vmem:[#allocation2 + $0x378] sm:$0xff]
    %v359 = vld [vmem:[#allocation2 + $0x380] sm:$0xff]
    %v360 = vld [vmem:[#allocation2 + $0x388] sm:$0xff]
    %v361 = vld [vmem:[#allocation2 + $0x390] sm:$0xff]
    %v362 = vld [vmem:[#allocation2 + $0x398] sm:$0xff]
    %v363 = vld [vmem:[#allocation2 + $0x3a0] sm:$0xff]
    %v364 = vld [vmem:[#allocation2 + $0x3a8] sm:$0xff]
    %v365 = vld [vmem:[#allocation2 + $0x3b0] sm:$0xff]
    %v366 = vld [vmem:[#allocation2 + $0x3b8] sm:$0xff]
    %v367 = vld [vmem:[#allocation2 + $0x3c0] sm:$0xff]
    %v368 = vld [vmem:[#allocation2 + $0x3c8] sm:$0xff]
    %v369 = vld [vmem:[#allocation2 + $0x3d0] sm:$0xff]
    %v370 = vld [vmem:[#allocation2 + $0x3d8] sm:$0xff]
    %v371 = vld [vmem:[#allocation2 + $0x3e0] sm:$0xff]
    %v372 = vld [vmem:[#allocation2 + $0x3e8] sm:$0xff]
    %v373 = vld [vmem:[#allocation2 + $0x3f0] sm:$0xff]
    %v374 = vld [vmem:[#allocation2 + $0x3f8] sm:$0xff]
    %v375 = vld [vmem:[#allocation2 + $0x400] sm:$0xff]
    %v376 = vld [vmem:[#allocation2 + $0x408] sm:$0xff]
    %v377 = vld [vmem:[#allocation2 + $0x410] sm:$0xff]
    %v378 = vld [vmem:[#allocation2 + $0x418] sm:$0xff]
    %v379 = vld [vmem:[#allocation2 + $0x420] sm:$0xff]
    %v380 = vld [vmem:[#allocation2 + $0x428] sm:$0xff]
    %v381 = vld [vmem:[#allocation2 + $0x430] sm:$0xff]
    %v382 = vld [vmem:[#allocation2 + $0x438] sm:$0xff]
    %v383 = vld [vmem:[#allocation2 + $0x440] sm:$0xff]
    %v384 = vld [vmem:[#allocation2 + $0x448] sm:$0xff]
    %v385 = vld [vmem:[#allocation2 + $0x450] sm:$0xff]
    %v386 = vld [vmem:[#allocation2 + $0x458] sm:$0xff]
    %v387 = vld [vmem:[#allocation2 + $0x460] sm:$0xff]
    %v388 = vld [vmem:[#allocation2 + $0x468] sm:$0xff]
    %v389 = vld [vmem:[#allocation2 + $0x470] sm:$0xff]
    %v390 = vld [vmem:[#allocation2 + $0x478] sm:$0xff]
    %v391 = vld [vmem:[#allocation2 + $0x480] sm:$0xff]
    %v392 = vld [vmem:[#allocation2 + $0x488] sm:$0xff]
    %v393 = vld [vmem:[#allocation2 + $0x490] sm:$0xff]
    %v394 = vld [vmem:[#allocation2 + $0x498] sm:$0xff]
    %v395 = vld [vmem:[#allocation2 + $0x4a0] sm:$0xff]
    %v396 = vld [vmem:[#allocation2 + $0x4a8] sm:$0xff]
    %v397 = vld [vmem:[#allocation2 + $0x4b0] sm:$0xff]
    %v398 = vld [vmem:[#allocation2 + $0x4b8] sm:$0xff]
    %v399 = vld [vmem:[#allocation2 + $0x4c0] sm:$0xff]
    %v400 = vld [vmem:[#allocation2 + $0x4c8] sm:$0xff]
    %v401 = vld [vmem:[#allocation2 + $0x4d0] sm:$0xff]
    %v402 = vld [vmem:[#allocation2 + $0x4d8] sm:$0xff]
    %v403 = vld [vmem:[#allocation2 + $0x4e0] sm:$0xff]
    %v404 = vld [vmem:[#allocation2 + $0x4e8] sm:$0xff]
    %v405 = vld [vmem:[#allocation2 + $0x4f0] sm:$0xff]
    %v406 = vld [vmem:[#allocation2 + $0x4f8] sm:$0xff]
    %v407 = vld [vmem:[#allocation2 + $0x500] sm:$0xff]
    %v408 = vld [vmem:[#allocation2 + $0x508] sm:$0xff]
    %v409 = vld [vmem:[#allocation2 + $0x510] sm:$0xff]
    %v410 = vld [vmem:[#allocation2 + $0x518] sm:$0xff]
    %v411 = vld [vmem:[#allocation2 + $0x520] sm:$0xff]
    %v412 = vld [vmem:[#allocation2 + $0x528] sm:$0xff]
    %v413 = vld [vmem:[#allocation2 + $0x530] sm:$0xff]
    %v414 = vld [vmem:[#allocation2 + $0x538] sm:$0xff]
    %v415 = vld [vmem:[#allocation2 + $0x540] sm:$0xff]
    %v416 = vld [vmem:[#allocation2 + $0x548] sm:$0xff]
    %v417 = vld [vmem:[#allocation2 + $0x550] sm:$0xff]
    %v418 = vld [vmem:[#allocation2 + $0x558] sm:$0xff]
    %v419 = vld [vmem:[#allocation2 + $0x560] sm:$0xff]
    %v420 = vld [vmem:[#allocation2 + $0x568] sm:$0xff]
    %v421 = vld [vmem:[#allocation2 + $0x570] sm:$0xff]
    %v422 = vld [vmem:[#allocation2 + $0x578] sm:$0xff]
    %v423 = vld [vmem:[#allocation2 + $0x580] sm:$0xff]
    %v424 = vld [vmem:[#allocation2 + $0x588] sm:$0xff]
    %v425 = vld [vmem:[#allocation2 + $0x590] sm:$0xff]
    %v426 = vld [vmem:[#allocation2 + $0x598] sm:$0xff]
    %v427 = vld [vmem:[#allocation2 + $0x5a0] sm:$0xff]
    %v428 = vld [vmem:[#allocation2 + $0x5a8] sm:$0xff]
    %v429 = vld [vmem:[#allocation2 + $0x5b0] sm:$0xff]
    %v430 = vld [vmem:[#allocation2 + $0x5b8] sm:$0xff]
    %v431 = vld [vmem:[#allocation2 + $0x5c0] sm:$0xff]
    %v432 = vld [vmem:[#allocation2 + $0x5c8] sm:$0xff]
    %v433 = vld [vmem:[#allocation2 + $0x5d0] sm:$0xff]
    %v434 = vld [vmem:[#allocation2 + $0x5d8] sm:$0xff]
    %v435 = vld [vmem:[#allocation2 + $0x5e0] sm:$0xff]
    %v436 = vld [vmem:[#allocation2 + $0x5e8] sm:$0xff]
    %v437 = vld [vmem:[#allocation2 + $0x5f0] sm:$0xff]
    %v438 = vld [vmem:[#allocation2 + $0x5f8] sm:$0xff]
    %v439 = vld [vmem:[#allocation2 + $0x600] sm:$0xff]
    %v440 = vld [vmem:[#allocation2 + $0x608] sm:$0xff]
    %v441 = vld [vmem:[#allocation2 + $0x610] sm:$0xff]
    %v442 = vld [vmem:[#allocation2 + $0x618] sm:$0xff]
    %v443 = vld [vmem:[#allocation2 + $0x620] sm:$0xff]
    %v444 = vld [vmem:[#allocation2 + $0x628] sm:$0xff]
    %v445 = vld [vmem:[#allocation2 + $0x630] sm:$0xff]
    %v446 = vld [vmem:[#allocation2 + $0x638] sm:$0xff]
    %v447 = vld [vmem:[#allocation2 + $0x640] sm:$0xff]
    %v448 = vld [vmem:[#allocation2 + $0x648] sm:$0xff]
    %v449 = vld [vmem:[#allocation2 + $0x650] sm:$0xff]
    %v450 = vld [vmem:[#allocation2 + $0x658] sm:$0xff]
    %v451 = vld [vmem:[#allocation2 + $0x660] sm:$0xff]
    %v452 = vld [vmem:[#allocation2 + $0x668] sm:$0xff]
    %v453 = vld [vmem:[#allocation2 + $0x670] sm:$0xff]
    %v454 = vld [vmem:[#allocation2 + $0x678] sm:$0xff]
    %v455 = vld [vmem:[#allocation2 + $0x680] sm:$0xff]
    %v456 = vld [vmem:[#allocation2 + $0x688] sm:$0xff]
    %v457 = vld [vmem:[#allocation2 + $0x690] sm:$0xff]
    %v458 = vld [vmem:[#allocation2 + $0x698] sm:$0xff]
    %v459 = vld [vmem:[#allocation2 + $0x6a0] sm:$0xff]
    %v460 = vld [vmem:[#allocation2 + $0x6a8] sm:$0xff]
    %v461 = vld [vmem:[#allocation2 + $0x6b0] sm:$0xff]
    %v462 = vld [vmem:[#allocation2 + $0x6b8] sm:$0xff]
    %v463 = vld [vmem:[#allocation2 + $0x6c0] sm:$0xff]
    %v464 = vld [vmem:[#allocation2 + $0x6c8] sm:$0xff]
    %v465 = vld [vmem:[#allocation2 + $0x6d0] sm:$0xff]
    %v466 = vld [vmem:[#allocation2 + $0x6d8] sm:$0xff]
    %v467 = vld [vmem:[#allocation2 + $0x6e0] sm:$0xff]
    %v468 = vld [vmem:[#allocation2 + $0x6e8] sm:$0xff]
    %v469 = vld [vmem:[#allocation2 + $0x6f0] sm:$0xff]
    %v470 = vld [vmem:[#allocation2 + $0x6f8] sm:$0xff]
    %v471 = vld [vmem:[#allocation2 + $0x700] sm:$0xff]
    %v472 = vld [vmem:[#allocation2 + $0x708] sm:$0xff]
    %v473 = vld [vmem:[#allocation2 + $0x710] sm:$0xff]
    %v474 = vld [vmem:[#allocation2 + $0x718] sm:$0xff]
    %v475 = vld [vmem:[#allocation2 + $0x720] sm:$0xff]
    %v476 = vld [vmem:[#allocation2 + $0x728] sm:$0xff]
    %v477 = vld [vmem:[#allocation2 + $0x730] sm:$0xff]
    %v478 = vld [vmem:[#allocation2 + $0x738] sm:$0xff]
    %v479 = vld [vmem:[#allocation2 + $0x740] sm:$0xff]
    %v480 = vld [vmem:[#allocation2 + $0x748] sm:$0xff]
    %v481 = vld [vmem:[#allocation2 + $0x750] sm:$0xff]
    %v482 = vld [vmem:[#allocation2 + $0x758] sm:$0xff]
    %v483 = vld [vmem:[#allocation2 + $0x760] sm:$0xff]
    %v484 = vld [vmem:[#allocation2 + $0x768] sm:$0xff]
    %v485 = vld [vmem:[#allocation2 + $0x770] sm:$0xff]
    %v486 = vld [vmem:[#allocation2 + $0x778] sm:$0xff]
    %v487 = vld [vmem:[#allocation2 + $0x780] sm:$0xff]
    %v488 = vld [vmem:[#allocation2 + $0x788] sm:$0xff]
    %v489 = vld [vmem:[#allocation2 + $0x790] sm:$0xff]
    %v490 = vld [vmem:[#allocation2 + $0x798] sm:$0xff]
    %v491 = vld [vmem:[#allocation2 + $0x7a0] sm:$0xff]
    %v492 = vld [vmem:[#allocation2 + $0x7a8] sm:$0xff]
    %v493 = vld [vmem:[#allocation2 + $0x7b0] sm:$0xff]
    %v494 = vld [vmem:[#allocation2 + $0x7b8] sm:$0xff]
    %v495 = vld [vmem:[#allocation2 + $0x7c0] sm:$0xff]
    %v496 = vld [vmem:[#allocation2 + $0x7c8] sm:$0xff]
    %v497 = vld [vmem:[#allocation2 + $0x7d0] sm:$0xff]
    %v498 = vld [vmem:[#allocation2 + $0x7d8] sm:$0xff]
    %v499 = vld [vmem:[#allocation2 + $0x7e0] sm:$0xff]
    %v500 = vld [vmem:[#allocation2 + $0x7e8] sm:$0xff]
    %v501 = vld [vmem:[#allocation2 + $0x7f0] sm:$0xff]
    %v502 = vld [vmem:[#allocation2 + $0x7f8] sm:$0xff]
    %v503 = vld [vmem:[#allocation2 + $0x800] sm:$0xff]
    %v504 = vld [vmem:[#allocation2 + $0x808] sm:$0xff]
    %v505 = vld [vmem:[#allocation2 + $0x810] sm:$0xff]
    %v506 = vld [vmem:[#allocation2 + $0x818] sm:$0xff]
    %v507 = vld [vmem:[#allocation2 + $0x820] sm:$0xff]
    %v508 = vld [vmem:[#allocation2 + $0x828] sm:$0xff]
    %v509 = vld [vmem:[#allocation2 + $0x830] sm:$0xff]
    %v510 = vld [vmem:[#allocation2 + $0x838] sm:$0xff]
    %v511 = vld [vmem:[#allocation2 + $0x840] sm:$0xff]
    %v512 = vld [vmem:[#allocation2 + $0x848] sm:$0xff]
    %v513 = vld [vmem:[#allocation2 + $0x850] sm:$0xff]
    %v514 = vld [vmem:[#allocation2 + $0x858] sm:$0xff]
    %v515 = vld [vmem:[#allocation2 + $0x860] sm:$0xff]
    %v516 = vld [vmem:[#allocation2 + $0x868] sm:$0xff]
    %v517 = vld [vmem:[#allocation2 + $0x870] sm:$0xff]
    %v518 = vld [vmem:[#allocation2 + $0x878] sm:$0xff]
    %v519 = vld [vmem:[#allocation2 + $0x880] sm:$0xff]
    %v520 = vld [vmem:[#allocation2 + $0x888] sm:$0xff]
    %v521 = vld [vmem:[#allocation2 + $0x890] sm:$0xff]
    %v522 = vld [vmem:[#allocation2 + $0x898] sm:$0xff]
    %v523 = vld [vmem:[#allocation2 + $0x8a0] sm:$0xff]
    %v524 = vld [vmem:[#allocation2 + $0x8a8] sm:$0xff]
    %v525 = vld [vmem:[#allocation2 + $0x8b0] sm:$0xff]
    %v526 = vld [vmem:[#allocation2 + $0x8b8] sm:$0xff]
    %v527 = vld [vmem:[#allocation2 + $0x8c0] sm:$0xff]
    %v528 = vld [vmem:[#allocation2 + $0x8c8] sm:$0xff]
    %v529 = vld [vmem:[#allocation2 + $0x8d0] sm:$0xff]
    %v530 = vld [vmem:[#allocation2 + $0x8d8] sm:$0xff]
    %v531 = vld [vmem:[#allocation2 + $0x8e0] sm:$0xff]
    %v532 = vld [vmem:[#allocation2 + $0x8e8] sm:$0xff]
    %v533 = vld [vmem:[#allocation2 + $0x8f0] sm:$0xff]
    %v534 = vld [vmem:[#allocation2 + $0x8f8] sm:$0xff]
    %v535 = vld [vmem:[#allocation2 + $0x900] sm:$0xff]
    %v536 = vld [vmem:[#allocation2 + $0x908] sm:$0xff]
    %v537 = vld [vmem:[#allocation2 + $0x910] sm:$0xff]
    %v538 = vld [vmem:[#allocation2 + $0x918] sm:$0xff]
    %v539 = vld [vmem:[#allocation2 + $0x920] sm:$0xff]
    %v540 = vld [vmem:[#allocation2 + $0x928] sm:$0xff]
    %v541 = vld [vmem:[#allocation2 + $0x930] sm:$0xff]
    %v542 = vld [vmem:[#allocation2 + $0x938] sm:$0xff]
    %v543 = vld [vmem:[#allocation2 + $0x940] sm:$0xff]
    %v544 = vld [vmem:[#allocation2 + $0x948] sm:$0xff]
    %v545 = vld [vmem:[#allocation2 + $0x950] sm:$0xff]
    %v546 = vld [vmem:[#allocation2 + $0x958] sm:$0xff]
    %v547 = vld [vmem:[#allocation2 + $0x960] sm:$0xff]
    %v548 = vld [vmem:[#allocation2 + $0x968] sm:$0xff]
    %v549 = vld [vmem:[#allocation2 + $0x970] sm:$0xff]
    %v550 = vld [vmem:[#allocation2 + $0x978] sm:$0xff]
    %v551 = vld [vmem:[#allocation2 + $0x980] sm:$0xff]
    %v552 = vld [vmem:[#allocation2 + $0x988] sm:$0xff]
    %v553 = vld [vmem:[#allocation2 + $0x990] sm:$0xff]
    %v554 = vld [vmem:[#allocation2 + $0x998] sm:$0xff]
    %v555 = vld [vmem:[#allocation2 + $0x9a0] sm:$0xff]
    %v556 = vld [vmem:[#allocation2 + $0x9a8] sm:$0xff]
    %v557 = vld [vmem:[#allocation2 + $0x9b0] sm:$0xff]
    %v558 = vld [vmem:[#allocation2 + $0x9b8] sm:$0xff]
    %v559 = vld [vmem:[#allocation2 + $0x9c0] sm:$0xff]
    %v560 = vld [vmem:[#allocation2 + $0x9c8] sm:$0xff]
    %v561 = vld [vmem:[#allocation2 + $0x9d0] sm:$0xff]
    %v562 = vld [vmem:[#allocation2 + $0x9d8] sm:$0xff]
    %v563 = vld [vmem:[#allocation2 + $0x9e0] sm:$0xff]
    %v564 = vld [vmem:[#allocation2 + $0x9e8] sm:$0xff]
    %v565 = vld [vmem:[#allocation2 + $0x9f0] sm:$0xff]
    %v566 = vld [vmem:[#allocation2 + $0x9f8] sm:$0xff]
    %v567 = vld [vmem:[#allocation2 + $0xa00] sm:$0xff]
    %v568 = vld [vmem:[#allocation2 + $0xa08] sm:$0xff]
    %v569 = vld [vmem:[#allocation2 + $0xa10] sm:$0xff]
    %v570 = vld [vmem:[#allocation2 + $0xa18] sm:$0xff]
    %v571 = vld [vmem:[#allocation2 + $0xa20] sm:$0xff]
    %v572 = vld [vmem:[#allocation2 + $0xa28] sm:$0xff]
    %v573 = vld [vmem:[#allocation2 + $0xa30] sm:$0xff]
    %v574 = vld [vmem:[#allocation2 + $0xa38] sm:$0xff]
    %v575 = vld [vmem:[#allocation2 + $0xa40] sm:$0xff]
    %v576 = vld [vmem:[#allocation2 + $0xa48] sm:$0xff]
    %v577 = vld [vmem:[#allocation2 + $0xa50] sm:$0xff]
    %v578 = vld [vmem:[#allocation2 + $0xa58] sm:$0xff]
    %v579 = vld [vmem:[#allocation2 + $0xa60] sm:$0xff]
    %v580 = vld [vmem:[#allocation2 + $0xa68] sm:$0xff]
    %v581 = vld [vmem:[#allocation2 + $0xa70] sm:$0xff]
    %v582 = vld [vmem:[#allocation2 + $0xa78] sm:$0xff]
    %v583 = vld [vmem:[#allocation2 + $0xa80] sm:$0xff]
    %v584 = vld [vmem:[#allocation2 + $0xa88] sm:$0xff]
    %v585 = vld [vmem:[#allocation2 + $0xa90] sm:$0xff]
    %v586 = vld [vmem:[#allocation2 + $0xa98] sm:$0xff]
    %v587 = vld [vmem:[#allocation2 + $0xaa0] sm:$0xff]
    %v588 = vld [vmem:[#allocation2 + $0xaa8] sm:$0xff]
    %v589 = vld [vmem:[#allocation2 + $0xab0] sm:$0xff]
    %v590 = vld [vmem:[#allocation2 + $0xab8] sm:$0xff]
    %v591 = vld [vmem:[#allocation2 + $0xac0] sm:$0xff]
    %v592 = vld [vmem:[#allocation2 + $0xac8] sm:$0xff]
    %v593 = vld [vmem:[#allocation2 + $0xad0] sm:$0xff]
    %v594 = vld [vmem:[#allocation2 + $0xad8] sm:$0xff]
    %v595 = vld [vmem:[#allocation2 + $0xae0] sm:$0xff]
    %v596 = vld [vmem:[#allocation2 + $0xae8] sm:$0xff]
    %v597 = vld [vmem:[#allocation2 + $0xaf0] sm:$0xff]
    %v598 = vld [vmem:[#allocation2 + $0xaf8] sm:$0xff]
    %v599 = vld [vmem:[#allocation2 + $0xb00] sm:$0xff]
    %v600 = vld [vmem:[#allocation2 + $0xb08] sm:$0xff]
    %v601 = vld [vmem:[#allocation2 + $0xb10] sm:$0xff]
    %v602 = vld [vmem:[#allocation2 + $0xb18] sm:$0xff]
    %v603 = vld [vmem:[#allocation2 + $0xb20] sm:$0xff]
    %v604 = vld [vmem:[#allocation2 + $0xb28] sm:$0xff]
    %v605 = vld [vmem:[#allocation2 + $0xb30] sm:$0xff]
    %v606 = vld [vmem:[#allocation2 + $0xb38] sm:$0xff]
    %v607 = vld [vmem:[#allocation2 + $0xb40] sm:$0xff]
    %v608 = vld [vmem:[#allocation2 + $0xb48] sm:$0xff]
    %v609 = vld [vmem:[#allocation2 + $0xb50] sm:$0xff]
    %v610 = vld [vmem:[#allocation2 + $0xb58] sm:$0xff]
    %v611 = vld [vmem:[#allocation2 + $0xb60] sm:$0xff]
    %v612 = vld [vmem:[#allocation2 + $0xb68] sm:$0xff]
    %v613 = vld [vmem:[#allocation2 + $0xb70] sm:$0xff]
    %v614 = vld [vmem:[#allocation2 + $0xb78] sm:$0xff]
    %v615 = vld [vmem:[#allocation2 + $0xb80] sm:$0xff]
    %v616 = vld [vmem:[#allocation2 + $0xb88] sm:$0xff]
    %v617 = vld [vmem:[#allocation2 + $0xb90] sm:$0xff]
    %v618 = vld [vmem:[#allocation2 + $0xb98] sm:$0xff]
    %v619 = vld [vmem:[#allocation2 + $0xba0] sm:$0xff]
    %v620 = vld [vmem:[#allocation2 + $0xba8] sm:$0xff]
    %v621 = vld [vmem:[#allocation2 + $0xbb0] sm:$0xff]
    %v622 = vld [vmem:[#allocation2 + $0xbb8] sm:$0xff]
    %v623 = vld [vmem:[#allocation2 + $0xbc0] sm:$0xff]
    %v624 = vld [vmem:[#allocation2 + $0xbc8] sm:$0xff]
    %v625 = vld [vmem:[#allocation2 + $0xbd0] sm:$0xff]
    %v626 = vld [vmem:[#allocation2 + $0xbd8] sm:$0xff]
    %v627 = vld [vmem:[#allocation2 + $0xbe0] sm:$0xff]
    %v628 = vld [vmem:[#allocation2 + $0xbe8] sm:$0xff]
    %v629 = vld [vmem:[#allocation2 + $0xbf0] sm:$0xff]
    %v630 = vld [vmem:[#allocation2 + $0xbf8] sm:$0xff]
    %v631 = vld [vmem:[#allocation2 + $0xc00] sm:$0xff]
    %v632 = vld [vmem:[#allocation2 + $0xc08] sm:$0xff]
    %v633 = vld [vmem:[#allocation2 + $0xc10] sm:$0xff]
    %v634 = vld [vmem:[#allocation2 + $0xc18] sm:$0xff]
    %v635 = vld [vmem:[#allocation2 + $0xc20] sm:$0xff]
    %v636 = vld [vmem:[#allocation2 + $0xc28] sm:$0xff]
    %v637 = vld [vmem:[#allocation2 + $0xc30] sm:$0xff]
    %v638 = vld [vmem:[#allocation2 + $0xc38] sm:$0xff]
    %v639 = vld [vmem:[#allocation2 + $0xc40] sm:$0xff]
    %v640 = vld [vmem:[#allocation2 + $0xc48] sm:$0xff]
    %v641 = vld [vmem:[#allocation2 + $0xc50] sm:$0xff]
    %v642 = vld [vmem:[#allocation2 + $0xc58] sm:$0xff]
    %v643 = vld [vmem:[#allocation2 + $0xc60] sm:$0xff]
    %v644 = vld [vmem:[#allocation2 + $0xc68] sm:$0xff]
    %v645 = vld [vmem:[#allocation2 + $0xc70] sm:$0xff]
    %v646 = vld [vmem:[#allocation2 + $0xc78] sm:$0xff]
    %v647 = vld [vmem:[#allocation2 + $0xc80] sm:$0xff]
    %v648 = vld [vmem:[#allocation2 + $0xc88] sm:$0xff]
    %v649 = vld [vmem:[#allocation2 + $0xc90] sm:$0xff]
    %v650 = vld [vmem:[#allocation2 + $0xc98] sm:$0xff]
    %v651 = vld [vmem:[#allocation2 + $0xca0] sm:$0xff]
    %v652 = vld [vmem:[#allocation2 + $0xca8] sm:$0xff]
    %v653 = vld [vmem:[#allocation2 + $0xcb0] sm:$0xff]
    %v654 = vld [vmem:[#allocation2 + $0xcb8] sm:$0xff]
    %v655 = vld [vmem:[#allocation2 + $0xcc0] sm:$0xff]
    %v656 = vld [vmem:[#allocation2 + $0xcc8] sm:$0xff]
    %v657 = vld [vmem:[#allocation2 + $0xcd0] sm:$0xff]
    %v658 = vld [vmem:[#allocation2 + $0xcd8] sm:$0xff]
    %v659 = vld [vmem:[#allocation2 + $0xce0] sm:$0xff]
    %v660 = vld [vmem:[#allocation2 + $0xce8] sm:$0xff]
    %v661 = vld [vmem:[#allocation2 + $0xcf0] sm:$0xff]
    %v662 = vld [vmem:[#allocation2 + $0xcf8] sm:$0xff]
    %v663 = vld [vmem:[#allocation2 + $0xd00] sm:$0xff]
    %v664 = vld [vmem:[#allocation2 + $0xd08] sm:$0xff]
    %v665 = vld [vmem:[#allocation2 + $0xd10] sm:$0xff]
    %v666 = vld [vmem:[#allocation2 + $0xd18] sm:$0xff]
    %v667 = vld [vmem:[#allocation2 + $0xd20] sm:$0xff]
    %v668 = vld [vmem:[#allocation2 + $0xd28] sm:$0xff]
    %v669 = vld [vmem:[#allocation2 + $0xd30] sm:$0xff]
    %v670 = vld [vmem:[#allocation2 + $0xd38] sm:$0xff]
    %v671 = vld [vmem:[#allocation2 + $0xd40] sm:$0xff]
    %v672 = vld [vmem:[#allocation2 + $0xd48] sm:$0xff]
    %v673 = vld [vmem:[#allocation2 + $0xd50] sm:$0xff]
    %v674 = vld [vmem:[#allocation5] sm:$0x3]
    %v676 = vlaneseq
    %v677 = vshrl.u32 %v676, 7
    %v678 = vsub.s32 0, %v677
    %v679 = vrot.slane %v674, %v678
    %v680 = vlaneseq
    %v681 = vshrl.u32 %v680, 7
    %v682 = vsub.s32 1, %v681
    %v683 = vrot.slane %v674, %v682
    %v1113 = vunpack.c.l.b16 %v247
    %v1114 = vunpack.c.h.b16 %v247
    %v1115 = vunpack.c.l.b16 %v248
    %v1116 = vunpack.c.h.b16 %v248
    %v1117 = vunpack.c.l.b16 %v249
    %v1118 = vunpack.c.h.b16 %v249
    %v1119 = vunpack.c.l.b16 %v250
    %v1120 = vunpack.c.h.b16 %v250
    %v1121 = vunpack.c.l.b16 %v251
    %v1122 = vunpack.c.h.b16 %v251
    %v1123 = vunpack.c.l.b16 %v252
    %v1124 = vunpack.c.h.b16 %v252
    %v1125 = vunpack.c.l.b16 %v253
    %v1126 = vunpack.c.h.b16 %v253
    %v1127 = vunpack.c.l.b16 %v254
    %v1128 = vunpack.c.h.b16 %v254
    %v1129 = vunpack.c.l.b16 %v255
    %v1130 = vunpack.c.h.b16 %v255
    %v1131 = vunpack.c.l.b16 %v256
    %v1132 = vunpack.c.h.b16 %v256
    %v1133 = vunpack.c.l.b16 %v257
    %v1134 = vunpack.c.h.b16 %v257
    %v1135 = vunpack.c.l.b16 %v258
    %v1136 = vunpack.c.h.b16 %v258
    %v1137 = vunpack.c.l.b16 %v259
    %v1138 = vunpack.c.h.b16 %v259
    %v1139 = vunpack.c.l.b16 %v260
    %v1140 = vunpack.c.h.b16 %v260
    %v1141 = vunpack.c.l.b16 %v261
    %v1142 = vunpack.c.h.b16 %v261
    %v1143 = vunpack.c.l.b16 %v262
    %v1144 = vunpack.c.h.b16 %v262
    %v1145 = vunpack.c.l.b16 %v263
    %v1146 = vunpack.c.h.b16 %v263
    %v1147 = vunpack.c.l.b16 %v264
    %v1148 = vunpack.c.h.b16 %v264
    %v1149 = vunpack.c.l.b16 %v265
    %v1150 = vunpack.c.h.b16 %v265
    %v1151 = vunpack.c.l.b16 %v266
    %v1152 = vunpack.c.h.b16 %v266
    %v1153 = vunpack.c.l.b16 %v267
    %v1154 = vunpack.c.h.b16 %v267
    %v1155 = vunpack.c.l.b16 %v268
    %v1156 = vunpack.c.h.b16 %v268
    %v1157 = vunpack.c.l.b16 %v269
    %v1158 = vunpack.c.h.b16 %v269
    %v1159 = vunpack.c.l.b16 %v270
    %v1160 = vunpack.c.h.b16 %v270
    %v1161 = vunpack.c.l.b16 %v271
    %v1162 = vunpack.c.h.b16 %v271
    %v1163 = vunpack.c.l.b16 %v272
    %v1164 = vunpack.c.h.b16 %v272
    %v1165 = vunpack.c.l.b16 %v273
    %v1166 = vunpack.c.h.b16 %v273
    %v1167 = vunpack.c.l.b16 %v274
    %v1168 = vunpack.c.h.b16 %v274
    %v1169 = vunpack.c.l.b16 %v275
    %v1170 = vunpack.c.h.b16 %v275
    %v1171 = vunpack.c.l.b16 %v276
    %v1172 = vunpack.c.h.b16 %v276
    %v1173 = vunpack.c.l.b16 %v277
    %v1174 = vunpack.c.h.b16 %v277
    %v1175 = vunpack.c.l.b16 %v278
    %v1176 = vunpack.c.h.b16 %v278
    %v1177 = vunpack.c.l.b16 %v279
    %v1178 = vunpack.c.h.b16 %v279
    %v1179 = vunpack.c.l.b16 %v280
    %v1180 = vunpack.c.h.b16 %v280
    %v1181 = vunpack.c.l.b16 %v281
    %v1182 = vunpack.c.h.b16 %v281
    %v1183 = vunpack.c.l.b16 %v282
    %v1184 = vunpack.c.h.b16 %v282
    %v1185 = vunpack.c.l.b16 %v283
    %v1186 = vunpack.c.h.b16 %v283
    %v1187 = vunpack.c.l.b16 %v284
    %v1188 = vunpack.c.h.b16 %v284
    %v1189 = vunpack.c.l.b16 %v285
    %v1190 = vunpack.c.h.b16 %v285
    %v1191 = vunpack.c.l.b16 %v286
    %v1192 = vunpack.c.h.b16 %v286
    %v1193 = vunpack.c.l.b16 %v287
    %v1194 = vunpack.c.h.b16 %v287
    %v1195 = vunpack.c.l.b16 %v288
    %v1196 = vunpack.c.h.b16 %v288
    %v1197 = vunpack.c.l.b16 %v289
    %v1198 = vunpack.c.h.b16 %v289
    %v1199 = vunpack.c.l.b16 %v290
    %v1200 = vunpack.c.h.b16 %v290
    %v1201 = vunpack.c.l.b16 %v291
    %v1202 = vunpack.c.h.b16 %v291
    %v1203 = vunpack.c.l.b16 %v292
    %v1204 = vunpack.c.h.b16 %v292
    %v1205 = vunpack.c.l.b16 %v293
    %v1206 = vunpack.c.h.b16 %v293
    %v1207 = vunpack.c.l.b16 %v294
    %v1208 = vunpack.c.h.b16 %v294
    %v1209 = vunpack.c.l.b16 %v295
    %v1210 = vunpack.c.h.b16 %v295
    %v1211 = vunpack.c.l.b16 %v296
    %v1212 = vunpack.c.h.b16 %v296
    %v1213 = vunpack.c.l.b16 %v297
    %v1214 = vunpack.c.h.b16 %v297
    %v1215 = vunpack.c.l.b16 %v298
    %v1216 = vunpack.c.h.b16 %v298
    %v1217 = vunpack.c.l.b16 %v299
    %v1218 = vunpack.c.h.b16 %v299
    %v1219 = vunpack.c.l.b16 %v300
    %v1220 = vunpack.c.h.b16 %v300
    %v1221 = vunpack.c.l.b16 %v301
    %v1222 = vunpack.c.h.b16 %v301
    %v1223 = vunpack.c.l.b16 %v302
    %v1224 = vunpack.c.h.b16 %v302
    %v1225 = vunpack.c.l.b16 %v303
    %v1226 = vunpack.c.h.b16 %v303
    %v1227 = vunpack.c.l.b16 %v304
    %v1228 = vunpack.c.h.b16 %v304
    %v1229 = vunpack.c.l.b16 %v305
    %v1230 = vunpack.c.h.b16 %v305
    %v1231 = vunpack.c.l.b16 %v306
    %v1232 = vunpack.c.h.b16 %v306
    %v1233 = vunpack.c.l.b16 %v307
    %v1234 = vunpack.c.h.b16 %v307
    %v1235 = vunpack.c.l.b16 %v308
    %v1236 = vunpack.c.h.b16 %v308
    %v1237 = vunpack.c.l.b16 %v309
    %v1238 = vunpack.c.h.b16 %v309
    %v1239 = vunpack.c.l.b16 %v310
    %v1240 = vunpack.c.h.b16 %v310
    %v1241 = vunpack.c.l.b16 %v311
    %v1242 = vunpack.c.h.b16 %v311
    %v1243 = vunpack.c.l.b16 %v312
    %v1244 = vunpack.c.h.b16 %v312
    %v1245 = vunpack.c.l.b16 %v313
    %v1246 = vunpack.c.h.b16 %v313
    %v1247 = vunpack.c.l.b16 %v314
    %v1248 = vunpack.c.h.b16 %v314
    %v1249 = vunpack.c.l.b16 %v315
    %v1250 = vunpack.c.h.b16 %v315
    %v1251 = vunpack.c.l.b16 %v316
    %v1252 = vunpack.c.h.b16 %v316
    %v1253 = vunpack.c.l.b16 %v317
    %v1254 = vunpack.c.h.b16 %v317
    %v1255 = vunpack.c.l.b16 %v318
    %v1256 = vunpack.c.h.b16 %v318
    %v1257 = vunpack.c.l.b16 %v319
    %v1258 = vunpack.c.h.b16 %v319
    %v1259 = vunpack.c.l.b16 %v320
    %v1260 = vunpack.c.h.b16 %v320
    %v1261 = vunpack.c.l.b16 %v321
    %v1262 = vunpack.c.h.b16 %v321
    %v1263 = vunpack.c.l.b16 %v322
    %v1264 = vunpack.c.h.b16 %v322
    %v1265 = vunpack.c.l.b16 %v323
    %v1266 = vunpack.c.h.b16 %v323
    %v1267 = vunpack.c.l.b16 %v324
    %v1268 = vunpack.c.h.b16 %v324
    %v1269 = vunpack.c.l.b16 %v325
    %v1270 = vunpack.c.h.b16 %v325
    %v1271 = vunpack.c.l.b16 %v326
    %v1272 = vunpack.c.h.b16 %v326
    %v1273 = vunpack.c.l.b16 %v327
    %v1274 = vunpack.c.h.b16 %v327
    %v1275 = vunpack.c.l.b16 %v328
    %v1276 = vunpack.c.h.b16 %v328
    %v1277 = vunpack.c.l.b16 %v329
    %v1278 = vunpack.c.h.b16 %v329
    %v1279 = vunpack.c.l.b16 %v330
    %v1280 = vunpack.c.h.b16 %v330
    %v1281 = vunpack.c.l.b16 %v331
    %v1282 = vunpack.c.h.b16 %v331
    %v1283 = vunpack.c.l.b16 %v332
    %v1284 = vunpack.c.h.b16 %v332
    %v1285 = vunpack.c.l.b16 %v333
    %v1286 = vunpack.c.h.b16 %v333
    %v1287 = vunpack.c.l.b16 %v334
    %v1288 = vunpack.c.h.b16 %v334
    %v1289 = vunpack.c.l.b16 %v335
    %v1290 = vunpack.c.h.b16 %v335
    %v1291 = vunpack.c.l.b16 %v336
    %v1292 = vunpack.c.h.b16 %v336
    %v1293 = vunpack.c.l.b16 %v337
    %v1294 = vunpack.c.h.b16 %v337
    %v1295 = vunpack.c.l.b16 %v338
    %v1296 = vunpack.c.h.b16 %v338
    %v1297 = vunpack.c.l.b16 %v339
    %v1298 = vunpack.c.h.b16 %v339
    %v1299 = vunpack.c.l.b16 %v340
    %v1300 = vunpack.c.h.b16 %v340
    %v1301 = vunpack.c.l.b16 %v341
    %v1302 = vunpack.c.h.b16 %v341
    %v1303 = vunpack.c.l.b16 %v342
    %v1304 = vunpack.c.h.b16 %v342
    %v1305 = vunpack.c.l.b16 %v343
    %v1306 = vunpack.c.h.b16 %v343
    %v1307 = vunpack.c.l.b16 %v344
    %v1308 = vunpack.c.h.b16 %v344
    %v1309 = vunpack.c.l.b16 %v345
    %v1310 = vunpack.c.h.b16 %v345
    %v1311 = vunpack.c.l.b16 %v346
    %v1312 = vunpack.c.h.b16 %v346
    %v1313 = vunpack.c.l.b16 %v347
    %v1314 = vunpack.c.h.b16 %v347
    %v1315 = vunpack.c.l.b16 %v348
    %v1316 = vunpack.c.h.b16 %v348
    %v1317 = vunpack.c.l.b16 %v349
    %v1318 = vunpack.c.h.b16 %v349
    %v1319 = vunpack.c.l.b16 %v350
    %v1320 = vunpack.c.h.b16 %v350
    %v1321 = vunpack.c.l.b16 %v351
    %v1322 = vunpack.c.h.b16 %v351
    %v1323 = vunpack.c.l.b16 %v352
    %v1324 = vunpack.c.h.b16 %v352
    %v1325 = vunpack.c.l.b16 %v353
    %v1326 = vunpack.c.h.b16 %v353
    %v1327 = vunpack.c.l.b16 %v354
    %v1328 = vunpack.c.h.b16 %v354
    %v1329 = vunpack.c.l.b16 %v355
    %v1330 = vunpack.c.h.b16 %v355
    %v1331 = vunpack.c.l.b16 %v356
    %v1332 = vunpack.c.h.b16 %v356
    %v1333 = vunpack.c.l.b16 %v357
    %v1334 = vunpack.c.h.b16 %v357
    %v1335 = vunpack.c.l.b16 %v358
    %v1336 = vunpack.c.h.b16 %v358
    %v1337 = vunpack.c.l.b16 %v359
    %v1338 = vunpack.c.h.b16 %v359
    %v1339 = vunpack.c.l.b16 %v360
    %v1340 = vunpack.c.h.b16 %v360
    %v1341 = vunpack.c.l.b16 %v361
    %v1342 = vunpack.c.h.b16 %v361
    %v1343 = vunpack.c.l.b16 %v362
    %v1344 = vunpack.c.h.b16 %v362
    %v1345 = vunpack.c.l.b16 %v363
    %v1346 = vunpack.c.h.b16 %v363
    %v1347 = vunpack.c.l.b16 %v364
    %v1348 = vunpack.c.h.b16 %v364
    %v1349 = vunpack.c.l.b16 %v365
    %v1350 = vunpack.c.h.b16 %v365
    %v1351 = vunpack.c.l.b16 %v366
    %v1352 = vunpack.c.h.b16 %v366
    %v1353 = vunpack.c.l.b16 %v367
    %v1354 = vunpack.c.h.b16 %v367
    %v1355 = vunpack.c.l.b16 %v368
    %v1356 = vunpack.c.h.b16 %v368
    %v1357 = vunpack.c.l.b16 %v369
    %v1358 = vunpack.c.h.b16 %v369
    %v1359 = vunpack.c.l.b16 %v370
    %v1360 = vunpack.c.h.b16 %v370
    %v1361 = vunpack.c.l.b16 %v371
    %v1362 = vunpack.c.h.b16 %v371
    %v1363 = vunpack.c.l.b16 %v372
    %v1364 = vunpack.c.h.b16 %v372
    %v1365 = vunpack.c.l.b16 %v373
    %v1366 = vunpack.c.h.b16 %v373
    %v1367 = vunpack.c.l.b16 %v374
    %v1368 = vunpack.c.h.b16 %v374
    %v1369 = vunpack.c.l.b16 %v375
    %v1370 = vunpack.c.h.b16 %v375
    %v1371 = vunpack.c.l.b16 %v376
    %v1372 = vunpack.c.h.b16 %v376
    %v1373 = vunpack.c.l.b16 %v377
    %v1374 = vunpack.c.h.b16 %v377
    %v1375 = vunpack.c.l.b16 %v378
    %v1376 = vunpack.c.h.b16 %v378
    %v1377 = vunpack.c.l.b16 %v379
    %v1378 = vunpack.c.h.b16 %v379
    %v1379 = vunpack.c.l.b16 %v380
    %v1380 = vunpack.c.h.b16 %v380
    %v1381 = vunpack.c.l.b16 %v381
    %v1382 = vunpack.c.h.b16 %v381
    %v1383 = vunpack.c.l.b16 %v382
    %v1384 = vunpack.c.h.b16 %v382
    %v1385 = vunpack.c.l.b16 %v383
    %v1386 = vunpack.c.h.b16 %v383
    %v1387 = vunpack.c.l.b16 %v384
    %v1388 = vunpack.c.h.b16 %v384
    %v1389 = vunpack.c.l.b16 %v385
    %v1390 = vunpack.c.h.b16 %v385
    %v1391 = vunpack.c.l.b16 %v386
    %v1392 = vunpack.c.h.b16 %v386
    %v1393 = vunpack.c.l.b16 %v387
    %v1394 = vunpack.c.h.b16 %v387
    %v1395 = vunpack.c.l.b16 %v388
    %v1396 = vunpack.c.h.b16 %v388
    %v1397 = vunpack.c.l.b16 %v389
    %v1398 = vunpack.c.h.b16 %v389
    %v1399 = vunpack.c.l.b16 %v390
    %v1400 = vunpack.c.h.b16 %v390
    %v1401 = vunpack.c.l.b16 %v391
    %v1402 = vunpack.c.h.b16 %v391
    %v1403 = vunpack.c.l.b16 %v392
    %v1404 = vunpack.c.h.b16 %v392
    %v1405 = vunpack.c.l.b16 %v393
    %v1406 = vunpack.c.h.b16 %v393
    %v1407 = vunpack.c.l.b16 %v394
    %v1408 = vunpack.c.h.b16 %v394
    %v1409 = vunpack.c.l.b16 %v395
    %v1410 = vunpack.c.h.b16 %v395
    %v1411 = vunpack.c.l.b16 %v396
    %v1412 = vunpack.c.h.b16 %v396
    %v1413 = vunpack.c.l.b16 %v397
    %v1414 = vunpack.c.h.b16 %v397
    %v1415 = vunpack.c.l.b16 %v398
    %v1416 = vunpack.c.h.b16 %v398
    %v1417 = vunpack.c.l.b16 %v399
    %v1418 = vunpack.c.h.b16 %v399
    %v1419 = vunpack.c.l.b16 %v400
    %v1420 = vunpack.c.h.b16 %v400
    %v1421 = vunpack.c.l.b16 %v401
    %v1422 = vunpack.c.h.b16 %v401
    %v1423 = vunpack.c.l.b16 %v402
    %v1424 = vunpack.c.h.b16 %v402
    %v1425 = vunpack.c.l.b16 %v403
    %v1426 = vunpack.c.h.b16 %v403
    %v1427 = vunpack.c.l.b16 %v404
    %v1428 = vunpack.c.h.b16 %v404
    %v1429 = vunpack.c.l.b16 %v405
    %v1430 = vunpack.c.h.b16 %v405
    %v1431 = vunpack.c.l.b16 %v406
    %v1432 = vunpack.c.h.b16 %v406
    %v1433 = vunpack.c.l.b16 %v407
    %v1434 = vunpack.c.h.b16 %v407
    %v1435 = vunpack.c.l.b16 %v408
    %v1436 = vunpack.c.h.b16 %v408
    %v1437 = vunpack.c.l.b16 %v409
    %v1438 = vunpack.c.h.b16 %v409
    %v1439 = vunpack.c.l.b16 %v410
    %v1440 = vunpack.c.h.b16 %v410
    %v1441 = vunpack.c.l.b16 %v411
    %v1442 = vunpack.c.h.b16 %v411
    %v1443 = vunpack.c.l.b16 %v412
    %v1444 = vunpack.c.h.b16 %v412
    %v1445 = vunpack.c.l.b16 %v413
    %v1446 = vunpack.c.h.b16 %v413
    %v1447 = vunpack.c.l.b16 %v414
    %v1448 = vunpack.c.h.b16 %v414
    %v1449 = vunpack.c.l.b16 %v415
    %v1450 = vunpack.c.h.b16 %v415
    %v1451 = vunpack.c.l.b16 %v416
    %v1452 = vunpack.c.h.b16 %v416
    %v1453 = vunpack.c.l.b16 %v417
    %v1454 = vunpack.c.h.b16 %v417
    %v1455 = vunpack.c.l.b16 %v418
    %v1456 = vunpack.c.h.b16 %v418
    %v1457 = vunpack.c.l.b16 %v419
    %v1458 = vunpack.c.h.b16 %v419
    %v1459 = vunpack.c.l.b16 %v420
    %v1460 = vunpack.c.h.b16 %v420
    %v1461 = vunpack.c.l.b16 %v421
    %v1462 = vunpack.c.h.b16 %v421
    %v1463 = vunpack.c.l.b16 %v422
    %v1464 = vunpack.c.h.b16 %v422
    %v1465 = vunpack.c.l.b16 %v423
    %v1466 = vunpack.c.h.b16 %v423
    %v1467 = vunpack.c.l.b16 %v424
    %v1468 = vunpack.c.h.b16 %v424
    %v1469 = vunpack.c.l.b16 %v425
    %v1470 = vunpack.c.h.b16 %v425
    %v1471 = vunpack.c.l.b16 %v426
    %v1472 = vunpack.c.h.b16 %v426
    %v1473 = vunpack.c.l.b16 %v427
    %v1474 = vunpack.c.h.b16 %v427
    %v1475 = vunpack.c.l.b16 %v428
    %v1476 = vunpack.c.h.b16 %v428
    %v1477 = vunpack.c.l.b16 %v429
    %v1478 = vunpack.c.h.b16 %v429
    %v1479 = vunpack.c.l.b16 %v430
    %v1480 = vunpack.c.h.b16 %v430
    %v1481 = vunpack.c.l.b16 %v431
    %v1482 = vunpack.c.h.b16 %v431
    %v1483 = vunpack.c.l.b16 %v432
    %v1484 = vunpack.c.h.b16 %v432
    %v1485 = vunpack.c.l.b16 %v433
    %v1486 = vunpack.c.h.b16 %v433
    %v1487 = vunpack.c.l.b16 %v434
    %v1488 = vunpack.c.h.b16 %v434
    %v1489 = vunpack.c.l.b16 %v435
    %v1490 = vunpack.c.h.b16 %v435
    %v1491 = vunpack.c.l.b16 %v436
    %v1492 = vunpack.c.h.b16 %v436
    %v1493 = vunpack.c.l.b16 %v437
    %v1494 = vunpack.c.h.b16 %v437
    %v1495 = vunpack.c.l.b16 %v438
    %v1496 = vunpack.c.h.b16 %v438
    %v1497 = vunpack.c.l.b16 %v439
    %v1498 = vunpack.c.h.b16 %v439
    %v1499 = vunpack.c.l.b16 %v440
    %v1500 = vunpack.c.h.b16 %v440
    %v1501 = vunpack.c.l.b16 %v441
    %v1502 = vunpack.c.h.b16 %v441
    %v1503 = vunpack.c.l.b16 %v442
    %v1504 = vunpack.c.h.b16 %v442
    %v1505 = vunpack.c.l.b16 %v443
    %v1506 = vunpack.c.h.b16 %v443
    %v1507 = vunpack.c.l.b16 %v444
    %v1508 = vunpack.c.h.b16 %v444
    %v1509 = vunpack.c.l.b16 %v445
    %v1510 = vunpack.c.h.b16 %v445
    %v1511 = vunpack.c.l.b16 %v446
    %v1512 = vunpack.c.h.b16 %v446
    %v1513 = vunpack.c.l.b16 %v447
    %v1514 = vunpack.c.h.b16 %v447
    %v1515 = vunpack.c.l.b16 %v448
    %v1516 = vunpack.c.h.b16 %v448
    %v1517 = vunpack.c.l.b16 %v449
    %v1518 = vunpack.c.h.b16 %v449
    %v1519 = vunpack.c.l.b16 %v450
    %v1520 = vunpack.c.h.b16 %v450
    %v1521 = vunpack.c.l.b16 %v451
    %v1522 = vunpack.c.h.b16 %v451
    %v1523 = vunpack.c.l.b16 %v452
    %v1524 = vunpack.c.h.b16 %v452
    %v1525 = vunpack.c.l.b16 %v453
    %v1526 = vunpack.c.h.b16 %v453
    %v1527 = vunpack.c.l.b16 %v454
    %v1528 = vunpack.c.h.b16 %v454
    %v1529 = vunpack.c.l.b16 %v455
    %v1530 = vunpack.c.h.b16 %v455
    %v1531 = vunpack.c.l.b16 %v456
    %v1532 = vunpack.c.h.b16 %v456
    %v1533 = vunpack.c.l.b16 %v457
    %v1534 = vunpack.c.h.b16 %v457
    %v1535 = vunpack.c.l.b16 %v458
    %v1536 = vunpack.c.h.b16 %v458
    %v1537 = vunpack.c.l.b16 %v459
    %v1538 = vunpack.c.h.b16 %v459
    %v1539 = vunpack.c.l.b16 %v460
    %v1540 = vunpack.c.h.b16 %v460
    %v1541 = vunpack.c.l.b16 %v461
    %v1542 = vunpack.c.h.b16 %v461
    %v1543 = vunpack.c.l.b16 %v462
    %v1544 = vunpack.c.h.b16 %v462
    %v1545 = vunpack.c.l.b16 %v463
    %v1546 = vunpack.c.h.b16 %v463
    %v1547 = vunpack.c.l.b16 %v464
    %v1548 = vunpack.c.h.b16 %v464
    %v1549 = vunpack.c.l.b16 %v465
    %v1550 = vunpack.c.h.b16 %v465
    %v1551 = vunpack.c.l.b16 %v466
    %v1552 = vunpack.c.h.b16 %v466
    %v1553 = vunpack.c.l.b16 %v467
    %v1554 = vunpack.c.h.b16 %v467
    %v1555 = vunpack.c.l.b16 %v468
    %v1556 = vunpack.c.h.b16 %v468
    %v1557 = vunpack.c.l.b16 %v469
    %v1558 = vunpack.c.h.b16 %v469
    %v1559 = vunpack.c.l.b16 %v470
    %v1560 = vunpack.c.h.b16 %v470
    %v1561 = vunpack.c.l.b16 %v471
    %v1562 = vunpack.c.h.b16 %v471
    %v1563 = vunpack.c.l.b16 %v472
    %v1564 = vunpack.c.h.b16 %v472
    %v1565 = vunpack.c.l.b16 %v473
    %v1566 = vunpack.c.h.b16 %v473
    %v1567 = vunpack.c.l.b16 %v474
    %v1568 = vunpack.c.h.b16 %v474
    %v1569 = vunpack.c.l.b16 %v475
    %v1570 = vunpack.c.h.b16 %v475
    %v1571 = vunpack.c.l.b16 %v476
    %v1572 = vunpack.c.h.b16 %v476
    %v1573 = vunpack.c.l.b16 %v477
    %v1574 = vunpack.c.h.b16 %v477
    %v1575 = vunpack.c.l.b16 %v478
    %v1576 = vunpack.c.h.b16 %v478
    %v1577 = vunpack.c.l.b16 %v479
    %v1578 = vunpack.c.h.b16 %v479
    %v1579 = vunpack.c.l.b16 %v480
    %v1580 = vunpack.c.h.b16 %v480
    %v1581 = vunpack.c.l.b16 %v481
    %v1582 = vunpack.c.h.b16 %v481
    %v1583 = vunpack.c.l.b16 %v482
    %v1584 = vunpack.c.h.b16 %v482
    %v1585 = vunpack.c.l.b16 %v483
    %v1586 = vunpack.c.h.b16 %v483
    %v1587 = vunpack.c.l.b16 %v484
    %v1588 = vunpack.c.h.b16 %v484
    %v1589 = vunpack.c.l.b16 %v485
    %v1590 = vunpack.c.h.b16 %v485
    %v1591 = vunpack.c.l.b16 %v486
    %v1592 = vunpack.c.h.b16 %v486
    %v1593 = vunpack.c.l.b16 %v487
    %v1594 = vunpack.c.h.b16 %v487
    %v1595 = vunpack.c.l.b16 %v488
    %v1596 = vunpack.c.h.b16 %v488
    %v1597 = vunpack.c.l.b16 %v489
    %v1598 = vunpack.c.h.b16 %v489
    %v1599 = vunpack.c.l.b16 %v490
    %v1600 = vunpack.c.h.b16 %v490
    %v1601 = vunpack.c.l.b16 %v491
    %v1602 = vunpack.c.h.b16 %v491
    %v1603 = vunpack.c.l.b16 %v492
    %v1604 = vunpack.c.h.b16 %v492
    %v1605 = vunpack.c.l.b16 %v493
    %v1606 = vunpack.c.h.b16 %v493
    %v1607 = vunpack.c.l.b16 %v494
    %v1608 = vunpack.c.h.b16 %v494
    %v1609 = vunpack.c.l.b16 %v495
    %v1610 = vunpack.c.h.b16 %v495
    %v1611 = vunpack.c.l.b16 %v496
    %v1612 = vunpack.c.h.b16 %v496
    %v1613 = vunpack.c.l.b16 %v497
    %v1614 = vunpack.c.h.b16 %v497
    %v1615 = vunpack.c.l.b16 %v498
    %v1616 = vunpack.c.h.b16 %v498
    %v1617 = vunpack.c.l.b16 %v499
    %v1618 = vunpack.c.h.b16 %v499
    %v1619 = vunpack.c.l.b16 %v500
    %v1620 = vunpack.c.h.b16 %v500
    %v1621 = vunpack.c.l.b16 %v501
    %v1622 = vunpack.c.h.b16 %v501
    %v1623 = vunpack.c.l.b16 %v502
    %v1624 = vunpack.c.h.b16 %v502
    %v1625 = vunpack.c.l.b16 %v503
    %v1626 = vunpack.c.h.b16 %v503
    %v1627 = vunpack.c.l.b16 %v504
    %v1628 = vunpack.c.h.b16 %v504
    %v1629 = vunpack.c.l.b16 %v505
    %v1630 = vunpack.c.h.b16 %v505
    %v1631 = vunpack.c.l.b16 %v506
    %v1632 = vunpack.c.h.b16 %v506
    %v1633 = vunpack.c.l.b16 %v507
    %v1634 = vunpack.c.h.b16 %v507
    %v1635 = vunpack.c.l.b16 %v508
    %v1636 = vunpack.c.h.b16 %v508
    %v1637 = vunpack.c.l.b16 %v509
    %v1638 = vunpack.c.h.b16 %v509
    %v1639 = vunpack.c.l.b16 %v510
    %v1640 = vunpack.c.h.b16 %v510
    %v1641 = vunpack.c.l.b16 %v511
    %v1642 = vunpack.c.h.b16 %v511
    %v1643 = vunpack.c.l.b16 %v512
    %v1644 = vunpack.c.h.b16 %v512
    %v1645 = vunpack.c.l.b16 %v513
    %v1646 = vunpack.c.h.b16 %v513
    %v1647 = vunpack.c.l.b16 %v514
    %v1648 = vunpack.c.h.b16 %v514
    %v1649 = vunpack.c.l.b16 %v515
    %v1650 = vunpack.c.h.b16 %v515
    %v1651 = vunpack.c.l.b16 %v516
    %v1652 = vunpack.c.h.b16 %v516
    %v1653 = vunpack.c.l.b16 %v517
    %v1654 = vunpack.c.h.b16 %v517
    %v1655 = vunpack.c.l.b16 %v518
    %v1656 = vunpack.c.h.b16 %v518
    %v1657 = vunpack.c.l.b16 %v519
    %v1658 = vunpack.c.h.b16 %v519
    %v1659 = vunpack.c.l.b16 %v520
    %v1660 = vunpack.c.h.b16 %v520
    %v1661 = vunpack.c.l.b16 %v521
    %v1662 = vunpack.c.h.b16 %v521
    %v1663 = vunpack.c.l.b16 %v522
    %v1664 = vunpack.c.h.b16 %v522
    %v1665 = vunpack.c.l.b16 %v523
    %v1666 = vunpack.c.h.b16 %v523
    %v1667 = vunpack.c.l.b16 %v524
    %v1668 = vunpack.c.h.b16 %v524
    %v1669 = vunpack.c.l.b16 %v525
    %v1670 = vunpack.c.h.b16 %v525
    %v1671 = vunpack.c.l.b16 %v526
    %v1672 = vunpack.c.h.b16 %v526
    %v1673 = vunpack.c.l.b16 %v527
    %v1674 = vunpack.c.h.b16 %v527
    %v1675 = vunpack.c.l.b16 %v528
    %v1676 = vunpack.c.h.b16 %v528
    %v1677 = vunpack.c.l.b16 %v529
    %v1678 = vunpack.c.h.b16 %v529
    %v1679 = vunpack.c.l.b16 %v530
    %v1680 = vunpack.c.h.b16 %v530
    %v1681 = vunpack.c.l.b16 %v531
    %v1682 = vunpack.c.h.b16 %v531
    %v1683 = vunpack.c.l.b16 %v532
    %v1684 = vunpack.c.h.b16 %v532
    %v1685 = vunpack.c.l.b16 %v533
    %v1686 = vunpack.c.h.b16 %v533
    %v1687 = vunpack.c.l.b16 %v534
    %v1688 = vunpack.c.h.b16 %v534
    %v1689 = vunpack.c.l.b16 %v535
    %v1690 = vunpack.c.h.b16 %v535
    %v1691 = vunpack.c.l.b16 %v536
    %v1692 = vunpack.c.h.b16 %v536
    %v1693 = vunpack.c.l.b16 %v537
    %v1694 = vunpack.c.h.b16 %v537
    %v1695 = vunpack.c.l.b16 %v538
    %v1696 = vunpack.c.h.b16 %v538
    %v1697 = vunpack.c.l.b16 %v539
    %v1698 = vunpack.c.h.b16 %v539
    %v1699 = vunpack.c.l.b16 %v540
    %v1700 = vunpack.c.h.b16 %v540
    %v1701 = vunpack.c.l.b16 %v541
    %v1702 = vunpack.c.h.b16 %v541
    %v1703 = vunpack.c.l.b16 %v542
    %v1704 = vunpack.c.h.b16 %v542
    %v1705 = vunpack.c.l.b16 %v543
    %v1706 = vunpack.c.h.b16 %v543
    %v1707 = vunpack.c.l.b16 %v544
    %v1708 = vunpack.c.h.b16 %v544
    %v1709 = vunpack.c.l.b16 %v545
    %v1710 = vunpack.c.h.b16 %v545
    %v1711 = vunpack.c.l.b16 %v546
    %v1712 = vunpack.c.h.b16 %v546
    %v1713 = vunpack.c.l.b16 %v547
    %v1714 = vunpack.c.h.b16 %v547
    %v1715 = vunpack.c.l.b16 %v548
    %v1716 = vunpack.c.h.b16 %v548
    %v1717 = vunpack.c.l.b16 %v549
    %v1718 = vunpack.c.h.b16 %v549
    %v1719 = vunpack.c.l.b16 %v550
    %v1720 = vunpack.c.h.b16 %v550
    %v1721 = vunpack.c.l.b16 %v551
    %v1722 = vunpack.c.h.b16 %v551
    %v1723 = vunpack.c.l.b16 %v552
    %v1724 = vunpack.c.h.b16 %v552
    %v1725 = vunpack.c.l.b16 %v553
    %v1726 = vunpack.c.h.b16 %v553
    %v1727 = vunpack.c.l.b16 %v554
    %v1728 = vunpack.c.h.b16 %v554
    %v1729 = vunpack.c.l.b16 %v555
    %v1730 = vunpack.c.h.b16 %v555
    %v1731 = vunpack.c.l.b16 %v556
    %v1732 = vunpack.c.h.b16 %v556
    %v1733 = vunpack.c.l.b16 %v557
    %v1734 = vunpack.c.h.b16 %v557
    %v1735 = vunpack.c.l.b16 %v558
    %v1736 = vunpack.c.h.b16 %v558
    %v1737 = vunpack.c.l.b16 %v559
    %v1738 = vunpack.c.h.b16 %v559
    %v1739 = vunpack.c.l.b16 %v560
    %v1740 = vunpack.c.h.b16 %v560
    %v1741 = vunpack.c.l.b16 %v561
    %v1742 = vunpack.c.h.b16 %v561
    %v1743 = vunpack.c.l.b16 %v562
    %v1744 = vunpack.c.h.b16 %v562
    %v1745 = vunpack.c.l.b16 %v563
    %v1746 = vunpack.c.h.b16 %v563
    %v1747 = vunpack.c.l.b16 %v564
    %v1748 = vunpack.c.h.b16 %v564
    %v1749 = vunpack.c.l.b16 %v565
    %v1750 = vunpack.c.h.b16 %v565
    %v1751 = vunpack.c.l.b16 %v566
    %v1752 = vunpack.c.h.b16 %v566
    %v1753 = vunpack.c.l.b16 %v567
    %v1754 = vunpack.c.h.b16 %v567
    %v1755 = vunpack.c.l.b16 %v568
    %v1756 = vunpack.c.h.b16 %v568
    %v1757 = vunpack.c.l.b16 %v569
    %v1758 = vunpack.c.h.b16 %v569
    %v1759 = vunpack.c.l.b16 %v570
    %v1760 = vunpack.c.h.b16 %v570
    %v1761 = vunpack.c.l.b16 %v571
    %v1762 = vunpack.c.h.b16 %v571
    %v1763 = vunpack.c.l.b16 %v572
    %v1764 = vunpack.c.h.b16 %v572
    %v1765 = vunpack.c.l.b16 %v573
    %v1766 = vunpack.c.h.b16 %v573
    %v1767 = vunpack.c.l.b16 %v574
    %v1768 = vunpack.c.h.b16 %v574
    %v1769 = vunpack.c.l.b16 %v575
    %v1770 = vunpack.c.h.b16 %v575
    %v1771 = vunpack.c.l.b16 %v576
    %v1772 = vunpack.c.h.b16 %v576
    %v1773 = vunpack.c.l.b16 %v577
    %v1774 = vunpack.c.h.b16 %v577
    %v1775 = vunpack.c.l.b16 %v578
    %v1776 = vunpack.c.h.b16 %v578
    %v1777 = vunpack.c.l.b16 %v579
    %v1778 = vunpack.c.h.b16 %v579
    %v1779 = vunpack.c.l.b16 %v580
    %v1780 = vunpack.c.h.b16 %v580
    %v1781 = vunpack.c.l.b16 %v581
    %v1782 = vunpack.c.h.b16 %v581
    %v1783 = vunpack.c.l.b16 %v582
    %v1784 = vunpack.c.h.b16 %v582
    %v1785 = vunpack.c.l.b16 %v583
    %v1786 = vunpack.c.h.b16 %v583
    %v1787 = vunpack.c.l.b16 %v584
    %v1788 = vunpack.c.h.b16 %v584
    %v1789 = vunpack.c.l.b16 %v585
    %v1790 = vunpack.c.h.b16 %v585
    %v1791 = vunpack.c.l.b16 %v586
    %v1792 = vunpack.c.h.b16 %v586
    %v1793 = vunpack.c.l.b16 %v587
    %v1794 = vunpack.c.h.b16 %v587
    %v1795 = vunpack.c.l.b16 %v588
    %v1796 = vunpack.c.h.b16 %v588
    %v1797 = vunpack.c.l.b16 %v589
    %v1798 = vunpack.c.h.b16 %v589
    %v1799 = vunpack.c.l.b16 %v590
    %v1800 = vunpack.c.h.b16 %v590
    %v1801 = vunpack.c.l.b16 %v591
    %v1802 = vunpack.c.h.b16 %v591
    %v1803 = vunpack.c.l.b16 %v592
    %v1804 = vunpack.c.h.b16 %v592
    %v1805 = vunpack.c.l.b16 %v593
    %v1806 = vunpack.c.h.b16 %v593
    %v1807 = vunpack.c.l.b16 %v594
    %v1808 = vunpack.c.h.b16 %v594
    %v1809 = vunpack.c.l.b16 %v595
    %v1810 = vunpack.c.h.b16 %v595
    %v1811 = vunpack.c.l.b16 %v596
    %v1812 = vunpack.c.h.b16 %v596
    %v1813 = vunpack.c.l.b16 %v597
    %v1814 = vunpack.c.h.b16 %v597
    %v1815 = vunpack.c.l.b16 %v598
    %v1816 = vunpack.c.h.b16 %v598
    %v1817 = vunpack.c.l.b16 %v599
    %v1818 = vunpack.c.h.b16 %v599
    %v1819 = vunpack.c.l.b16 %v600
    %v1820 = vunpack.c.h.b16 %v600
    %v1821 = vunpack.c.l.b16 %v601
    %v1822 = vunpack.c.h.b16 %v601
    %v1823 = vunpack.c.l.b16 %v602
    %v1824 = vunpack.c.h.b16 %v602
    %v1825 = vunpack.c.l.b16 %v603
    %v1826 = vunpack.c.h.b16 %v603
    %v1827 = vunpack.c.l.b16 %v604
    %v1828 = vunpack.c.h.b16 %v604
    %v1829 = vunpack.c.l.b16 %v605
    %v1830 = vunpack.c.h.b16 %v605
    %v1831 = vunpack.c.l.b16 %v606
    %v1832 = vunpack.c.h.b16 %v606
    %v1833 = vunpack.c.l.b16 %v607
    %v1834 = vunpack.c.h.b16 %v607
    %v1835 = vunpack.c.l.b16 %v608
    %v1836 = vunpack.c.h.b16 %v608
    %v1837 = vunpack.c.l.b16 %v609
    %v1838 = vunpack.c.h.b16 %v609
    %v1839 = vunpack.c.l.b16 %v610
    %v1840 = vunpack.c.h.b16 %v610
    %v1841 = vunpack.c.l.b16 %v611
    %v1842 = vunpack.c.h.b16 %v611
    %v1843 = vunpack.c.l.b16 %v612
    %v1844 = vunpack.c.h.b16 %v612
    %v1845 = vunpack.c.l.b16 %v613
    %v1846 = vunpack.c.h.b16 %v613
    %v1847 = vunpack.c.l.b16 %v614
    %v1848 = vunpack.c.h.b16 %v614
    %v1849 = vunpack.c.l.b16 %v615
    %v1850 = vunpack.c.h.b16 %v615
    %v1851 = vunpack.c.l.b16 %v616
    %v1852 = vunpack.c.h.b16 %v616
    %v1853 = vunpack.c.l.b16 %v617
    %v1854 = vunpack.c.h.b16 %v617
    %v1855 = vunpack.c.l.b16 %v618
    %v1856 = vunpack.c.h.b16 %v618
    %v1857 = vunpack.c.l.b16 %v619
    %v1858 = vunpack.c.h.b16 %v619
    %v1859 = vunpack.c.l.b16 %v620
    %v1860 = vunpack.c.h.b16 %v620
    %v1861 = vunpack.c.l.b16 %v621
    %v1862 = vunpack.c.h.b16 %v621
    %v1863 = vunpack.c.l.b16 %v622
    %v1864 = vunpack.c.h.b16 %v622
    %v1865 = vunpack.c.l.b16 %v623
    %v1866 = vunpack.c.h.b16 %v623
    %v1867 = vunpack.c.l.b16 %v624
    %v1868 = vunpack.c.h.b16 %v624
    %v1869 = vunpack.c.l.b16 %v625
    %v1870 = vunpack.c.h.b16 %v625
    %v1871 = vunpack.c.l.b16 %v626
    %v1872 = vunpack.c.h.b16 %v626
    %v1873 = vunpack.c.l.b16 %v627
    %v1874 = vunpack.c.h.b16 %v627
    %v1875 = vunpack.c.l.b16 %v628
    %v1876 = vunpack.c.h.b16 %v628
    %v1877 = vunpack.c.l.b16 %v629
    %v1878 = vunpack.c.h.b16 %v629
    %v1879 = vunpack.c.l.b16 %v630
    %v1880 = vunpack.c.h.b16 %v630
    %v1881 = vunpack.c.l.b16 %v631
    %v1882 = vunpack.c.h.b16 %v631
    %v1883 = vunpack.c.l.b16 %v632
    %v1884 = vunpack.c.h.b16 %v632
    %v1885 = vunpack.c.l.b16 %v633
    %v1886 = vunpack.c.h.b16 %v633
    %v1887 = vunpack.c.l.b16 %v634
    %v1888 = vunpack.c.h.b16 %v634
    %v1889 = vunpack.c.l.b16 %v635
    %v1890 = vunpack.c.h.b16 %v635
    %v1891 = vunpack.c.l.b16 %v636
    %v1892 = vunpack.c.h.b16 %v636
    %v1893 = vunpack.c.l.b16 %v637
    %v1894 = vunpack.c.h.b16 %v637
    %v1895 = vunpack.c.l.b16 %v638
    %v1896 = vunpack.c.h.b16 %v638
    %v1897 = vunpack.c.l.b16 %v639
    %v1898 = vunpack.c.h.b16 %v639
    %v1899 = vunpack.c.l.b16 %v640
    %v1900 = vunpack.c.h.b16 %v640
    %v1901 = vunpack.c.l.b16 %v641
    %v1902 = vunpack.c.h.b16 %v641
    %v1903 = vunpack.c.l.b16 %v642
    %v1904 = vunpack.c.h.b16 %v642
    %v1905 = vunpack.c.l.b16 %v643
    %v1906 = vunpack.c.h.b16 %v643
    %v1907 = vunpack.c.l.b16 %v644
    %v1908 = vunpack.c.h.b16 %v644
    %v1909 = vunpack.c.l.b16 %v645
    %v1910 = vunpack.c.h.b16 %v645
    %v1911 = vunpack.c.l.b16 %v646
    %v1912 = vunpack.c.h.b16 %v646
    %v1913 = vunpack.c.l.b16 %v647
    %v1914 = vunpack.c.h.b16 %v647
    %v1915 = vunpack.c.l.b16 %v648
    %v1916 = vunpack.c.h.b16 %v648
    %v1917 = vunpack.c.l.b16 %v649
    %v1918 = vunpack.c.h.b16 %v649
    %v1919 = vunpack.c.l.b16 %v650
    %v1920 = vunpack.c.h.b16 %v650
    %v1921 = vunpack.c.l.b16 %v651
    %v1922 = vunpack.c.h.b16 %v651
    %v1923 = vunpack.c.l.b16 %v652
    %v1924 = vunpack.c.h.b16 %v652
    %v1925 = vunpack.c.l.b16 %v653
    %v1926 = vunpack.c.h.b16 %v653
    %v1927 = vunpack.c.l.b16 %v654
    %v1928 = vunpack.c.h.b16 %v654
    %v1929 = vunpack.c.l.b16 %v655
    %v1930 = vunpack.c.h.b16 %v655
    %v1931 = vunpack.c.l.b16 %v656
    %v1932 = vunpack.c.h.b16 %v656
    %v1933 = vunpack.c.l.b16 %v657
    %v1934 = vunpack.c.h.b16 %v657
    %v1935 = vunpack.c.l.b16 %v658
    %v1936 = vunpack.c.h.b16 %v658
    %v1937 = vunpack.c.l.b16 %v659
    %v1938 = vunpack.c.h.b16 %v659
    %v1939 = vunpack.c.l.b16 %v660
    %v1940 = vunpack.c.h.b16 %v660
    %v1941 = vunpack.c.l.b16 %v661
    %v1942 = vunpack.c.h.b16 %v661
    %v1943 = vunpack.c.l.b16 %v662
    %v1944 = vunpack.c.h.b16 %v662
    %v1945 = vunpack.c.l.b16 %v663
    %v1946 = vunpack.c.h.b16 %v663
    %v1947 = vunpack.c.l.b16 %v664
    %v1948 = vunpack.c.h.b16 %v664
    %v1949 = vunpack.c.l.b16 %v665
    %v1950 = vunpack.c.h.b16 %v665
    %v1951 = vunpack.c.l.b16 %v666
    %v1952 = vunpack.c.h.b16 %v666
    %v1953 = vunpack.c.l.b16 %v667
    %v1954 = vunpack.c.h.b16 %v667
    %v1955 = vunpack.c.l.b16 %v668
    %v1956 = vunpack.c.h.b16 %v668
    %v1957 = vunpack.c.l.b16 %v669
    %v1958 = vunpack.c.h.b16 %v669
    %v1959 = vunpack.c.l.b16 %v670
    %v1960 = vunpack.c.h.b16 %v670
    %v1961 = vunpack.c.l.b16 %v671
    %v1962 = vunpack.c.h.b16 %v671
    %v1963 = vunpack.c.l.b16 %v672
    %v1964 = vunpack.c.h.b16 %v672
    %v1965 = vunpack.c.l.b16 %v673
    %v1966 = vunpack.c.h.b16 %v673
    %v1967 = vpack.c.b16 %v1115, %v1113
    %v1968 = vpack.c.b16 %v1116, %v1114
    %v1969 = vpack.c.b16 %v1119, %v1117
    %v1970 = vpack.c.b16 %v1120, %v1118
    %v1971 = vpack.c.b16 %v1123, %v1121
    %v1972 = vpack.c.b16 %v1124, %v1122
    %v1973 = vpack.c.b16 %v1127, %v1125
    %v1974 = vpack.c.b16 %v1128, %v1126
    %v1975 = vpack.c.b16 %v1131, %v1129
    %v1976 = vpack.c.b16 %v1132, %v1130
    %v1977 = vpack.c.b16 %v1135, %v1133
    %v1978 = vpack.c.b16 %v1136, %v1134
    %v1979 = vpack.c.b16 %v1139, %v1137
    %v1980 = vpack.c.b16 %v1140, %v1138
    %v1981 = vpack.c.b16 %v1143, %v1141
    %v1982 = vpack.c.b16 %v1144, %v1142
    %v1983 = vpack.c.b16 %v1147, %v1145
    %v1984 = vpack.c.b16 %v1148, %v1146
    %v1985 = vpack.c.b16 %v1151, %v1149
    %v1986 = vpack.c.b16 %v1152, %v1150
    %v1987 = vpack.c.b16 %v1155, %v1153
    %v1988 = vpack.c.b16 %v1156, %v1154
    %v1989 = vpack.c.b16 %v1159, %v1157
    %v1990 = vpack.c.b16 %v1160, %v1158
    %v1991 = vpack.c.b16 %v1163, %v1161
    %v1992 = vpack.c.b16 %v1164, %v1162
    %v1993 = vpack.c.b16 %v1167, %v1165
    %v1994 = vpack.c.b16 %v1168, %v1166
    %v1995 = vpack.c.b16 %v1171, %v1169
    %v1996 = vpack.c.b16 %v1172, %v1170
    %v1997 = vpack.c.b16 %v1175, %v1173
    %v1998 = vpack.c.b16 %v1176, %v1174
    %v1999 = vpack.c.b16 %v1179, %v1177
    %v2000 = vpack.c.b16 %v1180, %v1178
    %v2001 = vpack.c.b16 %v1183, %v1181
    %v2002 = vpack.c.b16 %v1184, %v1182
    %v2003 = vpack.c.b16 %v1187, %v1185
    %v2004 = vpack.c.b16 %v1188, %v1186
    %v2005 = vpack.c.b16 %v1191, %v1189
    %v2006 = vpack.c.b16 %v1192, %v1190
    %v2007 = vpack.c.b16 %v1195, %v1193
    %v2008 = vpack.c.b16 %v1196, %v1194
    %v2009 = vpack.c.b16 %v1199, %v1197
    %v2010 = vpack.c.b16 %v1200, %v1198
    %v2011 = vpack.c.b16 %v1203, %v1201
    %v2012 = vpack.c.b16 %v1204, %v1202
    %v2013 = vpack.c.b16 %v1207, %v1205
    %v2014 = vpack.c.b16 %v1208, %v1206
    %v2015 = vpack.c.b16 %v1211, %v1209
    %v2016 = vpack.c.b16 %v1212, %v1210
    %v2017 = vpack.c.b16 %v1215, %v1213
    %v2018 = vpack.c.b16 %v1216, %v1214
    %v2019 = vpack.c.b16 %v1219, %v1217
    %v2020 = vpack.c.b16 %v1220, %v1218
    %v2021 = vpack.c.b16 %v1223, %v1221
    %v2022 = vpack.c.b16 %v1224, %v1222
    %v2023 = vpack.c.b16 %v1227, %v1225
    %v2024 = vpack.c.b16 %v1228, %v1226
    %v2025 = vpack.c.b16 %v1231, %v1229
    %v2026 = vpack.c.b16 %v1232, %v1230
    %v2027 = vpack.c.b16 %v1235, %v1233
    %v2028 = vpack.c.b16 %v1236, %v1234
    %v2029 = vpack.c.b16 %v1239, %v1237
    %v2030 = vpack.c.b16 %v1240, %v1238
    %v2031 = vpack.c.b16 %v1243, %v1241
    %v2032 = vpack.c.b16 %v1244, %v1242
    %v2033 = vpack.c.b16 %v1247, %v1245
    %v2034 = vpack.c.b16 %v1248, %v1246
    %v2035 = vpack.c.b16 %v1251, %v1249
    %v2036 = vpack.c.b16 %v1252, %v1250
    %v2037 = vpack.c.b16 %v1255, %v1253
    %v2038 = vpack.c.b16 %v1256, %v1254
    %v2039 = vpack.c.b16 %v1259, %v1257
    %v2040 = vpack.c.b16 %v1260, %v1258
    %v2041 = vpack.c.b16 %v1263, %v1261
    %v2042 = vpack.c.b16 %v1264, %v1262
    %v2043 = vpack.c.b16 %v1267, %v1265
    %v2044 = vpack.c.b16 %v1268, %v1266
    %v2045 = vpack.c.b16 %v1271, %v1269
    %v2046 = vpack.c.b16 %v1272, %v1270
    %v2047 = vpack.c.b16 %v1275, %v1273
    %v2048 = vpack.c.b16 %v1276, %v1274
    %v2049 = vpack.c.b16 %v1279, %v1277
    %v2050 = vpack.c.b16 %v1280, %v1278
    %v2051 = vpack.c.b16 %v1283, %v1281
    %v2052 = vpack.c.b16 %v1284, %v1282
    %v2053 = vpack.c.b16 %v1287, %v1285
    %v2054 = vpack.c.b16 %v1288, %v1286
    %v2055 = vpack.c.b16 %v1291, %v1289
    %v2056 = vpack.c.b16 %v1292, %v1290
    %v2057 = vpack.c.b16 %v1295, %v1293
    %v2058 = vpack.c.b16 %v1296, %v1294
    %v2059 = vpack.c.b16 %v1299, %v1297
    %v2060 = vpack.c.b16 %v1300, %v1298
    %v2061 = vpack.c.b16 %v1303, %v1301
    %v2062 = vpack.c.b16 %v1304, %v1302
    %v2063 = vpack.c.b16 %v1307, %v1305
    %v2064 = vpack.c.b16 %v1308, %v1306
    %v2065 = vpack.c.b16 %v1311, %v1309
    %v2066 = vpack.c.b16 %v1312, %v1310
    %v2067 = vpack.c.b16 %v1315, %v1313
    %v2068 = vpack.c.b16 %v1316, %v1314
    %v2069 = vpack.c.b16 %v1319, %v1317
    %v2070 = vpack.c.b16 %v1320, %v1318
    %v2071 = vpack.c.b16 %v1323, %v1321
    %v2072 = vpack.c.b16 %v1324, %v1322
    %v2073 = vpack.c.b16 %v1327, %v1325
    %v2074 = vpack.c.b16 %v1328, %v1326
    %v2075 = vpack.c.b16 %v1331, %v1329
    %v2076 = vpack.c.b16 %v1332, %v1330
    %v2077 = vpack.c.b16 %v1335, %v1333
    %v2078 = vpack.c.b16 %v1336, %v1334
    %v2079 = vpack.c.b16 %v1339, %v1337
    %v2080 = vpack.c.b16 %v1340, %v1338
    %v2081 = vpack.c.b16 %v1343, %v1341
    %v2082 = vpack.c.b16 %v1344, %v1342
    %v2083 = vpack.c.b16 %v1347, %v1345
    %v2084 = vpack.c.b16 %v1348, %v1346
    %v2085 = vpack.c.b16 %v1351, %v1349
    %v2086 = vpack.c.b16 %v1352, %v1350
    %v2087 = vpack.c.b16 %v1355, %v1353
    %v2088 = vpack.c.b16 %v1356, %v1354
    %v2089 = vpack.c.b16 %v1359, %v1357
    %v2090 = vpack.c.b16 %v1360, %v1358
    %v2091 = vpack.c.b16 %v1363, %v1361
    %v2092 = vpack.c.b16 %v1364, %v1362
    %v2093 = vpack.c.b16 %v1367, %v1365
    %v2094 = vpack.c.b16 %v1368, %v1366
    %v2095 = vpack.c.b16 %v1371, %v1369
    %v2096 = vpack.c.b16 %v1372, %v1370
    %v2097 = vpack.c.b16 %v1375, %v1373
    %v2098 = vpack.c.b16 %v1376, %v1374
    %v2099 = vpack.c.b16 %v1379, %v1377
    %v2100 = vpack.c.b16 %v1380, %v1378
    %v2101 = vpack.c.b16 %v1383, %v1381
    %v2102 = vpack.c.b16 %v1384, %v1382
    %v2103 = vpack.c.b16 %v1387, %v1385
    %v2104 = vpack.c.b16 %v1388, %v1386
    %v2105 = vpack.c.b16 %v1391, %v1389
    %v2106 = vpack.c.b16 %v1392, %v1390
    %v2107 = vpack.c.b16 %v1395, %v1393
    %v2108 = vpack.c.b16 %v1396, %v1394
    %v2109 = vpack.c.b16 %v1399, %v1397
    %v2110 = vpack.c.b16 %v1400, %v1398
    %v2111 = vpack.c.b16 %v1403, %v1401
    %v2112 = vpack.c.b16 %v1404, %v1402
    %v2113 = vpack.c.b16 %v1407, %v1405
    %v2114 = vpack.c.b16 %v1408, %v1406
    %v2115 = vpack.c.b16 %v1411, %v1409
    %v2116 = vpack.c.b16 %v1412, %v1410
    %v2117 = vpack.c.b16 %v1415, %v1413
    %v2118 = vpack.c.b16 %v1416, %v1414
    %v2119 = vpack.c.b16 %v1419, %v1417
    %v2120 = vpack.c.b16 %v1420, %v1418
    %v2121 = vpack.c.b16 %v1423, %v1421
    %v2122 = vpack.c.b16 %v1424, %v1422
    %v2123 = vpack.c.b16 %v1427, %v1425
    %v2124 = vpack.c.b16 %v1428, %v1426
    %v2125 = vpack.c.b16 %v1431, %v1429
    %v2126 = vpack.c.b16 %v1432, %v1430
    %v2127 = vpack.c.b16 %v1435, %v1433
    %v2128 = vpack.c.b16 %v1436, %v1434
    %v2129 = vpack.c.b16 %v1439, %v1437
    %v2130 = vpack.c.b16 %v1440, %v1438
    %v2131 = vpack.c.b16 %v1443, %v1441
    %v2132 = vpack.c.b16 %v1444, %v1442
    %v2133 = vpack.c.b16 %v1447, %v1445
    %v2134 = vpack.c.b16 %v1448, %v1446
    %v2135 = vpack.c.b16 %v1451, %v1449
    %v2136 = vpack.c.b16 %v1452, %v1450
    %v2137 = vpack.c.b16 %v1455, %v1453
    %v2138 = vpack.c.b16 %v1456, %v1454
    %v2139 = vpack.c.b16 %v1459, %v1457
    %v2140 = vpack.c.b16 %v1460, %v1458
    %v2141 = vpack.c.b16 %v1463, %v1461
    %v2142 = vpack.c.b16 %v1464, %v1462
    %v2143 = vpack.c.b16 %v1467, %v1465
    %v2144 = vpack.c.b16 %v1468, %v1466
    %v2145 = vpack.c.b16 %v1471, %v1469
    %v2146 = vpack.c.b16 %v1472, %v1470
    %v2147 = vpack.c.b16 %v1475, %v1473
    %v2148 = vpack.c.b16 %v1476, %v1474
    %v2149 = vpack.c.b16 %v1479, %v1477
    %v2150 = vpack.c.b16 %v1480, %v1478
    %v2151 = vpack.c.b16 %v1483, %v1481
    %v2152 = vpack.c.b16 %v1484, %v1482
    %v2153 = vpack.c.b16 %v1487, %v1485
    %v2154 = vpack.c.b16 %v1488, %v1486
    %v2155 = vpack.c.b16 %v1491, %v1489
    %v2156 = vpack.c.b16 %v1492, %v1490
    %v2157 = vpack.c.b16 %v1495, %v1493
    %v2158 = vpack.c.b16 %v1496, %v1494
    %v2159 = vpack.c.b16 %v1499, %v1497
    %v2160 = vpack.c.b16 %v1500, %v1498
    %v2161 = vpack.c.b16 %v1503, %v1501
    %v2162 = vpack.c.b16 %v1504, %v1502
    %v2163 = vpack.c.b16 %v1507, %v1505
    %v2164 = vpack.c.b16 %v1508, %v1506
    %v2165 = vpack.c.b16 %v1511, %v1509
    %v2166 = vpack.c.b16 %v1512, %v1510
    %v2167 = vpack.c.b16 %v1515, %v1513
    %v2168 = vpack.c.b16 %v1516, %v1514
    %v2169 = vpack.c.b16 %v1519, %v1517
    %v2170 = vpack.c.b16 %v1520, %v1518
    %v2171 = vpack.c.b16 %v1523, %v1521
    %v2172 = vpack.c.b16 %v1524, %v1522
    %v2173 = vpack.c.b16 %v1527, %v1525
    %v2174 = vpack.c.b16 %v1528, %v1526
    %v2175 = vpack.c.b16 %v1531, %v1529
    %v2176 = vpack.c.b16 %v1532, %v1530
    %v2177 = vpack.c.b16 %v1535, %v1533
    %v2178 = vpack.c.b16 %v1536, %v1534
    %v2179 = vpack.c.b16 %v1539, %v1537
    %v2180 = vpack.c.b16 %v1540, %v1538
    %v2181 = vpack.c.b16 %v1543, %v1541
    %v2182 = vpack.c.b16 %v1544, %v1542
    %v2183 = vpack.c.b16 %v1547, %v1545
    %v2184 = vpack.c.b16 %v1548, %v1546
    %v2185 = vpack.c.b16 %v1551, %v1549
    %v2186 = vpack.c.b16 %v1552, %v1550
    %v2187 = vpack.c.b16 %v1555, %v1553
    %v2188 = vpack.c.b16 %v1556, %v1554
    %v2189 = vpack.c.b16 %v1559, %v1557
    %v2190 = vpack.c.b16 %v1560, %v1558
    %v2191 = vpack.c.b16 %v1563, %v1561
    %v2192 = vpack.c.b16 %v1564, %v1562
    %v2193 = vpack.c.b16 %v1567, %v1565
    %v2194 = vpack.c.b16 %v1568, %v1566
    %v2195 = vpack.c.b16 %v1571, %v1569
    %v2196 = vpack.c.b16 %v1572, %v1570
    %v2197 = vpack.c.b16 %v1575, %v1573
    %v2198 = vpack.c.b16 %v1576, %v1574
    %v2199 = vpack.c.b16 %v1579, %v1577
    %v2200 = vpack.c.b16 %v1580, %v1578
    %v2201 = vpack.c.b16 %v1583, %v1581
    %v2202 = vpack.c.b16 %v1584, %v1582
    %v2203 = vpack.c.b16 %v1587, %v1585
    %v2204 = vpack.c.b16 %v1588, %v1586
    %v2205 = vpack.c.b16 %v1591, %v1589
    %v2206 = vpack.c.b16 %v1592, %v1590
    %v2207 = vpack.c.b16 %v1595, %v1593
    %v2208 = vpack.c.b16 %v1596, %v1594
    %v2209 = vpack.c.b16 %v1599, %v1597
    %v2210 = vpack.c.b16 %v1600, %v1598
    %v2211 = vpack.c.b16 %v1603, %v1601
    %v2212 = vpack.c.b16 %v1604, %v1602
    %v2213 = vpack.c.b16 %v1607, %v1605
    %v2214 = vpack.c.b16 %v1608, %v1606
    %v2215 = vpack.c.b16 %v1611, %v1609
    %v2216 = vpack.c.b16 %v1612, %v1610
    %v2217 = vpack.c.b16 %v1615, %v1613
    %v2218 = vpack.c.b16 %v1616, %v1614
    %v2219 = vpack.c.b16 %v1619, %v1617
    %v2220 = vpack.c.b16 %v1620, %v1618
    %v2221 = vpack.c.b16 %v1623, %v1621
    %v2222 = vpack.c.b16 %v1624, %v1622
    %v2223 = vpack.c.b16 %v1627, %v1625
    %v2224 = vpack.c.b16 %v1628, %v1626
    %v2225 = vpack.c.b16 %v1631, %v1629
    %v2226 = vpack.c.b16 %v1632, %v1630
    %v2227 = vpack.c.b16 %v1635, %v1633
    %v2228 = vpack.c.b16 %v1636, %v1634
    %v2229 = vpack.c.b16 %v1639, %v1637
    %v2230 = vpack.c.b16 %v1640, %v1638
    %v2231 = vpack.c.b16 %v1643, %v1641
    %v2232 = vpack.c.b16 %v1644, %v1642
    %v2233 = vpack.c.b16 %v1647, %v1645
    %v2234 = vpack.c.b16 %v1648, %v1646
    %v2235 = vpack.c.b16 %v1651, %v1649
    %v2236 = vpack.c.b16 %v1652, %v1650
    %v2237 = vpack.c.b16 %v1655, %v1653
    %v2238 = vpack.c.b16 %v1656, %v1654
    %v2239 = vpack.c.b16 %v1659, %v1657
    %v2240 = vpack.c.b16 %v1660, %v1658
    %v2241 = vpack.c.b16 %v1663, %v1661
    %v2242 = vpack.c.b16 %v1664, %v1662
    %v2243 = vpack.c.b16 %v1667, %v1665
    %v2244 = vpack.c.b16 %v1668, %v1666
    %v2245 = vpack.c.b16 %v1671, %v1669
    %v2246 = vpack.c.b16 %v1672, %v1670
    %v2247 = vpack.c.b16 %v1675, %v1673
    %v2248 = vpack.c.b16 %v1676, %v1674
    %v2249 = vpack.c.b16 %v1679, %v1677
    %v2250 = vpack.c.b16 %v1680, %v1678
    %v2251 = vpack.c.b16 %v1683, %v1681
    %v2252 = vpack.c.b16 %v1684, %v1682
    %v2253 = vpack.c.b16 %v1687, %v1685
    %v2254 = vpack.c.b16 %v1688, %v1686
    %v2255 = vpack.c.b16 %v1691, %v1689
    %v2256 = vpack.c.b16 %v1692, %v1690
    %v2257 = vpack.c.b16 %v1695, %v1693
    %v2258 = vpack.c.b16 %v1696, %v1694
    %v2259 = vpack.c.b16 %v1699, %v1697
    %v2260 = vpack.c.b16 %v1700, %v1698
    %v2261 = vpack.c.b16 %v1703, %v1701
    %v2262 = vpack.c.b16 %v1704, %v1702
    %v2263 = vpack.c.b16 %v1707, %v1705
    %v2264 = vpack.c.b16 %v1708, %v1706
    %v2265 = vpack.c.b16 %v1711, %v1709
    %v2266 = vpack.c.b16 %v1712, %v1710
    %v2267 = vpack.c.b16 %v1715, %v1713
    %v2268 = vpack.c.b16 %v1716, %v1714
    %v2269 = vpack.c.b16 %v1719, %v1717
    %v2270 = vpack.c.b16 %v1720, %v1718
    %v2271 = vpack.c.b16 %v1723, %v1721
    %v2272 = vpack.c.b16 %v1724, %v1722
    %v2273 = vpack.c.b16 %v1727, %v1725
    %v2274 = vpack.c.b16 %v1728, %v1726
    %v2275 = vpack.c.b16 %v1731, %v1729
    %v2276 = vpack.c.b16 %v1732, %v1730
    %v2277 = vpack.c.b16 %v1735, %v1733
    %v2278 = vpack.c.b16 %v1736, %v1734
    %v2279 = vpack.c.b16 %v1739, %v1737
    %v2280 = vpack.c.b16 %v1740, %v1738
    %v2281 = vpack.c.b16 %v1743, %v1741
    %v2282 = vpack.c.b16 %v1744, %v1742
    %v2283 = vpack.c.b16 %v1747, %v1745
    %v2284 = vpack.c.b16 %v1748, %v1746
    %v2285 = vpack.c.b16 %v1751, %v1749
    %v2286 = vpack.c.b16 %v1752, %v1750
    %v2287 = vpack.c.b16 %v1755, %v1753
    %v2288 = vpack.c.b16 %v1756, %v1754
    %v2289 = vpack.c.b16 %v1759, %v1757
    %v2290 = vpack.c.b16 %v1760, %v1758
    %v2291 = vpack.c.b16 %v1763, %v1761
    %v2292 = vpack.c.b16 %v1764, %v1762
    %v2293 = vpack.c.b16 %v1767, %v1765
    %v2294 = vpack.c.b16 %v1768, %v1766
    %v2295 = vpack.c.b16 %v1771, %v1769
    %v2296 = vpack.c.b16 %v1772, %v1770
    %v2297 = vpack.c.b16 %v1775, %v1773
    %v2298 = vpack.c.b16 %v1776, %v1774
    %v2299 = vpack.c.b16 %v1779, %v1777
    %v2300 = vpack.c.b16 %v1780, %v1778
    %v2301 = vpack.c.b16 %v1783, %v1781
    %v2302 = vpack.c.b16 %v1784, %v1782
    %v2303 = vpack.c.b16 %v1787, %v1785
    %v2304 = vpack.c.b16 %v1788, %v1786
    %v2305 = vpack.c.b16 %v1791, %v1789
    %v2306 = vpack.c.b16 %v1792, %v1790
    %v2307 = vpack.c.b16 %v1795, %v1793
    %v2308 = vpack.c.b16 %v1796, %v1794
    %v2309 = vpack.c.b16 %v1799, %v1797
    %v2310 = vpack.c.b16 %v1800, %v1798
    %v2311 = vpack.c.b16 %v1803, %v1801
    %v2312 = vpack.c.b16 %v1804, %v1802
    %v2313 = vpack.c.b16 %v1807, %v1805
    %v2314 = vpack.c.b16 %v1808, %v1806
    %v2315 = vpack.c.b16 %v1811, %v1809
    %v2316 = vpack.c.b16 %v1812, %v1810
    %v2317 = vpack.c.b16 %v1815, %v1813
    %v2318 = vpack.c.b16 %v1816, %v1814
    %v2319 = vpack.c.b16 %v1819, %v1817
    %v2320 = vpack.c.b16 %v1820, %v1818
    %v2321 = vpack.c.b16 %v1823, %v1821
    %v2322 = vpack.c.b16 %v1824, %v1822
    %v2323 = vpack.c.b16 %v1827, %v1825
    %v2324 = vpack.c.b16 %v1828, %v1826
    %v2325 = vpack.c.b16 %v1831, %v1829
    %v2326 = vpack.c.b16 %v1832, %v1830
    %v2327 = vpack.c.b16 %v1835, %v1833
    %v2328 = vpack.c.b16 %v1836, %v1834
    %v2329 = vpack.c.b16 %v1839, %v1837
    %v2330 = vpack.c.b16 %v1840, %v1838
    %v2331 = vpack.c.b16 %v1843, %v1841
    %v2332 = vpack.c.b16 %v1844, %v1842
    %v2333 = vpack.c.b16 %v1847, %v1845
    %v2334 = vpack.c.b16 %v1848, %v1846
    %v2335 = vpack.c.b16 %v1851, %v1849
    %v2336 = vpack.c.b16 %v1852, %v1850
    %v2337 = vpack.c.b16 %v1855, %v1853
    %v2338 = vpack.c.b16 %v1856, %v1854
    %v2339 = vpack.c.b16 %v1859, %v1857
    %v2340 = vpack.c.b16 %v1860, %v1858
    %v2341 = vpack.c.b16 %v1863, %v1861
    %v2342 = vpack.c.b16 %v1864, %v1862
    %v2343 = vpack.c.b16 %v1867, %v1865
    %v2344 = vpack.c.b16 %v1868, %v1866
    %v2345 = vpack.c.b16 %v1871, %v1869
    %v2346 = vpack.c.b16 %v1872, %v1870
    %v2347 = vpack.c.b16 %v1875, %v1873
    %v2348 = vpack.c.b16 %v1876, %v1874
    %v2349 = vpack.c.b16 %v1879, %v1877
    %v2350 = vpack.c.b16 %v1880, %v1878
    %v2351 = vpack.c.b16 %v1883, %v1881
    %v2352 = vpack.c.b16 %v1884, %v1882
    %v2353 = vpack.c.b16 %v1887, %v1885
    %v2354 = vpack.c.b16 %v1888, %v1886
    %v2355 = vpack.c.b16 %v1891, %v1889
    %v2356 = vpack.c.b16 %v1892, %v1890
    %v2357 = vpack.c.b16 %v1895, %v1893
    %v2358 = vpack.c.b16 %v1896, %v1894
    %v2359 = vpack.c.b16 %v1899, %v1897
    %v2360 = vpack.c.b16 %v1900, %v1898
    %v2361 = vpack.c.b16 %v1903, %v1901
    %v2362 = vpack.c.b16 %v1904, %v1902
    %v2363 = vpack.c.b16 %v1907, %v1905
    %v2364 = vpack.c.b16 %v1908, %v1906
    %v2365 = vpack.c.b16 %v1911, %v1909
    %v2366 = vpack.c.b16 %v1912, %v1910
    %v2367 = vpack.c.b16 %v1915, %v1913
    %v2368 = vpack.c.b16 %v1916, %v1914
    %v2369 = vpack.c.b16 %v1919, %v1917
    %v2370 = vpack.c.b16 %v1920, %v1918
    %v2371 = vpack.c.b16 %v1923, %v1921
    %v2372 = vpack.c.b16 %v1924, %v1922
    %v2373 = vpack.c.b16 %v1927, %v1925
    %v2374 = vpack.c.b16 %v1928, %v1926
    %v2375 = vpack.c.b16 %v1931, %v1929
    %v2376 = vpack.c.b16 %v1932, %v1930
    %v2377 = vpack.c.b16 %v1935, %v1933
    %v2378 = vpack.c.b16 %v1936, %v1934
    %v2379 = vpack.c.b16 %v1939, %v1937
    %v2380 = vpack.c.b16 %v1940, %v1938
    %v2381 = vpack.c.b16 %v1943, %v1941
    %v2382 = vpack.c.b16 %v1944, %v1942
    %v2383 = vpack.c.b16 %v1947, %v1945
    %v2384 = vpack.c.b16 %v1948, %v1946
    %v2385 = vpack.c.b16 %v1951, %v1949
    %v2386 = vpack.c.b16 %v1952, %v1950
    %v2387 = vpack.c.b16 %v1955, %v1953
    %v2388 = vpack.c.b16 %v1956, %v1954
    %v2389 = vpack.c.b16 %v1959, %v1957
    %v2390 = vpack.c.b16 %v1960, %v1958
    %v2391 = vpack.c.b16 %v1963, %v1961
    %v2392 = vpack.c.b16 %v1964, %v1962
    %v2393 = vpack.c.b16 %v1965, %v1965
    %v2394 = vpack.c.b16 %v1966, %v1966
    %vm2821 = vcmask 719872
    %v2823 = vsel %vm2821, %v246, 0
    %vm2825 = vcmask 1043456
    %v2827 = vsel %vm2825, %v2393, 0
    %v2830 = vsel %vm2825, %v2394, 0
    %2832 = vmatprep.subr.bf16.mxu0 %v1982
    %2833 = vmatpush1.bf16.msra.mxu0 %v1981
    %2834 = vmatprep.subr.bf16.mxu0 %v1980
    %2835 = vmatpush1.bf16.msra.mxu0 %v1979
    %2836 = vmatprep.subr.bf16.mxu0 %v1978
    %2837 = vmatpush1.bf16.msra.mxu0 %v1977
    %2838 = vmatprep.subr.bf16.mxu0 %v1976
    %2839 = vmatpush1.bf16.msra.mxu0 %v1975
    %2840 = vmatprep.subr.bf16.mxu0 %v1974
    %2841 = vmatpush1.bf16.msra.mxu0 %v1973
    %2842 = vmatprep.subr.bf16.mxu0 %v1972
    %2843 = vmatpush1.bf16.msra.mxu0 %v1971
    %2844 = vmatprep.subr.bf16.mxu0 %v1970
    %2845 = vmatpush1.bf16.msra.mxu0 %v1969
    %2846 = vmatprep.subr.bf16.mxu0 %v1968
    %2847 = vmatpush1.bf16.msra.mxu0 %v1967
    %2848 = vmatprep.subr.bf16.mxu0 %v1998
    %2849 = vmatpush2.bf16.msra.mxu0 %v1997
    %2850 = vmatprep.subr.bf16.mxu0 %v1996
    %2851 = vmatpush2.bf16.msra.mxu0 %v1995
    %2852 = vmatprep.subr.bf16.mxu0 %v1994
    %2853 = vmatpush2.bf16.msra.mxu0 %v1993
    %2854 = vmatprep.subr.bf16.mxu0 %v1992
    %2855 = vmatpush2.bf16.msra.mxu0 %v1991
    %2856 = vmatprep.subr.bf16.mxu0 %v1990
    %2857 = vmatpush2.bf16.msra.mxu0 %v1989
    %2858 = vmatprep.subr.bf16.mxu0 %v1988
    %2859 = vmatpush2.bf16.msra.mxu0 %v1987
    %2860 = vmatprep.subr.bf16.mxu0 %v1986
    %2861 = vmatpush2.bf16.msra.mxu0 %v1985
    %2862 = vmatprep.subr.bf16.mxu0 %v1984
    %2863 = vmatpush2.bf16.msra.mxu0 %v1983
    %2864 = vmatprep.mubr.bf16.mxu0 %v221
    %2865 = vmatmul.mubr.bf16.gmra.mxu0 %v220
    %v2866 = vpop.f32.mrf.mxu0
    %v2867 = vadd.f32 %v679, %v2866
    %v2868 = vpop.f32.mrf.mxu0
    %v2869 = vadd.f32 %v683, %v2868
    %v2870 = vpop.f32.mrf.mxu0
    %v2871 = vpop.f32.mrf.mxu0
    %2872 = vdwg.mxu0
    %2873 = vmatprep.subr.bf16.mxu0 %v2014
    %2874 = vmatpush1.bf16.msra.mxu0 %v2013
    %2875 = vmatprep.subr.bf16.mxu0 %v2012
    %2876 = vmatpush1.bf16.msra.mxu0 %v2011
    %2877 = vmatprep.subr.bf16.mxu0 %v2010
    %2878 = vmatpush1.bf16.msra.mxu0 %v2009
    %2879 = vmatprep.subr.bf16.mxu0 %v2008
    %2880 = vmatpush1.bf16.msra.mxu0 %v2007
    %2881 = vmatprep.subr.bf16.mxu0 %v2006
    %2882 = vmatpush1.bf16.msra.mxu0 %v2005
    %2883 = vmatprep.subr.bf16.mxu0 %v2004
    %2884 = vmatpush1.bf16.msra.mxu0 %v2003
    %2885 = vmatprep.subr.bf16.mxu0 %v2002
    %2886 = vmatpush1.bf16.msra.mxu0 %v2001
    %2887 = vmatprep.subr.bf16.mxu0 %v2000
    %2888 = vmatpush1.bf16.msra.mxu0 %v1999
    %2889 = vmatprep.subr.bf16.mxu0 %v2030
    %2890 = vmatpush2.bf16.msra.mxu0 %v2029
    %2891 = vmatprep.subr.bf16.mxu0 %v2028
    %2892 = vmatpush2.bf16.msra.mxu0 %v2027
    %2893 = vmatprep.subr.bf16.mxu0 %v2026
    %2894 = vmatpush2.bf16.msra.mxu0 %v2025
    %2895 = vmatprep.subr.bf16.mxu0 %v2024
    %2896 = vmatpush2.bf16.msra.mxu0 %v2023
    %2897 = vmatprep.subr.bf16.mxu0 %v2022
    %2898 = vmatpush2.bf16.msra.mxu0 %v2021
    %2899 = vmatprep.subr.bf16.mxu0 %v2020
    %2900 = vmatpush2.bf16.msra.mxu0 %v2019
    %2901 = vmatprep.subr.bf16.mxu0 %v2018
    %2902 = vmatpush2.bf16.msra.mxu0 %v2017
    %2903 = vmatprep.subr.bf16.mxu0 %v2016
    %2904 = vmatpush2.bf16.msra.mxu0 %v2015
    %2905 = vmatprep.mubr.bf16.mxu0 %v223
    %2906 = vmatmul.mubr.bf16.gmra.mxu0 %v222
    %v2907 = vpop.f32.mrf.mxu0
    %v2908 = vadd.f32 %v2867, %v2907
    %v2909 = vpop.f32.mrf.mxu0
    %v2910 = vadd.f32 %v2869, %v2909
    %v2911 = vpop.f32.mrf.mxu0
    %v2912 = vpop.f32.mrf.mxu0
    %2913 = vdwg.mxu0
    %2914 = vmatprep.subr.bf16.mxu0 %v2046
    %2915 = vmatpush1.bf16.msra.mxu0 %v2045
    %2916 = vmatprep.subr.bf16.mxu0 %v2044
    %2917 = vmatpush1.bf16.msra.mxu0 %v2043
    %2918 = vmatprep.subr.bf16.mxu0 %v2042
    %2919 = vmatpush1.bf16.msra.mxu0 %v2041
    %2920 = vmatprep.subr.bf16.mxu0 %v2040
    %2921 = vmatpush1.bf16.msra.mxu0 %v2039
    %2922 = vmatprep.subr.bf16.mxu0 %v2038
    %2923 = vmatpush1.bf16.msra.mxu0 %v2037
    %2924 = vmatprep.subr.bf16.mxu0 %v2036
    %2925 = vmatpush1.bf16.msra.mxu0 %v2035
    %2926 = vmatprep.subr.bf16.mxu0 %v2034
    %2927 = vmatpush1.bf16.msra.mxu0 %v2033
    %2928 = vmatprep.subr.bf16.mxu0 %v2032
    %2929 = vmatpush1.bf16.msra.mxu0 %v2031
    %2930 = vmatprep.subr.bf16.mxu0 %v2062
    %2931 = vmatpush2.bf16.msra.mxu0 %v2061
    %2932 = vmatprep.subr.bf16.mxu0 %v2060
    %2933 = vmatpush2.bf16.msra.mxu0 %v2059
    %2934 = vmatprep.subr.bf16.mxu0 %v2058
    %2935 = vmatpush2.bf16.msra.mxu0 %v2057
    %2936 = vmatprep.subr.bf16.mxu0 %v2056
    %2937 = vmatpush2.bf16.msra.mxu0 %v2055
    %2938 = vmatprep.subr.bf16.mxu0 %v2054
    %2939 = vmatpush2.bf16.msra.mxu0 %v2053
    %2940 = vmatprep.subr.bf16.mxu0 %v2052
    %2941 = vmatpush2.bf16.msra.mxu0 %v2051
    %2942 = vmatprep.subr.bf16.mxu0 %v2050
    %2943 = vmatpush2.bf16.msra.mxu0 %v2049
    %2944 = vmatprep.subr.bf16.mxu0 %v2048
    %2945 = vmatpush2.bf16.msra.mxu0 %v2047
    %2946 = vmatprep.mubr.bf16.mxu0 %v225
    %2947 = vmatmul.mubr.bf16.gmra.mxu0 %v224
    %v2948 = vpop.f32.mrf.mxu0
    %v2949 = vadd.f32 %v2908, %v2948
    %v2950 = vpop.f32.mrf.mxu0
    %v2951 = vadd.f32 %v2910, %v2950
    %v2952 = vpop.f32.mrf.mxu0
    %v2953 = vpop.f32.mrf.mxu0
    %2954 = vdwg.mxu0
    %2955 = vmatprep.subr.bf16.mxu0 %v2078
    %2956 = vmatpush1.bf16.msra.mxu0 %v2077
    %2957 = vmatprep.subr.bf16.mxu0 %v2076
    %2958 = vmatpush1.bf16.msra.mxu0 %v2075
    %2959 = vmatprep.subr.bf16.mxu0 %v2074
    %2960 = vmatpush1.bf16.msra.mxu0 %v2073
    %2961 = vmatprep.subr.bf16.mxu0 %v2072
    %2962 = vmatpush1.bf16.msra.mxu0 %v2071
    %2963 = vmatprep.subr.bf16.mxu0 %v2070
    %2964 = vmatpush1.bf16.msra.mxu0 %v2069
    %2965 = vmatprep.subr.bf16.mxu0 %v2068
    %2966 = vmatpush1.bf16.msra.mxu0 %v2067
    %2967 = vmatprep.subr.bf16.mxu0 %v2066
    %2968 = vmatpush1.bf16.msra.mxu0 %v2065
    %2969 = vmatprep.subr.bf16.mxu0 %v2064
    %2970 = vmatpush1.bf16.msra.mxu0 %v2063
    %2971 = vmatprep.subr.bf16.mxu0 %v2094
    %2972 = vmatpush2.bf16.msra.mxu0 %v2093
    %2973 = vmatprep.subr.bf16.mxu0 %v2092
    %2974 = vmatpush2.bf16.msra.mxu0 %v2091
    %2975 = vmatprep.subr.bf16.mxu0 %v2090
    %2976 = vmatpush2.bf16.msra.mxu0 %v2089
    %2977 = vmatprep.subr.bf16.mxu0 %v2088
    %2978 = vmatpush2.bf16.msra.mxu0 %v2087
    %2979 = vmatprep.subr.bf16.mxu0 %v2086
    %2980 = vmatpush2.bf16.msra.mxu0 %v2085
    %2981 = vmatprep.subr.bf16.mxu0 %v2084
    %2982 = vmatpush2.bf16.msra.mxu0 %v2083
    %2983 = vmatprep.subr.bf16.mxu0 %v2082
    %2984 = vmatpush2.bf16.msra.mxu0 %v2081
    %2985 = vmatprep.subr.bf16.mxu0 %v2080
    %2986 = vmatpush2.bf16.msra.mxu0 %v2079
    %2987 = vmatprep.mubr.bf16.mxu0 %v227
    %2988 = vmatmul.mubr.bf16.gmra.mxu0 %v226
    %v2989 = vpop.f32.mrf.mxu0
    %v2990 = vadd.f32 %v2949, %v2989
    %v2991 = vpop.f32.mrf.mxu0
    %v2992 = vadd.f32 %v2951, %v2991
    %v2993 = vpop.f32.mrf.mxu0
    %v2994 = vpop.f32.mrf.mxu0
    %2995 = vdwg.mxu0
    %2996 = vmatprep.subr.bf16.mxu0 %v2110
    %2997 = vmatpush1.bf16.msra.mxu0 %v2109
    %2998 = vmatprep.subr.bf16.mxu0 %v2108
    %2999 = vmatpush1.bf16.msra.mxu0 %v2107
    %3000 = vmatprep.subr.bf16.mxu0 %v2106
    %3001 = vmatpush1.bf16.msra.mxu0 %v2105
    %3002 = vmatprep.subr.bf16.mxu0 %v2104
    %3003 = vmatpush1.bf16.msra.mxu0 %v2103
    %3004 = vmatprep.subr.bf16.mxu0 %v2102
    %3005 = vmatpush1.bf16.msra.mxu0 %v2101
    %3006 = vmatprep.subr.bf16.mxu0 %v2100
    %3007 = vmatpush1.bf16.msra.mxu0 %v2099
    %3008 = vmatprep.subr.bf16.mxu0 %v2098
    %3009 = vmatpush1.bf16.msra.mxu0 %v2097
    %3010 = vmatprep.subr.bf16.mxu0 %v2096
    %3011 = vmatpush1.bf16.msra.mxu0 %v2095
    %3012 = vmatprep.subr.bf16.mxu0 %v2126
    %3013 = vmatpush2.bf16.msra.mxu0 %v2125
    %3014 = vmatprep.subr.bf16.mxu0 %v2124
    %3015 = vmatpush2.bf16.msra.mxu0 %v2123
    %3016 = vmatprep.subr.bf16.mxu0 %v2122
    %3017 = vmatpush2.bf16.msra.mxu0 %v2121
    %3018 = vmatprep.subr.bf16.mxu0 %v2120
    %3019 = vmatpush2.bf16.msra.mxu0 %v2119
    %3020 = vmatprep.subr.bf16.mxu0 %v2118
    %3021 = vmatpush2.bf16.msra.mxu0 %v2117
    %3022 = vmatprep.subr.bf16.mxu0 %v2116
    %3023 = vmatpush2.bf16.msra.mxu0 %v2115
    %3024 = vmatprep.subr.bf16.mxu0 %v2114
    %3025 = vmatpush2.bf16.msra.mxu0 %v2113
    %3026 = vmatprep.subr.bf16.mxu0 %v2112
    %3027 = vmatpush2.bf16.msra.mxu0 %v2111
    %3028 = vmatprep.mubr.bf16.mxu0 %v229
    %3029 = vmatmul.mubr.bf16.gmra.mxu0 %v228
    %v3030 = vpop.f32.mrf.mxu0
    %v3031 = vadd.f32 %v2990, %v3030
    %v3032 = vpop.f32.mrf.mxu0
    %v3033 = vadd.f32 %v2992, %v3032
    %v3034 = vpop.f32.mrf.mxu0
    %v3035 = vpop.f32.mrf.mxu0
    %3036 = vdwg.mxu0
    %3037 = vmatprep.subr.bf16.mxu0 %v2142
    %3038 = vmatpush1.bf16.msra.mxu0 %v2141
    %3039 = vmatprep.subr.bf16.mxu0 %v2140
    %3040 = vmatpush1.bf16.msra.mxu0 %v2139
    %3041 = vmatprep.subr.bf16.mxu0 %v2138
    %3042 = vmatpush1.bf16.msra.mxu0 %v2137
    %3043 = vmatprep.subr.bf16.mxu0 %v2136
    %3044 = vmatpush1.bf16.msra.mxu0 %v2135
    %3045 = vmatprep.subr.bf16.mxu0 %v2134
    %3046 = vmatpush1.bf16.msra.mxu0 %v2133
    %3047 = vmatprep.subr.bf16.mxu0 %v2132
    %3048 = vmatpush1.bf16.msra.mxu0 %v2131
    %3049 = vmatprep.subr.bf16.mxu0 %v2130
    %3050 = vmatpush1.bf16.msra.mxu0 %v2129
    %3051 = vmatprep.subr.bf16.mxu0 %v2128
    %3052 = vmatpush1.bf16.msra.mxu0 %v2127
    %3053 = vmatprep.subr.bf16.mxu0 %v2158
    %3054 = vmatpush2.bf16.msra.mxu0 %v2157
    %3055 = vmatprep.subr.bf16.mxu0 %v2156
    %3056 = vmatpush2.bf16.msra.mxu0 %v2155
    %3057 = vmatprep.subr.bf16.mxu0 %v2154
    %3058 = vmatpush2.bf16.msra.mxu0 %v2153
    %3059 = vmatprep.subr.bf16.mxu0 %v2152
    %3060 = vmatpush2.bf16.msra.mxu0 %v2151
    %3061 = vmatprep.subr.bf16.mxu0 %v2150
    %3062 = vmatpush2.bf16.msra.mxu0 %v2149
    %3063 = vmatprep.subr.bf16.mxu0 %v2148
    %3064 = vmatpush2.bf16.msra.mxu0 %v2147
    %3065 = vmatprep.subr.bf16.mxu0 %v2146
    %3066 = vmatpush2.bf16.msra.mxu0 %v2145
    %3067 = vmatprep.subr.bf16.mxu0 %v2144
    %3068 = vmatpush2.bf16.msra.mxu0 %v2143
    %3069 = vmatprep.mubr.bf16.mxu0 %v231
    %3070 = vmatmul.mubr.bf16.gmra.mxu0 %v230
    %v3071 = vpop.f32.mrf.mxu0
    %v3072 = vadd.f32 %v3031, %v3071
    %v3073 = vpop.f32.mrf.mxu0
    %v3074 = vadd.f32 %v3033, %v3073
    %v3075 = vpop.f32.mrf.mxu0
    %v3076 = vpop.f32.mrf.mxu0
    %3077 = vdwg.mxu0
    %3078 = vmatprep.subr.bf16.mxu0 %v2174
    %3079 = vmatpush1.bf16.msra.mxu0 %v2173
    %3080 = vmatprep.subr.bf16.mxu0 %v2172
    %3081 = vmatpush1.bf16.msra.mxu0 %v2171
    %3082 = vmatprep.subr.bf16.mxu0 %v2170
    %3083 = vmatpush1.bf16.msra.mxu0 %v2169
    %3084 = vmatprep.subr.bf16.mxu0 %v2168
    %3085 = vmatpush1.bf16.msra.mxu0 %v2167
    %3086 = vmatprep.subr.bf16.mxu0 %v2166
    %3087 = vmatpush1.bf16.msra.mxu0 %v2165
    %3088 = vmatprep.subr.bf16.mxu0 %v2164
    %3089 = vmatpush1.bf16.msra.mxu0 %v2163
    %3090 = vmatprep.subr.bf16.mxu0 %v2162
    %3091 = vmatpush1.bf16.msra.mxu0 %v2161
    %3092 = vmatprep.subr.bf16.mxu0 %v2160
    %3093 = vmatpush1.bf16.msra.mxu0 %v2159
    %3094 = vmatprep.subr.bf16.mxu0 %v2190
    %3095 = vmatpush2.bf16.msra.mxu0 %v2189
    %3096 = vmatprep.subr.bf16.mxu0 %v2188
    %3097 = vmatpush2.bf16.msra.mxu0 %v2187
    %3098 = vmatprep.subr.bf16.mxu0 %v2186
    %3099 = vmatpush2.bf16.msra.mxu0 %v2185
    %3100 = vmatprep.subr.bf16.mxu0 %v2184
    %3101 = vmatpush2.bf16.msra.mxu0 %v2183
    %3102 = vmatprep.subr.bf16.mxu0 %v2182
    %3103 = vmatpush2.bf16.msra.mxu0 %v2181
    %3104 = vmatprep.subr.bf16.mxu0 %v2180
    %3105 = vmatpush2.bf16.msra.mxu0 %v2179
    %3106 = vmatprep.subr.bf16.mxu0 %v2178
    %3107 = vmatpush2.bf16.msra.mxu0 %v2177
    %3108 = vmatprep.subr.bf16.mxu0 %v2176
    %3109 = vmatpush2.bf16.msra.mxu0 %v2175
    %3110 = vmatprep.mubr.bf16.mxu0 %v233
    %3111 = vmatmul.mubr.bf16.gmra.mxu0 %v232
    %v3112 = vpop.f32.mrf.mxu0
    %v3113 = vadd.f32 %v3072, %v3112
    %v3114 = vpop.f32.mrf.mxu0
    %v3115 = vadd.f32 %v3074, %v3114
    %v3116 = vpop.f32.mrf.mxu0
    %v3117 = vpop.f32.mrf.mxu0
    %3118 = vdwg.mxu0
    %3119 = vmatprep.subr.bf16.mxu0 %v2206
    %3120 = vmatpush1.bf16.msra.mxu0 %v2205
    %3121 = vmatprep.subr.bf16.mxu0 %v2204
    %3122 = vmatpush1.bf16.msra.mxu0 %v2203
    %3123 = vmatprep.subr.bf16.mxu0 %v2202
    %3124 = vmatpush1.bf16.msra.mxu0 %v2201
    %3125 = vmatprep.subr.bf16.mxu0 %v2200
    %3126 = vmatpush1.bf16.msra.mxu0 %v2199
    %3127 = vmatprep.subr.bf16.mxu0 %v2198
    %3128 = vmatpush1.bf16.msra.mxu0 %v2197
    %3129 = vmatprep.subr.bf16.mxu0 %v2196
    %3130 = vmatpush1.bf16.msra.mxu0 %v2195
    %3131 = vmatprep.subr.bf16.mxu0 %v2194
    %3132 = vmatpush1.bf16.msra.mxu0 %v2193
    %3133 = vmatprep.subr.bf16.mxu0 %v2192
    %3134 = vmatpush1.bf16.msra.mxu0 %v2191
    %3135 = vmatprep.subr.bf16.mxu0 %v2222
    %3136 = vmatpush2.bf16.msra.mxu0 %v2221
    %3137 = vmatprep.subr.bf16.mxu0 %v2220
    %3138 = vmatpush2.bf16.msra.mxu0 %v2219
    %3139 = vmatprep.subr.bf16.mxu0 %v2218
    %3140 = vmatpush2.bf16.msra.mxu0 %v2217
    %3141 = vmatprep.subr.bf16.mxu0 %v2216
    %3142 = vmatpush2.bf16.msra.mxu0 %v2215
    %3143 = vmatprep.subr.bf16.mxu0 %v2214
    %3144 = vmatpush2.bf16.msra.mxu0 %v2213
    %3145 = vmatprep.subr.bf16.mxu0 %v2212
    %3146 = vmatpush2.bf16.msra.mxu0 %v2211
    %3147 = vmatprep.subr.bf16.mxu0 %v2210
    %3148 = vmatpush2.bf16.msra.mxu0 %v2209
    %3149 = vmatprep.subr.bf16.mxu0 %v2208
    %3150 = vmatpush2.bf16.msra.mxu0 %v2207
    %3151 = vmatprep.mubr.bf16.mxu0 %v235
    %3152 = vmatmul.mubr.bf16.gmra.mxu0 %v234
    %v3153 = vpop.f32.mrf.mxu0
    %v3154 = vadd.f32 %v3113, %v3153
    %v3155 = vpop.f32.mrf.mxu0
    %v3156 = vadd.f32 %v3115, %v3155
    %v3157 = vpop.f32.mrf.mxu0
    %v3158 = vpop.f32.mrf.mxu0
    %3159 = vdwg.mxu0
    %3160 = vmatprep.subr.bf16.mxu0 %v2238
    %3161 = vmatpush1.bf16.msra.mxu0 %v2237
    %3162 = vmatprep.subr.bf16.mxu0 %v2236
    %3163 = vmatpush1.bf16.msra.mxu0 %v2235
    %3164 = vmatprep.subr.bf16.mxu0 %v2234
    %3165 = vmatpush1.bf16.msra.mxu0 %v2233
    %3166 = vmatprep.subr.bf16.mxu0 %v2232
    %3167 = vmatpush1.bf16.msra.mxu0 %v2231
    %3168 = vmatprep.subr.bf16.mxu0 %v2230
    %3169 = vmatpush1.bf16.msra.mxu0 %v2229
    %3170 = vmatprep.subr.bf16.mxu0 %v2228
    %3171 = vmatpush1.bf16.msra.mxu0 %v2227
    %3172 = vmatprep.subr.bf16.mxu0 %v2226
    %3173 = vmatpush1.bf16.msra.mxu0 %v2225
    %3174 = vmatprep.subr.bf16.mxu0 %v2224
    %3175 = vmatpush1.bf16.msra.mxu0 %v2223
    %3176 = vmatprep.subr.bf16.mxu0 %v2254
    %3177 = vmatpush2.bf16.msra.mxu0 %v2253
    %3178 = vmatprep.subr.bf16.mxu0 %v2252
    %3179 = vmatpush2.bf16.msra.mxu0 %v2251
    %3180 = vmatprep.subr.bf16.mxu0 %v2250
    %3181 = vmatpush2.bf16.msra.mxu0 %v2249
    %3182 = vmatprep.subr.bf16.mxu0 %v2248
    %3183 = vmatpush2.bf16.msra.mxu0 %v2247
    %3184 = vmatprep.subr.bf16.mxu0 %v2246
    %3185 = vmatpush2.bf16.msra.mxu0 %v2245
    %3186 = vmatprep.subr.bf16.mxu0 %v2244
    %3187 = vmatpush2.bf16.msra.mxu0 %v2243
    %3188 = vmatprep.subr.bf16.mxu0 %v2242
    %3189 = vmatpush2.bf16.msra.mxu0 %v2241
    %3190 = vmatprep.subr.bf16.mxu0 %v2240
    %3191 = vmatpush2.bf16.msra.mxu0 %v2239
    %3192 = vmatprep.mubr.bf16.mxu0 %v237
    %3193 = vmatmul.mubr.bf16.gmra.mxu0 %v236
    %v3194 = vpop.f32.mrf.mxu0
    %v3195 = vadd.f32 %v3154, %v3194
    %v3196 = vpop.f32.mrf.mxu0
    %v3197 = vadd.f32 %v3156, %v3196
    %v3198 = vpop.f32.mrf.mxu0
    %v3199 = vpop.f32.mrf.mxu0
    %3200 = vdwg.mxu0
    %3201 = vmatprep.subr.bf16.mxu0 %v2270
    %3202 = vmatpush1.bf16.msra.mxu0 %v2269
    %3203 = vmatprep.subr.bf16.mxu0 %v2268
    %3204 = vmatpush1.bf16.msra.mxu0 %v2267
    %3205 = vmatprep.subr.bf16.mxu0 %v2266
    %3206 = vmatpush1.bf16.msra.mxu0 %v2265
    %3207 = vmatprep.subr.bf16.mxu0 %v2264
    %3208 = vmatpush1.bf16.msra.mxu0 %v2263
    %3209 = vmatprep.subr.bf16.mxu0 %v2262
    %3210 = vmatpush1.bf16.msra.mxu0 %v2261
    %3211 = vmatprep.subr.bf16.mxu0 %v2260
    %3212 = vmatpush1.bf16.msra.mxu0 %v2259
    %3213 = vmatprep.subr.bf16.mxu0 %v2258
    %3214 = vmatpush1.bf16.msra.mxu0 %v2257
    %3215 = vmatprep.subr.bf16.mxu0 %v2256
    %3216 = vmatpush1.bf16.msra.mxu0 %v2255
    %3217 = vmatprep.subr.bf16.mxu0 %v2286
    %3218 = vmatpush2.bf16.msra.mxu0 %v2285
    %3219 = vmatprep.subr.bf16.mxu0 %v2284
    %3220 = vmatpush2.bf16.msra.mxu0 %v2283
    %3221 = vmatprep.subr.bf16.mxu0 %v2282
    %3222 = vmatpush2.bf16.msra.mxu0 %v2281
    %3223 = vmatprep.subr.bf16.mxu0 %v2280
    %3224 = vmatpush2.bf16.msra.mxu0 %v2279
    %3225 = vmatprep.subr.bf16.mxu0 %v2278
    %3226 = vmatpush2.bf16.msra.mxu0 %v2277
    %3227 = vmatprep.subr.bf16.mxu0 %v2276
    %3228 = vmatpush2.bf16.msra.mxu0 %v2275
    %3229 = vmatprep.subr.bf16.mxu0 %v2274
    %3230 = vmatpush2.bf16.msra.mxu0 %v2273
    %3231 = vmatprep.subr.bf16.mxu0 %v2272
    %3232 = vmatpush2.bf16.msra.mxu0 %v2271
    %3233 = vmatprep.mubr.bf16.mxu0 %v239
    %3234 = vmatmul.mubr.bf16.gmra.mxu0 %v238
    %v3235 = vpop.f32.mrf.mxu0
    %v3236 = vadd.f32 %v3195, %v3235
    %v3237 = vpop.f32.mrf.mxu0
    %v3238 = vadd.f32 %v3197, %v3237
    %v3239 = vpop.f32.mrf.mxu0
    %v3240 = vpop.f32.mrf.mxu0
    %3241 = vdwg.mxu0
    %3242 = vmatprep.subr.bf16.mxu0 %v2302
    %3243 = vmatpush1.bf16.msra.mxu0 %v2301
    %3244 = vmatprep.subr.bf16.mxu0 %v2300
    %3245 = vmatpush1.bf16.msra.mxu0 %v2299
    %3246 = vmatprep.subr.bf16.mxu0 %v2298
    %3247 = vmatpush1.bf16.msra.mxu0 %v2297
    %3248 = vmatprep.subr.bf16.mxu0 %v2296
    %3249 = vmatpush1.bf16.msra.mxu0 %v2295
    %3250 = vmatprep.subr.bf16.mxu0 %v2294
    %3251 = vmatpush1.bf16.msra.mxu0 %v2293
    %3252 = vmatprep.subr.bf16.mxu0 %v2292
    %3253 = vmatpush1.bf16.msra.mxu0 %v2291
    %3254 = vmatprep.subr.bf16.mxu0 %v2290
    %3255 = vmatpush1.bf16.msra.mxu0 %v2289
    %3256 = vmatprep.subr.bf16.mxu0 %v2288
    %3257 = vmatpush1.bf16.msra.mxu0 %v2287
    %3258 = vmatprep.subr.bf16.mxu0 %v2318
    %3259 = vmatpush2.bf16.msra.mxu0 %v2317
    %3260 = vmatprep.subr.bf16.mxu0 %v2316
    %3261 = vmatpush2.bf16.msra.mxu0 %v2315
    %3262 = vmatprep.subr.bf16.mxu0 %v2314
    %3263 = vmatpush2.bf16.msra.mxu0 %v2313
    %3264 = vmatprep.subr.bf16.mxu0 %v2312
    %3265 = vmatpush2.bf16.msra.mxu0 %v2311
    %3266 = vmatprep.subr.bf16.mxu0 %v2310
    %3267 = vmatpush2.bf16.msra.mxu0 %v2309
    %3268 = vmatprep.subr.bf16.mxu0 %v2308
    %3269 = vmatpush2.bf16.msra.mxu0 %v2307
    %3270 = vmatprep.subr.bf16.mxu0 %v2306
    %3271 = vmatpush2.bf16.msra.mxu0 %v2305
    %3272 = vmatprep.subr.bf16.mxu0 %v2304
    %3273 = vmatpush2.bf16.msra.mxu0 %v2303
    %3274 = vmatprep.mubr.bf16.mxu0 %v241
    %3275 = vmatmul.mubr.bf16.gmra.mxu0 %v240
    %v3276 = vpop.f32.mrf.mxu0
    %v3277 = vadd.f32 %v3236, %v3276
    %v3278 = vpop.f32.mrf.mxu0
    %v3279 = vadd.f32 %v3238, %v3278
    %v3280 = vpop.f32.mrf.mxu0
    %v3281 = vpop.f32.mrf.mxu0
    %3282 = vdwg.mxu0
    %3283 = vmatprep.subr.bf16.mxu0 %v2334
    %3284 = vmatpush1.bf16.msra.mxu0 %v2333
    %3285 = vmatprep.subr.bf16.mxu0 %v2332
    %3286 = vmatpush1.bf16.msra.mxu0 %v2331
    %3287 = vmatprep.subr.bf16.mxu0 %v2330
    %3288 = vmatpush1.bf16.msra.mxu0 %v2329
    %3289 = vmatprep.subr.bf16.mxu0 %v2328
    %3290 = vmatpush1.bf16.msra.mxu0 %v2327
    %3291 = vmatprep.subr.bf16.mxu0 %v2326
    %3292 = vmatpush1.bf16.msra.mxu0 %v2325
    %3293 = vmatprep.subr.bf16.mxu0 %v2324
    %3294 = vmatpush1.bf16.msra.mxu0 %v2323
    %3295 = vmatprep.subr.bf16.mxu0 %v2322
    %3296 = vmatpush1.bf16.msra.mxu0 %v2321
    %3297 = vmatprep.subr.bf16.mxu0 %v2320
    %3298 = vmatpush1.bf16.msra.mxu0 %v2319
    %3299 = vmatprep.subr.bf16.mxu0 %v2350
    %3300 = vmatpush2.bf16.msra.mxu0 %v2349
    %3301 = vmatprep.subr.bf16.mxu0 %v2348
    %3302 = vmatpush2.bf16.msra.mxu0 %v2347
    %3303 = vmatprep.subr.bf16.mxu0 %v2346
    %3304 = vmatpush2.bf16.msra.mxu0 %v2345
    %3305 = vmatprep.subr.bf16.mxu0 %v2344
    %3306 = vmatpush2.bf16.msra.mxu0 %v2343
    %3307 = vmatprep.subr.bf16.mxu0 %v2342
    %3308 = vmatpush2.bf16.msra.mxu0 %v2341
    %3309 = vmatprep.subr.bf16.mxu0 %v2340
    %3310 = vmatpush2.bf16.msra.mxu0 %v2339
    %3311 = vmatprep.subr.bf16.mxu0 %v2338
    %3312 = vmatpush2.bf16.msra.mxu0 %v2337
    %3313 = vmatprep.subr.bf16.mxu0 %v2336
    %3314 = vmatpush2.bf16.msra.mxu0 %v2335
    %3315 = vmatprep.mubr.bf16.mxu0 %v243
    %3316 = vmatmul.mubr.bf16.gmra.mxu0 %v242
    %v3317 = vpop.f32.mrf.mxu0
    %v3318 = vadd.f32 %v3277, %v3317
    %v3319 = vpop.f32.mrf.mxu0
    %v3320 = vadd.f32 %v3279, %v3319
    %v3321 = vpop.f32.mrf.mxu0
    %v3322 = vpop.f32.mrf.mxu0
    %3323 = vdwg.mxu0
    %3324 = vmatprep.subr.bf16.mxu0 %v2366
    %3325 = vmatpush1.bf16.msra.mxu0 %v2365
    %3326 = vmatprep.subr.bf16.mxu0 %v2364
    %3327 = vmatpush1.bf16.msra.mxu0 %v2363
    %3328 = vmatprep.subr.bf16.mxu0 %v2362
    %3329 = vmatpush1.bf16.msra.mxu0 %v2361
    %3330 = vmatprep.subr.bf16.mxu0 %v2360
    %3331 = vmatpush1.bf16.msra.mxu0 %v2359
    %3332 = vmatprep.subr.bf16.mxu0 %v2358
    %3333 = vmatpush1.bf16.msra.mxu0 %v2357
    %3334 = vmatprep.subr.bf16.mxu0 %v2356
    %3335 = vmatpush1.bf16.msra.mxu0 %v2355
    %3336 = vmatprep.subr.bf16.mxu0 %v2354
    %3337 = vmatpush1.bf16.msra.mxu0 %v2353
    %3338 = vmatprep.subr.bf16.mxu0 %v2352
    %3339 = vmatpush1.bf16.msra.mxu0 %v2351
    %3340 = vmatprep.subr.bf16.mxu0 %v2382
    %3341 = vmatpush2.bf16.msra.mxu0 %v2381
    %3342 = vmatprep.subr.bf16.mxu0 %v2380
    %3343 = vmatpush2.bf16.msra.mxu0 %v2379
    %3344 = vmatprep.subr.bf16.mxu0 %v2378
    %3345 = vmatpush2.bf16.msra.mxu0 %v2377
    %3346 = vmatprep.subr.bf16.mxu0 %v2376
    %3347 = vmatpush2.bf16.msra.mxu0 %v2375
    %3348 = vmatprep.subr.bf16.mxu0 %v2374
    %3349 = vmatpush2.bf16.msra.mxu0 %v2373
    %3350 = vmatprep.subr.bf16.mxu0 %v2372
    %3351 = vmatpush2.bf16.msra.mxu0 %v2371
    %3352 = vmatprep.subr.bf16.mxu0 %v2370
    %3353 = vmatpush2.bf16.msra.mxu0 %v2369
    %3354 = vmatprep.subr.bf16.mxu0 %v2368
    %3355 = vmatpush2.bf16.msra.mxu0 %v2367
    %3356 = vmatprep.mubr.bf16.mxu0 %v245
    %3357 = vmatmul.mubr.bf16.gmra.mxu0 %v244
    %v3358 = vpop.f32.mrf.mxu0
    %v3359 = vadd.f32 %v3318, %v3358
    %v3360 = vpop.f32.mrf.mxu0
    %v3361 = vadd.f32 %v3320, %v3360
    %v3362 = vpop.f32.mrf.mxu0
    %v3363 = vpop.f32.mrf.mxu0
    %3364 = vdwg.mxu0
    %3365 = vmatprep.subr.bf16.mxu0 0
    %3366 = vmatpush1.bf16.msra.mxu0 0
    %3367 = vmatprep.subr.bf16.mxu0 0
    %3368 = vmatpush1.bf16.msra.mxu0 0
    %3369 = vmatprep.subr.bf16.mxu0 %v2830
    %3370 = vmatpush1.bf16.msra.mxu0 %v2827
    %3371 = vmatprep.subr.bf16.mxu0 %v2392
    %3372 = vmatpush1.bf16.msra.mxu0 %v2391
    %3373 = vmatprep.subr.bf16.mxu0 %v2390
    %3374 = vmatpush1.bf16.msra.mxu0 %v2389
    %3375 = vmatprep.subr.bf16.mxu0 %v2388
    %3376 = vmatpush1.bf16.msra.mxu0 %v2387
    %3377 = vmatprep.subr.bf16.mxu0 %v2386
    %3378 = vmatpush1.bf16.msra.mxu0 %v2385
    %3379 = vmatprep.subr.bf16.mxu0 %v2384
    %3380 = vmatpush1.bf16.msra.mxu0 %v2383
    %3381 = vmatprep.subr.bf16.mxu0 0
    %3382 = vmatpush2.bf16.msra.mxu0 0
    %3383 = vmatprep.subr.bf16.mxu0 0
    %3384 = vmatpush2.bf16.msra.mxu0 0
    %3385 = vmatprep.subr.bf16.mxu0 0
    %3386 = vmatpush2.bf16.msra.mxu0 0
    %3387 = vmatprep.subr.bf16.mxu0 0
    %3388 = vmatpush2.bf16.msra.mxu0 0
    %3389 = vmatprep.subr.bf16.mxu0 0
    %3390 = vmatpush2.bf16.msra.mxu0 0
    %3391 = vmatprep.subr.bf16.mxu0 0
    %3392 = vmatpush2.bf16.msra.mxu0 0
    %3393 = vmatprep.subr.bf16.mxu0 0
    %3394 = vmatpush2.bf16.msra.mxu0 0
    %3395 = vmatprep.subr.bf16.mxu0 0
    %3396 = vmatpush2.bf16.msra.mxu0 0
    %3397 = vmatprep.mubr.bf16.mxu0 0
    %3398 = vmatmul.mubr.bf16.gmra.mxu0 %v2823
    %v3399 = vpop.f32.mrf.mxu0
    %v3400 = vadd.f32 %v3359, %v3399
    %v3401 = vpop.f32.mrf.mxu0
    %v3402 = vadd.f32 %v3361, %v3401
    %v3403 = vpop.f32.mrf.mxu0
    %v3404 = vpop.f32.mrf.mxu0
    %3405 = vdwg.mxu0
    %v3406 = vxor.u32 %v3400, 2147483648
    %v3407 = vmul.f32 %v3406, 1.442695
    %v3408 = vpow.pop %v3407
    %v3409 = vadd.f32 %v3408, 1.0
    %v3410 = vrcp.pop %v3409
    %v3411 = vmul.f32 1.0, %v3410
    %v3412 = vtanh.pop %v3402
    %v3413 = vmul.f32 %v3411, %v3412
    %v3414 = vtanh.pop %v3413
    %3416 = vrot.lane.b32.xlu0 %v3414, 64
    %v3417 = vpop.permute.xlu0 %3416
    %v3419 = vmul.f32 %v3411, %v3417
    %v3420 = vld [vmem:[#allocation7] sm:$0xff]
    %v3421 = vld [vmem:[#allocation7 + $0x8] sm:$0xff]
    %v3422 = vld [vmem:[#allocation7 + $0x10] sm:$0xff]
    %v3423 = vld [vmem:[#allocation7 + $0x18] sm:$0xff]
    %v3424 = vld [vmem:[#allocation7 + $0x20] sm:$0xff]
    %v3425 = vld [vmem:[#allocation7 + $0x28] sm:$0xff]
    %v3426 = vld [vmem:[#allocation7 + $0x30] sm:$0xff]
    %v3427 = vld [vmem:[#allocation7 + $0x38] sm:$0xff]
    %v3428 = vld [vmem:[%s4] sm:$0x1]
    %v3430 = vlaneseq
    %v3431 = vshrl.u32 %v3430, 7
    %v3432 = vsub.s32 0, %v3431
    %v3433 = vrot.slane %v3428, %v3432
    %3436 = vrot.lane.b32.xlu0 %v3419, 64
    %v3437 = vpop.permute.xlu0 %3436
    %vm3438 = vcmask 523264
    %v3439 = vsel %vm3438, %v3437, 0
    %3441 = vmatprep.subr.mxu0 0.0
    %3442 = vmatpush1.msra.mxu0 0.0
    %3443 = vmatprep.subr.mxu0 0.0
    %3444 = vmatpush1.msra.mxu0 0.0
    %3445 = vmatprep.subr.mxu0 0.0
    %3446 = vmatpush1.msra.mxu0 0.0
    %3447 = vmatprep.subr.mxu0 0.0
    %3448 = vmatpush1.msra.mxu0 0.0
    %3449 = vmatprep.subr.mxu0 0.0
    %3450 = vmatpush1.msra.mxu0 0.0
    %3451 = vmatprep.subr.mxu0 0.0
    %3452 = vmatpush1.msra.mxu0 0.0
    %3453 = vmatprep.subr.mxu0 0.0
    %3454 = vmatpush1.msra.mxu0 0.0
    %3455 = vmatprep.subr.mxu0 0.0
    %3456 = vmatpush1.msra.mxu0 0.0
    %3457 = vmatprep.subr.mxu0 0.0
    %3458 = vmatpush1.msra.mxu0 %v3427
    %3459 = vmatprep.subr.mxu0 0.0
    %3460 = vmatpush1.msra.mxu0 %v3426
    %3461 = vmatprep.subr.mxu0 0.0
    %3462 = vmatpush1.msra.mxu0 %v3425
    %3463 = vmatprep.subr.mxu0 0.0
    %3464 = vmatpush1.msra.mxu0 %v3424
    %3465 = vmatprep.subr.mxu0 0.0
    %3466 = vmatpush1.msra.mxu0 %v3423
    %3467 = vmatprep.subr.mxu0 0.0
    %3468 = vmatpush1.msra.mxu0 %v3422
    %3469 = vmatprep.subr.mxu0 0.0
    %3470 = vmatpush1.msra.mxu0 %v3421
    %3471 = vmatprep.subr.mxu0 0.0
    %3472 = vmatpush1.msra.mxu0 %v3420
    %3473 = vmatprep.subr.mxu0 0.0
    %3474 = vmatpush2.msra.mxu0 0.0
    %3475 = vmatprep.subr.mxu0 0.0
    %3476 = vmatpush2.msra.mxu0 0.0
    %3477 = vmatprep.subr.mxu0 0.0
    %3478 = vmatpush2.msra.mxu0 0.0
    %3479 = vmatprep.subr.mxu0 0.0
    %3480 = vmatpush2.msra.mxu0 0.0
    %3481 = vmatprep.subr.mxu0 0.0
    %3482 = vmatpush2.msra.mxu0 0.0
    %3483 = vmatprep.subr.mxu0 0.0
    %3484 = vmatpush2.msra.mxu0 0.0
    %3485 = vmatprep.subr.mxu0 0.0
    %3486 = vmatpush2.msra.mxu0 0.0
    %3487 = vmatprep.subr.mxu0 0.0
    %3488 = vmatpush2.msra.mxu0 0.0
    %3489 = vmatprep.subr.mxu0 0.0
    %3490 = vmatpush2.msra.mxu0 0.0
    %3491 = vmatprep.subr.mxu0 0.0
    %3492 = vmatpush2.msra.mxu0 0.0
    %3493 = vmatprep.subr.mxu0 0.0
    %3494 = vmatpush2.msra.mxu0 0.0
    %3495 = vmatprep.subr.mxu0 0.0
    %3496 = vmatpush2.msra.mxu0 0.0
    %3497 = vmatprep.subr.mxu0 0.0
    %3498 = vmatpush2.msra.mxu0 0.0
    %3499 = vmatprep.subr.mxu0 0.0
    %3500 = vmatpush2.msra.mxu0 0.0
    %3501 = vmatprep.subr.mxu0 0.0
    %3502 = vmatpush2.msra.mxu0 0.0
    %3503 = vmatprep.subr.mxu0 0.0
    %3504 = vmatpush2.msra.mxu0 0.0
    %3505 = vmatprep.mubr.f32.mxu0 0.0
    %3506 = vmatmul.mubr.f32.gmra.mxu0 %v3439
    %v3507 = vpop.f32.mrf.mxu0
    %v3508 = vadd.f32 %v3433, %v3507
    %v3509 = vpop.f32.mrf.mxu0
    %3510 = vdwg.mxu0
    %vm3511 = vcmask 279552
    %3512 = vst.msk [vmem:[#allocation8] sm:$0x3] %vm3511, %v3508
    // Predicated region
    $region34: #{_lambda_.3} parent=1 // pred_check
      _
    $region35: #{_lambda_.3} parent=1 // pred_check_branch
      %3514 = sbr.rel (0) target = $region37
    $region36: #{_lambda_.3} parent=1 // pred_region
      %s3516 = ssub.s32 32, 32
      %3517 = vsyncadd [#allocation4], %s3516
      %s3519 = sshll.u32 [#allocation8], 4
      %s3520 = int_to_ptr.vmem [resolvable:$true] %s3519
      %3522 = dma.vmem_to_hbm [thread:$0]  %s3520, 32, %s5, [#allocation4]
    $region37: #{_lambda_.3} parent=1 // pred_fallthru
      _
    // Predicated region
    $region38: #{_lambda_.3} parent=1 // pred_check
      _
    $region39: #{_lambda_.3} parent=1 // pred_check_branch
      %3524 = sbr.rel (0) target = $region41
    $region40: #{_lambda_.3} parent=1 // pred_region
      %3525 = dma.done [#allocation4], 32
    $region41: #{_lambda_.3} parent=1 // pred_fallthru
      _
    %3526 = vsyncpa [#allocation3], 1
    %3527 = vsyncpa [#allocation6], 1
    %3528 = vsyncpa [#allocation4], 1

// kernel: _lambda_.2
$region0: #{_lambda_.2}
  #allocation0 [shape = 'u32[]', space=smem, size = 0x4, offset = 0x4, fixed_abs, tag = 'smem constant byte address 0x4 - core index']
  #allocation1 [shape = 'u32[144,128]{1,0:T(1,128)}', space=vmem, size = 0x12000, scoped, tag = 'internal scratch']
  #allocation2 [shape = 'f32[512,96]{1,0:T(8,128)}', space=vmem, size = 0x40000, scoped, tag = 'scratch operand']
  #allocation3 [shape = 'f32[256,64]{1,0:T(8,128)}', space=vmem, size = 0x20000, scoped, tag = 'scratch operand']
  %s0 = inlined_call_operand.vmem [shape: f32[512,14], index: 0, kind: input, shape index: {}]
  %s1 = inlined_call_operand.hbm [shape: bf16[2,14,104], index: 1, kind: input, shape index: {}]
  %s2 = inlined_call_operand.hbm [shape: bf16[2,104,192], index: 2, kind: input, shape index: {}]
  %s3 = inlined_call_operand.hbm [shape: bf16[2,96,120], index: 3, kind: input, shape index: {}]
  %s4 = inlined_call_operand.hbm [shape: bf16[2,120,128], index: 4, kind: input, shape index: {}]
  %s5 = inlined_call_operand.hbm [shape: bf16[2,64,48], index: 5, kind: input, shape index: {}]
  %s6 = inlined_call_operand.hbm [shape: bf16[1,48,56], index: 6, kind: input, shape index: {}]
  %s7 = inlined_call_operand.vmem [shape: f32[1,104], index: 7, kind: input, shape index: {}]
  %s8 = inlined_call_operand.vmem [shape: f32[1,192], index: 8, kind: input, shape index: {}]
  %s9 = inlined_call_operand.vmem [shape: f32[1,120], index: 9, kind: input, shape index: {}]
  %s10 = inlined_call_operand.vmem [shape: f32[1,128], index: 10, kind: input, shape index: {}]
  %s11 = inlined_call_operand.vmem [shape: f32[1,48], index: 11, kind: input, shape index: {}]
  %s12 = inlined_call_operand.vmem [shape: f32[1,56], index: 12, kind: input, shape index: {}]
  %s13 = inlined_call_operand.vmem [shape: f32[1,56], index: 13, kind: input, shape index: {}]
  %s14 = inlined_call_operand.vmem [shape: f32[1,56], index: 14, kind: input, shape index: {}]
  %s15 = inlined_call_operand.vmem [shape: f32[2,61,56], index: 15, kind: output, shape index: {}]
  %s16 = sld [smem:[#allocation0]]
  $region94: #{_lambda_.2} parent=0
    _
  %s18 = ssub.s32 1, %s16
  %s19 = scalar_select 0, %s18, %s16
  $region1: #{_lambda_.2} parent=0
    #allocation4 [shape = 'u8[8192]{0}', space=vmem, size = 0x2000, scoped, tag = 'input window, operand 1, single buffered']
    #allocation5 [shape = 's32[1]{0}', space=sflag, size = 0x4, scoped, tag = 'scoped memory for _lambda_.2']
    #allocation6 [shape = 'u8[106496]{0}', space=vmem, size = 0x1a000, scoped, tag = 'input window, operand 2, single buffered']
    #allocation7 [shape = 's32[1]{0}', space=sflag, size = 0x4, scoped, tag = 'scoped memory for _lambda_.2']
    #allocation8 [shape = 'u8[49152]{0}', space=vmem, size = 0xc000, scoped, tag = 'input window, operand 3, single buffered']
    #allocation9 [shape = 'u8[61440]{0}', space=vmem, size = 0xf000, scoped, tag = 'input window, operand 4, single buffered']
    #allocation10 [shape = 's32[1]{0}', space=sflag, size = 0x4, scoped, tag = 'scoped memory for _lambda_.2']
    #allocation11 [shape = 'u8[32768]{0}', space=vmem, size = 0x8000, scoped, tag = 'input window, operand 5, single buffered']
    #allocation12 [shape = 'u8[12288]{0}', space=vmem, size = 0x3000, scoped, tag = 'input window, operand 6, single buffered']
    #allocation13 [shape = 's32[1]{0}', space=sflag, size = 0x4, scoped, tag = 'scoped memory for _lambda_.2']
    %20 = vsyncpa [#allocation5], 0
    %21 = vsyncpa [#allocation7], 0
    %22 = vsyncpa [#allocation10], 0
    %23 = vsyncpa [#allocation13], 0
    // Predicated region
    $region2: #{_lambda_.2} parent=1 // pred_check
      _
    $region3: #{_lambda_.2} parent=1 // pred_check_branch
      %25 = sbr.rel (0) target = $region5
    $region4: #{_lambda_.2} parent=1 // pred_region
      _
    $region5: #{_lambda_.2} parent=1 // pred_fallthru
      _
    // Predicated region
    $region6: #{_lambda_.2} parent=1 // pred_check
      _
    $region7: #{_lambda_.2} parent=1 // pred_check_branch
      %27 = sbr.rel (0) target = $region9
    $region8: #{_lambda_.2} parent=1 // pred_region
      %s29 = ssub.s32 256, 256
      %30 = vsyncadd [#allocation5], %s29
      %s31 = sshll.u32 [#allocation4], 4
      %s32 = int_to_ptr.vmem [resolvable:$true] %s31
      %37 = dma.hbm_to_vmem [thread:$0]  %s1, 256, %s32, [#allocation5], 64, 64, 4
    $region9: #{_lambda_.2} parent=1 // pred_fallthru
      _
    // Predicated region
    $region10: #{_lambda_.2} parent=1 // pred_check
      _
    $region11: #{_lambda_.2} parent=1 // pred_check_branch
      %39 = sbr.rel (0) target = $region13
    $region12: #{_lambda_.2} parent=1 // pred_region
      %s41 = ssub.s32 3328, 3328
      %42 = vsyncadd [#allocation7], %s41
      %s43 = sshll.u32 [#allocation6], 4
      %s44 = int_to_ptr.vmem [resolvable:$true] %s43
      %49 = dma.hbm_to_vmem [thread:$0]  %s2, 3328, %s44, [#allocation7], 128, 128, 8
    $region13: #{_lambda_.2} parent=1 // pred_fallthru
      _
    // Predicated region
    $region14: #{_lambda_.2} parent=1 // pred_check
      _
    $region15: #{_lambda_.2} parent=1 // pred_check_branch
      %51 = sbr.rel (0) target = $region17
    $region16: #{_lambda_.2} parent=1 // pred_region
      %s53 = ssub.s32 1536, 1536
      %54 = vsyncadd [#allocation7], %s53
      %s55 = sshll.u32 [#allocation8], 4
      %s56 = int_to_ptr.vmem [resolvable:$true] %s55
      %61 = dma.hbm_to_vmem [thread:$0]  %s3, 1536, %s56, [#allocation7], 64, 64, 4
    $region17: #{_lambda_.2} parent=1 // pred_fallthru
      _
    // Predicated region
    $region18: #{_lambda_.2} parent=1 // pred_check
      _
    $region19: #{_lambda_.2} parent=1 // pred_check_branch
      %63 = sbr.rel (0) target = $region21
    $region20: #{_lambda_.2} parent=1 // pred_region
      %s65 = ssub.s32 1920, 1920
      %66 = vsyncadd [#allocation10], %s65
      %s67 = sshll.u32 [#allocation9], 4
      %s68 = int_to_ptr.vmem [resolvable:$true] %s67
      %73 = dma.hbm_to_vmem [thread:$0]  %s4, 1920, %s68, [#allocation10], 64, 64, 4
    $region21: #{_lambda_.2} parent=1 // pred_fallthru
      _
    // Predicated region
    $region22: #{_lambda_.2} parent=1 // pred_check
      _
    $region23: #{_lambda_.2} parent=1 // pred_check_branch
      %75 = sbr.rel (0) target = $region25
    $region24: #{_lambda_.2} parent=1 // pred_region
      %s77 = ssub.s32 1024, 1024
      %78 = vsyncadd [#allocation10], %s77
      %s79 = sshll.u32 [#allocation11], 4
      %s80 = int_to_ptr.vmem [resolvable:$true] %s79
      %85 = dma.hbm_to_vmem [thread:$0]  %s5, 1024, %s80, [#allocation10], 64, 64, 4
    $region25: #{_lambda_.2} parent=1 // pred_fallthru
      _
    // Predicated region
    $region26: #{_lambda_.2} parent=1 // pred_check
      _
    $region27: #{_lambda_.2} parent=1 // pred_check_branch
      %87 = sbr.rel (0) target = $region29
    $region28: #{_lambda_.2} parent=1 // pred_region
      %s89 = ssub.s32 384, 384
      %90 = vsyncadd [#allocation13], %s89
      %s91 = sshll.u32 [#allocation12], 4
      %s92 = int_to_ptr.vmem [resolvable:$true] %s91
      %97 = dma.hbm_to_vmem [thread:$0]  %s6, 384, %s92, [#allocation13], 64, 64, 4
    $region29: #{_lambda_.2} parent=1 // pred_fallthru
      _
    // Predicated region
    $region30: #{_lambda_.2} parent=1 // pred_check
      _
    $region31: #{_lambda_.2} parent=1 // pred_check_branch
      %99 = sbr.rel (0) target = $region33
    $region32: #{_lambda_.2} parent=1 // pred_region
      _
    $region33: #{_lambda_.2} parent=1 // pred_fallthru
      _
    // Predicated region
    $region34: #{_lambda_.2} parent=1 // pred_check
      _
    $region35: #{_lambda_.2} parent=1 // pred_check_branch
      %101 = sbr.rel (0) target = $region37
    $region36: #{_lambda_.2} parent=1 // pred_region
      _
    $region37: #{_lambda_.2} parent=1 // pred_fallthru
      _
    // Predicated region
    $region38: #{_lambda_.2} parent=1 // pred_check
      _
    $region39: #{_lambda_.2} parent=1 // pred_check_branch
      %103 = sbr.rel (0) target = $region41
    $region40: #{_lambda_.2} parent=1 // pred_region
      _
    $region41: #{_lambda_.2} parent=1 // pred_fallthru
      _
    // Predicated region
    $region42: #{_lambda_.2} parent=1 // pred_check
      _
    $region43: #{_lambda_.2} parent=1 // pred_check_branch
      %105 = sbr.rel (0) target = $region45
    $region44: #{_lambda_.2} parent=1 // pred_region
      _
    $region45: #{_lambda_.2} parent=1 // pred_fallthru
      _
    // Predicated region
    $region46: #{_lambda_.2} parent=1 // pred_check
      _
    $region47: #{_lambda_.2} parent=1 // pred_check_branch
      %107 = sbr.rel (0) target = $region49
    $region48: #{_lambda_.2} parent=1 // pred_region
      _
    $region49: #{_lambda_.2} parent=1 // pred_fallthru
      _
    // Predicated region
    $region50: #{_lambda_.2} parent=1 // pred_check
      _
    $region51: #{_lambda_.2} parent=1 // pred_check_branch
      %109 = sbr.rel (0) target = $region53
    $region52: #{_lambda_.2} parent=1 // pred_region
      _
    $region53: #{_lambda_.2} parent=1 // pred_fallthru
      _
    // Predicated region
    $region54: #{_lambda_.2} parent=1 // pred_check
      _
    $region55: #{_lambda_.2} parent=1 // pred_check_branch
      %111 = sbr.rel (0) target = $region57
    $region56: #{_lambda_.2} parent=1 // pred_region
      _
    $region57: #{_lambda_.2} parent=1 // pred_fallthru
      _
    // Predicated region
    $region58: #{_lambda_.2} parent=1 // pred_check
      _
    $region59: #{_lambda_.2} parent=1 // pred_check_branch
      %113 = sbr.rel (0) target = $region61
    $region60: #{_lambda_.2} parent=1 // pred_region
      _
    $region61: #{_lambda_.2} parent=1 // pred_fallthru
      _
    // Predicated region
    $region62: #{_lambda_.2} parent=1 // pred_check
      _
    $region63: #{_lambda_.2} parent=1 // pred_check_branch
      %115 = sbr.rel (0) target = $region65
    $region64: #{_lambda_.2} parent=1 // pred_region
      %116 = dma.done [#allocation5], 256
    $region65: #{_lambda_.2} parent=1 // pred_fallthru
      _
    // Predicated region
    $region66: #{_lambda_.2} parent=1 // pred_check
      _
    $region67: #{_lambda_.2} parent=1 // pred_check_branch
      %118 = sbr.rel (0) target = $region69
    $region68: #{_lambda_.2} parent=1 // pred_region
      %119 = dma.done [#allocation7], 3328
    $region69: #{_lambda_.2} parent=1 // pred_fallthru
      _
    // Predicated region
    $region70: #{_lambda_.2} parent=1 // pred_check
      _
    $region71: #{_lambda_.2} parent=1 // pred_check_branch
      %121 = sbr.rel (0) target = $region73
    $region72: #{_lambda_.2} parent=1 // pred_region
      %122 = dma.done [#allocation7], 1536
    $region73: #{_lambda_.2} parent=1 // pred_fallthru
      _
    // Predicated region
    $region74: #{_lambda_.2} parent=1 // pred_check
      _
    $region75: #{_lambda_.2} parent=1 // pred_check_branch
      %124 = sbr.rel (0) target = $region77
    $region76: #{_lambda_.2} parent=1 // pred_region
      %125 = dma.done [#allocation10], 1920
    $region77: #{_lambda_.2} parent=1 // pred_fallthru
      _
    // Predicated region
    $region78: #{_lambda_.2} parent=1 // pred_check
      _
    $region79: #{_lambda_.2} parent=1 // pred_check_branch
      %127 = sbr.rel (0) target = $region81
    $region80: #{_lambda_.2} parent=1 // pred_region
      %128 = dma.done [#allocation10], 1024
    $region81: #{_lambda_.2} parent=1 // pred_fallthru
      _
    // Predicated region
    $region82: #{_lambda_.2} parent=1 // pred_check
      _
    $region83: #{_lambda_.2} parent=1 // pred_check_branch
      %130 = sbr.rel (0) target = $region85
    $region84: #{_lambda_.2} parent=1 // pred_region
      %131 = dma.done [#allocation13], 384
    $region85: #{_lambda_.2} parent=1 // pred_fallthru
      _
    %v133 = vld [vmem:[%s0] sm:$0xff]
    %v134 = vld [vmem:[%s0 + $0x8] sm:$0xff]
    %v135 = vld [vmem:[%s0 + $0x10] sm:$0xff]
    %v136 = vld [vmem:[%s0 + $0x18] sm:$0xff]
    %v137 = vld [vmem:[%s0 + $0x20] sm:$0xff]
    %v138 = vld [vmem:[%s0 + $0x28] sm:$0xff]
    %v139 = vld [vmem:[%s0 + $0x30] sm:$0xff]
    %v140 = vld [vmem:[%s0 + $0x38] sm:$0xff]
    %v141 = vld [vmem:[%s0 + $0x40] sm:$0xff]
    %v142 = vld [vmem:[%s0 + $0x48] sm:$0xff]
    %v143 = vld [vmem:[%s0 + $0x50] sm:$0xff]
    %v144 = vld [vmem:[%s0 + $0x58] sm:$0xff]
    %v145 = vld [vmem:[%s0 + $0x60] sm:$0xff]
    %v146 = vld [vmem:[%s0 + $0x68] sm:$0xff]
    %v147 = vld [vmem:[%s0 + $0x70] sm:$0xff]
    %v148 = vld [vmem:[%s0 + $0x78] sm:$0xff]
    %v149 = vld [vmem:[%s0 + $0x80] sm:$0xff]
    %v150 = vld [vmem:[%s0 + $0x88] sm:$0xff]
    %v151 = vld [vmem:[%s0 + $0x90] sm:$0xff]
    %v152 = vld [vmem:[%s0 + $0x98] sm:$0xff]
    %v153 = vld [vmem:[%s0 + $0xa0] sm:$0xff]
    %v154 = vld [vmem:[%s0 + $0xa8] sm:$0xff]
    %v155 = vld [vmem:[%s0 + $0xb0] sm:$0xff]
    %v156 = vld [vmem:[%s0 + $0xb8] sm:$0xff]
    %v157 = vld [vmem:[%s0 + $0xc0] sm:$0xff]
    %v158 = vld [vmem:[%s0 + $0xc8] sm:$0xff]
    %v159 = vld [vmem:[%s0 + $0xd0] sm:$0xff]
    %v160 = vld [vmem:[%s0 + $0xd8] sm:$0xff]
    %v161 = vld [vmem:[%s0 + $0xe0] sm:$0xff]
    %v162 = vld [vmem:[%s0 + $0xe8] sm:$0xff]
    %v163 = vld [vmem:[%s0 + $0xf0] sm:$0xff]
    %v164 = vld [vmem:[%s0 + $0xf8] sm:$0xff]
    %v165 = vld [vmem:[%s0 + $0x100] sm:$0xff]
    %v166 = vld [vmem:[%s0 + $0x108] sm:$0xff]
    %v167 = vld [vmem:[%s0 + $0x110] sm:$0xff]
    %v168 = vld [vmem:[%s0 + $0x118] sm:$0xff]
    %v169 = vld [vmem:[%s0 + $0x120] sm:$0xff]
    %v170 = vld [vmem:[%s0 + $0x128] sm:$0xff]
    %v171 = vld [vmem:[%s0 + $0x130] sm:$0xff]
    %v172 = vld [vmem:[%s0 + $0x138] sm:$0xff]
    %v173 = vld [vmem:[%s0 + $0x140] sm:$0xff]
    %v174 = vld [vmem:[%s0 + $0x148] sm:$0xff]
    %v175 = vld [vmem:[%s0 + $0x150] sm:$0xff]
    %v176 = vld [vmem:[%s0 + $0x158] sm:$0xff]
    %v177 = vld [vmem:[%s0 + $0x160] sm:$0xff]
    %v178 = vld [vmem:[%s0 + $0x168] sm:$0xff]
    %v179 = vld [vmem:[%s0 + $0x170] sm:$0xff]
    %v180 = vld [vmem:[%s0 + $0x178] sm:$0xff]
    %v181 = vld [vmem:[%s0 + $0x180] sm:$0xff]
    %v182 = vld [vmem:[%s0 + $0x188] sm:$0xff]
    %v183 = vld [vmem:[%s0 + $0x190] sm:$0xff]
    %v184 = vld [vmem:[%s0 + $0x198] sm:$0xff]
    %v185 = vld [vmem:[%s0 + $0x1a0] sm:$0xff]
    %v186 = vld [vmem:[%s0 + $0x1a8] sm:$0xff]
    %v187 = vld [vmem:[%s0 + $0x1b0] sm:$0xff]
    %v188 = vld [vmem:[%s0 + $0x1b8] sm:$0xff]
    %v189 = vld [vmem:[%s0 + $0x1c0] sm:$0xff]
    %v190 = vld [vmem:[%s0 + $0x1c8] sm:$0xff]
    %v191 = vld [vmem:[%s0 + $0x1d0] sm:$0xff]
    %v192 = vld [vmem:[%s0 + $0x1d8] sm:$0xff]
    %v193 = vld [vmem:[%s0 + $0x1e0] sm:$0xff]
    %v194 = vld [vmem:[%s0 + $0x1e8] sm:$0xff]
    %v195 = vld [vmem:[%s0 + $0x1f0] sm:$0xff]
    %v196 = vld [vmem:[%s0 + $0x1f8] sm:$0xff]
    %v197 = vpack.c.bf16 %v134, %v133
    %v198 = vpack.c.bf16 %v136, %v135
    %v199 = vpack.c.bf16 %v138, %v137
    %v200 = vpack.c.bf16 %v140, %v139
    %v201 = vpack.c.bf16 %v142, %v141
    %v202 = vpack.c.bf16 %v144, %v143
    %v203 = vpack.c.bf16 %v146, %v145
    %v204 = vpack.c.bf16 %v148, %v147
    %v205 = vpack.c.bf16 %v150, %v149
    %v206 = vpack.c.bf16 %v152, %v151
    %v207 = vpack.c.bf16 %v154, %v153
    %v208 = vpack.c.bf16 %v156, %v155
    %v209 = vpack.c.bf16 %v158, %v157
    %v210 = vpack.c.bf16 %v160, %v159
    %v211 = vpack.c.bf16 %v162, %v161
    %v212 = vpack.c.bf16 %v164, %v163
    %v213 = vpack.c.bf16 %v166, %v165
    %v214 = vpack.c.bf16 %v168, %v167
    %v215 = vpack.c.bf16 %v170, %v169
    %v216 = vpack.c.bf16 %v172, %v171
    %v217 = vpack.c.bf16 %v174, %v173
    %v218 = vpack.c.bf16 %v176, %v175
    %v219 = vpack.c.bf16 %v178, %v177
    %v220 = vpack.c.bf16 %v180, %v179
    %v221 = vpack.c.bf16 %v182, %v181
    %v222 = vpack.c.bf16 %v184, %v183
    %v223 = vpack.c.bf16 %v186, %v185
    %v224 = vpack.c.bf16 %v188, %v187
    %v225 = vpack.c.bf16 %v190, %v189
    %v226 = vpack.c.bf16 %v192, %v191
    %v227 = vpack.c.bf16 %v194, %v193
    %v228 = vpack.c.bf16 %v196, %v195
    %v229 = vld [vmem:[#allocation4] sm:$0xf]
    %v230 = vld [vmem:[#allocation4 + $0x4] sm:$0x7]
    %s231 = scalar_lea.vmem [#allocation4], 8
    %v232 = vld [vmem:[%s231] sm:$0xf]
    %v233 = vld [vmem:[%s231 + $0x4] sm:$0x7]
    %vm234 = vsmask.f32 7424
    %v236 = vshrl.u32 %v197, 16
    %v238 = vshll.u32 %v197, 16
    %v240 = vrot.slane %v238, 1
    %v241 = vor.u32 %v236, %v240
    %v243 = vshll.u32 %v198, 16
    %v245 = vrot.slane %v243, 1
    %v246 = vsel %vm234, %v241, %v245
    %v247 = vshrl.u32 %v198, 16
    %v249 = vor.u32 %v247, %v245
    %v251 = vshll.u32 %v199, 16
    %v253 = vrot.slane %v251, 1
    %v254 = vsel %vm234, %v249, %v253
    %v255 = vshrl.u32 %v199, 16
    %v257 = vor.u32 %v255, %v253
    %v259 = vshll.u32 %v200, 16
    %v261 = vrot.slane %v259, 1
    %v262 = vsel %vm234, %v257, %v261
    %v263 = vshrl.u32 %v200, 16
    %v265 = vor.u32 %v263, %v261
    %v267 = vshll.u32 %v201, 16
    %v269 = vrot.slane %v267, 1
    %v270 = vsel %vm234, %v265, %v269
    %v271 = vshrl.u32 %v201, 16
    %v273 = vor.u32 %v271, %v269
    %v275 = vshll.u32 %v202, 16
    %v277 = vrot.slane %v275, 1
    %v278 = vsel %vm234, %v273, %v277
    %v279 = vshrl.u32 %v202, 16
    %v281 = vor.u32 %v279, %v277
    %v283 = vshll.u32 %v203, 16
    %v285 = vrot.slane %v283, 1
    %v286 = vsel %vm234, %v281, %v285
    %v287 = vshrl.u32 %v203, 16
    %v289 = vor.u32 %v287, %v285
    %v291 = vshll.u32 %v204, 16
    %v293 = vrot.slane %v291, 1
    %v294 = vsel %vm234, %v289, %v293
    %v295 = vshrl.u32 %v204, 16
    %v297 = vor.u32 %v295, %v293
    %v299 = vshll.u32 %v205, 16
    %v301 = vrot.slane %v299, 1
    %v302 = vsel %vm234, %v297, %v301
    %v303 = vshrl.u32 %v205, 16
    %v305 = vor.u32 %v303, %v301
    %v307 = vshll.u32 %v206, 16
    %v309 = vrot.slane %v307, 1
    %v310 = vsel %vm234, %v305, %v309
    %v311 = vshrl.u32 %v206, 16
    %v313 = vor.u32 %v311, %v309
    %v315 = vshll.u32 %v207, 16
    %v317 = vrot.slane %v315, 1
    %v318 = vsel %vm234, %v313, %v317
    %v319 = vshrl.u32 %v207, 16
    %v321 = vor.u32 %v319, %v317
    %v323 = vshll.u32 %v208, 16
    %v325 = vrot.slane %v323, 1
    %v326 = vsel %vm234, %v321, %v325
    %v327 = vshrl.u32 %v208, 16
    %v329 = vor.u32 %v327, %v325
    %v331 = vshll.u32 %v209, 16
    %v333 = vrot.slane %v331, 1
    %v334 = vsel %vm234, %v329, %v333
    %v335 = vshrl.u32 %v209, 16
    %v337 = vor.u32 %v335, %v333
    %v339 = vshll.u32 %v210, 16
    %v341 = vrot.slane %v339, 1
    %v342 = vsel %vm234, %v337, %v341
    %v343 = vshrl.u32 %v210, 16
    %v345 = vor.u32 %v343, %v341
    %v347 = vshll.u32 %v211, 16
    %v349 = vrot.slane %v347, 1
    %v350 = vsel %vm234, %v345, %v349
    %v351 = vshrl.u32 %v211, 16
    %v353 = vor.u32 %v351, %v349
    %v355 = vshll.u32 %v212, 16
    %v357 = vrot.slane %v355, 1
    %v358 = vsel %vm234, %v353, %v357
    %v359 = vshrl.u32 %v212, 16
    %v361 = vor.u32 %v359, %v357
    %v363 = vshll.u32 %v213, 16
    %v365 = vrot.slane %v363, 1
    %v366 = vsel %vm234, %v361, %v365
    %v367 = vshrl.u32 %v213, 16
    %v369 = vor.u32 %v367, %v365
    %v371 = vshll.u32 %v214, 16
    %v373 = vrot.slane %v371, 1
    %v374 = vsel %vm234, %v369, %v373
    %v375 = vshrl.u32 %v214, 16
    %v377 = vor.u32 %v375, %v373
    %v379 = vshll.u32 %v215, 16
    %v381 = vrot.slane %v379, 1
    %v382 = vsel %vm234, %v377, %v381
    %v383 = vshrl.u32 %v215, 16
    %v385 = vor.u32 %v383, %v381
    %v387 = vshll.u32 %v216, 16
    %v389 = vrot.slane %v387, 1
    %v390 = vsel %vm234, %v385, %v389
    %v391 = vshrl.u32 %v216, 16
    %v393 = vor.u32 %v391, %v389
    %v395 = vshll.u32 %v217, 16
    %v397 = vrot.slane %v395, 1
    %v398 = vsel %vm234, %v393, %v397
    %v399 = vshrl.u32 %v217, 16
    %v401 = vor.u32 %v399, %v397
    %v403 = vshll.u32 %v218, 16
    %v405 = vrot.slane %v403, 1
    %v406 = vsel %vm234, %v401, %v405
    %v407 = vshrl.u32 %v218, 16
    %v409 = vor.u32 %v407, %v405
    %v411 = vshll.u32 %v219, 16
    %v413 = vrot.slane %v411, 1
    %v414 = vsel %vm234, %v409, %v413
    %v415 = vshrl.u32 %v219, 16
    %v417 = vor.u32 %v415, %v413
    %v419 = vshll.u32 %v220, 16
    %v421 = vrot.slane %v419, 1
    %v422 = vsel %vm234, %v417, %v421
    %v423 = vshrl.u32 %v220, 16
    %v425 = vor.u32 %v423, %v421
    %v427 = vshll.u32 %v221, 16
    %v429 = vrot.slane %v427, 1
    %v430 = vsel %vm234, %v425, %v429
    %v431 = vshrl.u32 %v221, 16
    %v433 = vor.u32 %v431, %v429
    %v435 = vshll.u32 %v222, 16
    %v437 = vrot.slane %v435, 1
    %v438 = vsel %vm234, %v433, %v437
    %v439 = vshrl.u32 %v222, 16
    %v441 = vor.u32 %v439, %v437
    %v443 = vshll.u32 %v223, 16
    %v445 = vrot.slane %v443, 1
    %v446 = vsel %vm234, %v441, %v445
    %v447 = vshrl.u32 %v223, 16
    %v449 = vor.u32 %v447, %v445
    %v451 = vshll.u32 %v224, 16
    %v453 = vrot.slane %v451, 1
    %v454 = vsel %vm234, %v449, %v453
    %v455 = vshrl.u32 %v224, 16
    %v457 = vor.u32 %v455, %v453
    %v459 = vshll.u32 %v225, 16
    %v461 = vrot.slane %v459, 1
    %v462 = vsel %vm234, %v457, %v461
    %v463 = vshrl.u32 %v225, 16
    %v465 = vor.u32 %v463, %v461
    %v467 = vshll.u32 %v226, 16
    %v469 = vrot.slane %v467, 1
    %v470 = vsel %vm234, %v465, %v469
    %v471 = vshrl.u32 %v226, 16
    %v473 = vor.u32 %v471, %v469
    %v475 = vshll.u32 %v227, 16
    %v477 = vrot.slane %v475, 1
    %v478 = vsel %vm234, %v473, %v477
    %v479 = vshrl.u32 %v227, 16
    %v481 = vor.u32 %v479, %v477
    %v483 = vshll.u32 %v228, 16
    %v485 = vrot.slane %v483, 1
    %v486 = vsel %vm234, %v481, %v485
    %v487 = vshrl.u32 %v228, 16
    %v489 = vor.u32 %v487, %v485
    %v492 = vunpack.c.l.b16 %v232
    %v493 = vunpack.c.l.b16 %v233
    %v494 = vpack.c.b16 %v493, %v492
    %vm495 = vcmask 113664
    %v497 = vsel %vm495, %v246, 0
    %v500 = vsel %vm495, %v254, 0
    %v503 = vsel %vm495, %v262, 0
    %v506 = vsel %vm495, %v270, 0
    %v509 = vsel %vm495, %v278, 0
    %v512 = vsel %vm495, %v286, 0
    %v515 = vsel %vm495, %v294, 0
    %v518 = vsel %vm495, %v302, 0
    %v521 = vsel %vm495, %v310, 0
    %v524 = vsel %vm495, %v318, 0
    %v527 = vsel %vm495, %v326, 0
    %v530 = vsel %vm495, %v334, 0
    %v533 = vsel %vm495, %v342, 0
    %v536 = vsel %vm495, %v350, 0
    %v539 = vsel %vm495, %v358, 0
    %v542 = vsel %vm495, %v366, 0
    %v545 = vsel %vm495, %v374, 0
    %v548 = vsel %vm495, %v382, 0
    %v551 = vsel %vm495, %v390, 0
    %v554 = vsel %vm495, %v398, 0
    %v557 = vsel %vm495, %v406, 0
    %v560 = vsel %vm495, %v414, 0
    %v563 = vsel %vm495, %v422, 0
    %v566 = vsel %vm495, %v430, 0
    %v569 = vsel %vm495, %v438, 0
    %v572 = vsel %vm495, %v446, 0
    %v575 = vsel %vm495, %v454, 0
    %v578 = vsel %vm495, %v462, 0
    %v581 = vsel %vm495, %v470, 0
    %v584 = vsel %vm495, %v478, 0
    %v587 = vsel %vm495, %v486, 0
    %v590 = vsel %vm495, %v489, 0
    %vm592 = vcmask 1046528
    %v594 = vsel %vm592, %v494, 0
    %596 = vmatprep.subr.bf16.mxu0 0
    %597 = vmatpush1.bf16.msra.mxu0 0
    %598 = vmatprep.subr.bf16.mxu0 0
    %599 = vmatpush1.bf16.msra.mxu0 0
    %600 = vmatprep.subr.bf16.mxu0 0
    %601 = vmatpush1.bf16.msra.mxu0 0
    %602 = vmatprep.subr.bf16.mxu0 0
    %603 = vmatpush1.bf16.msra.mxu0 0
    %604 = vmatprep.subr.bf16.mxu0 0
    %605 = vmatpush1.bf16.msra.mxu0 0
    %606 = vmatprep.subr.bf16.mxu0 0
    %607 = vmatpush1.bf16.msra.mxu0 0
    %608 = vmatprep.subr.bf16.mxu0 0
    %609 = vmatpush1.bf16.msra.mxu0 0
    %610 = vmatprep.subr.bf16.mxu0 0
    %611 = vmatpush1.bf16.msra.mxu0 %v594
    %612 = vmatprep.subr.bf16.mxu0 0
    %613 = vmatpush2.bf16.msra.mxu0 0
    %614 = vmatprep.subr.bf16.mxu0 0
    %615 = vmatpush2.bf16.msra.mxu0 0
    %616 = vmatprep.subr.bf16.mxu0 0
    %617 = vmatpush2.bf16.msra.mxu0 0
    %618 = vmatprep.subr.bf16.mxu0 0
    %619 = vmatpush2.bf16.msra.mxu0 0
    %620 = vmatprep.subr.bf16.mxu0 0
    %621 = vmatpush2.bf16.msra.mxu0 0
    %622 = vmatprep.subr.bf16.mxu0 0
    %623 = vmatpush2.bf16.msra.mxu0 0
    %624 = vmatprep.subr.bf16.mxu0 0
    %625 = vmatpush2.bf16.msra.mxu0 0
    %626 = vmatprep.subr.bf16.mxu0 0
    %627 = vmatpush2.bf16.msra.mxu0 0
    %628 = vmatprep.mubr.bf16.mxu0 0
    %629 = vmatmul.mubr.bf16.gmra.mxu0 %v497
    %v630 = vpop.f32.mrf.mxu0
    %v631 = vadd.f32 0.0, %v630
    %v632 = vpop.f32.mrf.mxu0
    %v633 = vpop.f32.mrf.mxu0
    %v634 = vadd.f32 0.0, %v633
    %v635 = vpop.f32.mrf.mxu0
    %636 = vmatprep.mubr.bf16.mxu0 0
    %637 = vmatmul.mubr.bf16.gmra.mxu0 %v500
    %v638 = vpop.f32.mrf.mxu0
    %v639 = vadd.f32 0.0, %v638
    %v640 = vpop.f32.mrf.mxu0
    %v641 = vpop.f32.mrf.mxu0
    %v642 = vadd.f32 0.0, %v641
    %v643 = vpop.f32.mrf.mxu0
    %644 = vmatprep.mubr.bf16.mxu0 0
    %645 = vmatmul.mubr.bf16.gmra.mxu0 %v503
    %v646 = vpop.f32.mrf.mxu0
    %v647 = vadd.f32 0.0, %v646
    %v648 = vpop.f32.mrf.mxu0
    %v649 = vpop.f32.mrf.mxu0
    %v650 = vadd.f32 0.0, %v649
    %v651 = vpop.f32.mrf.mxu0
    %652 = vmatprep.mubr.bf16.mxu0 0
    %653 = vmatmul.mubr.bf16.gmra.mxu0 %v506
    %v654 = vpop.f32.mrf.mxu0
    %v655 = vadd.f32 0.0, %v654
    %v656 = vpop.f32.mrf.mxu0
    %v657 = vpop.f32.mrf.mxu0
    %v658 = vadd.f32 0.0, %v657
    %v659 = vpop.f32.mrf.mxu0
    %660 = vmatprep.mubr.bf16.mxu0 0
    %661 = vmatmul.mubr.bf16.gmra.mxu0 %v509
    %v662 = vpop.f32.mrf.mxu0
    %v663 = vadd.f32 0.0, %v662
    %v664 = vpop.f32.mrf.mxu0
    %v665 = vpop.f32.mrf.mxu0
    %v666 = vadd.f32 0.0, %v665
    %v667 = vpop.f32.mrf.mxu0
    %668 = vmatprep.mubr.bf16.mxu0 0
    %669 = vmatmul.mubr.bf16.gmra.mxu0 %v512
    %v670 = vpop.f32.mrf.mxu0
    %v671 = vadd.f32 0.0, %v670
    %v672 = vpop.f32.mrf.mxu0
    %v673 = vpop.f32.mrf.mxu0
    %v674 = vadd.f32 0.0, %v673
    %v675 = vpop.f32.mrf.mxu0
    %676 = vmatprep.mubr.bf16.mxu0 0
    %677 = vmatmul.mubr.bf16.gmra.mxu0 %v515
    %v678 = vpop.f32.mrf.mxu0
    %v679 = vadd.f32 0.0, %v678
    %v680 = vpop.f32.mrf.mxu0
    %v681 = vpop.f32.mrf.mxu0
    %v682 = vadd.f32 0.0, %v681
    %v683 = vpop.f32.mrf.mxu0
    %684 = vmatprep.mubr.bf16.mxu0 0
    %685 = vmatmul.mubr.bf16.gmra.mxu0 %v518
    %v686 = vpop.f32.mrf.mxu0
    %v687 = vadd.f32 0.0, %v686
    %v688 = vpop.f32.mrf.mxu0
    %v689 = vpop.f32.mrf.mxu0
    %v690 = vadd.f32 0.0, %v689
    %v691 = vpop.f32.mrf.mxu0
    %692 = vmatprep.mubr.bf16.mxu0 0
    %693 = vmatmul.mubr.bf16.gmra.mxu0 %v521
    %v694 = vpop.f32.mrf.mxu0
    %v695 = vadd.f32 0.0, %v694
    %v696 = vpop.f32.mrf.mxu0
    %v697 = vpop.f32.mrf.mxu0
    %v698 = vadd.f32 0.0, %v697
    %v699 = vpop.f32.mrf.mxu0
    %700 = vmatprep.mubr.bf16.mxu0 0
    %701 = vmatmul.mubr.bf16.gmra.mxu0 %v524
    %v702 = vpop.f32.mrf.mxu0
    %v703 = vadd.f32 0.0, %v702
    %v704 = vpop.f32.mrf.mxu0
    %v705 = vpop.f32.mrf.mxu0
    %v706 = vadd.f32 0.0, %v705
    %v707 = vpop.f32.mrf.mxu0
    %708 = vmatprep.mubr.bf16.mxu0 0
    %709 = vmatmul.mubr.bf16.gmra.mxu0 %v527
    %v710 = vpop.f32.mrf.mxu0
    %v711 = vadd.f32 0.0, %v710
    %v712 = vpop.f32.mrf.mxu0
    %v713 = vpop.f32.mrf.mxu0
    %v714 = vadd.f32 0.0, %v713
    %v715 = vpop.f32.mrf.mxu0
    %716 = vmatprep.mubr.bf16.mxu0 0
    %717 = vmatmul.mubr.bf16.gmra.mxu0 %v530
    %v718 = vpop.f32.mrf.mxu0
    %v719 = vadd.f32 0.0, %v718
    %v720 = vpop.f32.mrf.mxu0
    %v721 = vpop.f32.mrf.mxu0
    %v722 = vadd.f32 0.0, %v721
    %v723 = vpop.f32.mrf.mxu0
    %724 = vmatprep.mubr.bf16.mxu0 0
    %725 = vmatmul.mubr.bf16.gmra.mxu0 %v533
    %v726 = vpop.f32.mrf.mxu0
    %v727 = vadd.f32 0.0, %v726
    %v728 = vpop.f32.mrf.mxu0
    %v729 = vpop.f32.mrf.mxu0
    %v730 = vadd.f32 0.0, %v729
    %v731 = vpop.f32.mrf.mxu0
    %732 = vmatprep.mubr.bf16.mxu0 0
    %733 = vmatmul.mubr.bf16.gmra.mxu0 %v536
    %v734 = vpop.f32.mrf.mxu0
    %v735 = vadd.f32 0.0, %v734
    %v736 = vpop.f32.mrf.mxu0
    %v737 = vpop.f32.mrf.mxu0
    %v738 = vadd.f32 0.0, %v737
    %v739 = vpop.f32.mrf.mxu0
    %740 = vmatprep.mubr.bf16.mxu0 0
    %741 = vmatmul.mubr.bf16.gmra.mxu0 %v539
    %v742 = vpop.f32.mrf.mxu0
    %v743 = vadd.f32 0.0, %v742
    %v744 = vpop.f32.mrf.mxu0
    %v745 = vpop.f32.mrf.mxu0
    %v746 = vadd.f32 0.0, %v745
    %v747 = vpop.f32.mrf.mxu0
    %748 = vmatprep.mubr.bf16.mxu0 0
    %749 = vmatmul.mubr.bf16.gmra.mxu0 %v542
    %v750 = vpop.f32.mrf.mxu0
    %v751 = vadd.f32 0.0, %v750
    %v752 = vpop.f32.mrf.mxu0
    %v753 = vpop.f32.mrf.mxu0
    %v754 = vadd.f32 0.0, %v753
    %v755 = vpop.f32.mrf.mxu0
    %756 = vmatprep.mubr.bf16.mxu0 0
    %757 = vmatmul.mubr.bf16.gmra.mxu0 %v545
    %v758 = vpop.f32.mrf.mxu0
    %v759 = vadd.f32 0.0, %v758
    %v760 = vpop.f32.mrf.mxu0
    %v761 = vpop.f32.mrf.mxu0
    %v762 = vadd.f32 0.0, %v761
    %v763 = vpop.f32.mrf.mxu0
    %764 = vmatprep.mubr.bf16.mxu0 0
    %765 = vmatmul.mubr.bf16.gmra.mxu0 %v548
    %v766 = vpop.f32.mrf.mxu0
    %v767 = vadd.f32 0.0, %v766
    %v768 = vpop.f32.mrf.mxu0
    %v769 = vpop.f32.mrf.mxu0
    %v770 = vadd.f32 0.0, %v769
    %v771 = vpop.f32.mrf.mxu0
    %772 = vmatprep.mubr.bf16.mxu0 0
    %773 = vmatmul.mubr.bf16.gmra.mxu0 %v551
    %v774 = vpop.f32.mrf.mxu0
    %v775 = vadd.f32 0.0, %v774
    %v776 = vpop.f32.mrf.mxu0
    %v777 = vpop.f32.mrf.mxu0
    %v778 = vadd.f32 0.0, %v777
    %v779 = vpop.f32.mrf.mxu0
    %780 = vmatprep.mubr.bf16.mxu0 0
    %781 = vmatmul.mubr.bf16.gmra.mxu0 %v554
    %v782 = vpop.f32.mrf.mxu0
    %v783 = vadd.f32 0.0, %v782
    %v784 = vpop.f32.mrf.mxu0
    %v785 = vpop.f32.mrf.mxu0
    %v786 = vadd.f32 0.0, %v785
    %v787 = vpop.f32.mrf.mxu0
    %788 = vmatprep.mubr.bf16.mxu0 0
    %789 = vmatmul.mubr.bf16.gmra.mxu0 %v557
    %v790 = vpop.f32.mrf.mxu0
    %v791 = vadd.f32 0.0, %v790
    %v792 = vpop.f32.mrf.mxu0
    %v793 = vpop.f32.mrf.mxu0
    %v794 = vadd.f32 0.0, %v793
    %v795 = vpop.f32.mrf.mxu0
    %796 = vmatprep.mubr.bf16.mxu0 0
    %797 = vmatmul.mubr.bf16.gmra.mxu0 %v560
    %v798 = vpop.f32.mrf.mxu0
    %v799 = vadd.f32 0.0, %v798
    %v800 = vpop.f32.mrf.mxu0
    %v801 = vpop.f32.mrf.mxu0
    %v802 = vadd.f32 0.0, %v801
    %v803 = vpop.f32.mrf.mxu0
    %804 = vmatprep.mubr.bf16.mxu0 0
    %805 = vmatmul.mubr.bf16.gmra.mxu0 %v563
    %v806 = vpop.f32.mrf.mxu0
    %v807 = vadd.f32 0.0, %v806
    %v808 = vpop.f32.mrf.mxu0
    %v809 = vpop.f32.mrf.mxu0
    %v810 = vadd.f32 0.0, %v809
    %v811 = vpop.f32.mrf.mxu0
    %812 = vmatprep.mubr.bf16.mxu0 0
    %813 = vmatmul.mubr.bf16.gmra.mxu0 %v566
    %v814 = vpop.f32.mrf.mxu0
    %v815 = vadd.f32 0.0, %v814
    %v816 = vpop.f32.mrf.mxu0
    %v817 = vpop.f32.mrf.mxu0
    %v818 = vadd.f32 0.0, %v817
    %v819 = vpop.f32.mrf.mxu0
    %820 = vmatprep.mubr.bf16.mxu0 0
    %821 = vmatmul.mubr.bf16.gmra.mxu0 %v569
    %v822 = vpop.f32.mrf.mxu0
    %v823 = vadd.f32 0.0, %v822
    %v824 = vpop.f32.mrf.mxu0
    %v825 = vpop.f32.mrf.mxu0
    %v826 = vadd.f32 0.0, %v825
    %v827 = vpop.f32.mrf.mxu0
    %828 = vmatprep.mubr.bf16.mxu0 0
    %829 = vmatmul.mubr.bf16.gmra.mxu0 %v572
    %v830 = vpop.f32.mrf.mxu0
    %v831 = vadd.f32 0.0, %v830
    %v832 = vpop.f32.mrf.mxu0
    %v833 = vpop.f32.mrf.mxu0
    %v834 = vadd.f32 0.0, %v833
    %v835 = vpop.f32.mrf.mxu0
    %836 = vmatprep.mubr.bf16.mxu0 0
    %837 = vmatmul.mubr.bf16.gmra.mxu0 %v575
    %v838 = vpop.f32.mrf.mxu0
    %v839 = vadd.f32 0.0, %v838
    %v840 = vpop.f32.mrf.mxu0
    %v841 = vpop.f32.mrf.mxu0
    %v842 = vadd.f32 0.0, %v841
    %v843 = vpop.f32.mrf.mxu0
    %844 = vmatprep.mubr.bf16.mxu0 0
    %845 = vmatmul.mubr.bf16.gmra.mxu0 %v578
    %v846 = vpop.f32.mrf.mxu0
    %v847 = vadd.f32 0.0, %v846
    %v848 = vpop.f32.mrf.mxu0
    %v849 = vpop.f32.mrf.mxu0
    %v850 = vadd.f32 0.0, %v849
    %v851 = vpop.f32.mrf.mxu0
    %852 = vmatprep.mubr.bf16.mxu0 0
    %853 = vmatmul.mubr.bf16.gmra.mxu0 %v581
    %v854 = vpop.f32.mrf.mxu0
    %v855 = vadd.f32 0.0, %v854
    %v856 = vpop.f32.mrf.mxu0
    %v857 = vpop.f32.mrf.mxu0
    %v858 = vadd.f32 0.0, %v857
    %v859 = vpop.f32.mrf.mxu0
    %860 = vmatprep.mubr.bf16.mxu0 0
    %861 = vmatmul.mubr.bf16.gmra.mxu0 %v584
    %v862 = vpop.f32.mrf.mxu0
    %v863 = vadd.f32 0.0, %v862
    %v864 = vpop.f32.mrf.mxu0
    %v865 = vpop.f32.mrf.mxu0
    %v866 = vadd.f32 0.0, %v865
    %v867 = vpop.f32.mrf.mxu0
    %868 = vmatprep.mubr.bf16.mxu0 0
    %869 = vmatmul.mubr.bf16.gmra.mxu0 %v587
    %v870 = vpop.f32.mrf.mxu0
    %v871 = vadd.f32 0.0, %v870
    %v872 = vpop.f32.mrf.mxu0
    %v873 = vpop.f32.mrf.mxu0
    %v874 = vadd.f32 0.0, %v873
    %v875 = vpop.f32.mrf.mxu0
    %876 = vmatprep.mubr.bf16.mxu0 0
    %877 = vmatmul.mubr.bf16.gmra.mxu0 %v590
    %v878 = vpop.f32.mrf.mxu0
    %v879 = vadd.f32 0.0, %v878
    %v880 = vpop.f32.mrf.mxu0
    %v881 = vpop.f32.mrf.mxu0
    %v882 = vadd.f32 0.0, %v881
    %v883 = vpop.f32.mrf.mxu0
    %884 = vdwg.mxu0
    %v887 = vunpack.c.l.b16 %v229
    %v888 = vunpack.c.l.b16 %v230
    %v889 = vpack.c.b16 %v888, %v887
    %v890 = vsel %vm495, %v197, 0
    %v892 = vsel %vm495, %v198, 0
    %v894 = vsel %vm495, %v199, 0
    %v896 = vsel %vm495, %v200, 0
    %v898 = vsel %vm495, %v201, 0
    %v900 = vsel %vm495, %v202, 0
    %v902 = vsel %vm495, %v203, 0
    %v904 = vsel %vm495, %v204, 0
    %v906 = vsel %vm495, %v205, 0
    %v908 = vsel %vm495, %v206, 0
    %v910 = vsel %vm495, %v207, 0
    %v912 = vsel %vm495, %v208, 0
    %v914 = vsel %vm495, %v209, 0
    %v916 = vsel %vm495, %v210, 0
    %v918 = vsel %vm495, %v211, 0
    %v920 = vsel %vm495, %v212, 0
    %v922 = vsel %vm495, %v213, 0
    %v924 = vsel %vm495, %v214, 0
    %v926 = vsel %vm495, %v215, 0
    %v928 = vsel %vm495, %v216, 0
    %v930 = vsel %vm495, %v217, 0
    %v932 = vsel %vm495, %v218, 0
    %v934 = vsel %vm495, %v219, 0
    %v936 = vsel %vm495, %v220, 0
    %v938 = vsel %vm495, %v221, 0
    %v940 = vsel %vm495, %v222, 0
    %v942 = vsel %vm495, %v223, 0
    %v944 = vsel %vm495, %v224, 0
    %v946 = vsel %vm495, %v225, 0
    %v948 = vsel %vm495, %v226, 0
    %v950 = vsel %vm495, %v227, 0
    %v952 = vsel %vm495, %v228, 0
    %v955 = vsel %vm592, %v889, 0
    %957 = vmatprep.subr.bf16.mxu0 0
    %958 = vmatpush1.bf16.msra.mxu0 0
    %959 = vmatprep.subr.bf16.mxu0 0
    %960 = vmatpush1.bf16.msra.mxu0 0
    %961 = vmatprep.subr.bf16.mxu0 0
    %962 = vmatpush1.bf16.msra.mxu0 0
    %963 = vmatprep.subr.bf16.mxu0 0
    %964 = vmatpush1.bf16.msra.mxu0 0
    %965 = vmatprep.subr.bf16.mxu0 0
    %966 = vmatpush1.bf16.msra.mxu0 0
    %967 = vmatprep.subr.bf16.mxu0 0
    %968 = vmatpush1.bf16.msra.mxu0 0
    %969 = vmatprep.subr.bf16.mxu0 0
    %970 = vmatpush1.bf16.msra.mxu0 0
    %971 = vmatprep.subr.bf16.mxu0 0
    %972 = vmatpush1.bf16.msra.mxu0 %v955
    %973 = vmatprep.subr.bf16.mxu0 0
    %974 = vmatpush2.bf16.msra.mxu0 0
    %975 = vmatprep.subr.bf16.mxu0 0
    %976 = vmatpush2.bf16.msra.mxu0 0
    %977 = vmatprep.subr.bf16.mxu0 0
    %978 = vmatpush2.bf16.msra.mxu0 0
    %979 = vmatprep.subr.bf16.mxu0 0
    %980 = vmatpush2.bf16.msra.mxu0 0
    %981 = vmatprep.subr.bf16.mxu0 0
    %982 = vmatpush2.bf16.msra.mxu0 0
    %983 = vmatprep.subr.bf16.mxu0 0
    %984 = vmatpush2.bf16.msra.mxu0 0
    %985 = vmatprep.subr.bf16.mxu0 0
    %986 = vmatpush2.bf16.msra.mxu0 0
    %987 = vmatprep.subr.bf16.mxu0 0
    %988 = vmatpush2.bf16.msra.mxu0 0
    %989 = vmatprep.mubr.bf16.mxu0 0
    %990 = vmatmul.mubr.bf16.gmra.mxu0 %v890
    %v991 = vpop.f32.mrf.mxu0
    %v992 = vadd.f32 %v631, %v991
    %v993 = vpop.f32.mrf.mxu0
    %v994 = vpop.f32.mrf.mxu0
    %v995 = vadd.f32 %v634, %v994
    %v996 = vpop.f32.mrf.mxu0
    %997 = vmatprep.mubr.bf16.mxu0 0
    %998 = vmatmul.mubr.bf16.gmra.mxu0 %v892
    %v999 = vpop.f32.mrf.mxu0
    %v1000 = vadd.f32 %v639, %v999
    %v1001 = vpop.f32.mrf.mxu0
    %v1002 = vpop.f32.mrf.mxu0
    %v1003 = vadd.f32 %v642, %v1002
    %v1004 = vpop.f32.mrf.mxu0
    %1005 = vmatprep.mubr.bf16.mxu0 0
    %1006 = vmatmul.mubr.bf16.gmra.mxu0 %v894
    %v1007 = vpop.f32.mrf.mxu0
    %v1008 = vadd.f32 %v647, %v1007
    %v1009 = vpop.f32.mrf.mxu0
    %v1010 = vpop.f32.mrf.mxu0
    %v1011 = vadd.f32 %v650, %v1010
    %v1012 = vpop.f32.mrf.mxu0
    %1013 = vmatprep.mubr.bf16.mxu0 0
    %1014 = vmatmul.mubr.bf16.gmra.mxu0 %v896
    %v1015 = vpop.f32.mrf.mxu0
    %v1016 = vadd.f32 %v655, %v1015
    %v1017 = vpop.f32.mrf.mxu0
    %v1018 = vpop.f32.mrf.mxu0
    %v1019 = vadd.f32 %v658, %v1018
    %v1020 = vpop.f32.mrf.mxu0
    %1021 = vmatprep.mubr.bf16.mxu0 0
    %1022 = vmatmul.mubr.bf16.gmra.mxu0 %v898
    %v1023 = vpop.f32.mrf.mxu0
    %v1024 = vadd.f32 %v663, %v1023
    %v1025 = vpop.f32.mrf.mxu0
    %v1026 = vpop.f32.mrf.mxu0
    %v1027 = vadd.f32 %v666, %v1026
    %v1028 = vpop.f32.mrf.mxu0
    %1029 = vmatprep.mubr.bf16.mxu0 0
    %1030 = vmatmul.mubr.bf16.gmra.mxu0 %v900
    %v1031 = vpop.f32.mrf.mxu0
    %v1032 = vadd.f32 %v671, %v1031
    %v1033 = vpop.f32.mrf.mxu0
    %v1034 = vpop.f32.mrf.mxu0
    %v1035 = vadd.f32 %v674, %v1034
    %v1036 = vpop.f32.mrf.mxu0
    %1037 = vmatprep.mubr.bf16.mxu0 0
    %1038 = vmatmul.mubr.bf16.gmra.mxu0 %v902
    %v1039 = vpop.f32.mrf.mxu0
    %v1040 = vadd.f32 %v679, %v1039
    %v1041 = vpop.f32.mrf.mxu0
    %v1042 = vpop.f32.mrf.mxu0
    %v1043 = vadd.f32 %v682, %v1042
    %v1044 = vpop.f32.mrf.mxu0
    %1045 = vmatprep.mubr.bf16.mxu0 0
    %1046 = vmatmul.mubr.bf16.gmra.mxu0 %v904
    %v1047 = vpop.f32.mrf.mxu0
    %v1048 = vadd.f32 %v687, %v1047
    %v1049 = vpop.f32.mrf.mxu0
    %v1050 = vpop.f32.mrf.mxu0
    %v1051 = vadd.f32 %v690, %v1050
    %v1052 = vpop.f32.mrf.mxu0
    %1053 = vmatprep.mubr.bf16.mxu0 0
    %1054 = vmatmul.mubr.bf16.gmra.mxu0 %v906
    %v1055 = vpop.f32.mrf.mxu0
    %v1056 = vadd.f32 %v695, %v1055
    %v1057 = vpop.f32.mrf.mxu0
    %v1058 = vpop.f32.mrf.mxu0
    %v1059 = vadd.f32 %v698, %v1058
    %v1060 = vpop.f32.mrf.mxu0
    %1061 = vmatprep.mubr.bf16.mxu0 0
    %1062 = vmatmul.mubr.bf16.gmra.mxu0 %v908
    %v1063 = vpop.f32.mrf.mxu0
    %v1064 = vadd.f32 %v703, %v1063
    %v1065 = vpop.f32.mrf.mxu0
    %v1066 = vpop.f32.mrf.mxu0
    %v1067 = vadd.f32 %v706, %v1066
    %v1068 = vpop.f32.mrf.mxu0
    %1069 = vmatprep.mubr.bf16.mxu0 0
    %1070 = vmatmul.mubr.bf16.gmra.mxu0 %v910
    %v1071 = vpop.f32.mrf.mxu0
    %v1072 = vadd.f32 %v711, %v1071
    %v1073 = vpop.f32.mrf.mxu0
    %v1074 = vpop.f32.mrf.mxu0
    %v1075 = vadd.f32 %v714, %v1074
    %v1076 = vpop.f32.mrf.mxu0
    %1077 = vmatprep.mubr.bf16.mxu0 0
    %1078 = vmatmul.mubr.bf16.gmra.mxu0 %v912
    %v1079 = vpop.f32.mrf.mxu0
    %v1080 = vadd.f32 %v719, %v1079
    %v1081 = vpop.f32.mrf.mxu0
    %v1082 = vpop.f32.mrf.mxu0
    %v1083 = vadd.f32 %v722, %v1082
    %v1084 = vpop.f32.mrf.mxu0
    %1085 = vmatprep.mubr.bf16.mxu0 0
    %1086 = vmatmul.mubr.bf16.gmra.mxu0 %v914
    %v1087 = vpop.f32.mrf.mxu0
    %v1088 = vadd.f32 %v727, %v1087
    %v1089 = vpop.f32.mrf.mxu0
    %v1090 = vpop.f32.mrf.mxu0
    %v1091 = vadd.f32 %v730, %v1090
    %v1092 = vpop.f32.mrf.mxu0
    %1093 = vmatprep.mubr.bf16.mxu0 0
    %1094 = vmatmul.mubr.bf16.gmra.mxu0 %v916
    %v1095 = vpop.f32.mrf.mxu0
    %v1096 = vadd.f32 %v735, %v1095
    %v1097 = vpop.f32.mrf.mxu0
    %v1098 = vpop.f32.mrf.mxu0
    %v1099 = vadd.f32 %v738, %v1098
    %v1100 = vpop.f32.mrf.mxu0
    %1101 = vmatprep.mubr.bf16.mxu0 0
    %1102 = vmatmul.mubr.bf16.gmra.mxu0 %v918
    %v1103 = vpop.f32.mrf.mxu0
    %v1104 = vadd.f32 %v743, %v1103
    %v1105 = vpop.f32.mrf.mxu0
    %v1106 = vpop.f32.mrf.mxu0
    %v1107 = vadd.f32 %v746, %v1106
    %v1108 = vpop.f32.mrf.mxu0
    %1109 = vmatprep.mubr.bf16.mxu0 0
    %1110 = vmatmul.mubr.bf16.gmra.mxu0 %v920
    %v1111 = vpop.f32.mrf.mxu0
    %v1112 = vadd.f32 %v751, %v1111
    %v1113 = vpop.f32.mrf.mxu0
    %v1114 = vpop.f32.mrf.mxu0
    %v1115 = vadd.f32 %v754, %v1114
    %v1116 = vpop.f32.mrf.mxu0
    %1117 = vmatprep.mubr.bf16.mxu0 0
    %1118 = vmatmul.mubr.bf16.gmra.mxu0 %v922
    %v1119 = vpop.f32.mrf.mxu0
    %v1120 = vadd.f32 %v759, %v1119
    %v1121 = vpop.f32.mrf.mxu0
    %v1122 = vpop.f32.mrf.mxu0
    %v1123 = vadd.f32 %v762, %v1122
    %v1124 = vpop.f32.mrf.mxu0
    %1125 = vmatprep.mubr.bf16.mxu0 0
    %1126 = vmatmul.mubr.bf16.gmra.mxu0 %v924
    %v1127 = vpop.f32.mrf.mxu0
    %v1128 = vadd.f32 %v767, %v1127
    %v1129 = vpop.f32.mrf.mxu0
    %v1130 = vpop.f32.mrf.mxu0
    %v1131 = vadd.f32 %v770, %v1130
    %v1132 = vpop.f32.mrf.mxu0
    %1133 = vmatprep.mubr.bf16.mxu0 0
    %1134 = vmatmul.mubr.bf16.gmra.mxu0 %v926
    %v1135 = vpop.f32.mrf.mxu0
    %v1136 = vadd.f32 %v775, %v1135
    %v1137 = vpop.f32.mrf.mxu0
    %v1138 = vpop.f32.mrf.mxu0
    %v1139 = vadd.f32 %v778, %v1138
    %v1140 = vpop.f32.mrf.mxu0
    %1141 = vmatprep.mubr.bf16.mxu0 0
    %1142 = vmatmul.mubr.bf16.gmra.mxu0 %v928
    %v1143 = vpop.f32.mrf.mxu0
    %v1144 = vadd.f32 %v783, %v1143
    %v1145 = vpop.f32.mrf.mxu0
    %v1146 = vpop.f32.mrf.mxu0
    %v1147 = vadd.f32 %v786, %v1146
    %v1148 = vpop.f32.mrf.mxu0
    %1149 = vmatprep.mubr.bf16.mxu0 0
    %1150 = vmatmul.mubr.bf16.gmra.mxu0 %v930
    %v1151 = vpop.f32.mrf.mxu0
    %v1152 = vadd.f32 %v791, %v1151
    %v1153 = vpop.f32.mrf.mxu0
    %v1154 = vpop.f32.mrf.mxu0
    %v1155 = vadd.f32 %v794, %v1154
    %v1156 = vpop.f32.mrf.mxu0
    %1157 = vmatprep.mubr.bf16.mxu0 0
    %1158 = vmatmul.mubr.bf16.gmra.mxu0 %v932
    %v1159 = vpop.f32.mrf.mxu0
    %v1160 = vadd.f32 %v799, %v1159
    %v1161 = vpop.f32.mrf.mxu0
    %v1162 = vpop.f32.mrf.mxu0
    %v1163 = vadd.f32 %v802, %v1162
    %v1164 = vpop.f32.mrf.mxu0
    %1165 = vmatprep.mubr.bf16.mxu0 0
    %1166 = vmatmul.mubr.bf16.gmra.mxu0 %v934
    %v1167 = vpop.f32.mrf.mxu0
    %v1168 = vadd.f32 %v807, %v1167
    %v1169 = vpop.f32.mrf.mxu0
    %v1170 = vpop.f32.mrf.mxu0
    %v1171 = vadd.f32 %v810, %v1170
    %v1172 = vpop.f32.mrf.mxu0
    %1173 = vmatprep.mubr.bf16.mxu0 0
    %1174 = vmatmul.mubr.bf16.gmra.mxu0 %v936
    %v1175 = vpop.f32.mrf.mxu0
    %v1176 = vadd.f32 %v815, %v1175
    %v1177 = vpop.f32.mrf.mxu0
    %v1178 = vpop.f32.mrf.mxu0
    %v1179 = vadd.f32 %v818, %v1178
    %v1180 = vpop.f32.mrf.mxu0
    %1181 = vmatprep.mubr.bf16.mxu0 0
    %1182 = vmatmul.mubr.bf16.gmra.mxu0 %v938
    %v1183 = vpop.f32.mrf.mxu0
    %v1184 = vadd.f32 %v823, %v1183
    %v1185 = vpop.f32.mrf.mxu0
    %v1186 = vpop.f32.mrf.mxu0
    %v1187 = vadd.f32 %v826, %v1186
    %v1188 = vpop.f32.mrf.mxu0
    %1189 = vmatprep.mubr.bf16.mxu0 0
    %1190 = vmatmul.mubr.bf16.gmra.mxu0 %v940
    %v1191 = vpop.f32.mrf.mxu0
    %v1192 = vadd.f32 %v831, %v1191
    %v1193 = vpop.f32.mrf.mxu0
    %v1194 = vpop.f32.mrf.mxu0
    %v1195 = vadd.f32 %v834, %v1194
    %v1196 = vpop.f32.mrf.mxu0
    %1197 = vmatprep.mubr.bf16.mxu0 0
    %1198 = vmatmul.mubr.bf16.gmra.mxu0 %v942
    %v1199 = vpop.f32.mrf.mxu0
    %v1200 = vadd.f32 %v839, %v1199
    %v1201 = vpop.f32.mrf.mxu0
    %v1202 = vpop.f32.mrf.mxu0
    %v1203 = vadd.f32 %v842, %v1202
    %v1204 = vpop.f32.mrf.mxu0
    %1205 = vmatprep.mubr.bf16.mxu0 0
    %1206 = vmatmul.mubr.bf16.gmra.mxu0 %v944
    %v1207 = vpop.f32.mrf.mxu0
    %v1208 = vadd.f32 %v847, %v1207
    %v1209 = vpop.f32.mrf.mxu0
    %v1210 = vpop.f32.mrf.mxu0
    %v1211 = vadd.f32 %v850, %v1210
    %v1212 = vpop.f32.mrf.mxu0
    %1213 = vmatprep.mubr.bf16.mxu0 0
    %1214 = vmatmul.mubr.bf16.gmra.mxu0 %v946
    %v1215 = vpop.f32.mrf.mxu0
    %v1216 = vadd.f32 %v855, %v1215
    %v1217 = vpop.f32.mrf.mxu0
    %v1218 = vpop.f32.mrf.mxu0
    %v1219 = vadd.f32 %v858, %v1218
    %v1220 = vpop.f32.mrf.mxu0
    %1221 = vmatprep.mubr.bf16.mxu0 0
    %1222 = vmatmul.mubr.bf16.gmra.mxu0 %v948
    %v1223 = vpop.f32.mrf.mxu0
    %v1224 = vadd.f32 %v863, %v1223
    %v1225 = vpop.f32.mrf.mxu0
    %v1226 = vpop.f32.mrf.mxu0
    %v1227 = vadd.f32 %v866, %v1226
    %v1228 = vpop.f32.mrf.mxu0
    %1229 = vmatprep.mubr.bf16.mxu0 0
    %1230 = vmatmul.mubr.bf16.gmra.mxu0 %v950
    %v1231 = vpop.f32.mrf.mxu0
    %v1232 = vadd.f32 %v871, %v1231
    %v1233 = vpop.f32.mrf.mxu0
    %v1234 = vpop.f32.mrf.mxu0
    %v1235 = vadd.f32 %v874, %v1234
    %v1236 = vpop.f32.mrf.mxu0
    %1237 = vmatprep.mubr.bf16.mxu0 0
    %1238 = vmatmul.mubr.bf16.gmra.mxu0 %v952
    %v1239 = vpop.f32.mrf.mxu0
    %v1240 = vadd.f32 %v879, %v1239
    %v1241 = vpop.f32.mrf.mxu0
    %v1242 = vpop.f32.mrf.mxu0
    %v1243 = vadd.f32 %v882, %v1242
    %v1244 = vpop.f32.mrf.mxu0
    %1245 = vdwg.mxu0
    %v1246 = vld [vmem:[%s7] sm:$0x1]
    %v1248 = vlaneseq
    %v1249 = vshrl.u32 %v1248, 7
    %v1250 = vsub.s32 0, %v1249
    %v1251 = vrot.slane %v1246, %v1250
    %v1253 = vadd.f32 %v992, %v1251
    %v1254 = vadd.f32 %v995, %v1251
    %v1255 = vadd.f32 %v1000, %v1251
    %v1256 = vadd.f32 %v1003, %v1251
    %v1257 = vadd.f32 %v1008, %v1251
    %v1258 = vadd.f32 %v1011, %v1251
    %v1259 = vadd.f32 %v1016, %v1251
    %v1260 = vadd.f32 %v1019, %v1251
    %v1261 = vadd.f32 %v1024, %v1251
    %v1262 = vadd.f32 %v1027, %v1251
    %v1263 = vadd.f32 %v1032, %v1251
    %v1264 = vadd.f32 %v1035, %v1251
    %v1265 = vadd.f32 %v1040, %v1251
    %v1266 = vadd.f32 %v1043, %v1251
    %v1267 = vadd.f32 %v1048, %v1251
    %v1268 = vadd.f32 %v1051, %v1251
    %v1269 = vadd.f32 %v1056, %v1251
    %v1270 = vadd.f32 %v1059, %v1251
    %v1271 = vadd.f32 %v1064, %v1251
    %v1272 = vadd.f32 %v1067, %v1251
    %v1273 = vadd.f32 %v1072, %v1251
    %v1274 = vadd.f32 %v1075, %v1251
    %v1275 = vadd.f32 %v1080, %v1251
    %v1276 = vadd.f32 %v1083, %v1251
    %v1277 = vadd.f32 %v1088, %v1251
    %v1278 = vadd.f32 %v1091, %v1251
    %v1279 = vadd.f32 %v1096, %v1251
    %v1280 = vadd.f32 %v1099, %v1251
    %v1281 = vadd.f32 %v1104, %v1251
    %v1282 = vadd.f32 %v1107, %v1251
    %v1283 = vadd.f32 %v1112, %v1251
    %v1284 = vadd.f32 %v1115, %v1251
    %v1285 = vadd.f32 %v1120, %v1251
    %v1286 = vadd.f32 %v1123, %v1251
    %v1287 = vadd.f32 %v1128, %v1251
    %v1288 = vadd.f32 %v1131, %v1251
    %v1289 = vadd.f32 %v1136, %v1251
    %v1290 = vadd.f32 %v1139, %v1251
    %v1291 = vadd.f32 %v1144, %v1251
    %v1292 = vadd.f32 %v1147, %v1251
    %v1293 = vadd.f32 %v1152, %v1251
    %v1294 = vadd.f32 %v1155, %v1251
    %v1295 = vadd.f32 %v1160, %v1251
    %v1296 = vadd.f32 %v1163, %v1251
    %v1297 = vadd.f32 %v1168, %v1251
    %v1298 = vadd.f32 %v1171, %v1251
    %v1299 = vadd.f32 %v1176, %v1251
    %v1300 = vadd.f32 %v1179, %v1251
    %v1301 = vadd.f32 %v1184, %v1251
    %v1302 = vadd.f32 %v1187, %v1251
    %v1303 = vadd.f32 %v1192, %v1251
    %v1304 = vadd.f32 %v1195, %v1251
    %v1305 = vadd.f32 %v1200, %v1251
    %v1306 = vadd.f32 %v1203, %v1251
    %v1307 = vadd.f32 %v1208, %v1251
    %v1308 = vadd.f32 %v1211, %v1251
    %v1309 = vadd.f32 %v1216, %v1251
    %v1310 = vadd.f32 %v1219, %v1251
    %v1311 = vadd.f32 %v1224, %v1251
    %v1312 = vadd.f32 %v1227, %v1251
    %v1313 = vadd.f32 %v1232, %v1251
    %v1314 = vadd.f32 %v1235, %v1251
    %v1315 = vadd.f32 %v1240, %v1251
    %v1316 = vadd.f32 %v1243, %v1251
    %v1317 = vpack.c.bf16 %v1254, %v1253
    %v1318 = vpack.c.bf16 %v1256, %v1255
    %v1319 = vpack.c.bf16 %v1258, %v1257
    %v1320 = vpack.c.bf16 %v1260, %v1259
    %v1321 = vpack.c.bf16 %v1262, %v1261
    %v1322 = vpack.c.bf16 %v1264, %v1263
    %v1323 = vpack.c.bf16 %v1266, %v1265
    %v1324 = vpack.c.bf16 %v1268, %v1267
    %v1325 = vpack.c.bf16 %v1270, %v1269
    %v1326 = vpack.c.bf16 %v1272, %v1271
    %v1327 = vpack.c.bf16 %v1274, %v1273
    %v1328 = vpack.c.bf16 %v1276, %v1275
    %v1329 = vpack.c.bf16 %v1278, %v1277
    %v1330 = vpack.c.bf16 %v1280, %v1279
    %v1331 = vpack.c.bf16 %v1282, %v1281
    %v1332 = vpack.c.bf16 %v1284, %v1283
    %v1333 = vpack.c.bf16 %v1286, %v1285
    %v1334 = vpack.c.bf16 %v1288, %v1287
    %v1335 = vpack.c.bf16 %v1290, %v1289
    %v1336 = vpack.c.bf16 %v1292, %v1291
    %v1337 = vpack.c.bf16 %v1294, %v1293
    %v1338 = vpack.c.bf16 %v1296, %v1295
    %v1339 = vpack.c.bf16 %v1298, %v1297
    %v1340 = vpack.c.bf16 %v1300, %v1299
    %v1341 = vpack.c.bf16 %v1302, %v1301
    %v1342 = vpack.c.bf16 %v1304, %v1303
    %v1343 = vpack.c.bf16 %v1306, %v1305
    %v1344 = vpack.c.bf16 %v1308, %v1307
    %v1345 = vpack.c.bf16 %v1310, %v1309
    %v1346 = vpack.c.bf16 %v1312, %v1311
    %v1347 = vpack.c.bf16 %v1314, %v1313
    %v1348 = vpack.c.bf16 %v1316, %v1315
    %v1349 = vld [vmem:[#allocation6] sm:$0xff]
    %v1350 = vld [vmem:[#allocation6 + $0x8] sm:$0xff]
    %v1351 = vld [vmem:[#allocation6 + $0x10] sm:$0xff]
    %v1352 = vld [vmem:[#allocation6 + $0x18] sm:$0xff]
    %v1353 = vld [vmem:[#allocation6 + $0x20] sm:$0xff]
    %v1354 = vld [vmem:[#allocation6 + $0x28] sm:$0xff]
    %v1355 = vld [vmem:[#allocation6 + $0x30] sm:$0xff]
    %v1356 = vld [vmem:[#allocation6 + $0x38] sm:$0xff]
    %v1357 = vld [vmem:[#allocation6 + $0x40] sm:$0xff]
    %v1358 = vld [vmem:[#allocation6 + $0x48] sm:$0xff]
    %v1359 = vld [vmem:[#allocation6 + $0x50] sm:$0xff]
    %v1360 = vld [vmem:[#allocation6 + $0x58] sm:$0xff]
    %v1361 = vld [vmem:[#allocation6 + $0x60] sm:$0xff]
    %s1362 = scalar_lea.vmem [#allocation6], 104
    %v1363 = vld [vmem:[%s1362] sm:$0xff]
    %v1364 = vld [vmem:[%s1362 + $0x8] sm:$0xff]
    %v1365 = vld [vmem:[%s1362 + $0x10] sm:$0xff]
    %v1366 = vld [vmem:[%s1362 + $0x18] sm:$0xff]
    %v1367 = vld [vmem:[%s1362 + $0x20] sm:$0xff]
    %v1368 = vld [vmem:[%s1362 + $0x28] sm:$0xff]
    %v1369 = vld [vmem:[%s1362 + $0x30] sm:$0xff]
    %v1370 = vld [vmem:[%s1362 + $0x38] sm:$0xff]
    %v1371 = vld [vmem:[%s1362 + $0x40] sm:$0xff]
    %v1372 = vld [vmem:[%s1362 + $0x48] sm:$0xff]
    %v1373 = vld [vmem:[%s1362 + $0x50] sm:$0xff]
    %v1374 = vld [vmem:[%s1362 + $0x58] sm:$0xff]
    %v1375 = vld [vmem:[%s1362 + $0x60] sm:$0xff]
    %v1377 = vshrl.u32 %v1317, 16
    %v1379 = vshll.u32 %v1317, 16
    %v1381 = vrot.slane %v1379, 1
    %v1382 = vor.u32 %v1377, %v1381
    %v1384 = vshll.u32 %v1318, 16
    %v1386 = vrot.slane %v1384, 1
    %v1387 = vsel %vm234, %v1382, %v1386
    %v1388 = vshrl.u32 %v1318, 16
    %v1390 = vor.u32 %v1388, %v1386
    %v1392 = vshll.u32 %v1319, 16
    %v1394 = vrot.slane %v1392, 1
    %v1395 = vsel %vm234, %v1390, %v1394
    %v1396 = vshrl.u32 %v1319, 16
    %v1398 = vor.u32 %v1396, %v1394
    %v1400 = vshll.u32 %v1320, 16
    %v1402 = vrot.slane %v1400, 1
    %v1403 = vsel %vm234, %v1398, %v1402
    %v1404 = vshrl.u32 %v1320, 16
    %v1406 = vor.u32 %v1404, %v1402
    %v1408 = vshll.u32 %v1321, 16
    %v1410 = vrot.slane %v1408, 1
    %v1411 = vsel %vm234, %v1406, %v1410
    %v1412 = vshrl.u32 %v1321, 16
    %v1414 = vor.u32 %v1412, %v1410
    %v1416 = vshll.u32 %v1322, 16
    %v1418 = vrot.slane %v1416, 1
    %v1419 = vsel %vm234, %v1414, %v1418
    %v1420 = vshrl.u32 %v1322, 16
    %v1422 = vor.u32 %v1420, %v1418
    %v1424 = vshll.u32 %v1323, 16
    %v1426 = vrot.slane %v1424, 1
    %v1427 = vsel %vm234, %v1422, %v1426
    %v1428 = vshrl.u32 %v1323, 16
    %v1430 = vor.u32 %v1428, %v1426
    %v1432 = vshll.u32 %v1324, 16
    %v1434 = vrot.slane %v1432, 1
    %v1435 = vsel %vm234, %v1430, %v1434
    %v1436 = vshrl.u32 %v1324, 16
    %v1438 = vor.u32 %v1436, %v1434
    %v1440 = vshll.u32 %v1325, 16
    %v1442 = vrot.slane %v1440, 1
    %v1443 = vsel %vm234, %v1438, %v1442
    %v1444 = vshrl.u32 %v1325, 16
    %v1446 = vor.u32 %v1444, %v1442
    %v1448 = vshll.u32 %v1326, 16
    %v1450 = vrot.slane %v1448, 1
    %v1451 = vsel %vm234, %v1446, %v1450
    %v1452 = vshrl.u32 %v1326, 16
    %v1454 = vor.u32 %v1452, %v1450
    %v1456 = vshll.u32 %v1327, 16
    %v1458 = vrot.slane %v1456, 1
    %v1459 = vsel %vm234, %v1454, %v1458
    %v1460 = vshrl.u32 %v1327, 16
    %v1462 = vor.u32 %v1460, %v1458
    %v1464 = vshll.u32 %v1328, 16
    %v1466 = vrot.slane %v1464, 1
    %v1467 = vsel %vm234, %v1462, %v1466
    %v1468 = vshrl.u32 %v1328, 16
    %v1470 = vor.u32 %v1468, %v1466
    %v1472 = vshll.u32 %v1329, 16
    %v1474 = vrot.slane %v1472, 1
    %v1475 = vsel %vm234, %v1470, %v1474
    %v1476 = vshrl.u32 %v1329, 16
    %v1478 = vor.u32 %v1476, %v1474
    %v1480 = vshll.u32 %v1330, 16
    %v1482 = vrot.slane %v1480, 1
    %v1483 = vsel %vm234, %v1478, %v1482
    %v1484 = vshrl.u32 %v1330, 16
    %v1486 = vor.u32 %v1484, %v1482
    %v1488 = vshll.u32 %v1331, 16
    %v1490 = vrot.slane %v1488, 1
    %v1491 = vsel %vm234, %v1486, %v1490
    %v1492 = vshrl.u32 %v1331, 16
    %v1494 = vor.u32 %v1492, %v1490
    %v1496 = vshll.u32 %v1332, 16
    %v1498 = vrot.slane %v1496, 1
    %v1499 = vsel %vm234, %v1494, %v1498
    %v1500 = vshrl.u32 %v1332, 16
    %v1502 = vor.u32 %v1500, %v1498
    %v1504 = vshll.u32 %v1333, 16
    %v1506 = vrot.slane %v1504, 1
    %v1507 = vsel %vm234, %v1502, %v1506
    %v1508 = vshrl.u32 %v1333, 16
    %v1510 = vor.u32 %v1508, %v1506
    %v1512 = vshll.u32 %v1334, 16
    %v1514 = vrot.slane %v1512, 1
    %v1515 = vsel %vm234, %v1510, %v1514
    %v1516 = vshrl.u32 %v1334, 16
    %v1518 = vor.u32 %v1516, %v1514
    %v1520 = vshll.u32 %v1335, 16
    %v1522 = vrot.slane %v1520, 1
    %v1523 = vsel %vm234, %v1518, %v1522
    %v1524 = vshrl.u32 %v1335, 16
    %v1526 = vor.u32 %v1524, %v1522
    %v1528 = vshll.u32 %v1336, 16
    %v1530 = vrot.slane %v1528, 1
    %v1531 = vsel %vm234, %v1526, %v1530
    %v1532 = vshrl.u32 %v1336, 16
    %v1534 = vor.u32 %v1532, %v1530
    %v1536 = vshll.u32 %v1337, 16
    %v1538 = vrot.slane %v1536, 1
    %v1539 = vsel %vm234, %v1534, %v1538
    %v1540 = vshrl.u32 %v1337, 16
    %v1542 = vor.u32 %v1540, %v1538
    %v1544 = vshll.u32 %v1338, 16
    %v1546 = vrot.slane %v1544, 1
    %v1547 = vsel %vm234, %v1542, %v1546
    %v1548 = vshrl.u32 %v1338, 16
    %v1550 = vor.u32 %v1548, %v1546
    %v1552 = vshll.u32 %v1339, 16
    %v1554 = vrot.slane %v1552, 1
    %v1555 = vsel %vm234, %v1550, %v1554
    %v1556 = vshrl.u32 %v1339, 16
    %v1558 = vor.u32 %v1556, %v1554
    %v1560 = vshll.u32 %v1340, 16
    %v1562 = vrot.slane %v1560, 1
    %v1563 = vsel %vm234, %v1558, %v1562
    %v1564 = vshrl.u32 %v1340, 16
    %v1566 = vor.u32 %v1564, %v1562
    %v1568 = vshll.u32 %v1341, 16
    %v1570 = vrot.slane %v1568, 1
    %v1571 = vsel %vm234, %v1566, %v1570
    %v1572 = vshrl.u32 %v1341, 16
    %v1574 = vor.u32 %v1572, %v1570
    %v1576 = vshll.u32 %v1342, 16
    %v1578 = vrot.slane %v1576, 1
    %v1579 = vsel %vm234, %v1574, %v1578
    %v1580 = vshrl.u32 %v1342, 16
    %v1582 = vor.u32 %v1580, %v1578
    %v1584 = vshll.u32 %v1343, 16
    %v1586 = vrot.slane %v1584, 1
    %v1587 = vsel %vm234, %v1582, %v1586
    %v1588 = vshrl.u32 %v1343, 16
    %v1590 = vor.u32 %v1588, %v1586
    %v1592 = vshll.u32 %v1344, 16
    %v1594 = vrot.slane %v1592, 1
    %v1595 = vsel %vm234, %v1590, %v1594
    %v1596 = vshrl.u32 %v1344, 16
    %v1598 = vor.u32 %v1596, %v1594
    %v1600 = vshll.u32 %v1345, 16
    %v1602 = vrot.slane %v1600, 1
    %v1603 = vsel %vm234, %v1598, %v1602
    %v1604 = vshrl.u32 %v1345, 16
    %v1606 = vor.u32 %v1604, %v1602
    %v1608 = vshll.u32 %v1346, 16
    %v1610 = vrot.slane %v1608, 1
    %v1611 = vsel %vm234, %v1606, %v1610
    %v1612 = vshrl.u32 %v1346, 16
    %v1614 = vor.u32 %v1612, %v1610
    %v1616 = vshll.u32 %v1347, 16
    %v1618 = vrot.slane %v1616, 1
    %v1619 = vsel %vm234, %v1614, %v1618
    %v1620 = vshrl.u32 %v1347, 16
    %v1622 = vor.u32 %v1620, %v1618
    %v1624 = vshll.u32 %v1348, 16
    %v1626 = vrot.slane %v1624, 1
    %v1627 = vsel %vm234, %v1622, %v1626
    %v1628 = vshrl.u32 %v1348, 16
    %v1630 = vor.u32 %v1628, %v1626
    %v1644 = vunpack.c.l.b16 %v1363
    %v1645 = vunpack.c.h.b16 %v1363
    %v1646 = vunpack.c.l.b16 %v1364
    %v1647 = vunpack.c.h.b16 %v1364
    %v1648 = vunpack.c.l.b16 %v1365
    %v1649 = vunpack.c.h.b16 %v1365
    %v1650 = vunpack.c.l.b16 %v1366
    %v1651 = vunpack.c.h.b16 %v1366
    %v1652 = vunpack.c.l.b16 %v1367
    %v1653 = vunpack.c.h.b16 %v1367
    %v1654 = vunpack.c.l.b16 %v1368
    %v1655 = vunpack.c.h.b16 %v1368
    %v1656 = vunpack.c.l.b16 %v1369
    %v1657 = vunpack.c.h.b16 %v1369
    %v1658 = vunpack.c.l.b16 %v1370
    %v1659 = vunpack.c.h.b16 %v1370
    %v1660 = vunpack.c.l.b16 %v1371
    %v1661 = vunpack.c.h.b16 %v1371
    %v1662 = vunpack.c.l.b16 %v1372
    %v1663 = vunpack.c.h.b16 %v1372
    %v1664 = vunpack.c.l.b16 %v1373
    %v1665 = vunpack.c.h.b16 %v1373
    %v1666 = vunpack.c.l.b16 %v1374
    %v1667 = vunpack.c.h.b16 %v1374
    %v1668 = vunpack.c.l.b16 %v1375
    %v1669 = vunpack.c.h.b16 %v1375
    %v1670 = vpack.c.b16 %v1646, %v1644
    %v1671 = vpack.c.b16 %v1647, %v1645
    %v1672 = vpack.c.b16 %v1650, %v1648
    %v1673 = vpack.c.b16 %v1651, %v1649
    %v1674 = vpack.c.b16 %v1654, %v1652
    %v1675 = vpack.c.b16 %v1655, %v1653
    %v1676 = vpack.c.b16 %v1658, %v1656
    %v1677 = vpack.c.b16 %v1659, %v1657
    %v1678 = vpack.c.b16 %v1662, %v1660
    %v1679 = vpack.c.b16 %v1663, %v1661
    %v1680 = vpack.c.b16 %v1666, %v1664
    %v1681 = vpack.c.b16 %v1667, %v1665
    %v1682 = vpack.c.b16 %v1668, %v1668
    %v1683 = vpack.c.b16 %v1669, %v1669
    %vm1696 = vcmask 850944
    %v1698 = vsel %vm1696, %v1387, 0
    %v1701 = vsel %vm1696, %v1395, 0
    %v1704 = vsel %vm1696, %v1403, 0
    %v1707 = vsel %vm1696, %v1411, 0
    %v1710 = vsel %vm1696, %v1419, 0
    %v1713 = vsel %vm1696, %v1427, 0
    %v1716 = vsel %vm1696, %v1435, 0
    %v1719 = vsel %vm1696, %v1443, 0
    %v1722 = vsel %vm1696, %v1451, 0
    %v1725 = vsel %vm1696, %v1459, 0
    %v1728 = vsel %vm1696, %v1467, 0
    %v1731 = vsel %vm1696, %v1475, 0
    %v1734 = vsel %vm1696, %v1483, 0
    %v1737 = vsel %vm1696, %v1491, 0
    %v1740 = vsel %vm1696, %v1499, 0
    %v1743 = vsel %vm1696, %v1507, 0
    %v1746 = vsel %vm1696, %v1515, 0
    %v1749 = vsel %vm1696, %v1523, 0
    %v1752 = vsel %vm1696, %v1531, 0
    %v1755 = vsel %vm1696, %v1539, 0
    %v1758 = vsel %vm1696, %v1547, 0
    %v1761 = vsel %vm1696, %v1555, 0
    %v1764 = vsel %vm1696, %v1563, 0
    %v1767 = vsel %vm1696, %v1571, 0
    %v1770 = vsel %vm1696, %v1579, 0
    %v1773 = vsel %vm1696, %v1587, 0
    %v1776 = vsel %vm1696, %v1595, 0
    %v1779 = vsel %vm1696, %v1603, 0
    %v1782 = vsel %vm1696, %v1611, 0
    %v1785 = vsel %vm1696, %v1619, 0
    %v1788 = vsel %vm1696, %v1627, 0
    %v1791 = vsel %vm1696, %v1630, 0
    %vm1793 = vcmask 1043456
    %v1795 = vsel %vm1793, %v1682, 0
    %v1798 = vsel %vm1793, %v1683, 0
    %1800 = vmatprep.subr.bf16.mxu0 0
    %1801 = vmatpush1.bf16.msra.mxu0 0
    %1802 = vmatprep.subr.bf16.mxu0 %v1798
    %1803 = vmatpush1.bf16.msra.mxu0 %v1795
    %1804 = vmatprep.subr.bf16.mxu0 %v1681
    %1805 = vmatpush1.bf16.msra.mxu0 %v1680
    %1806 = vmatprep.subr.bf16.mxu0 %v1679
    %1807 = vmatpush1.bf16.msra.mxu0 %v1678
    %1808 = vmatprep.subr.bf16.mxu0 %v1677
    %1809 = vmatpush1.bf16.msra.mxu0 %v1676
    %1810 = vmatprep.subr.bf16.mxu0 %v1675
    %1811 = vmatpush1.bf16.msra.mxu0 %v1674
    %1812 = vmatprep.subr.bf16.mxu0 %v1673
    %1813 = vmatpush1.bf16.msra.mxu0 %v1672
    %1814 = vmatprep.subr.bf16.mxu0 %v1671
    %1815 = vmatpush1.bf16.msra.mxu0 %v1670
    %1816 = vmatprep.subr.bf16.mxu0 0
    %1817 = vmatpush2.bf16.msra.mxu0 0
    %1818 = vmatprep.subr.bf16.mxu0 0
    %1819 = vmatpush2.bf16.msra.mxu0 0
    %1820 = vmatprep.subr.bf16.mxu0 0
    %1821 = vmatpush2.bf16.msra.mxu0 0
    %1822 = vmatprep.subr.bf16.mxu0 0
    %1823 = vmatpush2.bf16.msra.mxu0 0
    %1824 = vmatprep.subr.bf16.mxu0 0
    %1825 = vmatpush2.bf16.msra.mxu0 0
    %1826 = vmatprep.subr.bf16.mxu0 0
    %1827 = vmatpush2.bf16.msra.mxu0 0
    %1828 = vmatprep.subr.bf16.mxu0 0
    %1829 = vmatpush2.bf16.msra.mxu0 0
    %1830 = vmatprep.subr.bf16.mxu0 0
    %1831 = vmatpush2.bf16.msra.mxu0 0
    %1832 = vmatprep.mubr.bf16.mxu0 0
    %1833 = vmatmul.mubr.bf16.gmra.mxu0 %v1698
    %v1834 = vpop.f32.mrf.mxu0
    %v1835 = vadd.f32 0.0, %v1834
    %v1836 = vpop.f32.mrf.mxu0
    %v1837 = vadd.f32 0.0, %v1836
    %v1838 = vpop.f32.mrf.mxu0
    %v1839 = vadd.f32 0.0, %v1838
    %v1840 = vpop.f32.mrf.mxu0
    %v1841 = vadd.f32 0.0, %v1840
    %1842 = vmatprep.mubr.bf16.mxu0 0
    %1843 = vmatmul.mubr.bf16.gmra.mxu0 %v1701
    %v1844 = vpop.f32.mrf.mxu0
    %v1845 = vadd.f32 0.0, %v1844
    %v1846 = vpop.f32.mrf.mxu0
    %v1847 = vadd.f32 0.0, %v1846
    %v1848 = vpop.f32.mrf.mxu0
    %v1849 = vadd.f32 0.0, %v1848
    %v1850 = vpop.f32.mrf.mxu0
    %v1851 = vadd.f32 0.0, %v1850
    %1852 = vmatprep.mubr.bf16.mxu0 0
    %1853 = vmatmul.mubr.bf16.gmra.mxu0 %v1704
    %v1854 = vpop.f32.mrf.mxu0
    %v1855 = vadd.f32 0.0, %v1854
    %v1856 = vpop.f32.mrf.mxu0
    %v1857 = vadd.f32 0.0, %v1856
    %v1858 = vpop.f32.mrf.mxu0
    %v1859 = vadd.f32 0.0, %v1858
    %v1860 = vpop.f32.mrf.mxu0
    %v1861 = vadd.f32 0.0, %v1860
    %1862 = vmatprep.mubr.bf16.mxu0 0
    %1863 = vmatmul.mubr.bf16.gmra.mxu0 %v1707
    %v1864 = vpop.f32.mrf.mxu0
    %v1865 = vadd.f32 0.0, %v1864
    %v1866 = vpop.f32.mrf.mxu0
    %v1867 = vadd.f32 0.0, %v1866
    %v1868 = vpop.f32.mrf.mxu0
    %v1869 = vadd.f32 0.0, %v1868
    %v1870 = vpop.f32.mrf.mxu0
    %v1871 = vadd.f32 0.0, %v1870
    %1872 = vmatprep.mubr.bf16.mxu0 0
    %1873 = vmatmul.mubr.bf16.gmra.mxu0 %v1710
    %v1874 = vpop.f32.mrf.mxu0
    %v1875 = vadd.f32 0.0, %v1874
    %v1876 = vpop.f32.mrf.mxu0
    %v1877 = vadd.f32 0.0, %v1876
    %v1878 = vpop.f32.mrf.mxu0
    %v1879 = vadd.f32 0.0, %v1878
    %v1880 = vpop.f32.mrf.mxu0
    %v1881 = vadd.f32 0.0, %v1880
    %1882 = vmatprep.mubr.bf16.mxu0 0
    %1883 = vmatmul.mubr.bf16.gmra.mxu0 %v1713
    %v1884 = vpop.f32.mrf.mxu0
    %v1885 = vadd.f32 0.0, %v1884
    %v1886 = vpop.f32.mrf.mxu0
    %v1887 = vadd.f32 0.0, %v1886
    %v1888 = vpop.f32.mrf.mxu0
    %v1889 = vadd.f32 0.0, %v1888
    %v1890 = vpop.f32.mrf.mxu0
    %v1891 = vadd.f32 0.0, %v1890
    %1892 = vmatprep.mubr.bf16.mxu0 0
    %1893 = vmatmul.mubr.bf16.gmra.mxu0 %v1716
    %v1894 = vpop.f32.mrf.mxu0
    %v1895 = vadd.f32 0.0, %v1894
    %v1896 = vpop.f32.mrf.mxu0
    %v1897 = vadd.f32 0.0, %v1896
    %v1898 = vpop.f32.mrf.mxu0
    %v1899 = vadd.f32 0.0, %v1898
    %v1900 = vpop.f32.mrf.mxu0
    %v1901 = vadd.f32 0.0, %v1900
    %1902 = vmatprep.mubr.bf16.mxu0 0
    %1903 = vmatmul.mubr.bf16.gmra.mxu0 %v1719
    %v1904 = vpop.f32.mrf.mxu0
    %v1905 = vadd.f32 0.0, %v1904
    %v1906 = vpop.f32.mrf.mxu0
    %v1907 = vadd.f32 0.0, %v1906
    %v1908 = vpop.f32.mrf.mxu0
    %v1909 = vadd.f32 0.0, %v1908
    %v1910 = vpop.f32.mrf.mxu0
    %v1911 = vadd.f32 0.0, %v1910
    %1912 = vmatprep.mubr.bf16.mxu0 0
    %1913 = vmatmul.mubr.bf16.gmra.mxu0 %v1722
    %v1914 = vpop.f32.mrf.mxu0
    %v1915 = vadd.f32 0.0, %v1914
    %v1916 = vpop.f32.mrf.mxu0
    %v1917 = vadd.f32 0.0, %v1916
    %v1918 = vpop.f32.mrf.mxu0
    %v1919 = vadd.f32 0.0, %v1918
    %v1920 = vpop.f32.mrf.mxu0
    %v1921 = vadd.f32 0.0, %v1920
    %1922 = vmatprep.mubr.bf16.mxu0 0
    %1923 = vmatmul.mubr.bf16.gmra.mxu0 %v1725
    %v1924 = vpop.f32.mrf.mxu0
    %v1925 = vadd.f32 0.0, %v1924
    %v1926 = vpop.f32.mrf.mxu0
    %v1927 = vadd.f32 0.0, %v1926
    %v1928 = vpop.f32.mrf.mxu0
    %v1929 = vadd.f32 0.0, %v1928
    %v1930 = vpop.f32.mrf.mxu0
    %v1931 = vadd.f32 0.0, %v1930
    %1932 = vmatprep.mubr.bf16.mxu0 0
    %1933 = vmatmul.mubr.bf16.gmra.mxu0 %v1728
    %v1934 = vpop.f32.mrf.mxu0
    %v1935 = vadd.f32 0.0, %v1934
    %v1936 = vpop.f32.mrf.mxu0
    %v1937 = vadd.f32 0.0, %v1936
    %v1938 = vpop.f32.mrf.mxu0
    %v1939 = vadd.f32 0.0, %v1938
    %v1940 = vpop.f32.mrf.mxu0
    %v1941 = vadd.f32 0.0, %v1940
    %1942 = vmatprep.mubr.bf16.mxu0 0
    %1943 = vmatmul.mubr.bf16.gmra.mxu0 %v1731
    %v1944 = vpop.f32.mrf.mxu0
    %v1945 = vadd.f32 0.0, %v1944
    %v1946 = vpop.f32.mrf.mxu0
    %v1947 = vadd.f32 0.0, %v1946
    %v1948 = vpop.f32.mrf.mxu0
    %v1949 = vadd.f32 0.0, %v1948
    %v1950 = vpop.f32.mrf.mxu0
    %v1951 = vadd.f32 0.0, %v1950
    %1952 = vmatprep.mubr.bf16.mxu0 0
    %1953 = vmatmul.mubr.bf16.gmra.mxu0 %v1734
    %v1954 = vpop.f32.mrf.mxu0
    %v1955 = vadd.f32 0.0, %v1954
    %v1956 = vpop.f32.mrf.mxu0
    %v1957 = vadd.f32 0.0, %v1956
    %v1958 = vpop.f32.mrf.mxu0
    %v1959 = vadd.f32 0.0, %v1958
    %v1960 = vpop.f32.mrf.mxu0
    %v1961 = vadd.f32 0.0, %v1960
    %1962 = vmatprep.mubr.bf16.mxu0 0
    %1963 = vmatmul.mubr.bf16.gmra.mxu0 %v1737
    %v1964 = vpop.f32.mrf.mxu0
    %v1965 = vadd.f32 0.0, %v1964
    %v1966 = vpop.f32.mrf.mxu0
    %v1967 = vadd.f32 0.0, %v1966
    %v1968 = vpop.f32.mrf.mxu0
    %v1969 = vadd.f32 0.0, %v1968
    %v1970 = vpop.f32.mrf.mxu0
    %v1971 = vadd.f32 0.0, %v1970
    %1972 = vmatprep.mubr.bf16.mxu0 0
    %1973 = vmatmul.mubr.bf16.gmra.mxu0 %v1740
    %v1974 = vpop.f32.mrf.mxu0
    %v1975 = vadd.f32 0.0, %v1974
    %v1976 = vpop.f32.mrf.mxu0
    %v1977 = vadd.f32 0.0, %v1976
    %v1978 = vpop.f32.mrf.mxu0
    %v1979 = vadd.f32 0.0, %v1978
    %v1980 = vpop.f32.mrf.mxu0
    %v1981 = vadd.f32 0.0, %v1980
    %1982 = vmatprep.mubr.bf16.mxu0 0
    %1983 = vmatmul.mubr.bf16.gmra.mxu0 %v1743
    %v1984 = vpop.f32.mrf.mxu0
    %v1985 = vadd.f32 0.0, %v1984
    %v1986 = vpop.f32.mrf.mxu0
    %v1987 = vadd.f32 0.0, %v1986
    %v1988 = vpop.f32.mrf.mxu0
    %v1989 = vadd.f32 0.0, %v1988
    %v1990 = vpop.f32.mrf.mxu0
    %v1991 = vadd.f32 0.0, %v1990
    %1992 = vmatprep.mubr.bf16.mxu0 0
    %1993 = vmatmul.mubr.bf16.gmra.mxu0 %v1746
    %v1994 = vpop.f32.mrf.mxu0
    %v1995 = vadd.f32 0.0, %v1994
    %v1996 = vpop.f32.mrf.mxu0
    %v1997 = vadd.f32 0.0, %v1996
    %v1998 = vpop.f32.mrf.mxu0
    %v1999 = vadd.f32 0.0, %v1998
    %v2000 = vpop.f32.mrf.mxu0
    %v2001 = vadd.f32 0.0, %v2000
    %2002 = vmatprep.mubr.bf16.mxu0 0
    %2003 = vmatmul.mubr.bf16.gmra.mxu0 %v1749
    %v2004 = vpop.f32.mrf.mxu0
    %v2005 = vadd.f32 0.0, %v2004
    %v2006 = vpop.f32.mrf.mxu0
    %v2007 = vadd.f32 0.0, %v2006
    %v2008 = vpop.f32.mrf.mxu0
    %v2009 = vadd.f32 0.0, %v2008
    %v2010 = vpop.f32.mrf.mxu0
    %v2011 = vadd.f32 0.0, %v2010
    %2012 = vmatprep.mubr.bf16.mxu0 0
    %2013 = vmatmul.mubr.bf16.gmra.mxu0 %v1752
    %v2014 = vpop.f32.mrf.mxu0
    %v2015 = vadd.f32 0.0, %v2014
    %v2016 = vpop.f32.mrf.mxu0
    %v2017 = vadd.f32 0.0, %v2016
    %v2018 = vpop.f32.mrf.mxu0
    %v2019 = vadd.f32 0.0, %v2018
    %v2020 = vpop.f32.mrf.mxu0
    %v2021 = vadd.f32 0.0, %v2020
    %2022 = vmatprep.mubr.bf16.mxu0 0
    %2023 = vmatmul.mubr.bf16.gmra.mxu0 %v1755
    %v2024 = vpop.f32.mrf.mxu0
    %v2025 = vadd.f32 0.0, %v2024
    %v2026 = vpop.f32.mrf.mxu0
    %v2027 = vadd.f32 0.0, %v2026
    %v2028 = vpop.f32.mrf.mxu0
    %v2029 = vadd.f32 0.0, %v2028
    %v2030 = vpop.f32.mrf.mxu0
    %v2031 = vadd.f32 0.0, %v2030
    %2032 = vmatprep.mubr.bf16.mxu0 0
    %2033 = vmatmul.mubr.bf16.gmra.mxu0 %v1758
    %v2034 = vpop.f32.mrf.mxu0
    %v2035 = vadd.f32 0.0, %v2034
    %v2036 = vpop.f32.mrf.mxu0
    %v2037 = vadd.f32 0.0, %v2036
    %v2038 = vpop.f32.mrf.mxu0
    %v2039 = vadd.f32 0.0, %v2038
    %v2040 = vpop.f32.mrf.mxu0
    %v2041 = vadd.f32 0.0, %v2040
    %2042 = vmatprep.mubr.bf16.mxu0 0
    %2043 = vmatmul.mubr.bf16.gmra.mxu0 %v1761
    %v2044 = vpop.f32.mrf.mxu0
    %v2045 = vadd.f32 0.0, %v2044
    %v2046 = vpop.f32.mrf.mxu0
    %v2047 = vadd.f32 0.0, %v2046
    %v2048 = vpop.f32.mrf.mxu0
    %v2049 = vadd.f32 0.0, %v2048
    %v2050 = vpop.f32.mrf.mxu0
    %v2051 = vadd.f32 0.0, %v2050
    %2052 = vmatprep.mubr.bf16.mxu0 0
    %2053 = vmatmul.mubr.bf16.gmra.mxu0 %v1764
    %v2054 = vpop.f32.mrf.mxu0
    %v2055 = vadd.f32 0.0, %v2054
    %v2056 = vpop.f32.mrf.mxu0
    %v2057 = vadd.f32 0.0, %v2056
    %v2058 = vpop.f32.mrf.mxu0
    %v2059 = vadd.f32 0.0, %v2058
    %v2060 = vpop.f32.mrf.mxu0
    %v2061 = vadd.f32 0.0, %v2060
    %2062 = vmatprep.mubr.bf16.mxu0 0
    %2063 = vmatmul.mubr.bf16.gmra.mxu0 %v1767
    %v2064 = vpop.f32.mrf.mxu0
    %v2065 = vadd.f32 0.0, %v2064
    %v2066 = vpop.f32.mrf.mxu0
    %v2067 = vadd.f32 0.0, %v2066
    %v2068 = vpop.f32.mrf.mxu0
    %v2069 = vadd.f32 0.0, %v2068
    %v2070 = vpop.f32.mrf.mxu0
    %v2071 = vadd.f32 0.0, %v2070
    %2072 = vmatprep.mubr.bf16.mxu0 0
    %2073 = vmatmul.mubr.bf16.gmra.mxu0 %v1770
    %v2074 = vpop.f32.mrf.mxu0
    %v2075 = vadd.f32 0.0, %v2074
    %v2076 = vpop.f32.mrf.mxu0
    %v2077 = vadd.f32 0.0, %v2076
    %v2078 = vpop.f32.mrf.mxu0
    %v2079 = vadd.f32 0.0, %v2078
    %v2080 = vpop.f32.mrf.mxu0
    %v2081 = vadd.f32 0.0, %v2080
    %2082 = vmatprep.mubr.bf16.mxu0 0
    %2083 = vmatmul.mubr.bf16.gmra.mxu0 %v1773
    %v2084 = vpop.f32.mrf.mxu0
    %v2085 = vadd.f32 0.0, %v2084
    %v2086 = vpop.f32.mrf.mxu0
    %v2087 = vadd.f32 0.0, %v2086
    %v2088 = vpop.f32.mrf.mxu0
    %v2089 = vadd.f32 0.0, %v2088
    %v2090 = vpop.f32.mrf.mxu0
    %v2091 = vadd.f32 0.0, %v2090
    %2092 = vmatprep.mubr.bf16.mxu0 0
    %2093 = vmatmul.mubr.bf16.gmra.mxu0 %v1776
    %v2094 = vpop.f32.mrf.mxu0
    %v2095 = vadd.f32 0.0, %v2094
    %v2096 = vpop.f32.mrf.mxu0
    %v2097 = vadd.f32 0.0, %v2096
    %v2098 = vpop.f32.mrf.mxu0
    %v2099 = vadd.f32 0.0, %v2098
    %v2100 = vpop.f32.mrf.mxu0
    %v2101 = vadd.f32 0.0, %v2100
    %2102 = vmatprep.mubr.bf16.mxu0 0
    %2103 = vmatmul.mubr.bf16.gmra.mxu0 %v1779
    %v2104 = vpop.f32.mrf.mxu0
    %v2105 = vadd.f32 0.0, %v2104
    %v2106 = vpop.f32.mrf.mxu0
    %v2107 = vadd.f32 0.0, %v2106
    %v2108 = vpop.f32.mrf.mxu0
    %v2109 = vadd.f32 0.0, %v2108
    %v2110 = vpop.f32.mrf.mxu0
    %v2111 = vadd.f32 0.0, %v2110
    %2112 = vmatprep.mubr.bf16.mxu0 0
    %2113 = vmatmul.mubr.bf16.gmra.mxu0 %v1782
    %v2114 = vpop.f32.mrf.mxu0
    %v2115 = vadd.f32 0.0, %v2114
    %v2116 = vpop.f32.mrf.mxu0
    %v2117 = vadd.f32 0.0, %v2116
    %v2118 = vpop.f32.mrf.mxu0
    %v2119 = vadd.f32 0.0, %v2118
    %v2120 = vpop.f32.mrf.mxu0
    %v2121 = vadd.f32 0.0, %v2120
    %2122 = vmatprep.mubr.bf16.mxu0 0
    %2123 = vmatmul.mubr.bf16.gmra.mxu0 %v1785
    %v2124 = vpop.f32.mrf.mxu0
    %v2125 = vadd.f32 0.0, %v2124
    %v2126 = vpop.f32.mrf.mxu0
    %v2127 = vadd.f32 0.0, %v2126
    %v2128 = vpop.f32.mrf.mxu0
    %v2129 = vadd.f32 0.0, %v2128
    %v2130 = vpop.f32.mrf.mxu0
    %v2131 = vadd.f32 0.0, %v2130
    %2132 = vmatprep.mubr.bf16.mxu0 0
    %2133 = vmatmul.mubr.bf16.gmra.mxu0 %v1788
    %v2134 = vpop.f32.mrf.mxu0
    %v2135 = vadd.f32 0.0, %v2134
    %v2136 = vpop.f32.mrf.mxu0
    %v2137 = vadd.f32 0.0, %v2136
    %v2138 = vpop.f32.mrf.mxu0
    %v2139 = vadd.f32 0.0, %v2138
    %v2140 = vpop.f32.mrf.mxu0
    %v2141 = vadd.f32 0.0, %v2140
    %2142 = vmatprep.mubr.bf16.mxu0 0
    %2143 = vmatmul.mubr.bf16.gmra.mxu0 %v1791
    %v2144 = vpop.f32.mrf.mxu0
    %v2145 = vadd.f32 0.0, %v2144
    %v2146 = vpop.f32.mrf.mxu0
    %v2147 = vadd.f32 0.0, %v2146
    %v2148 = vpop.f32.mrf.mxu0
    %v2149 = vadd.f32 0.0, %v2148
    %v2150 = vpop.f32.mrf.mxu0
    %v2151 = vadd.f32 0.0, %v2150
    %2152 = vdwg.mxu0
    %v2166 = vunpack.c.l.b16 %v1349
    %v2167 = vunpack.c.h.b16 %v1349
    %v2168 = vunpack.c.l.b16 %v1350
    %v2169 = vunpack.c.h.b16 %v1350
    %v2170 = vunpack.c.l.b16 %v1351
    %v2171 = vunpack.c.h.b16 %v1351
    %v2172 = vunpack.c.l.b16 %v1352
    %v2173 = vunpack.c.h.b16 %v1352
    %v2174 = vunpack.c.l.b16 %v1353
    %v2175 = vunpack.c.h.b16 %v1353
    %v2176 = vunpack.c.l.b16 %v1354
    %v2177 = vunpack.c.h.b16 %v1354
    %v2178 = vunpack.c.l.b16 %v1355
    %v2179 = vunpack.c.h.b16 %v1355
    %v2180 = vunpack.c.l.b16 %v1356
    %v2181 = vunpack.c.h.b16 %v1356
    %v2182 = vunpack.c.l.b16 %v1357
    %v2183 = vunpack.c.h.b16 %v1357
    %v2184 = vunpack.c.l.b16 %v1358
    %v2185 = vunpack.c.h.b16 %v1358
    %v2186 = vunpack.c.l.b16 %v1359
    %v2187 = vunpack.c.h.b16 %v1359
    %v2188 = vunpack.c.l.b16 %v1360
    %v2189 = vunpack.c.h.b16 %v1360
    %v2190 = vunpack.c.l.b16 %v1361
    %v2191 = vunpack.c.h.b16 %v1361
    %v2192 = vpack.c.b16 %v2168, %v2166
    %v2193 = vpack.c.b16 %v2169, %v2167
    %v2194 = vpack.c.b16 %v2172, %v2170
    %v2195 = vpack.c.b16 %v2173, %v2171
    %v2196 = vpack.c.b16 %v2176, %v2174
    %v2197 = vpack.c.b16 %v2177, %v2175
    %v2198 = vpack.c.b16 %v2180, %v2178
    %v2199 = vpack.c.b16 %v2181, %v2179
    %v2200 = vpack.c.b16 %v2184, %v2182
    %v2201 = vpack.c.b16 %v2185, %v2183
    %v2202 = vpack.c.b16 %v2188, %v2186
    %v2203 = vpack.c.b16 %v2189, %v2187
    %v2204 = vpack.c.b16 %v2190, %v2190
    %v2205 = vpack.c.b16 %v2191, %v2191
    %v2218 = vsel %vm1696, %v1317, 0
    %v2220 = vsel %vm1696, %v1318, 0
    %v2222 = vsel %vm1696, %v1319, 0
    %v2224 = vsel %vm1696, %v1320, 0
    %v2226 = vsel %vm1696, %v1321, 0
    %v2228 = vsel %vm1696, %v1322, 0
    %v2230 = vsel %vm1696, %v1323, 0
    %v2232 = vsel %vm1696, %v1324, 0
    %v2234 = vsel %vm1696, %v1325, 0
    %v2236 = vsel %vm1696, %v1326, 0
    %v2238 = vsel %vm1696, %v1327, 0
    %v2240 = vsel %vm1696, %v1328, 0
    %v2242 = vsel %vm1696, %v1329, 0
    %v2244 = vsel %vm1696, %v1330, 0
    %v2246 = vsel %vm1696, %v1331, 0
    %v2248 = vsel %vm1696, %v1332, 0
    %v2250 = vsel %vm1696, %v1333, 0
    %v2252 = vsel %vm1696, %v1334, 0
    %v2254 = vsel %vm1696, %v1335, 0
    %v2256 = vsel %vm1696, %v1336, 0
    %v2258 = vsel %vm1696, %v1337, 0
    %v2260 = vsel %vm1696, %v1338, 0
    %v2262 = vsel %vm1696, %v1339, 0
    %v2264 = vsel %vm1696, %v1340, 0
    %v2266 = vsel %vm1696, %v1341, 0
    %v2268 = vsel %vm1696, %v1342, 0
    %v2270 = vsel %vm1696, %v1343, 0
    %v2272 = vsel %vm1696, %v1344, 0
    %v2274 = vsel %vm1696, %v1345, 0
    %v2276 = vsel %vm1696, %v1346, 0
    %v2278 = vsel %vm1696, %v1347, 0
    %v2280 = vsel %vm1696, %v1348, 0
    %v2283 = vsel %vm1793, %v2204, 0
    %v2286 = vsel %vm1793, %v2205, 0
    %2288 = vmatprep.subr.bf16.mxu0 0
    %2289 = vmatpush1.bf16.msra.mxu0 0
    %2290 = vmatprep.subr.bf16.mxu0 %v2286
    %2291 = vmatpush1.bf16.msra.mxu0 %v2283
    %2292 = vmatprep.subr.bf16.mxu0 %v2203
    %2293 = vmatpush1.bf16.msra.mxu0 %v2202
    %2294 = vmatprep.subr.bf16.mxu0 %v2201
    %2295 = vmatpush1.bf16.msra.mxu0 %v2200
    %2296 = vmatprep.subr.bf16.mxu0 %v2199
    %2297 = vmatpush1.bf16.msra.mxu0 %v2198
    %2298 = vmatprep.subr.bf16.mxu0 %v2197
    %2299 = vmatpush1.bf16.msra.mxu0 %v2196
    %2300 = vmatprep.subr.bf16.mxu0 %v2195
    %2301 = vmatpush1.bf16.msra.mxu0 %v2194
    %2302 = vmatprep.subr.bf16.mxu0 %v2193
    %2303 = vmatpush1.bf16.msra.mxu0 %v2192
    %2304 = vmatprep.subr.bf16.mxu0 0
    %2305 = vmatpush2.bf16.msra.mxu0 0
    %2306 = vmatprep.subr.bf16.mxu0 0
    %2307 = vmatpush2.bf16.msra.mxu0 0
    %2308 = vmatprep.subr.bf16.mxu0 0
    %2309 = vmatpush2.bf16.msra.mxu0 0
    %2310 = vmatprep.subr.bf16.mxu0 0
    %2311 = vmatpush2.bf16.msra.mxu0 0
    %2312 = vmatprep.subr.bf16.mxu0 0
    %2313 = vmatpush2.bf16.msra.mxu0 0
    %2314 = vmatprep.subr.bf16.mxu0 0
    %2315 = vmatpush2.bf16.msra.mxu0 0
    %2316 = vmatprep.subr.bf16.mxu0 0
    %2317 = vmatpush2.bf16.msra.mxu0 0
    %2318 = vmatprep.subr.bf16.mxu0 0
    %2319 = vmatpush2.bf16.msra.mxu0 0
    %2320 = vmatprep.mubr.bf16.mxu0 0
    %2321 = vmatmul.mubr.bf16.gmra.mxu0 %v2218
    %v2322 = vpop.f32.mrf.mxu0
    %v2323 = vadd.f32 %v1835, %v2322
    %v2324 = vpop.f32.mrf.mxu0
    %v2325 = vadd.f32 %v1837, %v2324
    %v2326 = vpop.f32.mrf.mxu0
    %v2327 = vadd.f32 %v1839, %v2326
    %v2328 = vpop.f32.mrf.mxu0
    %v2329 = vadd.f32 %v1841, %v2328
    %2330 = vmatprep.mubr.bf16.mxu0 0
    %2331 = vmatmul.mubr.bf16.gmra.mxu0 %v2220
    %v2332 = vpop.f32.mrf.mxu0
    %v2333 = vadd.f32 %v1845, %v2332
    %v2334 = vpop.f32.mrf.mxu0
    %v2335 = vadd.f32 %v1847, %v2334
    %v2336 = vpop.f32.mrf.mxu0
    %v2337 = vadd.f32 %v1849, %v2336
    %v2338 = vpop.f32.mrf.mxu0
    %v2339 = vadd.f32 %v1851, %v2338
    %2340 = vmatprep.mubr.bf16.mxu0 0
    %2341 = vmatmul.mubr.bf16.gmra.mxu0 %v2222
    %v2342 = vpop.f32.mrf.mxu0
    %v2343 = vadd.f32 %v1855, %v2342
    %v2344 = vpop.f32.mrf.mxu0
    %v2345 = vadd.f32 %v1857, %v2344
    %v2346 = vpop.f32.mrf.mxu0
    %v2347 = vadd.f32 %v1859, %v2346
    %v2348 = vpop.f32.mrf.mxu0
    %v2349 = vadd.f32 %v1861, %v2348
    %2350 = vmatprep.mubr.bf16.mxu0 0
    %2351 = vmatmul.mubr.bf16.gmra.mxu0 %v2224
    %v2352 = vpop.f32.mrf.mxu0
    %v2353 = vadd.f32 %v1865, %v2352
    %v2354 = vpop.f32.mrf.mxu0
    %v2355 = vadd.f32 %v1867, %v2354
    %v2356 = vpop.f32.mrf.mxu0
    %v2357 = vadd.f32 %v1869, %v2356
    %v2358 = vpop.f32.mrf.mxu0
    %v2359 = vadd.f32 %v1871, %v2358
    %2360 = vmatprep.mubr.bf16.mxu0 0
    %2361 = vmatmul.mubr.bf16.gmra.mxu0 %v2226
    %v2362 = vpop.f32.mrf.mxu0
    %v2363 = vadd.f32 %v1875, %v2362
    %v2364 = vpop.f32.mrf.mxu0
    %v2365 = vadd.f32 %v1877, %v2364
    %v2366 = vpop.f32.mrf.mxu0
    %v2367 = vadd.f32 %v1879, %v2366
    %v2368 = vpop.f32.mrf.mxu0
    %v2369 = vadd.f32 %v1881, %v2368
    %2370 = vmatprep.mubr.bf16.mxu0 0
    %2371 = vmatmul.mubr.bf16.gmra.mxu0 %v2228
    %v2372 = vpop.f32.mrf.mxu0
    %v2373 = vadd.f32 %v1885, %v2372
    %v2374 = vpop.f32.mrf.mxu0
    %v2375 = vadd.f32 %v1887, %v2374
    %v2376 = vpop.f32.mrf.mxu0
    %v2377 = vadd.f32 %v1889, %v2376
    %v2378 = vpop.f32.mrf.mxu0
    %v2379 = vadd.f32 %v1891, %v2378
    %2380 = vmatprep.mubr.bf16.mxu0 0
    %2381 = vmatmul.mubr.bf16.gmra.mxu0 %v2230
    %v2382 = vpop.f32.mrf.mxu0
    %v2383 = vadd.f32 %v1895, %v2382
    %v2384 = vpop.f32.mrf.mxu0
    %v2385 = vadd.f32 %v1897, %v2384
    %v2386 = vpop.f32.mrf.mxu0
    %v2387 = vadd.f32 %v1899, %v2386
    %v2388 = vpop.f32.mrf.mxu0
    %v2389 = vadd.f32 %v1901, %v2388
    %2390 = vmatprep.mubr.bf16.mxu0 0
    %2391 = vmatmul.mubr.bf16.gmra.mxu0 %v2232
    %v2392 = vpop.f32.mrf.mxu0
    %v2393 = vadd.f32 %v1905, %v2392
    %v2394 = vpop.f32.mrf.mxu0
    %v2395 = vadd.f32 %v1907, %v2394
    %v2396 = vpop.f32.mrf.mxu0
    %v2397 = vadd.f32 %v1909, %v2396
    %v2398 = vpop.f32.mrf.mxu0
    %v2399 = vadd.f32 %v1911, %v2398
    %2400 = vmatprep.mubr.bf16.mxu0 0
    %2401 = vmatmul.mubr.bf16.gmra.mxu0 %v2234
    %v2402 = vpop.f32.mrf.mxu0
    %v2403 = vadd.f32 %v1915, %v2402
    %v2404 = vpop.f32.mrf.mxu0
    %v2405 = vadd.f32 %v1917, %v2404
    %v2406 = vpop.f32.mrf.mxu0
    %v2407 = vadd.f32 %v1919, %v2406
    %v2408 = vpop.f32.mrf.mxu0
    %v2409 = vadd.f32 %v1921, %v2408
    %2410 = vmatprep.mubr.bf16.mxu0 0
    %2411 = vmatmul.mubr.bf16.gmra.mxu0 %v2236
    %v2412 = vpop.f32.mrf.mxu0
    %v2413 = vadd.f32 %v1925, %v2412
    %v2414 = vpop.f32.mrf.mxu0
    %v2415 = vadd.f32 %v1927, %v2414
    %v2416 = vpop.f32.mrf.mxu0
    %v2417 = vadd.f32 %v1929, %v2416
    %v2418 = vpop.f32.mrf.mxu0
    %v2419 = vadd.f32 %v1931, %v2418
    %2420 = vmatprep.mubr.bf16.mxu0 0
    %2421 = vmatmul.mubr.bf16.gmra.mxu0 %v2238
    %v2422 = vpop.f32.mrf.mxu0
    %v2423 = vadd.f32 %v1935, %v2422
    %v2424 = vpop.f32.mrf.mxu0
    %v2425 = vadd.f32 %v1937, %v2424
    %v2426 = vpop.f32.mrf.mxu0
    %v2427 = vadd.f32 %v1939, %v2426
    %v2428 = vpop.f32.mrf.mxu0
    %v2429 = vadd.f32 %v1941, %v2428
    %2430 = vmatprep.mubr.bf16.mxu0 0
    %2431 = vmatmul.mubr.bf16.gmra.mxu0 %v2240
    %v2432 = vpop.f32.mrf.mxu0
    %v2433 = vadd.f32 %v1945, %v2432
    %v2434 = vpop.f32.mrf.mxu0
    %v2435 = vadd.f32 %v1947, %v2434
    %v2436 = vpop.f32.mrf.mxu0
    %v2437 = vadd.f32 %v1949, %v2436
    %v2438 = vpop.f32.mrf.mxu0
    %v2439 = vadd.f32 %v1951, %v2438
    %2440 = vmatprep.mubr.bf16.mxu0 0
    %2441 = vmatmul.mubr.bf16.gmra.mxu0 %v2242
    %v2442 = vpop.f32.mrf.mxu0
    %v2443 = vadd.f32 %v1955, %v2442
    %v2444 = vpop.f32.mrf.mxu0
    %v2445 = vadd.f32 %v1957, %v2444
    %v2446 = vpop.f32.mrf.mxu0
    %v2447 = vadd.f32 %v1959, %v2446
    %v2448 = vpop.f32.mrf.mxu0
    %v2449 = vadd.f32 %v1961, %v2448
    %2450 = vmatprep.mubr.bf16.mxu0 0
    %2451 = vmatmul.mubr.bf16.gmra.mxu0 %v2244
    %v2452 = vpop.f32.mrf.mxu0
    %v2453 = vadd.f32 %v1965, %v2452
    %v2454 = vpop.f32.mrf.mxu0
    %v2455 = vadd.f32 %v1967, %v2454
    %v2456 = vpop.f32.mrf.mxu0
    %v2457 = vadd.f32 %v1969, %v2456
    %v2458 = vpop.f32.mrf.mxu0
    %v2459 = vadd.f32 %v1971, %v2458
    %2460 = vmatprep.mubr.bf16.mxu0 0
    %2461 = vmatmul.mubr.bf16.gmra.mxu0 %v2246
    %v2462 = vpop.f32.mrf.mxu0
    %v2463 = vadd.f32 %v1975, %v2462
    %v2464 = vpop.f32.mrf.mxu0
    %v2465 = vadd.f32 %v1977, %v2464
    %v2466 = vpop.f32.mrf.mxu0
    %v2467 = vadd.f32 %v1979, %v2466
    %v2468 = vpop.f32.mrf.mxu0
    %v2469 = vadd.f32 %v1981, %v2468
    %2470 = vmatprep.mubr.bf16.mxu0 0
    %2471 = vmatmul.mubr.bf16.gmra.mxu0 %v2248
    %v2472 = vpop.f32.mrf.mxu0
    %v2473 = vadd.f32 %v1985, %v2472
    %v2474 = vpop.f32.mrf.mxu0
    %v2475 = vadd.f32 %v1987, %v2474
    %v2476 = vpop.f32.mrf.mxu0
    %v2477 = vadd.f32 %v1989, %v2476
    %v2478 = vpop.f32.mrf.mxu0
    %v2479 = vadd.f32 %v1991, %v2478
    %2480 = vmatprep.mubr.bf16.mxu0 0
    %2481 = vmatmul.mubr.bf16.gmra.mxu0 %v2250
    %v2482 = vpop.f32.mrf.mxu0
    %v2483 = vadd.f32 %v1995, %v2482
    %v2484 = vpop.f32.mrf.mxu0
    %v2485 = vadd.f32 %v1997, %v2484
    %v2486 = vpop.f32.mrf.mxu0
    %v2487 = vadd.f32 %v1999, %v2486
    %v2488 = vpop.f32.mrf.mxu0
    %v2489 = vadd.f32 %v2001, %v2488
    %2490 = vmatprep.mubr.bf16.mxu0 0
    %2491 = vmatmul.mubr.bf16.gmra.mxu0 %v2252
    %v2492 = vpop.f32.mrf.mxu0
    %v2493 = vadd.f32 %v2005, %v2492
    %v2494 = vpop.f32.mrf.mxu0
    %v2495 = vadd.f32 %v2007, %v2494
    %v2496 = vpop.f32.mrf.mxu0
    %v2497 = vadd.f32 %v2009, %v2496
    %v2498 = vpop.f32.mrf.mxu0
    %v2499 = vadd.f32 %v2011, %v2498
    %2500 = vmatprep.mubr.bf16.mxu0 0
    %2501 = vmatmul.mubr.bf16.gmra.mxu0 %v2254
    %v2502 = vpop.f32.mrf.mxu0
    %v2503 = vadd.f32 %v2015, %v2502
    %v2504 = vpop.f32.mrf.mxu0
    %v2505 = vadd.f32 %v2017, %v2504
    %v2506 = vpop.f32.mrf.mxu0
    %v2507 = vadd.f32 %v2019, %v2506
    %v2508 = vpop.f32.mrf.mxu0
    %v2509 = vadd.f32 %v2021, %v2508
    %2510 = vmatprep.mubr.bf16.mxu0 0
    %2511 = vmatmul.mubr.bf16.gmra.mxu0 %v2256
    %v2512 = vpop.f32.mrf.mxu0
    %v2513 = vadd.f32 %v2025, %v2512
    %v2514 = vpop.f32.mrf.mxu0
    %v2515 = vadd.f32 %v2027, %v2514
    %v2516 = vpop.f32.mrf.mxu0
    %v2517 = vadd.f32 %v2029, %v2516
    %v2518 = vpop.f32.mrf.mxu0
    %v2519 = vadd.f32 %v2031, %v2518
    %2520 = vmatprep.mubr.bf16.mxu0 0
    %2521 = vmatmul.mubr.bf16.gmra.mxu0 %v2258
    %v2522 = vpop.f32.mrf.mxu0
    %v2523 = vadd.f32 %v2035, %v2522
    %v2524 = vpop.f32.mrf.mxu0
    %v2525 = vadd.f32 %v2037, %v2524
    %v2526 = vpop.f32.mrf.mxu0
    %v2527 = vadd.f32 %v2039, %v2526
    %v2528 = vpop.f32.mrf.mxu0
    %v2529 = vadd.f32 %v2041, %v2528
    %2530 = vmatprep.mubr.bf16.mxu0 0
    %2531 = vmatmul.mubr.bf16.gmra.mxu0 %v2260
    %v2532 = vpop.f32.mrf.mxu0
    %v2533 = vadd.f32 %v2045, %v2532
    %v2534 = vpop.f32.mrf.mxu0
    %v2535 = vadd.f32 %v2047, %v2534
    %v2536 = vpop.f32.mrf.mxu0
    %v2537 = vadd.f32 %v2049, %v2536
    %v2538 = vpop.f32.mrf.mxu0
    %v2539 = vadd.f32 %v2051, %v2538
    %2540 = vmatprep.mubr.bf16.mxu0 0
    %2541 = vmatmul.mubr.bf16.gmra.mxu0 %v2262
    %v2542 = vpop.f32.mrf.mxu0
    %v2543 = vadd.f32 %v2055, %v2542
    %v2544 = vpop.f32.mrf.mxu0
    %v2545 = vadd.f32 %v2057, %v2544
    %v2546 = vpop.f32.mrf.mxu0
    %v2547 = vadd.f32 %v2059, %v2546
    %v2548 = vpop.f32.mrf.mxu0
    %v2549 = vadd.f32 %v2061, %v2548
    %2550 = vmatprep.mubr.bf16.mxu0 0
    %2551 = vmatmul.mubr.bf16.gmra.mxu0 %v2264
    %v2552 = vpop.f32.mrf.mxu0
    %v2553 = vadd.f32 %v2065, %v2552
    %v2554 = vpop.f32.mrf.mxu0
    %v2555 = vadd.f32 %v2067, %v2554
    %v2556 = vpop.f32.mrf.mxu0
    %v2557 = vadd.f32 %v2069, %v2556
    %v2558 = vpop.f32.mrf.mxu0
    %v2559 = vadd.f32 %v2071, %v2558
    %2560 = vmatprep.mubr.bf16.mxu0 0
    %2561 = vmatmul.mubr.bf16.gmra.mxu0 %v2266
    %v2562 = vpop.f32.mrf.mxu0
    %v2563 = vadd.f32 %v2075, %v2562
    %v2564 = vpop.f32.mrf.mxu0
    %v2565 = vadd.f32 %v2077, %v2564
    %v2566 = vpop.f32.mrf.mxu0
    %v2567 = vadd.f32 %v2079, %v2566
    %v2568 = vpop.f32.mrf.mxu0
    %v2569 = vadd.f32 %v2081, %v2568
    %2570 = vmatprep.mubr.bf16.mxu0 0
    %2571 = vmatmul.mubr.bf16.gmra.mxu0 %v2268
    %v2572 = vpop.f32.mrf.mxu0
    %v2573 = vadd.f32 %v2085, %v2572
    %v2574 = vpop.f32.mrf.mxu0
    %v2575 = vadd.f32 %v2087, %v2574
    %v2576 = vpop.f32.mrf.mxu0
    %v2577 = vadd.f32 %v2089, %v2576
    %v2578 = vpop.f32.mrf.mxu0
    %v2579 = vadd.f32 %v2091, %v2578
    %2580 = vmatprep.mubr.bf16.mxu0 0
    %2581 = vmatmul.mubr.bf16.gmra.mxu0 %v2270
    %v2582 = vpop.f32.mrf.mxu0
    %v2583 = vadd.f32 %v2095, %v2582
    %v2584 = vpop.f32.mrf.mxu0
    %v2585 = vadd.f32 %v2097, %v2584
    %v2586 = vpop.f32.mrf.mxu0
    %v2587 = vadd.f32 %v2099, %v2586
    %v2588 = vpop.f32.mrf.mxu0
    %v2589 = vadd.f32 %v2101, %v2588
    %2590 = vmatprep.mubr.bf16.mxu0 0
    %2591 = vmatmul.mubr.bf16.gmra.mxu0 %v2272
    %v2592 = vpop.f32.mrf.mxu0
    %v2593 = vadd.f32 %v2105, %v2592
    %v2594 = vpop.f32.mrf.mxu0
    %v2595 = vadd.f32 %v2107, %v2594
    %v2596 = vpop.f32.mrf.mxu0
    %v2597 = vadd.f32 %v2109, %v2596
    %v2598 = vpop.f32.mrf.mxu0
    %v2599 = vadd.f32 %v2111, %v2598
    %2600 = vmatprep.mubr.bf16.mxu0 0
    %2601 = vmatmul.mubr.bf16.gmra.mxu0 %v2274
    %v2602 = vpop.f32.mrf.mxu0
    %v2603 = vadd.f32 %v2115, %v2602
    %v2604 = vpop.f32.mrf.mxu0
    %v2605 = vadd.f32 %v2117, %v2604
    %v2606 = vpop.f32.mrf.mxu0
    %v2607 = vadd.f32 %v2119, %v2606
    %v2608 = vpop.f32.mrf.mxu0
    %v2609 = vadd.f32 %v2121, %v2608
    %2610 = vmatprep.mubr.bf16.mxu0 0
    %2611 = vmatmul.mubr.bf16.gmra.mxu0 %v2276
    %v2612 = vpop.f32.mrf.mxu0
    %v2613 = vadd.f32 %v2125, %v2612
    %v2614 = vpop.f32.mrf.mxu0
    %v2615 = vadd.f32 %v2127, %v2614
    %v2616 = vpop.f32.mrf.mxu0
    %v2617 = vadd.f32 %v2129, %v2616
    %v2618 = vpop.f32.mrf.mxu0
    %v2619 = vadd.f32 %v2131, %v2618
    %2620 = vmatprep.mubr.bf16.mxu0 0
    %2621 = vmatmul.mubr.bf16.gmra.mxu0 %v2278
    %v2622 = vpop.f32.mrf.mxu0
    %v2623 = vadd.f32 %v2135, %v2622
    %v2624 = vpop.f32.mrf.mxu0
    %v2625 = vadd.f32 %v2137, %v2624
    %v2626 = vpop.f32.mrf.mxu0
    %v2627 = vadd.f32 %v2139, %v2626
    %v2628 = vpop.f32.mrf.mxu0
    %v2629 = vadd.f32 %v2141, %v2628
    %2630 = vmatprep.mubr.bf16.mxu0 0
    %2631 = vmatmul.mubr.bf16.gmra.mxu0 %v2280
    %v2632 = vpop.f32.mrf.mxu0
    %v2633 = vadd.f32 %v2145, %v2632
    %v2634 = vpop.f32.mrf.mxu0
    %v2635 = vadd.f32 %v2147, %v2634
    %v2636 = vpop.f32.mrf.mxu0
    %v2637 = vadd.f32 %v2149, %v2636
    %v2638 = vpop.f32.mrf.mxu0
    %v2639 = vadd.f32 %v2151, %v2638
    %2640 = vdwg.mxu0
    %v2641 = vld [vmem:[%s8] sm:$0x3]
    %v2643 = vlaneseq
    %v2644 = vshrl.u32 %v2643, 7
    %v2645 = vsub.s32 0, %v2644
    %v2646 = vrot.slane %v2641, %v2645
    %v2647 = vlaneseq
    %v2648 = vshrl.u32 %v2647, 7
    %v2649 = vsub.s32 1, %v2648
    %v2650 = vrot.slane %v2641, %v2649
    %v2653 = vadd.f32 %v2323, %v2646
    %v2654 = vadd.f32 %v2325, %v2650
    %v2655 = vadd.f32 %v2327, %v2646
    %v2656 = vadd.f32 %v2329, %v2650
    %v2657 = vadd.f32 %v2333, %v2646
    %v2658 = vadd.f32 %v2335, %v2650
    %v2659 = vadd.f32 %v2337, %v2646
    %v2660 = vadd.f32 %v2339, %v2650
    %v2661 = vadd.f32 %v2343, %v2646
    %v2662 = vadd.f32 %v2345, %v2650
    %v2663 = vadd.f32 %v2347, %v2646
    %v2664 = vadd.f32 %v2349, %v2650
    %v2665 = vadd.f32 %v2353, %v2646
    %v2666 = vadd.f32 %v2355, %v2650
    %v2667 = vadd.f32 %v2357, %v2646
    %v2668 = vadd.f32 %v2359, %v2650
    %v2669 = vadd.f32 %v2363, %v2646
    %v2670 = vadd.f32 %v2365, %v2650
    %v2671 = vadd.f32 %v2367, %v2646
    %v2672 = vadd.f32 %v2369, %v2650
    %v2673 = vadd.f32 %v2373, %v2646
    %v2674 = vadd.f32 %v2375, %v2650
    %v2675 = vadd.f32 %v2377, %v2646
    %v2676 = vadd.f32 %v2379, %v2650
    %v2677 = vadd.f32 %v2383, %v2646
    %v2678 = vadd.f32 %v2385, %v2650
    %v2679 = vadd.f32 %v2387, %v2646
    %v2680 = vadd.f32 %v2389, %v2650
    %v2681 = vadd.f32 %v2393, %v2646
    %v2682 = vadd.f32 %v2395, %v2650
    %v2683 = vadd.f32 %v2397, %v2646
    %v2684 = vadd.f32 %v2399, %v2650
    %v2685 = vadd.f32 %v2403, %v2646
    %v2686 = vadd.f32 %v2405, %v2650
    %v2687 = vadd.f32 %v2407, %v2646
    %v2688 = vadd.f32 %v2409, %v2650
    %v2689 = vadd.f32 %v2413, %v2646
    %v2690 = vadd.f32 %v2415, %v2650
    %v2691 = vadd.f32 %v2417, %v2646
    %v2692 = vadd.f32 %v2419, %v2650
    %v2693 = vadd.f32 %v2423, %v2646
    %v2694 = vadd.f32 %v2425, %v2650
    %v2695 = vadd.f32 %v2427, %v2646
    %v2696 = vadd.f32 %v2429, %v2650
    %v2697 = vadd.f32 %v2433, %v2646
    %v2698 = vadd.f32 %v2435, %v2650
    %v2699 = vadd.f32 %v2437, %v2646
    %v2700 = vadd.f32 %v2439, %v2650
    %v2701 = vadd.f32 %v2443, %v2646
    %v2702 = vadd.f32 %v2445, %v2650
    %v2703 = vadd.f32 %v2447, %v2646
    %v2704 = vadd.f32 %v2449, %v2650
    %v2705 = vadd.f32 %v2453, %v2646
    %v2706 = vadd.f32 %v2455, %v2650
    %v2707 = vadd.f32 %v2457, %v2646
    %v2708 = vadd.f32 %v2459, %v2650
    %v2709 = vadd.f32 %v2463, %v2646
    %v2710 = vadd.f32 %v2465, %v2650
    %v2711 = vadd.f32 %v2467, %v2646
    %v2712 = vadd.f32 %v2469, %v2650
    %v2713 = vadd.f32 %v2473, %v2646
    %v2714 = vadd.f32 %v2475, %v2650
    %v2715 = vadd.f32 %v2477, %v2646
    %v2716 = vadd.f32 %v2479, %v2650
    %v2717 = vadd.f32 %v2483, %v2646
    %v2718 = vadd.f32 %v2485, %v2650
    %v2719 = vadd.f32 %v2487, %v2646
    %v2720 = vadd.f32 %v2489, %v2650
    %v2721 = vadd.f32 %v2493, %v2646
    %v2722 = vadd.f32 %v2495, %v2650
    %v2723 = vadd.f32 %v2497, %v2646
    %v2724 = vadd.f32 %v2499, %v2650
    %v2725 = vadd.f32 %v2503, %v2646
    %v2726 = vadd.f32 %v2505, %v2650
    %v2727 = vadd.f32 %v2507, %v2646
    %v2728 = vadd.f32 %v2509, %v2650
    %v2729 = vadd.f32 %v2513, %v2646
    %v2730 = vadd.f32 %v2515, %v2650
    %v2731 = vadd.f32 %v2517, %v2646
    %v2732 = vadd.f32 %v2519, %v2650
    %v2733 = vadd.f32 %v2523, %v2646
    %v2734 = vadd.f32 %v2525, %v2650
    %v2735 = vadd.f32 %v2527, %v2646
    %v2736 = vadd.f32 %v2529, %v2650
    %v2737 = vadd.f32 %v2533, %v2646
    %v2738 = vadd.f32 %v2535, %v2650
    %v2739 = vadd.f32 %v2537, %v2646
    %v2740 = vadd.f32 %v2539, %v2650
    %v2741 = vadd.f32 %v2543, %v2646
    %v2742 = vadd.f32 %v2545, %v2650
    %v2743 = vadd.f32 %v2547, %v2646
    %v2744 = vadd.f32 %v2549, %v2650
    %v2745 = vadd.f32 %v2553, %v2646
    %v2746 = vadd.f32 %v2555, %v2650
    %v2747 = vadd.f32 %v2557, %v2646
    %v2748 = vadd.f32 %v2559, %v2650
    %v2749 = vadd.f32 %v2563, %v2646
    %v2750 = vadd.f32 %v2565, %v2650
    %v2751 = vadd.f32 %v2567, %v2646
    %v2752 = vadd.f32 %v2569, %v2650
    %v2753 = vadd.f32 %v2573, %v2646
    %v2754 = vadd.f32 %v2575, %v2650
    %v2755 = vadd.f32 %v2577, %v2646
    %v2756 = vadd.f32 %v2579, %v2650
    %v2757 = vadd.f32 %v2583, %v2646
    %v2758 = vadd.f32 %v2585, %v2650
    %v2759 = vadd.f32 %v2587, %v2646
    %v2760 = vadd.f32 %v2589, %v2650
    %v2761 = vadd.f32 %v2593, %v2646
    %v2762 = vadd.f32 %v2595, %v2650
    %v2763 = vadd.f32 %v2597, %v2646
    %v2764 = vadd.f32 %v2599, %v2650
    %v2765 = vadd.f32 %v2603, %v2646
    %v2766 = vadd.f32 %v2605, %v2650
    %v2767 = vadd.f32 %v2607, %v2646
    %v2768 = vadd.f32 %v2609, %v2650
    %v2769 = vadd.f32 %v2613, %v2646
    %v2770 = vadd.f32 %v2615, %v2650
    %v2771 = vadd.f32 %v2617, %v2646
    %v2772 = vadd.f32 %v2619, %v2650
    %v2773 = vadd.f32 %v2623, %v2646
    %v2774 = vadd.f32 %v2625, %v2650
    %v2775 = vadd.f32 %v2627, %v2646
    %v2776 = vadd.f32 %v2629, %v2650
    %v2777 = vadd.f32 %v2633, %v2646
    %v2778 = vadd.f32 %v2635, %v2650
    %v2779 = vadd.f32 %v2637, %v2646
    %v2780 = vadd.f32 %v2639, %v2650
    %2909 = vrot.lane.b32.xlu0 %v2653, 32
    %v2910 = vpop.permute.xlu0 %2909
    %2911 = vrot.lane.b32.xlu0 %v2654, 32
    %v2912 = vpop.permute.xlu0 %2911
    %2913 = vrot.lane.b32.xlu0 %v2655, 32
    %v2914 = vpop.permute.xlu0 %2913
    %2915 = vrot.lane.b32.xlu0 %v2656, 32
    %v2916 = vpop.permute.xlu0 %2915
    %2917 = vrot.lane.b32.xlu0 %v2657, 32
    %v2918 = vpop.permute.xlu0 %2917
    %2919 = vrot.lane.b32.xlu0 %v2658, 32
    %v2920 = vpop.permute.xlu0 %2919
    %2921 = vrot.lane.b32.xlu0 %v2659, 32
    %v2922 = vpop.permute.xlu0 %2921
    %2923 = vrot.lane.b32.xlu0 %v2660, 32
    %v2924 = vpop.permute.xlu0 %2923
    %2925 = vrot.lane.b32.xlu0 %v2661, 32
    %v2926 = vpop.permute.xlu0 %2925
    %2927 = vrot.lane.b32.xlu0 %v2662, 32
    %v2928 = vpop.permute.xlu0 %2927
    %2929 = vrot.lane.b32.xlu0 %v2663, 32
    %v2930 = vpop.permute.xlu0 %2929
    %2931 = vrot.lane.b32.xlu0 %v2664, 32
    %v2932 = vpop.permute.xlu0 %2931
    %2933 = vrot.lane.b32.xlu0 %v2665, 32
    %v2934 = vpop.permute.xlu0 %2933
    %2935 = vrot.lane.b32.xlu0 %v2666, 32
    %v2936 = vpop.permute.xlu0 %2935
    %2937 = vrot.lane.b32.xlu0 %v2667, 32
    %v2938 = vpop.permute.xlu0 %2937
    %2939 = vrot.lane.b32.xlu0 %v2668, 32
    %v2940 = vpop.permute.xlu0 %2939
    %2941 = vrot.lane.b32.xlu0 %v2669, 32
    %v2942 = vpop.permute.xlu0 %2941
    %2943 = vrot.lane.b32.xlu0 %v2670, 32
    %v2944 = vpop.permute.xlu0 %2943
    %2945 = vrot.lane.b32.xlu0 %v2671, 32
    %v2946 = vpop.permute.xlu0 %2945
    %2947 = vrot.lane.b32.xlu0 %v2672, 32
    %v2948 = vpop.permute.xlu0 %2947
    %2949 = vrot.lane.b32.xlu0 %v2673, 32
    %v2950 = vpop.permute.xlu0 %2949
    %2951 = vrot.lane.b32.xlu0 %v2674, 32
    %v2952 = vpop.permute.xlu0 %2951
    %2953 = vrot.lane.b32.xlu0 %v2675, 32
    %v2954 = vpop.permute.xlu0 %2953
    %2955 = vrot.lane.b32.xlu0 %v2676, 32
    %v2956 = vpop.permute.xlu0 %2955
    %2957 = vrot.lane.b32.xlu0 %v2677, 32
    %v2958 = vpop.permute.xlu0 %2957
    %2959 = vrot.lane.b32.xlu0 %v2678, 32
    %v2960 = vpop.permute.xlu0 %2959
    %2961 = vrot.lane.b32.xlu0 %v2679, 32
    %v2962 = vpop.permute.xlu0 %2961
    %2963 = vrot.lane.b32.xlu0 %v2680, 32
    %v2964 = vpop.permute.xlu0 %2963
    %2965 = vrot.lane.b32.xlu0 %v2681, 32
    %v2966 = vpop.permute.xlu0 %2965
    %2967 = vrot.lane.b32.xlu0 %v2682, 32
    %v2968 = vpop.permute.xlu0 %2967
    %2969 = vrot.lane.b32.xlu0 %v2683, 32
    %v2970 = vpop.permute.xlu0 %2969
    %2971 = vrot.lane.b32.xlu0 %v2684, 32
    %v2972 = vpop.permute.xlu0 %2971
    %2973 = vrot.lane.b32.xlu0 %v2685, 32
    %v2974 = vpop.permute.xlu0 %2973
    %2975 = vrot.lane.b32.xlu0 %v2686, 32
    %v2976 = vpop.permute.xlu0 %2975
    %2977 = vrot.lane.b32.xlu0 %v2687, 32
    %v2978 = vpop.permute.xlu0 %2977
    %2979 = vrot.lane.b32.xlu0 %v2688, 32
    %v2980 = vpop.permute.xlu0 %2979
    %2981 = vrot.lane.b32.xlu0 %v2689, 32
    %v2982 = vpop.permute.xlu0 %2981
    %2983 = vrot.lane.b32.xlu0 %v2690, 32
    %v2984 = vpop.permute.xlu0 %2983
    %2985 = vrot.lane.b32.xlu0 %v2691, 32
    %v2986 = vpop.permute.xlu0 %2985
    %2987 = vrot.lane.b32.xlu0 %v2692, 32
    %v2988 = vpop.permute.xlu0 %2987
    %2989 = vrot.lane.b32.xlu0 %v2693, 32
    %v2990 = vpop.permute.xlu0 %2989
    %2991 = vrot.lane.b32.xlu0 %v2694, 32
    %v2992 = vpop.permute.xlu0 %2991
    %2993 = vrot.lane.b32.xlu0 %v2695, 32
    %v2994 = vpop.permute.xlu0 %2993
    %2995 = vrot.lane.b32.xlu0 %v2696, 32
    %v2996 = vpop.permute.xlu0 %2995
    %2997 = vrot.lane.b32.xlu0 %v2697, 32
    %v2998 = vpop.permute.xlu0 %2997
    %2999 = vrot.lane.b32.xlu0 %v2698, 32
    %v3000 = vpop.permute.xlu0 %2999
    %3001 = vrot.lane.b32.xlu0 %v2699, 32
    %v3002 = vpop.permute.xlu0 %3001
    %3003 = vrot.lane.b32.xlu0 %v2700, 32
    %v3004 = vpop.permute.xlu0 %3003
    %3005 = vrot.lane.b32.xlu0 %v2701, 32
    %v3006 = vpop.permute.xlu0 %3005
    %3007 = vrot.lane.b32.xlu0 %v2702, 32
    %v3008 = vpop.permute.xlu0 %3007
    %3009 = vrot.lane.b32.xlu0 %v2703, 32
    %v3010 = vpop.permute.xlu0 %3009
    %3011 = vrot.lane.b32.xlu0 %v2704, 32
    %v3012 = vpop.permute.xlu0 %3011
    %3013 = vrot.lane.b32.xlu0 %v2705, 32
    %v3014 = vpop.permute.xlu0 %3013
    %3015 = vrot.lane.b32.xlu0 %v2706, 32
    %v3016 = vpop.permute.xlu0 %3015
    %3017 = vrot.lane.b32.xlu0 %v2707, 32
    %v3018 = vpop.permute.xlu0 %3017
    %3019 = vrot.lane.b32.xlu0 %v2708, 32
    %v3020 = vpop.permute.xlu0 %3019
    %3021 = vrot.lane.b32.xlu0 %v2709, 32
    %v3022 = vpop.permute.xlu0 %3021
    %3023 = vrot.lane.b32.xlu0 %v2710, 32
    %v3024 = vpop.permute.xlu0 %3023
    %3025 = vrot.lane.b32.xlu0 %v2711, 32
    %v3026 = vpop.permute.xlu0 %3025
    %3027 = vrot.lane.b32.xlu0 %v2712, 32
    %v3028 = vpop.permute.xlu0 %3027
    %3029 = vrot.lane.b32.xlu0 %v2713, 32
    %v3030 = vpop.permute.xlu0 %3029
    %3031 = vrot.lane.b32.xlu0 %v2714, 32
    %v3032 = vpop.permute.xlu0 %3031
    %3033 = vrot.lane.b32.xlu0 %v2715, 32
    %v3034 = vpop.permute.xlu0 %3033
    %3035 = vrot.lane.b32.xlu0 %v2716, 32
    %v3036 = vpop.permute.xlu0 %3035
    %3037 = vrot.lane.b32.xlu0 %v2717, 32
    %v3038 = vpop.permute.xlu0 %3037
    %3039 = vrot.lane.b32.xlu0 %v2718, 32
    %v3040 = vpop.permute.xlu0 %3039
    %3041 = vrot.lane.b32.xlu0 %v2719, 32
    %v3042 = vpop.permute.xlu0 %3041
    %3043 = vrot.lane.b32.xlu0 %v2720, 32
    %v3044 = vpop.permute.xlu0 %3043
    %3045 = vrot.lane.b32.xlu0 %v2721, 32
    %v3046 = vpop.permute.xlu0 %3045
    %3047 = vrot.lane.b32.xlu0 %v2722, 32
    %v3048 = vpop.permute.xlu0 %3047
    %3049 = vrot.lane.b32.xlu0 %v2723, 32
    %v3050 = vpop.permute.xlu0 %3049
    %3051 = vrot.lane.b32.xlu0 %v2724, 32
    %v3052 = vpop.permute.xlu0 %3051
    %3053 = vrot.lane.b32.xlu0 %v2725, 32
    %v3054 = vpop.permute.xlu0 %3053
    %3055 = vrot.lane.b32.xlu0 %v2726, 32
    %v3056 = vpop.permute.xlu0 %3055
    %3057 = vrot.lane.b32.xlu0 %v2727, 32
    %v3058 = vpop.permute.xlu0 %3057
    %3059 = vrot.lane.b32.xlu0 %v2728, 32
    %v3060 = vpop.permute.xlu0 %3059
    %3061 = vrot.lane.b32.xlu0 %v2729, 32
    %v3062 = vpop.permute.xlu0 %3061
    %3063 = vrot.lane.b32.xlu0 %v2730, 32
    %v3064 = vpop.permute.xlu0 %3063
    %3065 = vrot.lane.b32.xlu0 %v2731, 32
    %v3066 = vpop.permute.xlu0 %3065
    %3067 = vrot.lane.b32.xlu0 %v2732, 32
    %v3068 = vpop.permute.xlu0 %3067
    %3069 = vrot.lane.b32.xlu0 %v2733, 32
    %v3070 = vpop.permute.xlu0 %3069
    %3071 = vrot.lane.b32.xlu0 %v2734, 32
    %v3072 = vpop.permute.xlu0 %3071
    %3073 = vrot.lane.b32.xlu0 %v2735, 32
    %v3074 = vpop.permute.xlu0 %3073
    %3075 = vrot.lane.b32.xlu0 %v2736, 32
    %v3076 = vpop.permute.xlu0 %3075
    %3077 = vrot.lane.b32.xlu0 %v2737, 32
    %v3078 = vpop.permute.xlu0 %3077
    %3079 = vrot.lane.b32.xlu0 %v2738, 32
    %v3080 = vpop.permute.xlu0 %3079
    %3081 = vrot.lane.b32.xlu0 %v2739, 32
    %v3082 = vpop.permute.xlu0 %3081
    %3083 = vrot.lane.b32.xlu0 %v2740, 32
    %v3084 = vpop.permute.xlu0 %3083
    %3085 = vrot.lane.b32.xlu0 %v2741, 32
    %v3086 = vpop.permute.xlu0 %3085
    %3087 = vrot.lane.b32.xlu0 %v2742, 32
    %v3088 = vpop.permute.xlu0 %3087
    %3089 = vrot.lane.b32.xlu0 %v2743, 32
    %v3090 = vpop.permute.xlu0 %3089
    %3091 = vrot.lane.b32.xlu0 %v2744, 32
    %v3092 = vpop.permute.xlu0 %3091
    %3093 = vrot.lane.b32.xlu0 %v2745, 32
    %v3094 = vpop.permute.xlu0 %3093
    %3095 = vrot.lane.b32.xlu0 %v2746, 32
    %v3096 = vpop.permute.xlu0 %3095
    %3097 = vrot.lane.b32.xlu0 %v2747, 32
    %v3098 = vpop.permute.xlu0 %3097
    %3099 = vrot.lane.b32.xlu0 %v2748, 32
    %v3100 = vpop.permute.xlu0 %3099
    %3101 = vrot.lane.b32.xlu0 %v2749, 32
    %v3102 = vpop.permute.xlu0 %3101
    %3103 = vrot.lane.b32.xlu0 %v2750, 32
    %v3104 = vpop.permute.xlu0 %3103
    %3105 = vrot.lane.b32.xlu0 %v2751, 32
    %v3106 = vpop.permute.xlu0 %3105
    %3107 = vrot.lane.b32.xlu0 %v2752, 32
    %v3108 = vpop.permute.xlu0 %3107
    %3109 = vrot.lane.b32.xlu0 %v2753, 32
    %v3110 = vpop.permute.xlu0 %3109
    %3111 = vrot.lane.b32.xlu0 %v2754, 32
    %v3112 = vpop.permute.xlu0 %3111
    %3113 = vrot.lane.b32.xlu0 %v2755, 32
    %v3114 = vpop.permute.xlu0 %3113
    %3115 = vrot.lane.b32.xlu0 %v2756, 32
    %v3116 = vpop.permute.xlu0 %3115
    %3117 = vrot.lane.b32.xlu0 %v2757, 32
    %v3118 = vpop.permute.xlu0 %3117
    %3119 = vrot.lane.b32.xlu0 %v2758, 32
    %v3120 = vpop.permute.xlu0 %3119
    %3121 = vrot.lane.b32.xlu0 %v2759, 32
    %v3122 = vpop.permute.xlu0 %3121
    %3123 = vrot.lane.b32.xlu0 %v2760, 32
    %v3124 = vpop.permute.xlu0 %3123
    %3125 = vrot.lane.b32.xlu0 %v2761, 32
    %v3126 = vpop.permute.xlu0 %3125
    %3127 = vrot.lane.b32.xlu0 %v2762, 32
    %v3128 = vpop.permute.xlu0 %3127
    %3129 = vrot.lane.b32.xlu0 %v2763, 32
    %v3130 = vpop.permute.xlu0 %3129
    %3131 = vrot.lane.b32.xlu0 %v2764, 32
    %v3132 = vpop.permute.xlu0 %3131
    %3133 = vrot.lane.b32.xlu0 %v2765, 32
    %v3134 = vpop.permute.xlu0 %3133
    %3135 = vrot.lane.b32.xlu0 %v2766, 32
    %v3136 = vpop.permute.xlu0 %3135
    %3137 = vrot.lane.b32.xlu0 %v2767, 32
    %v3138 = vpop.permute.xlu0 %3137
    %3139 = vrot.lane.b32.xlu0 %v2768, 32
    %v3140 = vpop.permute.xlu0 %3139
    %3141 = vrot.lane.b32.xlu0 %v2769, 32
    %v3142 = vpop.permute.xlu0 %3141
    %3143 = vrot.lane.b32.xlu0 %v2770, 32
    %v3144 = vpop.permute.xlu0 %3143
    %3145 = vrot.lane.b32.xlu0 %v2771, 32
    %v3146 = vpop.permute.xlu0 %3145
    %3147 = vrot.lane.b32.xlu0 %v2772, 32
    %v3148 = vpop.permute.xlu0 %3147
    %3149 = vrot.lane.b32.xlu0 %v2773, 32
    %v3150 = vpop.permute.xlu0 %3149
    %3151 = vrot.lane.b32.xlu0 %v2774, 32
    %v3152 = vpop.permute.xlu0 %3151
    %3153 = vrot.lane.b32.xlu0 %v2775, 32
    %v3154 = vpop.permute.xlu0 %3153
    %3155 = vrot.lane.b32.xlu0 %v2776, 32
    %v3156 = vpop.permute.xlu0 %3155
    %3157 = vrot.lane.b32.xlu0 %v2777, 32
    %v3158 = vpop.permute.xlu0 %3157
    %3159 = vrot.lane.b32.xlu0 %v2778, 32
    %v3160 = vpop.permute.xlu0 %3159
    %3161 = vrot.lane.b32.xlu0 %v2779, 32
    %v3162 = vpop.permute.xlu0 %3161
    %3163 = vrot.lane.b32.xlu0 %v2780, 32
    %v3164 = vpop.permute.xlu0 %3163
    %vm3165 = vcmask 261120
    %v3166 = vsel %vm3165, %v2910, %v2912
    %v3167 = vsel %vm3165, %v2914, %v2916
    %v3168 = vsel %vm3165, %v2918, %v2920
    %v3169 = vsel %vm3165, %v2922, %v2924
    %v3170 = vsel %vm3165, %v2926, %v2928
    %v3171 = vsel %vm3165, %v2930, %v2932
    %v3172 = vsel %vm3165, %v2934, %v2936
    %v3173 = vsel %vm3165, %v2938, %v2940
    %v3174 = vsel %vm3165, %v2942, %v2944
    %v3175 = vsel %vm3165, %v2946, %v2948
    %v3176 = vsel %vm3165, %v2950, %v2952
    %v3177 = vsel %vm3165, %v2954, %v2956
    %v3178 = vsel %vm3165, %v2958, %v2960
    %v3179 = vsel %vm3165, %v2962, %v2964
    %v3180 = vsel %vm3165, %v2966, %v2968
    %v3181 = vsel %vm3165, %v2970, %v2972
    %v3182 = vsel %vm3165, %v2974, %v2976
    %v3183 = vsel %vm3165, %v2978, %v2980
    %v3184 = vsel %vm3165, %v2982, %v2984
    %v3185 = vsel %vm3165, %v2986, %v2988
    %v3186 = vsel %vm3165, %v2990, %v2992
    %v3187 = vsel %vm3165, %v2994, %v2996
    %v3188 = vsel %vm3165, %v2998, %v3000
    %v3189 = vsel %vm3165, %v3002, %v3004
    %v3190 = vsel %vm3165, %v3006, %v3008
    %v3191 = vsel %vm3165, %v3010, %v3012
    %v3192 = vsel %vm3165, %v3014, %v3016
    %v3193 = vsel %vm3165, %v3018, %v3020
    %v3194 = vsel %vm3165, %v3022, %v3024
    %v3195 = vsel %vm3165, %v3026, %v3028
    %v3196 = vsel %vm3165, %v3030, %v3032
    %v3197 = vsel %vm3165, %v3034, %v3036
    %v3198 = vsel %vm3165, %v3038, %v3040
    %v3199 = vsel %vm3165, %v3042, %v3044
    %v3200 = vsel %vm3165, %v3046, %v3048
    %v3201 = vsel %vm3165, %v3050, %v3052
    %v3202 = vsel %vm3165, %v3054, %v3056
    %v3203 = vsel %vm3165, %v3058, %v3060
    %v3204 = vsel %vm3165, %v3062, %v3064
    %v3205 = vsel %vm3165, %v3066, %v3068
    %v3206 = vsel %vm3165, %v3070, %v3072
    %v3207 = vsel %vm3165, %v3074, %v3076
    %v3208 = vsel %vm3165, %v3078, %v3080
    %v3209 = vsel %vm3165, %v3082, %v3084
    %v3210 = vsel %vm3165, %v3086, %v3088
    %v3211 = vsel %vm3165, %v3090, %v3092
    %v3212 = vsel %vm3165, %v3094, %v3096
    %v3213 = vsel %vm3165, %v3098, %v3100
    %v3214 = vsel %vm3165, %v3102, %v3104
    %v3215 = vsel %vm3165, %v3106, %v3108
    %v3216 = vsel %vm3165, %v3110, %v3112
    %v3217 = vsel %vm3165, %v3114, %v3116
    %v3218 = vsel %vm3165, %v3118, %v3120
    %v3219 = vsel %vm3165, %v3122, %v3124
    %v3220 = vsel %vm3165, %v3126, %v3128
    %v3221 = vsel %vm3165, %v3130, %v3132
    %v3222 = vsel %vm3165, %v3134, %v3136
    %v3223 = vsel %vm3165, %v3138, %v3140
    %v3224 = vsel %vm3165, %v3142, %v3144
    %v3225 = vsel %vm3165, %v3146, %v3148
    %v3226 = vsel %vm3165, %v3150, %v3152
    %v3227 = vsel %vm3165, %v3154, %v3156
    %v3228 = vsel %vm3165, %v3158, %v3160
    %v3229 = vsel %vm3165, %v3162, %v3164
    %v3294 = vmax.f32 %v2653, %v3166
    %v3295 = vmax.f32 %v2655, %v3167
    %v3296 = vmax.f32 %v2657, %v3168
    %v3297 = vmax.f32 %v2659, %v3169
    %v3298 = vmax.f32 %v2661, %v3170
    %v3299 = vmax.f32 %v2663, %v3171
    %v3300 = vmax.f32 %v2665, %v3172
    %v3301 = vmax.f32 %v2667, %v3173
    %v3302 = vmax.f32 %v2669, %v3174
    %v3303 = vmax.f32 %v2671, %v3175
    %v3304 = vmax.f32 %v2673, %v3176
    %v3305 = vmax.f32 %v2675, %v3177
    %v3306 = vmax.f32 %v2677, %v3178
    %v3307 = vmax.f32 %v2679, %v3179
    %v3308 = vmax.f32 %v2681, %v3180
    %v3309 = vmax.f32 %v2683, %v3181
    %v3310 = vmax.f32 %v2685, %v3182
    %v3311 = vmax.f32 %v2687, %v3183
    %v3312 = vmax.f32 %v2689, %v3184
    %v3313 = vmax.f32 %v2691, %v3185
    %v3314 = vmax.f32 %v2693, %v3186
    %v3315 = vmax.f32 %v2695, %v3187
    %v3316 = vmax.f32 %v2697, %v3188
    %v3317 = vmax.f32 %v2699, %v3189
    %v3318 = vmax.f32 %v2701, %v3190
    %v3319 = vmax.f32 %v2703, %v3191
    %v3320 = vmax.f32 %v2705, %v3192
    %v3321 = vmax.f32 %v2707, %v3193
    %v3322 = vmax.f32 %v2709, %v3194
    %v3323 = vmax.f32 %v2711, %v3195
    %v3324 = vmax.f32 %v2713, %v3196
    %v3325 = vmax.f32 %v2715, %v3197
    %v3326 = vmax.f32 %v2717, %v3198
    %v3327 = vmax.f32 %v2719, %v3199
    %v3328 = vmax.f32 %v2721, %v3200
    %v3329 = vmax.f32 %v2723, %v3201
    %v3330 = vmax.f32 %v2725, %v3202
    %v3331 = vmax.f32 %v2727, %v3203
    %v3332 = vmax.f32 %v2729, %v3204
    %v3333 = vmax.f32 %v2731, %v3205
    %v3334 = vmax.f32 %v2733, %v3206
    %v3335 = vmax.f32 %v2735, %v3207
    %v3336 = vmax.f32 %v2737, %v3208
    %v3337 = vmax.f32 %v2739, %v3209
    %v3338 = vmax.f32 %v2741, %v3210
    %v3339 = vmax.f32 %v2743, %v3211
    %v3340 = vmax.f32 %v2745, %v3212
    %v3341 = vmax.f32 %v2747, %v3213
    %v3342 = vmax.f32 %v2749, %v3214
    %v3343 = vmax.f32 %v2751, %v3215
    %v3344 = vmax.f32 %v2753, %v3216
    %v3345 = vmax.f32 %v2755, %v3217
    %v3346 = vmax.f32 %v2757, %v3218
    %v3347 = vmax.f32 %v2759, %v3219
    %v3348 = vmax.f32 %v2761, %v3220
    %v3349 = vmax.f32 %v2763, %v3221
    %v3350 = vmax.f32 %v2765, %v3222
    %v3351 = vmax.f32 %v2767, %v3223
    %v3352 = vmax.f32 %v2769, %v3224
    %v3353 = vmax.f32 %v2771, %v3225
    %v3354 = vmax.f32 %v2773, %v3226
    %v3355 = vmax.f32 %v2775, %v3227
    %v3356 = vmax.f32 %v2777, %v3228
    %v3357 = vmax.f32 %v2779, %v3229
    %v3422 = vrot.slane %v3294, 1
    %v3423 = vrot.slane %v3295, 1
    %v3424 = vsel %vm592, %v3422, %v3423
    %v3425 = vrot.slane %v3296, 1
    %v3426 = vsel %vm592, %v3423, %v3425
    %v3427 = vrot.slane %v3297, 1
    %v3428 = vsel %vm592, %v3425, %v3427
    %v3429 = vrot.slane %v3298, 1
    %v3430 = vsel %vm592, %v3427, %v3429
    %v3431 = vrot.slane %v3299, 1
    %v3432 = vsel %vm592, %v3429, %v3431
    %v3433 = vrot.slane %v3300, 1
    %v3434 = vsel %vm592, %v3431, %v3433
    %v3435 = vrot.slane %v3301, 1
    %v3436 = vsel %vm592, %v3433, %v3435
    %v3437 = vrot.slane %v3302, 1
    %v3438 = vsel %vm592, %v3435, %v3437
    %v3439 = vrot.slane %v3303, 1
    %v3440 = vsel %vm592, %v3437, %v3439
    %v3441 = vrot.slane %v3304, 1
    %v3442 = vsel %vm592, %v3439, %v3441
    %v3443 = vrot.slane %v3305, 1
    %v3444 = vsel %vm592, %v3441, %v3443
    %v3445 = vrot.slane %v3306, 1
    %v3446 = vsel %vm592, %v3443, %v3445
    %v3447 = vrot.slane %v3307, 1
    %v3448 = vsel %vm592, %v3445, %v3447
    %v3449 = vrot.slane %v3308, 1
    %v3450 = vsel %vm592, %v3447, %v3449
    %v3451 = vrot.slane %v3309, 1
    %v3452 = vsel %vm592, %v3449, %v3451
    %v3453 = vrot.slane %v3310, 1
    %v3454 = vsel %vm592, %v3451, %v3453
    %v3455 = vrot.slane %v3311, 1
    %v3456 = vsel %vm592, %v3453, %v3455
    %v3457 = vrot.slane %v3312, 1
    %v3458 = vsel %vm592, %v3455, %v3457
    %v3459 = vrot.slane %v3313, 1
    %v3460 = vsel %vm592, %v3457, %v3459
    %v3461 = vrot.slane %v3314, 1
    %v3462 = vsel %vm592, %v3459, %v3461
    %v3463 = vrot.slane %v3315, 1
    %v3464 = vsel %vm592, %v3461, %v3463
    %v3465 = vrot.slane %v3316, 1
    %v3466 = vsel %vm592, %v3463, %v3465
    %v3467 = vrot.slane %v3317, 1
    %v3468 = vsel %vm592, %v3465, %v3467
    %v3469 = vrot.slane %v3318, 1
    %v3470 = vsel %vm592, %v3467, %v3469
    %v3471 = vrot.slane %v3319, 1
    %v3472 = vsel %vm592, %v3469, %v3471
    %v3473 = vrot.slane %v3320, 1
    %v3474 = vsel %vm592, %v3471, %v3473
    %v3475 = vrot.slane %v3321, 1
    %v3476 = vsel %vm592, %v3473, %v3475
    %v3477 = vrot.slane %v3322, 1
    %v3478 = vsel %vm592, %v3475, %v3477
    %v3479 = vrot.slane %v3323, 1
    %v3480 = vsel %vm592, %v3477, %v3479
    %v3481 = vrot.slane %v3324, 1
    %v3482 = vsel %vm592, %v3479, %v3481
    %v3483 = vrot.slane %v3325, 1
    %v3484 = vsel %vm592, %v3481, %v3483
    %v3485 = vrot.slane %v3326, 1
    %v3486 = vsel %vm592, %v3483, %v3485
    %v3487 = vrot.slane %v3327, 1
    %v3488 = vsel %vm592, %v3485, %v3487
    %v3489 = vrot.slane %v3328, 1
    %v3490 = vsel %vm592, %v3487, %v3489
    %v3491 = vrot.slane %v3329, 1
    %v3492 = vsel %vm592, %v3489, %v3491
    %v3493 = vrot.slane %v3330, 1
    %v3494 = vsel %vm592, %v3491, %v3493
    %v3495 = vrot.slane %v3331, 1
    %v3496 = vsel %vm592, %v3493, %v3495
    %v3497 = vrot.slane %v3332, 1
    %v3498 = vsel %vm592, %v3495, %v3497
    %v3499 = vrot.slane %v3333, 1
    %v3500 = vsel %vm592, %v3497, %v3499
    %v3501 = vrot.slane %v3334, 1
    %v3502 = vsel %vm592, %v3499, %v3501
    %v3503 = vrot.slane %v3335, 1
    %v3504 = vsel %vm592, %v3501, %v3503
    %v3505 = vrot.slane %v3336, 1
    %v3506 = vsel %vm592, %v3503, %v3505
    %v3507 = vrot.slane %v3337, 1
    %v3508 = vsel %vm592, %v3505, %v3507
    %v3509 = vrot.slane %v3338, 1
    %v3510 = vsel %vm592, %v3507, %v3509
    %v3511 = vrot.slane %v3339, 1
    %v3512 = vsel %vm592, %v3509, %v3511
    %v3513 = vrot.slane %v3340, 1
    %v3514 = vsel %vm592, %v3511, %v3513
    %v3515 = vrot.slane %v3341, 1
    %v3516 = vsel %vm592, %v3513, %v3515
    %v3517 = vrot.slane %v3342, 1
    %v3518 = vsel %vm592, %v3515, %v3517
    %v3519 = vrot.slane %v3343, 1
    %v3520 = vsel %vm592, %v3517, %v3519
    %v3521 = vrot.slane %v3344, 1
    %v3522 = vsel %vm592, %v3519, %v3521
    %v3523 = vrot.slane %v3345, 1
    %v3524 = vsel %vm592, %v3521, %v3523
    %v3525 = vrot.slane %v3346, 1
    %v3526 = vsel %vm592, %v3523, %v3525
    %v3527 = vrot.slane %v3347, 1
    %v3528 = vsel %vm592, %v3525, %v3527
    %v3529 = vrot.slane %v3348, 1
    %v3530 = vsel %vm592, %v3527, %v3529
    %v3531 = vrot.slane %v3349, 1
    %v3532 = vsel %vm592, %v3529, %v3531
    %v3533 = vrot.slane %v3350, 1
    %v3534 = vsel %vm592, %v3531, %v3533
    %v3535 = vrot.slane %v3351, 1
    %v3536 = vsel %vm592, %v3533, %v3535
    %v3537 = vrot.slane %v3352, 1
    %v3538 = vsel %vm592, %v3535, %v3537
    %v3539 = vrot.slane %v3353, 1
    %v3540 = vsel %vm592, %v3537, %v3539
    %v3541 = vrot.slane %v3354, 1
    %v3542 = vsel %vm592, %v3539, %v3541
    %v3543 = vrot.slane %v3355, 1
    %v3544 = vsel %vm592, %v3541, %v3543
    %v3545 = vrot.slane %v3356, 1
    %v3546 = vsel %vm592, %v3543, %v3545
    %v3547 = vrot.slane %v3357, 1
    %v3548 = vsel %vm592, %v3545, %v3547
    %v3613 = vmax.f32 %v3294, %v3424
    %v3614 = vmax.f32 %v3295, %v3426
    %v3615 = vmax.f32 %v3296, %v3428
    %v3616 = vmax.f32 %v3297, %v3430
    %v3617 = vmax.f32 %v3298, %v3432
    %v3618 = vmax.f32 %v3299, %v3434
    %v3619 = vmax.f32 %v3300, %v3436
    %v3620 = vmax.f32 %v3301, %v3438
    %v3621 = vmax.f32 %v3302, %v3440
    %v3622 = vmax.f32 %v3303, %v3442
    %v3623 = vmax.f32 %v3304, %v3444
    %v3624 = vmax.f32 %v3305, %v3446
    %v3625 = vmax.f32 %v3306, %v3448
    %v3626 = vmax.f32 %v3307, %v3450
    %v3627 = vmax.f32 %v3308, %v3452
    %v3628 = vmax.f32 %v3309, %v3454
    %v3629 = vmax.f32 %v3310, %v3456
    %v3630 = vmax.f32 %v3311, %v3458
    %v3631 = vmax.f32 %v3312, %v3460
    %v3632 = vmax.f32 %v3313, %v3462
    %v3633 = vmax.f32 %v3314, %v3464
    %v3634 = vmax.f32 %v3315, %v3466
    %v3635 = vmax.f32 %v3316, %v3468
    %v3636 = vmax.f32 %v3317, %v3470
    %v3637 = vmax.f32 %v3318, %v3472
    %v3638 = vmax.f32 %v3319, %v3474
    %v3639 = vmax.f32 %v3320, %v3476
    %v3640 = vmax.f32 %v3321, %v3478
    %v3641 = vmax.f32 %v3322, %v3480
    %v3642 = vmax.f32 %v3323, %v3482
    %v3643 = vmax.f32 %v3324, %v3484
    %v3644 = vmax.f32 %v3325, %v3486
    %v3645 = vmax.f32 %v3326, %v3488
    %v3646 = vmax.f32 %v3327, %v3490
    %v3647 = vmax.f32 %v3328, %v3492
    %v3648 = vmax.f32 %v3329, %v3494
    %v3649 = vmax.f32 %v3330, %v3496
    %v3650 = vmax.f32 %v3331, %v3498
    %v3651 = vmax.f32 %v3332, %v3500
    %v3652 = vmax.f32 %v3333, %v3502
    %v3653 = vmax.f32 %v3334, %v3504
    %v3654 = vmax.f32 %v3335, %v3506
    %v3655 = vmax.f32 %v3336, %v3508
    %v3656 = vmax.f32 %v3337, %v3510
    %v3657 = vmax.f32 %v3338, %v3512
    %v3658 = vmax.f32 %v3339, %v3514
    %v3659 = vmax.f32 %v3340, %v3516
    %v3660 = vmax.f32 %v3341, %v3518
    %v3661 = vmax.f32 %v3342, %v3520
    %v3662 = vmax.f32 %v3343, %v3522
    %v3663 = vmax.f32 %v3344, %v3524
    %v3664 = vmax.f32 %v3345, %v3526
    %v3665 = vmax.f32 %v3346, %v3528
    %v3666 = vmax.f32 %v3347, %v3530
    %v3667 = vmax.f32 %v3348, %v3532
    %v3668 = vmax.f32 %v3349, %v3534
    %v3669 = vmax.f32 %v3350, %v3536
    %v3670 = vmax.f32 %v3351, %v3538
    %v3671 = vmax.f32 %v3352, %v3540
    %v3672 = vmax.f32 %v3353, %v3542
    %v3673 = vmax.f32 %v3354, %v3544
    %v3674 = vmax.f32 %v3355, %v3546
    %v3675 = vmax.f32 %v3356, %v3548
    %v3676 = vmax.f32 %v3357, %v3547
    %v3677 = vmax.f32 %v3613, 0.0
    %v3678 = vmax.f32 %v3614, 0.0
    %v3679 = vmax.f32 %v3615, 0.0
    %v3680 = vmax.f32 %v3616, 0.0
    %v3681 = vmax.f32 %v3617, 0.0
    %v3682 = vmax.f32 %v3618, 0.0
    %v3683 = vmax.f32 %v3619, 0.0
    %v3684 = vmax.f32 %v3620, 0.0
    %v3685 = vmax.f32 %v3621, 0.0
    %v3686 = vmax.f32 %v3622, 0.0
    %v3687 = vmax.f32 %v3623, 0.0
    %v3688 = vmax.f32 %v3624, 0.0
    %v3689 = vmax.f32 %v3625, 0.0
    %v3690 = vmax.f32 %v3626, 0.0
    %v3691 = vmax.f32 %v3627, 0.0
    %v3692 = vmax.f32 %v3628, 0.0
    %v3693 = vmax.f32 %v3629, 0.0
    %v3694 = vmax.f32 %v3630, 0.0
    %v3695 = vmax.f32 %v3631, 0.0
    %v3696 = vmax.f32 %v3632, 0.0
    %v3697 = vmax.f32 %v3633, 0.0
    %v3698 = vmax.f32 %v3634, 0.0
    %v3699 = vmax.f32 %v3635, 0.0
    %v3700 = vmax.f32 %v3636, 0.0
    %v3701 = vmax.f32 %v3637, 0.0
    %v3702 = vmax.f32 %v3638, 0.0
    %v3703 = vmax.f32 %v3639, 0.0
    %v3704 = vmax.f32 %v3640, 0.0
    %v3705 = vmax.f32 %v3641, 0.0
    %v3706 = vmax.f32 %v3642, 0.0
    %v3707 = vmax.f32 %v3643, 0.0
    %v3708 = vmax.f32 %v3644, 0.0
    %v3709 = vmax.f32 %v3645, 0.0
    %v3710 = vmax.f32 %v3646, 0.0
    %v3711 = vmax.f32 %v3647, 0.0
    %v3712 = vmax.f32 %v3648, 0.0
    %v3713 = vmax.f32 %v3649, 0.0
    %v3714 = vmax.f32 %v3650, 0.0
    %v3715 = vmax.f32 %v3651, 0.0
    %v3716 = vmax.f32 %v3652, 0.0
    %v3717 = vmax.f32 %v3653, 0.0
    %v3718 = vmax.f32 %v3654, 0.0
    %v3719 = vmax.f32 %v3655, 0.0
    %v3720 = vmax.f32 %v3656, 0.0
    %v3721 = vmax.f32 %v3657, 0.0
    %v3722 = vmax.f32 %v3658, 0.0
    %v3723 = vmax.f32 %v3659, 0.0
    %v3724 = vmax.f32 %v3660, 0.0
    %v3725 = vmax.f32 %v3661, 0.0
    %v3726 = vmax.f32 %v3662, 0.0
    %v3727 = vmax.f32 %v3663, 0.0
    %v3728 = vmax.f32 %v3664, 0.0
    %v3729 = vmax.f32 %v3665, 0.0
    %v3730 = vmax.f32 %v3666, 0.0
    %v3731 = vmax.f32 %v3667, 0.0
    %v3732 = vmax.f32 %v3668, 0.0
    %v3733 = vmax.f32 %v3669, 0.0
    %v3734 = vmax.f32 %v3670, 0.0
    %v3735 = vmax.f32 %v3671, 0.0
    %v3736 = vmax.f32 %v3672, 0.0
    %v3737 = vmax.f32 %v3673, 0.0
    %v3738 = vmax.f32 %v3674, 0.0
    %v3739 = vmax.f32 %v3675, 0.0
    %v3740 = vmax.f32 %v3676, 0.0
    %vm3741 = vcmask 785408
    %3742 = vst.msk [vmem:[#allocation2] sm:$0xff] %vm3741, %v3677
    %3743 = vst.msk [vmem:[#allocation2 + $0x8] sm:$0xff] %vm3741, %v3678
    %3744 = vst.msk [vmem:[#allocation2 + $0x10] sm:$0xff] %vm3741, %v3679
    %3745 = vst.msk [vmem:[#allocation2 + $0x18] sm:$0xff] %vm3741, %v3680
    %3746 = vst.msk [vmem:[#allocation2 + $0x20] sm:$0xff] %vm3741, %v3681
    %3747 = vst.msk [vmem:[#allocation2 + $0x28] sm:$0xff] %vm3741, %v3682
    %3748 = vst.msk [vmem:[#allocation2 + $0x30] sm:$0xff] %vm3741, %v3683
    %3749 = vst.msk [vmem:[#allocation2 + $0x38] sm:$0xff] %vm3741, %v3684
    %3750 = vst.msk [vmem:[#allocation2 + $0x40] sm:$0xff] %vm3741, %v3685
    %3751 = vst.msk [vmem:[#allocation2 + $0x48] sm:$0xff] %vm3741, %v3686
    %3752 = vst.msk [vmem:[#allocation2 + $0x50] sm:$0xff] %vm3741, %v3687
    %3753 = vst.msk [vmem:[#allocation2 + $0x58] sm:$0xff] %vm3741, %v3688
    %3754 = vst.msk [vmem:[#allocation2 + $0x60] sm:$0xff] %vm3741, %v3689
    %3755 = vst.msk [vmem:[#allocation2 + $0x68] sm:$0xff] %vm3741, %v3690
    %3756 = vst.msk [vmem:[#allocation2 + $0x70] sm:$0xff] %vm3741, %v3691
    %3757 = vst.msk [vmem:[#allocation2 + $0x78] sm:$0xff] %vm3741, %v3692
    %3758 = vst.msk [vmem:[#allocation2 + $0x80] sm:$0xff] %vm3741, %v3693
    %3759 = vst.msk [vmem:[#allocation2 + $0x88] sm:$0xff] %vm3741, %v3694
    %3760 = vst.msk [vmem:[#allocation2 + $0x90] sm:$0xff] %vm3741, %v3695
    %3761 = vst.msk [vmem:[#allocation2 + $0x98] sm:$0xff] %vm3741, %v3696
    %3762 = vst.msk [vmem:[#allocation2 + $0xa0] sm:$0xff] %vm3741, %v3697
    %3763 = vst.msk [vmem:[#allocation2 + $0xa8] sm:$0xff] %vm3741, %v3698
    %3764 = vst.msk [vmem:[#allocation2 + $0xb0] sm:$0xff] %vm3741, %v3699
    %3765 = vst.msk [vmem:[#allocation2 + $0xb8] sm:$0xff] %vm3741, %v3700
    %3766 = vst.msk [vmem:[#allocation2 + $0xc0] sm:$0xff] %vm3741, %v3701
    %3767 = vst.msk [vmem:[#allocation2 + $0xc8] sm:$0xff] %vm3741, %v3702
    %3768 = vst.msk [vmem:[#allocation2 + $0xd0] sm:$0xff] %vm3741, %v3703
    %3769 = vst.msk [vmem:[#allocation2 + $0xd8] sm:$0xff] %vm3741, %v3704
    %3770 = vst.msk [vmem:[#allocation2 + $0xe0] sm:$0xff] %vm3741, %v3705
    %3771 = vst.msk [vmem:[#allocation2 + $0xe8] sm:$0xff] %vm3741, %v3706
    %3772 = vst.msk [vmem:[#allocation2 + $0xf0] sm:$0xff] %vm3741, %v3707
    %3773 = vst.msk [vmem:[#allocation2 + $0xf8] sm:$0xff] %vm3741, %v3708
    %3774 = vst.msk [vmem:[#allocation2 + $0x100] sm:$0xff] %vm3741, %v3709
    %3775 = vst.msk [vmem:[#allocation2 + $0x108] sm:$0xff] %vm3741, %v3710
    %3776 = vst.msk [vmem:[#allocation2 + $0x110] sm:$0xff] %vm3741, %v3711
    %3777 = vst.msk [vmem:[#allocation2 + $0x118] sm:$0xff] %vm3741, %v3712
    %3778 = vst.msk [vmem:[#allocation2 + $0x120] sm:$0xff] %vm3741, %v3713
    %3779 = vst.msk [vmem:[#allocation2 + $0x128] sm:$0xff] %vm3741, %v3714
    %3780 = vst.msk [vmem:[#allocation2 + $0x130] sm:$0xff] %vm3741, %v3715
    %3781 = vst.msk [vmem:[#allocation2 + $0x138] sm:$0xff] %vm3741, %v3716
    %3782 = vst.msk [vmem:[#allocation2 + $0x140] sm:$0xff] %vm3741, %v3717
    %3783 = vst.msk [vmem:[#allocation2 + $0x148] sm:$0xff] %vm3741, %v3718
    %3784 = vst.msk [vmem:[#allocation2 + $0x150] sm:$0xff] %vm3741, %v3719
    %3785 = vst.msk [vmem:[#allocation2 + $0x158] sm:$0xff] %vm3741, %v3720
    %3786 = vst.msk [vmem:[#allocation2 + $0x160] sm:$0xff] %vm3741, %v3721
    %3787 = vst.msk [vmem:[#allocation2 + $0x168] sm:$0xff] %vm3741, %v3722
    %3788 = vst.msk [vmem:[#allocation2 + $0x170] sm:$0xff] %vm3741, %v3723
    %3789 = vst.msk [vmem:[#allocation2 + $0x178] sm:$0xff] %vm3741, %v3724
    %3790 = vst.msk [vmem:[#allocation2 + $0x180] sm:$0xff] %vm3741, %v3725
    %3791 = vst.msk [vmem:[#allocation2 + $0x188] sm:$0xff] %vm3741, %v3726
    %3792 = vst.msk [vmem:[#allocation2 + $0x190] sm:$0xff] %vm3741, %v3727
    %3793 = vst.msk [vmem:[#allocation2 + $0x198] sm:$0xff] %vm3741, %v3728
    %3794 = vst.msk [vmem:[#allocation2 + $0x1a0] sm:$0xff] %vm3741, %v3729
    %3795 = vst.msk [vmem:[#allocation2 + $0x1a8] sm:$0xff] %vm3741, %v3730
    %3796 = vst.msk [vmem:[#allocation2 + $0x1b0] sm:$0xff] %vm3741, %v3731
    %3797 = vst.msk [vmem:[#allocation2 + $0x1b8] sm:$0xff] %vm3741, %v3732
    %3798 = vst.msk [vmem:[#allocation2 + $0x1c0] sm:$0xff] %vm3741, %v3733
    %3799 = vst.msk [vmem:[#allocation2 + $0x1c8] sm:$0xff] %vm3741, %v3734
    %3800 = vst.msk [vmem:[#allocation2 + $0x1d0] sm:$0xff] %vm3741, %v3735
    %3801 = vst.msk [vmem:[#allocation2 + $0x1d8] sm:$0xff] %vm3741, %v3736
    %3802 = vst.msk [vmem:[#allocation2 + $0x1e0] sm:$0xff] %vm3741, %v3737
    %3803 = vst.msk [vmem:[#allocation2 + $0x1e8] sm:$0xff] %vm3741, %v3738
    %3804 = vst.msk [vmem:[#allocation2 + $0x1f0] sm:$0xff] %vm3741, %v3739
    %vm3805 = vcmask 782336
    %3806 = vst.msk [vmem:[#allocation2 + $0x1f8] sm:$0x1f] %vm3805, %v3740
    %v3807 = vld [vmem:[#allocation2] ss:$2 sm:$0xff]
    %s3808 = scalar_lea.vmem [#allocation2], 16
    %v3809 = vld [vmem:[%s3808] ss:$2 sm:$0xff]
    %s3810 = scalar_lea.vmem [#allocation2], 32
    %v3811 = vld [vmem:[%s3810] ss:$2 sm:$0xff]
    %s3812 = scalar_lea.vmem [#allocation2], 48
    %v3813 = vld [vmem:[%s3812] ss:$2 sm:$0xff]
    %s3814 = scalar_lea.vmem [#allocation2], 64
    %v3815 = vld [vmem:[%s3814] ss:$2 sm:$0xff]
    %s3816 = scalar_lea.vmem [#allocation2], 80
    %v3817 = vld [vmem:[%s3816] ss:$2 sm:$0xff]
    %s3818 = scalar_lea.vmem [#allocation2], 96
    %v3819 = vld [vmem:[%s3818] ss:$2 sm:$0xff]
    %s3820 = scalar_lea.vmem [#allocation2], 112
    %v3821 = vld [vmem:[%s3820] ss:$2 sm:$0xff]
    %s3822 = scalar_lea.vmem [#allocation2], 128
    %v3823 = vld [vmem:[%s3822] ss:$2 sm:$0xff]
    %s3824 = scalar_lea.vmem [#allocation2], 144
    %v3825 = vld [vmem:[%s3824] ss:$2 sm:$0xff]
    %s3826 = scalar_lea.vmem [#allocation2], 160
    %v3827 = vld [vmem:[%s3826] ss:$2 sm:$0xff]
    %s3828 = scalar_lea.vmem [#allocation2], 176
    %v3829 = vld [vmem:[%s3828] ss:$2 sm:$0xff]
    %s3830 = scalar_lea.vmem [#allocation2], 192
    %v3831 = vld [vmem:[%s3830] ss:$2 sm:$0xff]
    %s3832 = scalar_lea.vmem [#allocation2], 208
    %v3833 = vld [vmem:[%s3832] ss:$2 sm:$0xff]
    %s3834 = scalar_lea.vmem [#allocation2], 224
    %v3835 = vld [vmem:[%s3834] ss:$2 sm:$0xff]
    %s3836 = scalar_lea.vmem [#allocation2], 240
    %v3837 = vld [vmem:[%s3836] ss:$2 sm:$0xff]
    %s3838 = scalar_lea.vmem [#allocation2], 256
    %v3839 = vld [vmem:[%s3838] ss:$2 sm:$0xff]
    %s3840 = scalar_lea.vmem [#allocation2], 272
    %v3841 = vld [vmem:[%s3840] ss:$2 sm:$0xff]
    %s3842 = scalar_lea.vmem [#allocation2], 288
    %v3843 = vld [vmem:[%s3842] ss:$2 sm:$0xff]
    %s3844 = scalar_lea.vmem [#allocation2], 304
    %v3845 = vld [vmem:[%s3844] ss:$2 sm:$0xff]
    %s3846 = scalar_lea.vmem [#allocation2], 320
    %v3847 = vld [vmem:[%s3846] ss:$2 sm:$0xff]
    %s3848 = scalar_lea.vmem [#allocation2], 336
    %v3849 = vld [vmem:[%s3848] ss:$2 sm:$0xff]
    %s3850 = scalar_lea.vmem [#allocation2], 352
    %v3851 = vld [vmem:[%s3850] ss:$2 sm:$0xff]
    %s3852 = scalar_lea.vmem [#allocation2], 368
    %v3853 = vld [vmem:[%s3852] ss:$2 sm:$0xff]
    %s3854 = scalar_lea.vmem [#allocation2], 384
    %v3855 = vld [vmem:[%s3854] ss:$2 sm:$0xff]
    %s3856 = scalar_lea.vmem [#allocation2], 400
    %v3857 = vld [vmem:[%s3856] ss:$2 sm:$0xff]
    %s3858 = scalar_lea.vmem [#allocation2], 416
    %v3859 = vld [vmem:[%s3858] ss:$2 sm:$0xff]
    %s3860 = scalar_lea.vmem [#allocation2], 432
    %v3861 = vld [vmem:[%s3860] ss:$2 sm:$0xff]
    %s3862 = scalar_lea.vmem [#allocation2], 448
    %v3863 = vld [vmem:[%s3862] ss:$2 sm:$0xff]
    %s3864 = scalar_lea.vmem [#allocation2], 464
    %v3865 = vld [vmem:[%s3864] ss:$2 sm:$0xff]
    %s3866 = scalar_lea.vmem [#allocation2], 480
    %v3867 = vld [vmem:[%s3866] ss:$2 sm:$0xff]
    %s3868 = scalar_lea.vmem [#allocation2], 496
    %v3869 = vld [vmem:[%s3868] ss:$2 sm:$0x7f]
    %v3870 = vpack.c.bf16 %v3809, %v3807
    %v3871 = vpack.c.bf16 %v3813, %v3811
    %v3872 = vpack.c.bf16 %v3817, %v3815
    %v3873 = vpack.c.bf16 %v3821, %v3819
    %v3874 = vpack.c.bf16 %v3825, %v3823
    %v3875 = vpack.c.bf16 %v3829, %v3827
    %v3876 = vpack.c.bf16 %v3833, %v3831
    %v3877 = vpack.c.bf16 %v3837, %v3835
    %v3878 = vpack.c.bf16 %v3841, %v3839
    %v3879 = vpack.c.bf16 %v3845, %v3843
    %v3880 = vpack.c.bf16 %v3849, %v3847
    %v3881 = vpack.c.bf16 %v3853, %v3851
    %v3882 = vpack.c.bf16 %v3857, %v3855
    %v3883 = vpack.c.bf16 %v3861, %v3859
    %v3884 = vpack.c.bf16 %v3865, %v3863
    %v3885 = vpack.c.bf16 %v3869, %v3867
    %v3886 = vld [vmem:[#allocation8] sm:$0xf]
    %v3887 = vld [vmem:[#allocation8 + $0x4] sm:$0xf]
    %v3888 = vld [vmem:[#allocation8 + $0x8] sm:$0xf]
    %v3889 = vld [vmem:[#allocation8 + $0xc] sm:$0xf]
    %v3890 = vld [vmem:[#allocation8 + $0x10] sm:$0xf]
    %v3891 = vld [vmem:[#allocation8 + $0x14] sm:$0xf]
    %v3892 = vld [vmem:[#allocation8 + $0x18] sm:$0xf]
    %v3893 = vld [vmem:[#allocation8 + $0x1c] sm:$0xf]
    %v3894 = vld [vmem:[#allocation8 + $0x20] sm:$0xf]
    %v3895 = vld [vmem:[#allocation8 + $0x24] sm:$0xf]
    %v3896 = vld [vmem:[#allocation8 + $0x28] sm:$0xf]
    %v3897 = vld [vmem:[#allocation8 + $0x2c] sm:$0xf]
    %s3898 = scalar_lea.vmem [#allocation8], 48
    %v3899 = vld [vmem:[%s3898] sm:$0xf]
    %v3900 = vld [vmem:[%s3898 + $0x4] sm:$0xf]
    %v3901 = vld [vmem:[%s3898 + $0x8] sm:$0xf]
    %v3902 = vld [vmem:[%s3898 + $0xc] sm:$0xf]
    %v3903 = vld [vmem:[%s3898 + $0x10] sm:$0xf]
    %v3904 = vld [vmem:[%s3898 + $0x14] sm:$0xf]
    %v3905 = vld [vmem:[%s3898 + $0x18] sm:$0xf]
    %v3906 = vld [vmem:[%s3898 + $0x1c] sm:$0xf]
    %v3907 = vld [vmem:[%s3898 + $0x20] sm:$0xf]
    %v3908 = vld [vmem:[%s3898 + $0x24] sm:$0xf]
    %v3909 = vld [vmem:[%s3898 + $0x28] sm:$0xf]
    %v3910 = vld [vmem:[%s3898 + $0x2c] sm:$0xf]
    %v3912 = vshrl.u32 %v3870, 16
    %v3914 = vshll.u32 %v3870, 16
    %v3916 = vrot.slane %v3914, 1
    %v3917 = vor.u32 %v3912, %v3916
    %v3919 = vshll.u32 %v3871, 16
    %v3921 = vrot.slane %v3919, 1
    %v3922 = vsel %vm234, %v3917, %v3921
    %v3923 = vshrl.u32 %v3871, 16
    %v3925 = vor.u32 %v3923, %v3921
    %v3927 = vshll.u32 %v3872, 16
    %v3929 = vrot.slane %v3927, 1
    %v3930 = vsel %vm234, %v3925, %v3929
    %v3931 = vshrl.u32 %v3872, 16
    %v3933 = vor.u32 %v3931, %v3929
    %v3935 = vshll.u32 %v3873, 16
    %v3937 = vrot.slane %v3935, 1
    %v3938 = vsel %vm234, %v3933, %v3937
    %v3939 = vshrl.u32 %v3873, 16
    %v3941 = vor.u32 %v3939, %v3937
    %v3943 = vshll.u32 %v3874, 16
    %v3945 = vrot.slane %v3943, 1
    %v3946 = vsel %vm234, %v3941, %v3945
    %v3947 = vshrl.u32 %v3874, 16
    %v3949 = vor.u32 %v3947, %v3945
    %v3951 = vshll.u32 %v3875, 16
    %v3953 = vrot.slane %v3951, 1
    %v3954 = vsel %vm234, %v3949, %v3953
    %v3955 = vshrl.u32 %v3875, 16
    %v3957 = vor.u32 %v3955, %v3953
    %v3959 = vshll.u32 %v3876, 16
    %v3961 = vrot.slane %v3959, 1
    %v3962 = vsel %vm234, %v3957, %v3961
    %v3963 = vshrl.u32 %v3876, 16
    %v3965 = vor.u32 %v3963, %v3961
    %v3967 = vshll.u32 %v3877, 16
    %v3969 = vrot.slane %v3967, 1
    %v3970 = vsel %vm234, %v3965, %v3969
    %v3971 = vshrl.u32 %v3877, 16
    %v3973 = vor.u32 %v3971, %v3969
    %v3975 = vshll.u32 %v3878, 16
    %v3977 = vrot.slane %v3975, 1
    %v3978 = vsel %vm234, %v3973, %v3977
    %v3979 = vshrl.u32 %v3878, 16
    %v3981 = vor.u32 %v3979, %v3977
    %v3983 = vshll.u32 %v3879, 16
    %v3985 = vrot.slane %v3983, 1
    %v3986 = vsel %vm234, %v3981, %v3985
    %v3987 = vshrl.u32 %v3879, 16
    %v3989 = vor.u32 %v3987, %v3985
    %v3991 = vshll.u32 %v3880, 16
    %v3993 = vrot.slane %v3991, 1
    %v3994 = vsel %vm234, %v3989, %v3993
    %v3995 = vshrl.u32 %v3880, 16
    %v3997 = vor.u32 %v3995, %v3993
    %v3999 = vshll.u32 %v3881, 16
    %v4001 = vrot.slane %v3999, 1
    %v4002 = vsel %vm234, %v3997, %v4001
    %v4003 = vshrl.u32 %v3881, 16
    %v4005 = vor.u32 %v4003, %v4001
    %v4007 = vshll.u32 %v3882, 16
    %v4009 = vrot.slane %v4007, 1
    %v4010 = vsel %vm234, %v4005, %v4009
    %v4011 = vshrl.u32 %v3882, 16
    %v4013 = vor.u32 %v4011, %v4009
    %v4015 = vshll.u32 %v3883, 16
    %v4017 = vrot.slane %v4015, 1
    %v4018 = vsel %vm234, %v4013, %v4017
    %v4019 = vshrl.u32 %v3883, 16
    %v4021 = vor.u32 %v4019, %v4017
    %v4023 = vshll.u32 %v3884, 16
    %v4025 = vrot.slane %v4023, 1
    %v4026 = vsel %vm234, %v4021, %v4025
    %v4027 = vshrl.u32 %v3884, 16
    %v4029 = vor.u32 %v4027, %v4025
    %v4031 = vshll.u32 %v3885, 16
    %v4033 = vrot.slane %v4031, 1
    %v4034 = vsel %vm234, %v4029, %v4033
    %v4035 = vshrl.u32 %v3885, 16
    %v4037 = vor.u32 %v4035, %v4033
    %v4050 = vunpack.c.l.b16 %v3899
    %v4051 = vunpack.c.l.b16 %v3900
    %v4052 = vunpack.c.l.b16 %v3901
    %v4053 = vunpack.c.l.b16 %v3902
    %v4054 = vunpack.c.l.b16 %v3903
    %v4055 = vunpack.c.l.b16 %v3904
    %v4056 = vunpack.c.l.b16 %v3905
    %v4057 = vunpack.c.l.b16 %v3906
    %v4058 = vunpack.c.l.b16 %v3907
    %v4059 = vunpack.c.l.b16 %v3908
    %v4060 = vunpack.c.l.b16 %v3909
    %v4061 = vunpack.c.l.b16 %v3910
    %v4062 = vpack.c.b16 %v4051, %v4050
    %v4063 = vpack.c.b16 %v4053, %v4052
    %v4064 = vpack.c.b16 %v4055, %v4054
    %v4065 = vpack.c.b16 %v4057, %v4056
    %v4066 = vpack.c.b16 %v4059, %v4058
    %v4067 = vpack.c.b16 %v4061, %v4060
    %v4075 = vsel %vm3741, %v3922, 0
    %v4078 = vsel %vm3741, %v3930, 0
    %v4081 = vsel %vm3741, %v3938, 0
    %v4084 = vsel %vm3741, %v3946, 0
    %v4087 = vsel %vm3741, %v3954, 0
    %v4090 = vsel %vm3741, %v3962, 0
    %v4093 = vsel %vm3741, %v3970, 0
    %v4096 = vsel %vm3741, %v3978, 0
    %v4099 = vsel %vm3741, %v3986, 0
    %v4102 = vsel %vm3741, %v3994, 0
    %v4105 = vsel %vm3741, %v4002, 0
    %v4108 = vsel %vm3741, %v4010, 0
    %v4111 = vsel %vm3741, %v4018, 0
    %v4114 = vsel %vm3741, %v4026, 0
    %v4117 = vsel %vm3741, %v4034, 0
    %v4120 = vsel %vm3741, %v4037, 0
    %4122 = vmatprep.subr.bf16.mxu0 0
    %4123 = vmatpush1.bf16.msra.mxu0 0
    %4124 = vmatprep.subr.bf16.mxu0 0
    %4125 = vmatpush1.bf16.msra.mxu0 0
    %4126 = vmatprep.subr.bf16.mxu0 0
    %4127 = vmatpush1.bf16.msra.mxu0 %v4067
    %4128 = vmatprep.subr.bf16.mxu0 0
    %4129 = vmatpush1.bf16.msra.mxu0 %v4066
    %4130 = vmatprep.subr.bf16.mxu0 0
    %4131 = vmatpush1.bf16.msra.mxu0 %v4065
    %4132 = vmatprep.subr.bf16.mxu0 0
    %4133 = vmatpush1.bf16.msra.mxu0 %v4064
    %4134 = vmatprep.subr.bf16.mxu0 0
    %4135 = vmatpush1.bf16.msra.mxu0 %v4063
    %4136 = vmatprep.subr.bf16.mxu0 0
    %4137 = vmatpush1.bf16.msra.mxu0 %v4062
    %4138 = vmatprep.subr.bf16.mxu0 0
    %4139 = vmatpush2.bf16.msra.mxu0 0
    %4140 = vmatprep.subr.bf16.mxu0 0
    %4141 = vmatpush2.bf16.msra.mxu0 0
    %4142 = vmatprep.subr.bf16.mxu0 0
    %4143 = vmatpush2.bf16.msra.mxu0 0
    %4144 = vmatprep.subr.bf16.mxu0 0
    %4145 = vmatpush2.bf16.msra.mxu0 0
    %4146 = vmatprep.subr.bf16.mxu0 0
    %4147 = vmatpush2.bf16.msra.mxu0 0
    %4148 = vmatprep.subr.bf16.mxu0 0
    %4149 = vmatpush2.bf16.msra.mxu0 0
    %4150 = vmatprep.subr.bf16.mxu0 0
    %4151 = vmatpush2.bf16.msra.mxu0 0
    %4152 = vmatprep.subr.bf16.mxu0 0
    %4153 = vmatpush2.bf16.msra.mxu0 0
    %4154 = vmatprep.mubr.bf16.mxu0 0
    %4155 = vmatmul.mubr.bf16.gmra.mxu0 %v4075
    %v4156 = vpop.f32.mrf.mxu0
    %v4157 = vadd.f32 0.0, %v4156
    %v4158 = vpop.f32.mrf.mxu0
    %v4159 = vpop.f32.mrf.mxu0
    %v4160 = vadd.f32 0.0, %v4159
    %v4161 = vpop.f32.mrf.mxu0
    %4162 = vmatprep.mubr.bf16.mxu0 0
    %4163 = vmatmul.mubr.bf16.gmra.mxu0 %v4078
    %v4164 = vpop.f32.mrf.mxu0
    %v4165 = vadd.f32 0.0, %v4164
    %v4166 = vpop.f32.mrf.mxu0
    %v4167 = vpop.f32.mrf.mxu0
    %v4168 = vadd.f32 0.0, %v4167
    %v4169 = vpop.f32.mrf.mxu0
    %4170 = vmatprep.mubr.bf16.mxu0 0
    %4171 = vmatmul.mubr.bf16.gmra.mxu0 %v4081
    %v4172 = vpop.f32.mrf.mxu0
    %v4173 = vadd.f32 0.0, %v4172
    %v4174 = vpop.f32.mrf.mxu0
    %v4175 = vpop.f32.mrf.mxu0
    %v4176 = vadd.f32 0.0, %v4175
    %v4177 = vpop.f32.mrf.mxu0
    %4178 = vmatprep.mubr.bf16.mxu0 0
    %4179 = vmatmul.mubr.bf16.gmra.mxu0 %v4084
    %v4180 = vpop.f32.mrf.mxu0
    %v4181 = vadd.f32 0.0, %v4180
    %v4182 = vpop.f32.mrf.mxu0
    %v4183 = vpop.f32.mrf.mxu0
    %v4184 = vadd.f32 0.0, %v4183
    %v4185 = vpop.f32.mrf.mxu0
    %4186 = vmatprep.mubr.bf16.mxu0 0
    %4187 = vmatmul.mubr.bf16.gmra.mxu0 %v4087
    %v4188 = vpop.f32.mrf.mxu0
    %v4189 = vadd.f32 0.0, %v4188
    %v4190 = vpop.f32.mrf.mxu0
    %v4191 = vpop.f32.mrf.mxu0
    %v4192 = vadd.f32 0.0, %v4191
    %v4193 = vpop.f32.mrf.mxu0
    %4194 = vmatprep.mubr.bf16.mxu0 0
    %4195 = vmatmul.mubr.bf16.gmra.mxu0 %v4090
    %v4196 = vpop.f32.mrf.mxu0
    %v4197 = vadd.f32 0.0, %v4196
    %v4198 = vpop.f32.mrf.mxu0
    %v4199 = vpop.f32.mrf.mxu0
    %v4200 = vadd.f32 0.0, %v4199
    %v4201 = vpop.f32.mrf.mxu0
    %4202 = vmatprep.mubr.bf16.mxu0 0
    %4203 = vmatmul.mubr.bf16.gmra.mxu0 %v4093
    %v4204 = vpop.f32.mrf.mxu0
    %v4205 = vadd.f32 0.0, %v4204
    %v4206 = vpop.f32.mrf.mxu0
    %v4207 = vpop.f32.mrf.mxu0
    %v4208 = vadd.f32 0.0, %v4207
    %v4209 = vpop.f32.mrf.mxu0
    %4210 = vmatprep.mubr.bf16.mxu0 0
    %4211 = vmatmul.mubr.bf16.gmra.mxu0 %v4096
    %v4212 = vpop.f32.mrf.mxu0
    %v4213 = vadd.f32 0.0, %v4212
    %v4214 = vpop.f32.mrf.mxu0
    %v4215 = vpop.f32.mrf.mxu0
    %v4216 = vadd.f32 0.0, %v4215
    %v4217 = vpop.f32.mrf.mxu0
    %4218 = vmatprep.mubr.bf16.mxu0 0
    %4219 = vmatmul.mubr.bf16.gmra.mxu0 %v4099
    %v4220 = vpop.f32.mrf.mxu0
    %v4221 = vadd.f32 0.0, %v4220
    %v4222 = vpop.f32.mrf.mxu0
    %v4223 = vpop.f32.mrf.mxu0
    %v4224 = vadd.f32 0.0, %v4223
    %v4225 = vpop.f32.mrf.mxu0
    %4226 = vmatprep.mubr.bf16.mxu0 0
    %4227 = vmatmul.mubr.bf16.gmra.mxu0 %v4102
    %v4228 = vpop.f32.mrf.mxu0
    %v4229 = vadd.f32 0.0, %v4228
    %v4230 = vpop.f32.mrf.mxu0
    %v4231 = vpop.f32.mrf.mxu0
    %v4232 = vadd.f32 0.0, %v4231
    %v4233 = vpop.f32.mrf.mxu0
    %4234 = vmatprep.mubr.bf16.mxu0 0
    %4235 = vmatmul.mubr.bf16.gmra.mxu0 %v4105
    %v4236 = vpop.f32.mrf.mxu0
    %v4237 = vadd.f32 0.0, %v4236
    %v4238 = vpop.f32.mrf.mxu0
    %v4239 = vpop.f32.mrf.mxu0
    %v4240 = vadd.f32 0.0, %v4239
    %v4241 = vpop.f32.mrf.mxu0
    %4242 = vmatprep.mubr.bf16.mxu0 0
    %4243 = vmatmul.mubr.bf16.gmra.mxu0 %v4108
    %v4244 = vpop.f32.mrf.mxu0
    %v4245 = vadd.f32 0.0, %v4244
    %v4246 = vpop.f32.mrf.mxu0
    %v4247 = vpop.f32.mrf.mxu0
    %v4248 = vadd.f32 0.0, %v4247
    %v4249 = vpop.f32.mrf.mxu0
    %4250 = vmatprep.mubr.bf16.mxu0 0
    %4251 = vmatmul.mubr.bf16.gmra.mxu0 %v4111
    %v4252 = vpop.f32.mrf.mxu0
    %v4253 = vadd.f32 0.0, %v4252
    %v4254 = vpop.f32.mrf.mxu0
    %v4255 = vpop.f32.mrf.mxu0
    %v4256 = vadd.f32 0.0, %v4255
    %v4257 = vpop.f32.mrf.mxu0
    %4258 = vmatprep.mubr.bf16.mxu0 0
    %4259 = vmatmul.mubr.bf16.gmra.mxu0 %v4114
    %v4260 = vpop.f32.mrf.mxu0
    %v4261 = vadd.f32 0.0, %v4260
    %v4262 = vpop.f32.mrf.mxu0
    %v4263 = vpop.f32.mrf.mxu0
    %v4264 = vadd.f32 0.0, %v4263
    %v4265 = vpop.f32.mrf.mxu0
    %4266 = vmatprep.mubr.bf16.mxu0 0
    %4267 = vmatmul.mubr.bf16.gmra.mxu0 %v4117
    %v4268 = vpop.f32.mrf.mxu0
    %v4269 = vadd.f32 0.0, %v4268
    %v4270 = vpop.f32.mrf.mxu0
    %v4271 = vpop.f32.mrf.mxu0
    %v4272 = vadd.f32 0.0, %v4271
    %v4273 = vpop.f32.mrf.mxu0
    %4274 = vmatprep.mubr.bf16.mxu0 0
    %4275 = vmatmul.mubr.bf16.gmra.mxu0 %v4120
    %v4276 = vpop.f32.mrf.mxu0
    %v4277 = vadd.f32 0.0, %v4276
    %v4278 = vpop.f32.mrf.mxu0
    %v4279 = vpop.f32.mrf.mxu0
    %v4280 = vadd.f32 0.0, %v4279
    %v4281 = vpop.f32.mrf.mxu0
    %4282 = vdwg.mxu0
    %v4295 = vunpack.c.l.b16 %v3886
    %v4296 = vunpack.c.l.b16 %v3887
    %v4297 = vunpack.c.l.b16 %v3888
    %v4298 = vunpack.c.l.b16 %v3889
    %v4299 = vunpack.c.l.b16 %v3890
    %v4300 = vunpack.c.l.b16 %v3891
    %v4301 = vunpack.c.l.b16 %v3892
    %v4302 = vunpack.c.l.b16 %v3893
    %v4303 = vunpack.c.l.b16 %v3894
    %v4304 = vunpack.c.l.b16 %v3895
    %v4305 = vunpack.c.l.b16 %v3896
    %v4306 = vunpack.c.l.b16 %v3897
    %v4307 = vpack.c.b16 %v4296, %v4295
    %v4308 = vpack.c.b16 %v4298, %v4297
    %v4309 = vpack.c.b16 %v4300, %v4299
    %v4310 = vpack.c.b16 %v4302, %v4301
    %v4311 = vpack.c.b16 %v4304, %v4303
    %v4312 = vpack.c.b16 %v4306, %v4305
    %v4319 = vsel %vm3741, %v3870, 0
    %v4321 = vsel %vm3741, %v3871, 0
    %v4323 = vsel %vm3741, %v3872, 0
    %v4325 = vsel %vm3741, %v3873, 0
    %v4327 = vsel %vm3741, %v3874, 0
    %v4329 = vsel %vm3741, %v3875, 0
    %v4331 = vsel %vm3741, %v3876, 0
    %v4333 = vsel %vm3741, %v3877, 0
    %v4335 = vsel %vm3741, %v3878, 0
    %v4337 = vsel %vm3741, %v3879, 0
    %v4339 = vsel %vm3741, %v3880, 0
    %v4341 = vsel %vm3741, %v3881, 0
    %v4343 = vsel %vm3741, %v3882, 0
    %v4345 = vsel %vm3741, %v3883, 0
    %v4347 = vsel %vm3741, %v3884, 0
    %v4349 = vsel %vm3741, %v3885, 0
    %4351 = vmatprep.subr.bf16.mxu0 0
    %4352 = vmatpush1.bf16.msra.mxu0 0
    %4353 = vmatprep.subr.bf16.mxu0 0
    %4354 = vmatpush1.bf16.msra.mxu0 0
    %4355 = vmatprep.subr.bf16.mxu0 0
    %4356 = vmatpush1.bf16.msra.mxu0 %v4312
    %4357 = vmatprep.subr.bf16.mxu0 0
    %4358 = vmatpush1.bf16.msra.mxu0 %v4311
    %4359 = vmatprep.subr.bf16.mxu0 0
    %4360 = vmatpush1.bf16.msra.mxu0 %v4310
    %4361 = vmatprep.subr.bf16.mxu0 0
    %4362 = vmatpush1.bf16.msra.mxu0 %v4309
    %4363 = vmatprep.subr.bf16.mxu0 0
    %4364 = vmatpush1.bf16.msra.mxu0 %v4308
    %4365 = vmatprep.subr.bf16.mxu0 0
    %4366 = vmatpush1.bf16.msra.mxu0 %v4307
    %4367 = vmatprep.subr.bf16.mxu0 0
    %4368 = vmatpush2.bf16.msra.mxu0 0
    %4369 = vmatprep.subr.bf16.mxu0 0
    %4370 = vmatpush2.bf16.msra.mxu0 0
    %4371 = vmatprep.subr.bf16.mxu0 0
    %4372 = vmatpush2.bf16.msra.mxu0 0
    %4373 = vmatprep.subr.bf16.mxu0 0
    %4374 = vmatpush2.bf16.msra.mxu0 0
    %4375 = vmatprep.subr.bf16.mxu0 0
    %4376 = vmatpush2.bf16.msra.mxu0 0
    %4377 = vmatprep.subr.bf16.mxu0 0
    %4378 = vmatpush2.bf16.msra.mxu0 0
    %4379 = vmatprep.subr.bf16.mxu0 0
    %4380 = vmatpush2.bf16.msra.mxu0 0
    %4381 = vmatprep.subr.bf16.mxu0 0
    %4382 = vmatpush2.bf16.msra.mxu0 0
    %4383 = vmatprep.mubr.bf16.mxu0 0
    %4384 = vmatmul.mubr.bf16.gmra.mxu0 %v4319
    %v4385 = vpop.f32.mrf.mxu0
    %v4386 = vadd.f32 %v4157, %v4385
    %v4387 = vpop.f32.mrf.mxu0
    %v4388 = vpop.f32.mrf.mxu0
    %v4389 = vadd.f32 %v4160, %v4388
    %v4390 = vpop.f32.mrf.mxu0
    %4391 = vmatprep.mubr.bf16.mxu0 0
    %4392 = vmatmul.mubr.bf16.gmra.mxu0 %v4321
    %v4393 = vpop.f32.mrf.mxu0
    %v4394 = vadd.f32 %v4165, %v4393
    %v4395 = vpop.f32.mrf.mxu0
    %v4396 = vpop.f32.mrf.mxu0
    %v4397 = vadd.f32 %v4168, %v4396
    %v4398 = vpop.f32.mrf.mxu0
    %4399 = vmatprep.mubr.bf16.mxu0 0
    %4400 = vmatmul.mubr.bf16.gmra.mxu0 %v4323
    %v4401 = vpop.f32.mrf.mxu0
    %v4402 = vadd.f32 %v4173, %v4401
    %v4403 = vpop.f32.mrf.mxu0
    %v4404 = vpop.f32.mrf.mxu0
    %v4405 = vadd.f32 %v4176, %v4404
    %v4406 = vpop.f32.mrf.mxu0
    %4407 = vmatprep.mubr.bf16.mxu0 0
    %4408 = vmatmul.mubr.bf16.gmra.mxu0 %v4325
    %v4409 = vpop.f32.mrf.mxu0
    %v4410 = vadd.f32 %v4181, %v4409
    %v4411 = vpop.f32.mrf.mxu0
    %v4412 = vpop.f32.mrf.mxu0
    %v4413 = vadd.f32 %v4184, %v4412
    %v4414 = vpop.f32.mrf.mxu0
    %4415 = vmatprep.mubr.bf16.mxu0 0
    %4416 = vmatmul.mubr.bf16.gmra.mxu0 %v4327
    %v4417 = vpop.f32.mrf.mxu0
    %v4418 = vadd.f32 %v4189, %v4417
    %v4419 = vpop.f32.mrf.mxu0
    %v4420 = vpop.f32.mrf.mxu0
    %v4421 = vadd.f32 %v4192, %v4420
    %v4422 = vpop.f32.mrf.mxu0
    %4423 = vmatprep.mubr.bf16.mxu0 0
    %4424 = vmatmul.mubr.bf16.gmra.mxu0 %v4329
    %v4425 = vpop.f32.mrf.mxu0
    %v4426 = vadd.f32 %v4197, %v4425
    %v4427 = vpop.f32.mrf.mxu0
    %v4428 = vpop.f32.mrf.mxu0
    %v4429 = vadd.f32 %v4200, %v4428
    %v4430 = vpop.f32.mrf.mxu0
    %4431 = vmatprep.mubr.bf16.mxu0 0
    %4432 = vmatmul.mubr.bf16.gmra.mxu0 %v4331
    %v4433 = vpop.f32.mrf.mxu0
    %v4434 = vadd.f32 %v4205, %v4433
    %v4435 = vpop.f32.mrf.mxu0
    %v4436 = vpop.f32.mrf.mxu0
    %v4437 = vadd.f32 %v4208, %v4436
    %v4438 = vpop.f32.mrf.mxu0
    %4439 = vmatprep.mubr.bf16.mxu0 0
    %4440 = vmatmul.mubr.bf16.gmra.mxu0 %v4333
    %v4441 = vpop.f32.mrf.mxu0
    %v4442 = vadd.f32 %v4213, %v4441
    %v4443 = vpop.f32.mrf.mxu0
    %v4444 = vpop.f32.mrf.mxu0
    %v4445 = vadd.f32 %v4216, %v4444
    %v4446 = vpop.f32.mrf.mxu0
    %4447 = vmatprep.mubr.bf16.mxu0 0
    %4448 = vmatmul.mubr.bf16.gmra.mxu0 %v4335
    %v4449 = vpop.f32.mrf.mxu0
    %v4450 = vadd.f32 %v4221, %v4449
    %v4451 = vpop.f32.mrf.mxu0
    %v4452 = vpop.f32.mrf.mxu0
    %v4453 = vadd.f32 %v4224, %v4452
    %v4454 = vpop.f32.mrf.mxu0
    %4455 = vmatprep.mubr.bf16.mxu0 0
    %4456 = vmatmul.mubr.bf16.gmra.mxu0 %v4337
    %v4457 = vpop.f32.mrf.mxu0
    %v4458 = vadd.f32 %v4229, %v4457
    %v4459 = vpop.f32.mrf.mxu0
    %v4460 = vpop.f32.mrf.mxu0
    %v4461 = vadd.f32 %v4232, %v4460
    %v4462 = vpop.f32.mrf.mxu0
    %4463 = vmatprep.mubr.bf16.mxu0 0
    %4464 = vmatmul.mubr.bf16.gmra.mxu0 %v4339
    %v4465 = vpop.f32.mrf.mxu0
    %v4466 = vadd.f32 %v4237, %v4465
    %v4467 = vpop.f32.mrf.mxu0
    %v4468 = vpop.f32.mrf.mxu0
    %v4469 = vadd.f32 %v4240, %v4468
    %v4470 = vpop.f32.mrf.mxu0
    %4471 = vmatprep.mubr.bf16.mxu0 0
    %4472 = vmatmul.mubr.bf16.gmra.mxu0 %v4341
    %v4473 = vpop.f32.mrf.mxu0
    %v4474 = vadd.f32 %v4245, %v4473
    %v4475 = vpop.f32.mrf.mxu0
    %v4476 = vpop.f32.mrf.mxu0
    %v4477 = vadd.f32 %v4248, %v4476
    %v4478 = vpop.f32.mrf.mxu0
    %4479 = vmatprep.mubr.bf16.mxu0 0
    %4480 = vmatmul.mubr.bf16.gmra.mxu0 %v4343
    %v4481 = vpop.f32.mrf.mxu0
    %v4482 = vadd.f32 %v4253, %v4481
    %v4483 = vpop.f32.mrf.mxu0
    %v4484 = vpop.f32.mrf.mxu0
    %v4485 = vadd.f32 %v4256, %v4484
    %v4486 = vpop.f32.mrf.mxu0
    %4487 = vmatprep.mubr.bf16.mxu0 0
    %4488 = vmatmul.mubr.bf16.gmra.mxu0 %v4345
    %v4489 = vpop.f32.mrf.mxu0
    %v4490 = vadd.f32 %v4261, %v4489
    %v4491 = vpop.f32.mrf.mxu0
    %v4492 = vpop.f32.mrf.mxu0
    %v4493 = vadd.f32 %v4264, %v4492
    %v4494 = vpop.f32.mrf.mxu0
    %4495 = vmatprep.mubr.bf16.mxu0 0
    %4496 = vmatmul.mubr.bf16.gmra.mxu0 %v4347
    %v4497 = vpop.f32.mrf.mxu0
    %v4498 = vadd.f32 %v4269, %v4497
    %v4499 = vpop.f32.mrf.mxu0
    %v4500 = vpop.f32.mrf.mxu0
    %v4501 = vadd.f32 %v4272, %v4500
    %v4502 = vpop.f32.mrf.mxu0
    %4503 = vmatprep.mubr.bf16.mxu0 0
    %4504 = vmatmul.mubr.bf16.gmra.mxu0 %v4349
    %v4505 = vpop.f32.mrf.mxu0
    %v4506 = vadd.f32 %v4277, %v4505
    %v4507 = vpop.f32.mrf.mxu0
    %v4508 = vpop.f32.mrf.mxu0
    %v4509 = vadd.f32 %v4280, %v4508
    %v4510 = vpop.f32.mrf.mxu0
    %4511 = vdwg.mxu0
    %v4512 = vld [vmem:[%s9] sm:$0x1]
    %v4514 = vlaneseq
    %v4515 = vshrl.u32 %v4514, 7
    %v4516 = vsub.s32 0, %v4515
    %v4517 = vrot.slane %v4512, %v4516
    %v4519 = vadd.f32 %v4386, %v4517
    %v4520 = vadd.f32 %v4389, %v4517
    %v4521 = vadd.f32 %v4394, %v4517
    %v4522 = vadd.f32 %v4397, %v4517
    %v4523 = vadd.f32 %v4402, %v4517
    %v4524 = vadd.f32 %v4405, %v4517
    %v4525 = vadd.f32 %v4410, %v4517
    %v4526 = vadd.f32 %v4413, %v4517
    %v4527 = vadd.f32 %v4418, %v4517
    %v4528 = vadd.f32 %v4421, %v4517
    %v4529 = vadd.f32 %v4426, %v4517
    %v4530 = vadd.f32 %v4429, %v4517
    %v4531 = vadd.f32 %v4434, %v4517
    %v4532 = vadd.f32 %v4437, %v4517
    %v4533 = vadd.f32 %v4442, %v4517
    %v4534 = vadd.f32 %v4445, %v4517
    %v4535 = vadd.f32 %v4450, %v4517
    %v4536 = vadd.f32 %v4453, %v4517
    %v4537 = vadd.f32 %v4458, %v4517
    %v4538 = vadd.f32 %v4461, %v4517
    %v4539 = vadd.f32 %v4466, %v4517
    %v4540 = vadd.f32 %v4469, %v4517
    %v4541 = vadd.f32 %v4474, %v4517
    %v4542 = vadd.f32 %v4477, %v4517
    %v4543 = vadd.f32 %v4482, %v4517
    %v4544 = vadd.f32 %v4485, %v4517
    %v4545 = vadd.f32 %v4490, %v4517
    %v4546 = vadd.f32 %v4493, %v4517
    %v4547 = vadd.f32 %v4498, %v4517
    %v4548 = vadd.f32 %v4501, %v4517
    %v4549 = vadd.f32 %v4506, %v4517
    %v4550 = vadd.f32 %v4509, %v4517
    %v4551 = vpack.c.bf16 %v4520, %v4519
    %v4552 = vpack.c.bf16 %v4522, %v4521
    %v4553 = vpack.c.bf16 %v4524, %v4523
    %v4554 = vpack.c.bf16 %v4526, %v4525
    %v4555 = vpack.c.bf16 %v4528, %v4527
    %v4556 = vpack.c.bf16 %v4530, %v4529
    %v4557 = vpack.c.bf16 %v4532, %v4531
    %v4558 = vpack.c.bf16 %v4534, %v4533
    %v4559 = vpack.c.bf16 %v4536, %v4535
    %v4560 = vpack.c.bf16 %v4538, %v4537
    %v4561 = vpack.c.bf16 %v4540, %v4539
    %v4562 = vpack.c.bf16 %v4542, %v4541
    %v4563 = vpack.c.bf16 %v4544, %v4543
    %v4564 = vpack.c.bf16 %v4546, %v4545
    %v4565 = vpack.c.bf16 %v4548, %v4547
    %v4566 = vpack.c.bf16 %v4550, %v4549
    %v4567 = vld [vmem:[#allocation9] sm:$0xf]
    %v4568 = vld [vmem:[#allocation9 + $0x4] sm:$0xf]
    %v4569 = vld [vmem:[#allocation9 + $0x8] sm:$0xf]
    %v4570 = vld [vmem:[#allocation9 + $0xc] sm:$0xf]
    %v4571 = vld [vmem:[#allocation9 + $0x10] sm:$0xf]
    %v4572 = vld [vmem:[#allocation9 + $0x14] sm:$0xf]
    %v4573 = vld [vmem:[#allocation9 + $0x18] sm:$0xf]
    %v4574 = vld [vmem:[#allocation9 + $0x1c] sm:$0xf]
    %v4575 = vld [vmem:[#allocation9 + $0x20] sm:$0xf]
    %v4576 = vld [vmem:[#allocation9 + $0x24] sm:$0xf]
    %v4577 = vld [vmem:[#allocation9 + $0x28] sm:$0xf]
    %v4578 = vld [vmem:[#allocation9 + $0x2c] sm:$0xf]
    %v4579 = vld [vmem:[#allocation9 + $0x30] sm:$0xf]
    %v4580 = vld [vmem:[#allocation9 + $0x34] sm:$0xf]
    %v4581 = vld [vmem:[#allocation9 + $0x38] sm:$0xf]
    %s4582 = scalar_lea.vmem [#allocation9], 60
    %v4583 = vld [vmem:[%s4582] sm:$0xf]
    %v4584 = vld [vmem:[%s4582 + $0x4] sm:$0xf]
    %v4585 = vld [vmem:[%s4582 + $0x8] sm:$0xf]
    %v4586 = vld [vmem:[%s4582 + $0xc] sm:$0xf]
    %v4587 = vld [vmem:[%s4582 + $0x10] sm:$0xf]
    %v4588 = vld [vmem:[%s4582 + $0x14] sm:$0xf]
    %v4589 = vld [vmem:[%s4582 + $0x18] sm:$0xf]
    %v4590 = vld [vmem:[%s4582 + $0x1c] sm:$0xf]
    %v4591 = vld [vmem:[%s4582 + $0x20] sm:$0xf]
    %v4592 = vld [vmem:[%s4582 + $0x24] sm:$0xf]
    %v4593 = vld [vmem:[%s4582 + $0x28] sm:$0xf]
    %v4594 = vld [vmem:[%s4582 + $0x2c] sm:$0xf]
    %v4595 = vld [vmem:[%s4582 + $0x30] sm:$0xf]
    %v4596 = vld [vmem:[%s4582 + $0x34] sm:$0xf]
    %v4597 = vld [vmem:[%s4582 + $0x38] sm:$0xf]
    %v4599 = vshrl.u32 %v4551, 16
    %v4601 = vshll.u32 %v4551, 16
    %v4603 = vrot.slane %v4601, 1
    %v4604 = vor.u32 %v4599, %v4603
    %v4606 = vshll.u32 %v4552, 16
    %v4608 = vrot.slane %v4606, 1
    %v4609 = vsel %vm234, %v4604, %v4608
    %v4610 = vshrl.u32 %v4552, 16
    %v4612 = vor.u32 %v4610, %v4608
    %v4614 = vshll.u32 %v4553, 16
    %v4616 = vrot.slane %v4614, 1
    %v4617 = vsel %vm234, %v4612, %v4616
    %v4618 = vshrl.u32 %v4553, 16
    %v4620 = vor.u32 %v4618, %v4616
    %v4622 = vshll.u32 %v4554, 16
    %v4624 = vrot.slane %v4622, 1
    %v4625 = vsel %vm234, %v4620, %v4624
    %v4626 = vshrl.u32 %v4554, 16
    %v4628 = vor.u32 %v4626, %v4624
    %v4630 = vshll.u32 %v4555, 16
    %v4632 = vrot.slane %v4630, 1
    %v4633 = vsel %vm234, %v4628, %v4632
    %v4634 = vshrl.u32 %v4555, 16
    %v4636 = vor.u32 %v4634, %v4632
    %v4638 = vshll.u32 %v4556, 16
    %v4640 = vrot.slane %v4638, 1
    %v4641 = vsel %vm234, %v4636, %v4640
    %v4642 = vshrl.u32 %v4556, 16
    %v4644 = vor.u32 %v4642, %v4640
    %v4646 = vshll.u32 %v4557, 16
    %v4648 = vrot.slane %v4646, 1
    %v4649 = vsel %vm234, %v4644, %v4648
    %v4650 = vshrl.u32 %v4557, 16
    %v4652 = vor.u32 %v4650, %v4648
    %v4654 = vshll.u32 %v4558, 16
    %v4656 = vrot.slane %v4654, 1
    %v4657 = vsel %vm234, %v4652, %v4656
    %v4658 = vshrl.u32 %v4558, 16
    %v4660 = vor.u32 %v4658, %v4656
    %v4662 = vshll.u32 %v4559, 16
    %v4664 = vrot.slane %v4662, 1
    %v4665 = vsel %vm234, %v4660, %v4664
    %v4666 = vshrl.u32 %v4559, 16
    %v4668 = vor.u32 %v4666, %v4664
    %v4670 = vshll.u32 %v4560, 16
    %v4672 = vrot.slane %v4670, 1
    %v4673 = vsel %vm234, %v4668, %v4672
    %v4674 = vshrl.u32 %v4560, 16
    %v4676 = vor.u32 %v4674, %v4672
    %v4678 = vshll.u32 %v4561, 16
    %v4680 = vrot.slane %v4678, 1
    %v4681 = vsel %vm234, %v4676, %v4680
    %v4682 = vshrl.u32 %v4561, 16
    %v4684 = vor.u32 %v4682, %v4680
    %v4686 = vshll.u32 %v4562, 16
    %v4688 = vrot.slane %v4686, 1
    %v4689 = vsel %vm234, %v4684, %v4688
    %v4690 = vshrl.u32 %v4562, 16
    %v4692 = vor.u32 %v4690, %v4688
    %v4694 = vshll.u32 %v4563, 16
    %v4696 = vrot.slane %v4694, 1
    %v4697 = vsel %vm234, %v4692, %v4696
    %v4698 = vshrl.u32 %v4563, 16
    %v4700 = vor.u32 %v4698, %v4696
    %v4702 = vshll.u32 %v4564, 16
    %v4704 = vrot.slane %v4702, 1
    %v4705 = vsel %vm234, %v4700, %v4704
    %v4706 = vshrl.u32 %v4564, 16
    %v4708 = vor.u32 %v4706, %v4704
    %v4710 = vshll.u32 %v4565, 16
    %v4712 = vrot.slane %v4710, 1
    %v4713 = vsel %vm234, %v4708, %v4712
    %v4714 = vshrl.u32 %v4565, 16
    %v4716 = vor.u32 %v4714, %v4712
    %v4718 = vshll.u32 %v4566, 16
    %v4720 = vrot.slane %v4718, 1
    %v4721 = vsel %vm234, %v4716, %v4720
    %v4722 = vshrl.u32 %v4566, 16
    %v4724 = vor.u32 %v4722, %v4720
    %v4740 = vunpack.c.l.b16 %v4583
    %v4741 = vunpack.c.l.b16 %v4584
    %v4742 = vunpack.c.l.b16 %v4585
    %v4743 = vunpack.c.l.b16 %v4586
    %v4744 = vunpack.c.l.b16 %v4587
    %v4745 = vunpack.c.l.b16 %v4588
    %v4746 = vunpack.c.l.b16 %v4589
    %v4747 = vunpack.c.l.b16 %v4590
    %v4748 = vunpack.c.l.b16 %v4591
    %v4749 = vunpack.c.l.b16 %v4592
    %v4750 = vunpack.c.l.b16 %v4593
    %v4751 = vunpack.c.l.b16 %v4594
    %v4752 = vunpack.c.l.b16 %v4595
    %v4753 = vunpack.c.l.b16 %v4596
    %v4754 = vunpack.c.l.b16 %v4597
    %v4755 = vpack.c.b16 %v4741, %v4740
    %v4756 = vpack.c.b16 %v4743, %v4742
    %v4757 = vpack.c.b16 %v4745, %v4744
    %v4758 = vpack.c.b16 %v4747, %v4746
    %v4759 = vpack.c.b16 %v4749, %v4748
    %v4760 = vpack.c.b16 %v4751, %v4750
    %v4761 = vpack.c.b16 %v4753, %v4752
    %v4762 = vpack.c.b16 %v4754, %v4754
    %vm4770 = vcmask 982016
    %v4772 = vsel %vm4770, %v4609, 0
    %v4775 = vsel %vm4770, %v4617, 0
    %v4778 = vsel %vm4770, %v4625, 0
    %v4781 = vsel %vm4770, %v4633, 0
    %v4784 = vsel %vm4770, %v4641, 0
    %v4787 = vsel %vm4770, %v4649, 0
    %v4790 = vsel %vm4770, %v4657, 0
    %v4793 = vsel %vm4770, %v4665, 0
    %v4796 = vsel %vm4770, %v4673, 0
    %v4799 = vsel %vm4770, %v4681, 0
    %v4802 = vsel %vm4770, %v4689, 0
    %v4805 = vsel %vm4770, %v4697, 0
    %v4808 = vsel %vm4770, %v4705, 0
    %v4811 = vsel %vm4770, %v4713, 0
    %v4814 = vsel %vm4770, %v4721, 0
    %v4817 = vsel %vm4770, %v4724, 0
    %v4820 = vsel %vm1793, %v4762, 0
    %4822 = vmatprep.subr.bf16.mxu0 0
    %4823 = vmatpush1.bf16.msra.mxu0 %v4820
    %4824 = vmatprep.subr.bf16.mxu0 0
    %4825 = vmatpush1.bf16.msra.mxu0 %v4761
    %4826 = vmatprep.subr.bf16.mxu0 0
    %4827 = vmatpush1.bf16.msra.mxu0 %v4760
    %4828 = vmatprep.subr.bf16.mxu0 0
    %4829 = vmatpush1.bf16.msra.mxu0 %v4759
    %4830 = vmatprep.subr.bf16.mxu0 0
    %4831 = vmatpush1.bf16.msra.mxu0 %v4758
    %4832 = vmatprep.subr.bf16.mxu0 0
    %4833 = vmatpush1.bf16.msra.mxu0 %v4757
    %4834 = vmatprep.subr.bf16.mxu0 0
    %4835 = vmatpush1.bf16.msra.mxu0 %v4756
    %4836 = vmatprep.subr.bf16.mxu0 0
    %4837 = vmatpush1.bf16.msra.mxu0 %v4755
    %4838 = vmatprep.subr.bf16.mxu0 0
    %4839 = vmatpush2.bf16.msra.mxu0 0
    %4840 = vmatprep.subr.bf16.mxu0 0
    %4841 = vmatpush2.bf16.msra.mxu0 0
    %4842 = vmatprep.subr.bf16.mxu0 0
    %4843 = vmatpush2.bf16.msra.mxu0 0
    %4844 = vmatprep.subr.bf16.mxu0 0
    %4845 = vmatpush2.bf16.msra.mxu0 0
    %4846 = vmatprep.subr.bf16.mxu0 0
    %4847 = vmatpush2.bf16.msra.mxu0 0
    %4848 = vmatprep.subr.bf16.mxu0 0
    %4849 = vmatpush2.bf16.msra.mxu0 0
    %4850 = vmatprep.subr.bf16.mxu0 0
    %4851 = vmatpush2.bf16.msra.mxu0 0
    %4852 = vmatprep.subr.bf16.mxu0 0
    %4853 = vmatpush2.bf16.msra.mxu0 0
    %4854 = vmatprep.mubr.bf16.mxu0 0
    %4855 = vmatmul.mubr.bf16.gmra.mxu0 %v4772
    %v4856 = vpop.f32.mrf.mxu0
    %v4857 = vadd.f32 0.0, %v4856
    %v4858 = vpop.f32.mrf.mxu0
    %v4859 = vpop.f32.mrf.mxu0
    %v4860 = vadd.f32 0.0, %v4859
    %v4861 = vpop.f32.mrf.mxu0
    %4862 = vmatprep.mubr.bf16.mxu0 0
    %4863 = vmatmul.mubr.bf16.gmra.mxu0 %v4775
    %v4864 = vpop.f32.mrf.mxu0
    %v4865 = vadd.f32 0.0, %v4864
    %v4866 = vpop.f32.mrf.mxu0
    %v4867 = vpop.f32.mrf.mxu0
    %v4868 = vadd.f32 0.0, %v4867
    %v4869 = vpop.f32.mrf.mxu0
    %4870 = vmatprep.mubr.bf16.mxu0 0
    %4871 = vmatmul.mubr.bf16.gmra.mxu0 %v4778
    %v4872 = vpop.f32.mrf.mxu0
    %v4873 = vadd.f32 0.0, %v4872
    %v4874 = vpop.f32.mrf.mxu0
    %v4875 = vpop.f32.mrf.mxu0
    %v4876 = vadd.f32 0.0, %v4875
    %v4877 = vpop.f32.mrf.mxu0
    %4878 = vmatprep.mubr.bf16.mxu0 0
    %4879 = vmatmul.mubr.bf16.gmra.mxu0 %v4781
    %v4880 = vpop.f32.mrf.mxu0
    %v4881 = vadd.f32 0.0, %v4880
    %v4882 = vpop.f32.mrf.mxu0
    %v4883 = vpop.f32.mrf.mxu0
    %v4884 = vadd.f32 0.0, %v4883
    %v4885 = vpop.f32.mrf.mxu0
    %4886 = vmatprep.mubr.bf16.mxu0 0
    %4887 = vmatmul.mubr.bf16.gmra.mxu0 %v4784
    %v4888 = vpop.f32.mrf.mxu0
    %v4889 = vadd.f32 0.0, %v4888
    %v4890 = vpop.f32.mrf.mxu0
    %v4891 = vpop.f32.mrf.mxu0
    %v4892 = vadd.f32 0.0, %v4891
    %v4893 = vpop.f32.mrf.mxu0
    %4894 = vmatprep.mubr.bf16.mxu0 0
    %4895 = vmatmul.mubr.bf16.gmra.mxu0 %v4787
    %v4896 = vpop.f32.mrf.mxu0
    %v4897 = vadd.f32 0.0, %v4896
    %v4898 = vpop.f32.mrf.mxu0
    %v4899 = vpop.f32.mrf.mxu0
    %v4900 = vadd.f32 0.0, %v4899
    %v4901 = vpop.f32.mrf.mxu0
    %4902 = vmatprep.mubr.bf16.mxu0 0
    %4903 = vmatmul.mubr.bf16.gmra.mxu0 %v4790
    %v4904 = vpop.f32.mrf.mxu0
    %v4905 = vadd.f32 0.0, %v4904
    %v4906 = vpop.f32.mrf.mxu0
    %v4907 = vpop.f32.mrf.mxu0
    %v4908 = vadd.f32 0.0, %v4907
    %v4909 = vpop.f32.mrf.mxu0
    %4910 = vmatprep.mubr.bf16.mxu0 0
    %4911 = vmatmul.mubr.bf16.gmra.mxu0 %v4793
    %v4912 = vpop.f32.mrf.mxu0
    %v4913 = vadd.f32 0.0, %v4912
    %v4914 = vpop.f32.mrf.mxu0
    %v4915 = vpop.f32.mrf.mxu0
    %v4916 = vadd.f32 0.0, %v4915
    %v4917 = vpop.f32.mrf.mxu0
    %4918 = vmatprep.mubr.bf16.mxu0 0
    %4919 = vmatmul.mubr.bf16.gmra.mxu0 %v4796
    %v4920 = vpop.f32.mrf.mxu0
    %v4921 = vadd.f32 0.0, %v4920
    %v4922 = vpop.f32.mrf.mxu0
    %v4923 = vpop.f32.mrf.mxu0
    %v4924 = vadd.f32 0.0, %v4923
    %v4925 = vpop.f32.mrf.mxu0
    %4926 = vmatprep.mubr.bf16.mxu0 0
    %4927 = vmatmul.mubr.bf16.gmra.mxu0 %v4799
    %v4928 = vpop.f32.mrf.mxu0
    %v4929 = vadd.f32 0.0, %v4928
    %v4930 = vpop.f32.mrf.mxu0
    %v4931 = vpop.f32.mrf.mxu0
    %v4932 = vadd.f32 0.0, %v4931
    %v4933 = vpop.f32.mrf.mxu0
    %4934 = vmatprep.mubr.bf16.mxu0 0
    %4935 = vmatmul.mubr.bf16.gmra.mxu0 %v4802
    %v4936 = vpop.f32.mrf.mxu0
    %v4937 = vadd.f32 0.0, %v4936
    %v4938 = vpop.f32.mrf.mxu0
    %v4939 = vpop.f32.mrf.mxu0
    %v4940 = vadd.f32 0.0, %v4939
    %v4941 = vpop.f32.mrf.mxu0
    %4942 = vmatprep.mubr.bf16.mxu0 0
    %4943 = vmatmul.mubr.bf16.gmra.mxu0 %v4805
    %v4944 = vpop.f32.mrf.mxu0
    %v4945 = vadd.f32 0.0, %v4944
    %v4946 = vpop.f32.mrf.mxu0
    %v4947 = vpop.f32.mrf.mxu0
    %v4948 = vadd.f32 0.0, %v4947
    %v4949 = vpop.f32.mrf.mxu0
    %4950 = vmatprep.mubr.bf16.mxu0 0
    %4951 = vmatmul.mubr.bf16.gmra.mxu0 %v4808
    %v4952 = vpop.f32.mrf.mxu0
    %v4953 = vadd.f32 0.0, %v4952
    %v4954 = vpop.f32.mrf.mxu0
    %v4955 = vpop.f32.mrf.mxu0
    %v4956 = vadd.f32 0.0, %v4955
    %v4957 = vpop.f32.mrf.mxu0
    %4958 = vmatprep.mubr.bf16.mxu0 0
    %4959 = vmatmul.mubr.bf16.gmra.mxu0 %v4811
    %v4960 = vpop.f32.mrf.mxu0
    %v4961 = vadd.f32 0.0, %v4960
    %v4962 = vpop.f32.mrf.mxu0
    %v4963 = vpop.f32.mrf.mxu0
    %v4964 = vadd.f32 0.0, %v4963
    %v4965 = vpop.f32.mrf.mxu0
    %4966 = vmatprep.mubr.bf16.mxu0 0
    %4967 = vmatmul.mubr.bf16.gmra.mxu0 %v4814
    %v4968 = vpop.f32.mrf.mxu0
    %v4969 = vadd.f32 0.0, %v4968
    %v4970 = vpop.f32.mrf.mxu0
    %v4971 = vpop.f32.mrf.mxu0
    %v4972 = vadd.f32 0.0, %v4971
    %v4973 = vpop.f32.mrf.mxu0
    %4974 = vmatprep.mubr.bf16.mxu0 0
    %4975 = vmatmul.mubr.bf16.gmra.mxu0 %v4817
    %v4976 = vpop.f32.mrf.mxu0
    %v4977 = vadd.f32 0.0, %v4976
    %v4978 = vpop.f32.mrf.mxu0
    %v4979 = vpop.f32.mrf.mxu0
    %v4980 = vadd.f32 0.0, %v4979
    %v4981 = vpop.f32.mrf.mxu0
    %4982 = vdwg.mxu0
    %v4998 = vunpack.c.l.b16 %v4567
    %v4999 = vunpack.c.l.b16 %v4568
    %v5000 = vunpack.c.l.b16 %v4569
    %v5001 = vunpack.c.l.b16 %v4570
    %v5002 = vunpack.c.l.b16 %v4571
    %v5003 = vunpack.c.l.b16 %v4572
    %v5004 = vunpack.c.l.b16 %v4573
    %v5005 = vunpack.c.l.b16 %v4574
    %v5006 = vunpack.c.l.b16 %v4575
    %v5007 = vunpack.c.l.b16 %v4576
    %v5008 = vunpack.c.l.b16 %v4577
    %v5009 = vunpack.c.l.b16 %v4578
    %v5010 = vunpack.c.l.b16 %v4579
    %v5011 = vunpack.c.l.b16 %v4580
    %v5012 = vunpack.c.l.b16 %v4581
    %v5013 = vpack.c.b16 %v4999, %v4998
    %v5014 = vpack.c.b16 %v5001, %v5000
    %v5015 = vpack.c.b16 %v5003, %v5002
    %v5016 = vpack.c.b16 %v5005, %v5004
    %v5017 = vpack.c.b16 %v5007, %v5006
    %v5018 = vpack.c.b16 %v5009, %v5008
    %v5019 = vpack.c.b16 %v5011, %v5010
    %v5020 = vpack.c.b16 %v5012, %v5012
    %v5028 = vsel %vm4770, %v4551, 0
    %v5030 = vsel %vm4770, %v4552, 0
    %v5032 = vsel %vm4770, %v4553, 0
    %v5034 = vsel %vm4770, %v4554, 0
    %v5036 = vsel %vm4770, %v4555, 0
    %v5038 = vsel %vm4770, %v4556, 0
    %v5040 = vsel %vm4770, %v4557, 0
    %v5042 = vsel %vm4770, %v4558, 0
    %v5044 = vsel %vm4770, %v4559, 0
    %v5046 = vsel %vm4770, %v4560, 0
    %v5048 = vsel %vm4770, %v4561, 0
    %v5050 = vsel %vm4770, %v4562, 0
    %v5052 = vsel %vm4770, %v4563, 0
    %v5054 = vsel %vm4770, %v4564, 0
    %v5056 = vsel %vm4770, %v4565, 0
    %v5058 = vsel %vm4770, %v4566, 0
    %v5061 = vsel %vm1793, %v5020, 0
    %5063 = vmatprep.subr.bf16.mxu0 0
    %5064 = vmatpush1.bf16.msra.mxu0 %v5061
    %5065 = vmatprep.subr.bf16.mxu0 0
    %5066 = vmatpush1.bf16.msra.mxu0 %v5019
    %5067 = vmatprep.subr.bf16.mxu0 0
    %5068 = vmatpush1.bf16.msra.mxu0 %v5018
    %5069 = vmatprep.subr.bf16.mxu0 0
    %5070 = vmatpush1.bf16.msra.mxu0 %v5017
    %5071 = vmatprep.subr.bf16.mxu0 0
    %5072 = vmatpush1.bf16.msra.mxu0 %v5016
    %5073 = vmatprep.subr.bf16.mxu0 0
    %5074 = vmatpush1.bf16.msra.mxu0 %v5015
    %5075 = vmatprep.subr.bf16.mxu0 0
    %5076 = vmatpush1.bf16.msra.mxu0 %v5014
    %5077 = vmatprep.subr.bf16.mxu0 0
    %5078 = vmatpush1.bf16.msra.mxu0 %v5013
    %5079 = vmatprep.subr.bf16.mxu0 0
    %5080 = vmatpush2.bf16.msra.mxu0 0
    %5081 = vmatprep.subr.bf16.mxu0 0
    %5082 = vmatpush2.bf16.msra.mxu0 0
    %5083 = vmatprep.subr.bf16.mxu0 0
    %5084 = vmatpush2.bf16.msra.mxu0 0
    %5085 = vmatprep.subr.bf16.mxu0 0
    %5086 = vmatpush2.bf16.msra.mxu0 0
    %5087 = vmatprep.subr.bf16.mxu0 0
    %5088 = vmatpush2.bf16.msra.mxu0 0
    %5089 = vmatprep.subr.bf16.mxu0 0
    %5090 = vmatpush2.bf16.msra.mxu0 0
    %5091 = vmatprep.subr.bf16.mxu0 0
    %5092 = vmatpush2.bf16.msra.mxu0 0
    %5093 = vmatprep.subr.bf16.mxu0 0
    %5094 = vmatpush2.bf16.msra.mxu0 0
    %5095 = vmatprep.mubr.bf16.mxu0 0
    %5096 = vmatmul.mubr.bf16.gmra.mxu0 %v5028
    %v5097 = vpop.f32.mrf.mxu0
    %v5098 = vadd.f32 %v4857, %v5097
    %v5099 = vpop.f32.mrf.mxu0
    %v5100 = vpop.f32.mrf.mxu0
    %v5101 = vadd.f32 %v4860, %v5100
    %v5102 = vpop.f32.mrf.mxu0
    %5103 = vmatprep.mubr.bf16.mxu0 0
    %5104 = vmatmul.mubr.bf16.gmra.mxu0 %v5030
    %v5105 = vpop.f32.mrf.mxu0
    %v5106 = vadd.f32 %v4865, %v5105
    %v5107 = vpop.f32.mrf.mxu0
    %v5108 = vpop.f32.mrf.mxu0
    %v5109 = vadd.f32 %v4868, %v5108
    %v5110 = vpop.f32.mrf.mxu0
    %5111 = vmatprep.mubr.bf16.mxu0 0
    %5112 = vmatmul.mubr.bf16.gmra.mxu0 %v5032
    %v5113 = vpop.f32.mrf.mxu0
    %v5114 = vadd.f32 %v4873, %v5113
    %v5115 = vpop.f32.mrf.mxu0
    %v5116 = vpop.f32.mrf.mxu0
    %v5117 = vadd.f32 %v4876, %v5116
    %v5118 = vpop.f32.mrf.mxu0
    %5119 = vmatprep.mubr.bf16.mxu0 0
    %5120 = vmatmul.mubr.bf16.gmra.mxu0 %v5034
    %v5121 = vpop.f32.mrf.mxu0
    %v5122 = vadd.f32 %v4881, %v5121
    %v5123 = vpop.f32.mrf.mxu0
    %v5124 = vpop.f32.mrf.mxu0
    %v5125 = vadd.f32 %v4884, %v5124
    %v5126 = vpop.f32.mrf.mxu0
    %5127 = vmatprep.mubr.bf16.mxu0 0
    %5128 = vmatmul.mubr.bf16.gmra.mxu0 %v5036
    %v5129 = vpop.f32.mrf.mxu0
    %v5130 = vadd.f32 %v4889, %v5129
    %v5131 = vpop.f32.mrf.mxu0
    %v5132 = vpop.f32.mrf.mxu0
    %v5133 = vadd.f32 %v4892, %v5132
    %v5134 = vpop.f32.mrf.mxu0
    %5135 = vmatprep.mubr.bf16.mxu0 0
    %5136 = vmatmul.mubr.bf16.gmra.mxu0 %v5038
    %v5137 = vpop.f32.mrf.mxu0
    %v5138 = vadd.f32 %v4897, %v5137
    %v5139 = vpop.f32.mrf.mxu0
    %v5140 = vpop.f32.mrf.mxu0
    %v5141 = vadd.f32 %v4900, %v5140
    %v5142 = vpop.f32.mrf.mxu0
    %5143 = vmatprep.mubr.bf16.mxu0 0
    %5144 = vmatmul.mubr.bf16.gmra.mxu0 %v5040
    %v5145 = vpop.f32.mrf.mxu0
    %v5146 = vadd.f32 %v4905, %v5145
    %v5147 = vpop.f32.mrf.mxu0
    %v5148 = vpop.f32.mrf.mxu0
    %v5149 = vadd.f32 %v4908, %v5148
    %v5150 = vpop.f32.mrf.mxu0
    %5151 = vmatprep.mubr.bf16.mxu0 0
    %5152 = vmatmul.mubr.bf16.gmra.mxu0 %v5042
    %v5153 = vpop.f32.mrf.mxu0
    %v5154 = vadd.f32 %v4913, %v5153
    %v5155 = vpop.f32.mrf.mxu0
    %v5156 = vpop.f32.mrf.mxu0
    %v5157 = vadd.f32 %v4916, %v5156
    %v5158 = vpop.f32.mrf.mxu0
    %5159 = vmatprep.mubr.bf16.mxu0 0
    %5160 = vmatmul.mubr.bf16.gmra.mxu0 %v5044
    %v5161 = vpop.f32.mrf.mxu0
    %v5162 = vadd.f32 %v4921, %v5161
    %v5163 = vpop.f32.mrf.mxu0
    %v5164 = vpop.f32.mrf.mxu0
    %v5165 = vadd.f32 %v4924, %v5164
    %v5166 = vpop.f32.mrf.mxu0
    %5167 = vmatprep.mubr.bf16.mxu0 0
    %5168 = vmatmul.mubr.bf16.gmra.mxu0 %v5046
    %v5169 = vpop.f32.mrf.mxu0
    %v5170 = vadd.f32 %v4929, %v5169
    %v5171 = vpop.f32.mrf.mxu0
    %v5172 = vpop.f32.mrf.mxu0
    %v5173 = vadd.f32 %v4932, %v5172
    %v5174 = vpop.f32.mrf.mxu0
    %5175 = vmatprep.mubr.bf16.mxu0 0
    %5176 = vmatmul.mubr.bf16.gmra.mxu0 %v5048
    %v5177 = vpop.f32.mrf.mxu0
    %v5178 = vadd.f32 %v4937, %v5177
    %v5179 = vpop.f32.mrf.mxu0
    %v5180 = vpop.f32.mrf.mxu0
    %v5181 = vadd.f32 %v4940, %v5180
    %v5182 = vpop.f32.mrf.mxu0
    %5183 = vmatprep.mubr.bf16.mxu0 0
    %5184 = vmatmul.mubr.bf16.gmra.mxu0 %v5050
    %v5185 = vpop.f32.mrf.mxu0
    %v5186 = vadd.f32 %v4945, %v5185
    %v5187 = vpop.f32.mrf.mxu0
    %v5188 = vpop.f32.mrf.mxu0
    %v5189 = vadd.f32 %v4948, %v5188
    %v5190 = vpop.f32.mrf.mxu0
    %5191 = vmatprep.mubr.bf16.mxu0 0
    %5192 = vmatmul.mubr.bf16.gmra.mxu0 %v5052
    %v5193 = vpop.f32.mrf.mxu0
    %v5194 = vadd.f32 %v4953, %v5193
    %v5195 = vpop.f32.mrf.mxu0
    %v5196 = vpop.f32.mrf.mxu0
    %v5197 = vadd.f32 %v4956, %v5196
    %v5198 = vpop.f32.mrf.mxu0
    %5199 = vmatprep.mubr.bf16.mxu0 0
    %5200 = vmatmul.mubr.bf16.gmra.mxu0 %v5054
    %v5201 = vpop.f32.mrf.mxu0
    %v5202 = vadd.f32 %v4961, %v5201
    %v5203 = vpop.f32.mrf.mxu0
    %v5204 = vpop.f32.mrf.mxu0
    %v5205 = vadd.f32 %v4964, %v5204
    %v5206 = vpop.f32.mrf.mxu0
    %5207 = vmatprep.mubr.bf16.mxu0 0
    %5208 = vmatmul.mubr.bf16.gmra.mxu0 %v5056
    %v5209 = vpop.f32.mrf.mxu0
    %v5210 = vadd.f32 %v4969, %v5209
    %v5211 = vpop.f32.mrf.mxu0
    %v5212 = vpop.f32.mrf.mxu0
    %v5213 = vadd.f32 %v4972, %v5212
    %v5214 = vpop.f32.mrf.mxu0
    %5215 = vmatprep.mubr.bf16.mxu0 0
    %5216 = vmatmul.mubr.bf16.gmra.mxu0 %v5058
    %v5217 = vpop.f32.mrf.mxu0
    %v5218 = vadd.f32 %v4977, %v5217
    %v5219 = vpop.f32.mrf.mxu0
    %v5220 = vpop.f32.mrf.mxu0
    %v5221 = vadd.f32 %v4980, %v5220
    %v5222 = vpop.f32.mrf.mxu0
    %5223 = vdwg.mxu0
    %v5224 = vld [vmem:[%s10] sm:$0x1]
    %v5226 = vlaneseq
    %v5227 = vshrl.u32 %v5226, 7
    %v5228 = vsub.s32 0, %v5227
    %v5229 = vrot.slane %v5224, %v5228
    %v5231 = vadd.f32 %v5098, %v5229
    %v5232 = vadd.f32 %v5101, %v5229
    %v5233 = vadd.f32 %v5106, %v5229
    %v5234 = vadd.f32 %v5109, %v5229
    %v5235 = vadd.f32 %v5114, %v5229
    %v5236 = vadd.f32 %v5117, %v5229
    %v5237 = vadd.f32 %v5122, %v5229
    %v5238 = vadd.f32 %v5125, %v5229
    %v5239 = vadd.f32 %v5130, %v5229
    %v5240 = vadd.f32 %v5133, %v5229
    %v5241 = vadd.f32 %v5138, %v5229
    %v5242 = vadd.f32 %v5141, %v5229
    %v5243 = vadd.f32 %v5146, %v5229
    %v5244 = vadd.f32 %v5149, %v5229
    %v5245 = vadd.f32 %v5154, %v5229
    %v5246 = vadd.f32 %v5157, %v5229
    %v5247 = vadd.f32 %v5162, %v5229
    %v5248 = vadd.f32 %v5165, %v5229
    %v5249 = vadd.f32 %v5170, %v5229
    %v5250 = vadd.f32 %v5173, %v5229
    %v5251 = vadd.f32 %v5178, %v5229
    %v5252 = vadd.f32 %v5181, %v5229
    %v5253 = vadd.f32 %v5186, %v5229
    %v5254 = vadd.f32 %v5189, %v5229
    %v5255 = vadd.f32 %v5194, %v5229
    %v5256 = vadd.f32 %v5197, %v5229
    %v5257 = vadd.f32 %v5202, %v5229
    %v5258 = vadd.f32 %v5205, %v5229
    %v5259 = vadd.f32 %v5210, %v5229
    %v5260 = vadd.f32 %v5213, %v5229
    %v5261 = vadd.f32 %v5218, %v5229
    %v5262 = vadd.f32 %v5221, %v5229
    %5295 = vrot.lane.b32.xlu0 %v5231, 64
    %v5296 = vpop.permute.xlu0 %5295
    %5297 = vrot.lane.b32.xlu0 %v5232, 64
    %v5298 = vpop.permute.xlu0 %5297
    %5299 = vrot.lane.b32.xlu0 %v5233, 64
    %v5300 = vpop.permute.xlu0 %5299
    %5301 = vrot.lane.b32.xlu0 %v5234, 64
    %v5302 = vpop.permute.xlu0 %5301
    %5303 = vrot.lane.b32.xlu0 %v5235, 64
    %v5304 = vpop.permute.xlu0 %5303
    %5305 = vrot.lane.b32.xlu0 %v5236, 64
    %v5306 = vpop.permute.xlu0 %5305
    %5307 = vrot.lane.b32.xlu0 %v5237, 64
    %v5308 = vpop.permute.xlu0 %5307
    %5309 = vrot.lane.b32.xlu0 %v5238, 64
    %v5310 = vpop.permute.xlu0 %5309
    %5311 = vrot.lane.b32.xlu0 %v5239, 64
    %v5312 = vpop.permute.xlu0 %5311
    %5313 = vrot.lane.b32.xlu0 %v5240, 64
    %v5314 = vpop.permute.xlu0 %5313
    %5315 = vrot.lane.b32.xlu0 %v5241, 64
    %v5316 = vpop.permute.xlu0 %5315
    %5317 = vrot.lane.b32.xlu0 %v5242, 64
    %v5318 = vpop.permute.xlu0 %5317
    %5319 = vrot.lane.b32.xlu0 %v5243, 64
    %v5320 = vpop.permute.xlu0 %5319
    %5321 = vrot.lane.b32.xlu0 %v5244, 64
    %v5322 = vpop.permute.xlu0 %5321
    %5323 = vrot.lane.b32.xlu0 %v5245, 64
    %v5324 = vpop.permute.xlu0 %5323
    %5325 = vrot.lane.b32.xlu0 %v5246, 64
    %v5326 = vpop.permute.xlu0 %5325
    %5327 = vrot.lane.b32.xlu0 %v5247, 64
    %v5328 = vpop.permute.xlu0 %5327
    %5329 = vrot.lane.b32.xlu0 %v5248, 64
    %v5330 = vpop.permute.xlu0 %5329
    %5331 = vrot.lane.b32.xlu0 %v5249, 64
    %v5332 = vpop.permute.xlu0 %5331
    %5333 = vrot.lane.b32.xlu0 %v5250, 64
    %v5334 = vpop.permute.xlu0 %5333
    %5335 = vrot.lane.b32.xlu0 %v5251, 64
    %v5336 = vpop.permute.xlu0 %5335
    %5337 = vrot.lane.b32.xlu0 %v5252, 64
    %v5338 = vpop.permute.xlu0 %5337
    %5339 = vrot.lane.b32.xlu0 %v5253, 64
    %v5340 = vpop.permute.xlu0 %5339
    %5341 = vrot.lane.b32.xlu0 %v5254, 64
    %v5342 = vpop.permute.xlu0 %5341
    %5343 = vrot.lane.b32.xlu0 %v5255, 64
    %v5344 = vpop.permute.xlu0 %5343
    %5345 = vrot.lane.b32.xlu0 %v5256, 64
    %v5346 = vpop.permute.xlu0 %5345
    %5347 = vrot.lane.b32.xlu0 %v5257, 64
    %v5348 = vpop.permute.xlu0 %5347
    %5349 = vrot.lane.b32.xlu0 %v5258, 64
    %v5350 = vpop.permute.xlu0 %5349
    %5351 = vrot.lane.b32.xlu0 %v5259, 64
    %v5352 = vpop.permute.xlu0 %5351
    %5353 = vrot.lane.b32.xlu0 %v5260, 64
    %v5354 = vpop.permute.xlu0 %5353
    %5355 = vrot.lane.b32.xlu0 %v5261, 64
    %v5356 = vpop.permute.xlu0 %5355
    %5357 = vrot.lane.b32.xlu0 %v5262, 64
    %v5358 = vpop.permute.xlu0 %5357
    %v5391 = vmax.f32 %v5231, %v5296
    %v5392 = vmax.f32 %v5232, %v5298
    %v5393 = vmax.f32 %v5233, %v5300
    %v5394 = vmax.f32 %v5234, %v5302
    %v5395 = vmax.f32 %v5235, %v5304
    %v5396 = vmax.f32 %v5236, %v5306
    %v5397 = vmax.f32 %v5237, %v5308
    %v5398 = vmax.f32 %v5238, %v5310
    %v5399 = vmax.f32 %v5239, %v5312
    %v5400 = vmax.f32 %v5240, %v5314
    %v5401 = vmax.f32 %v5241, %v5316
    %v5402 = vmax.f32 %v5242, %v5318
    %v5403 = vmax.f32 %v5243, %v5320
    %v5404 = vmax.f32 %v5244, %v5322
    %v5405 = vmax.f32 %v5245, %v5324
    %v5406 = vmax.f32 %v5246, %v5326
    %v5407 = vmax.f32 %v5247, %v5328
    %v5408 = vmax.f32 %v5248, %v5330
    %v5409 = vmax.f32 %v5249, %v5332
    %v5410 = vmax.f32 %v5250, %v5334
    %v5411 = vmax.f32 %v5251, %v5336
    %v5412 = vmax.f32 %v5252, %v5338
    %v5413 = vmax.f32 %v5253, %v5340
    %v5414 = vmax.f32 %v5254, %v5342
    %v5415 = vmax.f32 %v5255, %v5344
    %v5416 = vmax.f32 %v5256, %v5346
    %v5417 = vmax.f32 %v5257, %v5348
    %v5418 = vmax.f32 %v5258, %v5350
    %v5419 = vmax.f32 %v5259, %v5352
    %v5420 = vmax.f32 %v5260, %v5354
    %v5421 = vmax.f32 %v5261, %v5356
    %v5422 = vmax.f32 %v5262, %v5358
    %v5455 = vrot.slane %v5391, 1
    %v5456 = vrot.slane %v5392, 1
    %v5457 = vsel %vm592, %v5455, %v5456
    %v5458 = vrot.slane %v5393, 1
    %v5459 = vsel %vm592, %v5456, %v5458
    %v5460 = vrot.slane %v5394, 1
    %v5461 = vsel %vm592, %v5458, %v5460
    %v5462 = vrot.slane %v5395, 1
    %v5463 = vsel %vm592, %v5460, %v5462
    %v5464 = vrot.slane %v5396, 1
    %v5465 = vsel %vm592, %v5462, %v5464
    %v5466 = vrot.slane %v5397, 1
    %v5467 = vsel %vm592, %v5464, %v5466
    %v5468 = vrot.slane %v5398, 1
    %v5469 = vsel %vm592, %v5466, %v5468
    %v5470 = vrot.slane %v5399, 1
    %v5471 = vsel %vm592, %v5468, %v5470
    %v5472 = vrot.slane %v5400, 1
    %v5473 = vsel %vm592, %v5470, %v5472
    %v5474 = vrot.slane %v5401, 1
    %v5475 = vsel %vm592, %v5472, %v5474
    %v5476 = vrot.slane %v5402, 1
    %v5477 = vsel %vm592, %v5474, %v5476
    %v5478 = vrot.slane %v5403, 1
    %v5479 = vsel %vm592, %v5476, %v5478
    %v5480 = vrot.slane %v5404, 1
    %v5481 = vsel %vm592, %v5478, %v5480
    %v5482 = vrot.slane %v5405, 1
    %v5483 = vsel %vm592, %v5480, %v5482
    %v5484 = vrot.slane %v5406, 1
    %v5485 = vsel %vm592, %v5482, %v5484
    %v5486 = vrot.slane %v5407, 1
    %v5487 = vsel %vm592, %v5484, %v5486
    %v5488 = vrot.slane %v5408, 1
    %v5489 = vsel %vm592, %v5486, %v5488
    %v5490 = vrot.slane %v5409, 1
    %v5491 = vsel %vm592, %v5488, %v5490
    %v5492 = vrot.slane %v5410, 1
    %v5493 = vsel %vm592, %v5490, %v5492
    %v5494 = vrot.slane %v5411, 1
    %v5495 = vsel %vm592, %v5492, %v5494
    %v5496 = vrot.slane %v5412, 1
    %v5497 = vsel %vm592, %v5494, %v5496
    %v5498 = vrot.slane %v5413, 1
    %v5499 = vsel %vm592, %v5496, %v5498
    %v5500 = vrot.slane %v5414, 1
    %v5501 = vsel %vm592, %v5498, %v5500
    %v5502 = vrot.slane %v5415, 1
    %v5503 = vsel %vm592, %v5500, %v5502
    %v5504 = vrot.slane %v5416, 1
    %v5505 = vsel %vm592, %v5502, %v5504
    %v5506 = vrot.slane %v5417, 1
    %v5507 = vsel %vm592, %v5504, %v5506
    %v5508 = vrot.slane %v5418, 1
    %v5509 = vsel %vm592, %v5506, %v5508
    %v5510 = vrot.slane %v5419, 1
    %v5511 = vsel %vm592, %v5508, %v5510
    %v5512 = vrot.slane %v5420, 1
    %v5513 = vsel %vm592, %v5510, %v5512
    %v5514 = vrot.slane %v5421, 1
    %v5515 = vsel %vm592, %v5512, %v5514
    %v5516 = vrot.slane %v5422, 1
    %v5517 = vsel %vm592, %v5514, %v5516
    %v5550 = vmax.f32 %v5391, %v5457
    %v5551 = vmax.f32 %v5392, %v5459
    %v5552 = vmax.f32 %v5393, %v5461
    %v5553 = vmax.f32 %v5394, %v5463
    %v5554 = vmax.f32 %v5395, %v5465
    %v5555 = vmax.f32 %v5396, %v5467
    %v5556 = vmax.f32 %v5397, %v5469
    %v5557 = vmax.f32 %v5398, %v5471
    %v5558 = vmax.f32 %v5399, %v5473
    %v5559 = vmax.f32 %v5400, %v5475
    %v5560 = vmax.f32 %v5401, %v5477
    %v5561 = vmax.f32 %v5402, %v5479
    %v5562 = vmax.f32 %v5403, %v5481
    %v5563 = vmax.f32 %v5404, %v5483
    %v5564 = vmax.f32 %v5405, %v5485
    %v5565 = vmax.f32 %v5406, %v5487
    %v5566 = vmax.f32 %v5407, %v5489
    %v5567 = vmax.f32 %v5408, %v5491
    %v5568 = vmax.f32 %v5409, %v5493
    %v5569 = vmax.f32 %v5410, %v5495
    %v5570 = vmax.f32 %v5411, %v5497
    %v5571 = vmax.f32 %v5412, %v5499
    %v5572 = vmax.f32 %v5413, %v5501
    %v5573 = vmax.f32 %v5414, %v5503
    %v5574 = vmax.f32 %v5415, %v5505
    %v5575 = vmax.f32 %v5416, %v5507
    %v5576 = vmax.f32 %v5417, %v5509
    %v5577 = vmax.f32 %v5418, %v5511
    %v5578 = vmax.f32 %v5419, %v5513
    %v5579 = vmax.f32 %v5420, %v5515
    %v5580 = vmax.f32 %v5421, %v5517
    %v5581 = vmax.f32 %v5422, %v5516
    %v5582 = vmax.f32 %v5550, 0.0
    %v5583 = vmax.f32 %v5551, 0.0
    %v5584 = vmax.f32 %v5552, 0.0
    %v5585 = vmax.f32 %v5553, 0.0
    %v5586 = vmax.f32 %v5554, 0.0
    %v5587 = vmax.f32 %v5555, 0.0
    %v5588 = vmax.f32 %v5556, 0.0
    %v5589 = vmax.f32 %v5557, 0.0
    %v5590 = vmax.f32 %v5558, 0.0
    %v5591 = vmax.f32 %v5559, 0.0
    %v5592 = vmax.f32 %v5560, 0.0
    %v5593 = vmax.f32 %v5561, 0.0
    %v5594 = vmax.f32 %v5562, 0.0
    %v5595 = vmax.f32 %v5563, 0.0
    %v5596 = vmax.f32 %v5564, 0.0
    %v5597 = vmax.f32 %v5565, 0.0
    %v5598 = vmax.f32 %v5566, 0.0
    %v5599 = vmax.f32 %v5567, 0.0
    %v5600 = vmax.f32 %v5568, 0.0
    %v5601 = vmax.f32 %v5569, 0.0
    %v5602 = vmax.f32 %v5570, 0.0
    %v5603 = vmax.f32 %v5571, 0.0
    %v5604 = vmax.f32 %v5572, 0.0
    %v5605 = vmax.f32 %v5573, 0.0
    %v5606 = vmax.f32 %v5574, 0.0
    %v5607 = vmax.f32 %v5575, 0.0
    %v5608 = vmax.f32 %v5576, 0.0
    %v5609 = vmax.f32 %v5577, 0.0
    %v5610 = vmax.f32 %v5578, 0.0
    %v5611 = vmax.f32 %v5579, 0.0
    %v5612 = vmax.f32 %v5580, 0.0
    %v5613 = vmax.f32 %v5581, 0.0
    %vm5614 = vcmask 523264
    %5615 = vst.msk [vmem:[#allocation3] sm:$0xff] %vm5614, %v5582
    %5616 = vst.msk [vmem:[#allocation3 + $0x8] sm:$0xff] %vm5614, %v5583
    %5617 = vst.msk [vmem:[#allocation3 + $0x10] sm:$0xff] %vm5614, %v5584
    %5618 = vst.msk [vmem:[#allocation3 + $0x18] sm:$0xff] %vm5614, %v5585
    %5619 = vst.msk [vmem:[#allocation3 + $0x20] sm:$0xff] %vm5614, %v5586
    %5620 = vst.msk [vmem:[#allocation3 + $0x28] sm:$0xff] %vm5614, %v5587
    %5621 = vst.msk [vmem:[#allocation3 + $0x30] sm:$0xff] %vm5614, %v5588
    %5622 = vst.msk [vmem:[#allocation3 + $0x38] sm:$0xff] %vm5614, %v5589
    %5623 = vst.msk [vmem:[#allocation3 + $0x40] sm:$0xff] %vm5614, %v5590
    %5624 = vst.msk [vmem:[#allocation3 + $0x48] sm:$0xff] %vm5614, %v5591
    %5625 = vst.msk [vmem:[#allocation3 + $0x50] sm:$0xff] %vm5614, %v5592
    %5626 = vst.msk [vmem:[#allocation3 + $0x58] sm:$0xff] %vm5614, %v5593
    %5627 = vst.msk [vmem:[#allocation3 + $0x60] sm:$0xff] %vm5614, %v5594
    %5628 = vst.msk [vmem:[#allocation3 + $0x68] sm:$0xff] %vm5614, %v5595
    %5629 = vst.msk [vmem:[#allocation3 + $0x70] sm:$0xff] %vm5614, %v5596
    %5630 = vst.msk [vmem:[#allocation3 + $0x78] sm:$0xff] %vm5614, %v5597
    %5631 = vst.msk [vmem:[#allocation3 + $0x80] sm:$0xff] %vm5614, %v5598
    %5632 = vst.msk [vmem:[#allocation3 + $0x88] sm:$0xff] %vm5614, %v5599
    %5633 = vst.msk [vmem:[#allocation3 + $0x90] sm:$0xff] %vm5614, %v5600
    %5634 = vst.msk [vmem:[#allocation3 + $0x98] sm:$0xff] %vm5614, %v5601
    %5635 = vst.msk [vmem:[#allocation3 + $0xa0] sm:$0xff] %vm5614, %v5602
    %5636 = vst.msk [vmem:[#allocation3 + $0xa8] sm:$0xff] %vm5614, %v5603
    %5637 = vst.msk [vmem:[#allocation3 + $0xb0] sm:$0xff] %vm5614, %v5604
    %5638 = vst.msk [vmem:[#allocation3 + $0xb8] sm:$0xff] %vm5614, %v5605
    %5639 = vst.msk [vmem:[#allocation3 + $0xc0] sm:$0xff] %vm5614, %v5606
    %5640 = vst.msk [vmem:[#allocation3 + $0xc8] sm:$0xff] %vm5614, %v5607
    %5641 = vst.msk [vmem:[#allocation3 + $0xd0] sm:$0xff] %vm5614, %v5608
    %5642 = vst.msk [vmem:[#allocation3 + $0xd8] sm:$0xff] %vm5614, %v5609
    %5643 = vst.msk [vmem:[#allocation3 + $0xe0] sm:$0xff] %vm5614, %v5610
    %5644 = vst.msk [vmem:[#allocation3 + $0xe8] sm:$0xff] %vm5614, %v5611
    %5645 = vst.msk [vmem:[#allocation3 + $0xf0] sm:$0xff] %vm5614, %v5612
    %vm5646 = vcmask 519168
    %5647 = vst.msk [vmem:[#allocation3 + $0xf8] sm:$0xf] %vm5646, %v5613
    %v5648 = vld [vmem:[#allocation3] ss:$2 sm:$0xff]
    %s5649 = scalar_lea.vmem [#allocation3], 16
    %v5650 = vld [vmem:[%s5649] ss:$2 sm:$0xff]
    %s5651 = scalar_lea.vmem [#allocation3], 32
    %v5652 = vld [vmem:[%s5651] ss:$2 sm:$0xff]
    %s5653 = scalar_lea.vmem [#allocation3], 48
    %v5654 = vld [vmem:[%s5653] ss:$2 sm:$0xff]
    %s5655 = scalar_lea.vmem [#allocation3], 64
    %v5656 = vld [vmem:[%s5655] ss:$2 sm:$0xff]
    %s5657 = scalar_lea.vmem [#allocation3], 80
    %v5658 = vld [vmem:[%s5657] ss:$2 sm:$0xff]
    %s5659 = scalar_lea.vmem [#allocation3], 96
    %v5660 = vld [vmem:[%s5659] ss:$2 sm:$0xff]
    %s5661 = scalar_lea.vmem [#allocation3], 112
    %v5662 = vld [vmem:[%s5661] ss:$2 sm:$0xff]
    %s5663 = scalar_lea.vmem [#allocation3], 128
    %v5664 = vld [vmem:[%s5663] ss:$2 sm:$0xff]
    %s5665 = scalar_lea.vmem [#allocation3], 144
    %v5666 = vld [vmem:[%s5665] ss:$2 sm:$0xff]
    %s5667 = scalar_lea.vmem [#allocation3], 160
    %v5668 = vld [vmem:[%s5667] ss:$2 sm:$0xff]
    %s5669 = scalar_lea.vmem [#allocation3], 176
    %v5670 = vld [vmem:[%s5669] ss:$2 sm:$0xff]
    %s5671 = scalar_lea.vmem [#allocation3], 192
    %v5672 = vld [vmem:[%s5671] ss:$2 sm:$0xff]
    %s5673 = scalar_lea.vmem [#allocation3], 208
    %v5674 = vld [vmem:[%s5673] ss:$2 sm:$0xff]
    %s5675 = scalar_lea.vmem [#allocation3], 224
    %v5676 = vld [vmem:[%s5675] ss:$2 sm:$0xff]
    %s5677 = scalar_lea.vmem [#allocation3], 240
    %v5678 = vld [vmem:[%s5677] ss:$2 sm:$0x3f]
    %v5679 = vpack.c.bf16 %v5650, %v5648
    %v5680 = vpack.c.bf16 %v5654, %v5652
    %v5681 = vpack.c.bf16 %v5658, %v5656
    %v5682 = vpack.c.bf16 %v5662, %v5660
    %v5683 = vpack.c.bf16 %v5666, %v5664
    %v5684 = vpack.c.bf16 %v5670, %v5668
    %v5685 = vpack.c.bf16 %v5674, %v5672
    %v5686 = vpack.c.bf16 %v5678, %v5676
    %v5687 = vld [vmem:[#allocation11] sm:$0xf]
    %v5688 = vld [vmem:[#allocation11 + $0x4] sm:$0xf]
    %v5689 = vld [vmem:[#allocation11 + $0x8] sm:$0xf]
    %v5690 = vld [vmem:[#allocation11 + $0xc] sm:$0xf]
    %v5691 = vld [vmem:[#allocation11 + $0x10] sm:$0xf]
    %v5692 = vld [vmem:[#allocation11 + $0x14] sm:$0xf]
    %v5693 = vld [vmem:[#allocation11 + $0x18] sm:$0xf]
    %v5694 = vld [vmem:[#allocation11 + $0x1c] sm:$0xf]
    %s5695 = scalar_lea.vmem [#allocation11], 32
    %v5696 = vld [vmem:[%s5695] sm:$0xf]
    %v5697 = vld [vmem:[%s5695 + $0x4] sm:$0xf]
    %v5698 = vld [vmem:[%s5695 + $0x8] sm:$0xf]
    %v5699 = vld [vmem:[%s5695 + $0xc] sm:$0xf]
    %v5700 = vld [vmem:[%s5695 + $0x10] sm:$0xf]
    %v5701 = vld [vmem:[%s5695 + $0x14] sm:$0xf]
    %v5702 = vld [vmem:[%s5695 + $0x18] sm:$0xf]
    %v5703 = vld [vmem:[%s5695 + $0x1c] sm:$0xf]
    %v5705 = vshrl.u32 %v5679, 16
    %v5707 = vshll.u32 %v5679, 16
    %v5709 = vrot.slane %v5707, 1
    %v5710 = vor.u32 %v5705, %v5709
    %v5712 = vshll.u32 %v5680, 16
    %v5714 = vrot.slane %v5712, 1
    %v5715 = vsel %vm234, %v5710, %v5714
    %v5716 = vshrl.u32 %v5680, 16
    %v5718 = vor.u32 %v5716, %v5714
    %v5720 = vshll.u32 %v5681, 16
    %v5722 = vrot.slane %v5720, 1
    %v5723 = vsel %vm234, %v5718, %v5722
    %v5724 = vshrl.u32 %v5681, 16
    %v5726 = vor.u32 %v5724, %v5722
    %v5728 = vshll.u32 %v5682, 16
    %v5730 = vrot.slane %v5728, 1
    %v5731 = vsel %vm234, %v5726, %v5730
    %v5732 = vshrl.u32 %v5682, 16
    %v5734 = vor.u32 %v5732, %v5730
    %v5736 = vshll.u32 %v5683, 16
    %v5738 = vrot.slane %v5736, 1
    %v5739 = vsel %vm234, %v5734, %v5738
    %v5740 = vshrl.u32 %v5683, 16
    %v5742 = vor.u32 %v5740, %v5738
    %v5744 = vshll.u32 %v5684, 16
    %v5746 = vrot.slane %v5744, 1
    %v5747 = vsel %vm234, %v5742, %v5746
    %v5748 = vshrl.u32 %v5684, 16
    %v5750 = vor.u32 %v5748, %v5746
    %v5752 = vshll.u32 %v5685, 16
    %v5754 = vrot.slane %v5752, 1
    %v5755 = vsel %vm234, %v5750, %v5754
    %v5756 = vshrl.u32 %v5685, 16
    %v5758 = vor.u32 %v5756, %v5754
    %v5760 = vshll.u32 %v5686, 16
    %v5762 = vrot.slane %v5760, 1
    %v5763 = vsel %vm234, %v5758, %v5762
    %v5764 = vshrl.u32 %v5686, 16
    %v5766 = vor.u32 %v5764, %v5762
    %v5775 = vunpack.c.l.b16 %v5696
    %v5776 = vunpack.c.l.b16 %v5697
    %v5777 = vunpack.c.l.b16 %v5698
    %v5778 = vunpack.c.l.b16 %v5699
    %v5779 = vunpack.c.l.b16 %v5700
    %v5780 = vunpack.c.l.b16 %v5701
    %v5781 = vunpack.c.l.b16 %v5702
    %v5782 = vunpack.c.l.b16 %v5703
    %v5783 = vpack.c.b16 %v5776, %v5775
    %v5784 = vpack.c.b16 %v5778, %v5777
    %v5785 = vpack.c.b16 %v5780, %v5779
    %v5786 = vpack.c.b16 %v5782, %v5781
    %v5792 = vsel %vm5614, %v5715, 0
    %v5795 = vsel %vm5614, %v5723, 0
    %v5798 = vsel %vm5614, %v5731, 0
    %v5801 = vsel %vm5614, %v5739, 0
    %v5804 = vsel %vm5614, %v5747, 0
    %v5807 = vsel %vm5614, %v5755, 0
    %v5810 = vsel %vm5614, %v5763, 0
    %v5813 = vsel %vm5614, %v5766, 0
    %5815 = vmatprep.subr.bf16.mxu0 0
    %5816 = vmatpush1.bf16.msra.mxu0 0
    %5817 = vmatprep.subr.bf16.mxu0 0
    %5818 = vmatpush1.bf16.msra.mxu0 0
    %5819 = vmatprep.subr.bf16.mxu0 0
    %5820 = vmatpush1.bf16.msra.mxu0 0
    %5821 = vmatprep.subr.bf16.mxu0 0
    %5822 = vmatpush1.bf16.msra.mxu0 0
    %5823 = vmatprep.subr.bf16.mxu0 0
    %5824 = vmatpush1.bf16.msra.mxu0 %v5786
    %5825 = vmatprep.subr.bf16.mxu0 0
    %5826 = vmatpush1.bf16.msra.mxu0 %v5785
    %5827 = vmatprep.subr.bf16.mxu0 0
    %5828 = vmatpush1.bf16.msra.mxu0 %v5784
    %5829 = vmatprep.subr.bf16.mxu0 0
    %5830 = vmatpush1.bf16.msra.mxu0 %v5783
    %5831 = vmatprep.subr.bf16.mxu0 0
    %5832 = vmatpush2.bf16.msra.mxu0 0
    %5833 = vmatprep.subr.bf16.mxu0 0
    %5834 = vmatpush2.bf16.msra.mxu0 0
    %5835 = vmatprep.subr.bf16.mxu0 0
    %5836 = vmatpush2.bf16.msra.mxu0 0
    %5837 = vmatprep.subr.bf16.mxu0 0
    %5838 = vmatpush2.bf16.msra.mxu0 0
    %5839 = vmatprep.subr.bf16.mxu0 0
    %5840 = vmatpush2.bf16.msra.mxu0 0
    %5841 = vmatprep.subr.bf16.mxu0 0
    %5842 = vmatpush2.bf16.msra.mxu0 0
    %5843 = vmatprep.subr.bf16.mxu0 0
    %5844 = vmatpush2.bf16.msra.mxu0 0
    %5845 = vmatprep.subr.bf16.mxu0 0
    %5846 = vmatpush2.bf16.msra.mxu0 0
    %5847 = vmatprep.mubr.bf16.mxu0 0
    %5848 = vmatmul.mubr.bf16.gmra.mxu0 %v5792
    %v5849 = vpop.f32.mrf.mxu0
    %v5850 = vadd.f32 0.0, %v5849
    %v5851 = vpop.f32.mrf.mxu0
    %v5852 = vpop.f32.mrf.mxu0
    %v5853 = vadd.f32 0.0, %v5852
    %v5854 = vpop.f32.mrf.mxu0
    %5855 = vmatprep.mubr.bf16.mxu0 0
    %5856 = vmatmul.mubr.bf16.gmra.mxu0 %v5795
    %v5857 = vpop.f32.mrf.mxu0
    %v5858 = vadd.f32 0.0, %v5857
    %v5859 = vpop.f32.mrf.mxu0
    %v5860 = vpop.f32.mrf.mxu0
    %v5861 = vadd.f32 0.0, %v5860
    %v5862 = vpop.f32.mrf.mxu0
    %5863 = vmatprep.mubr.bf16.mxu0 0
    %5864 = vmatmul.mubr.bf16.gmra.mxu0 %v5798
    %v5865 = vpop.f32.mrf.mxu0
    %v5866 = vadd.f32 0.0, %v5865
    %v5867 = vpop.f32.mrf.mxu0
    %v5868 = vpop.f32.mrf.mxu0
    %v5869 = vadd.f32 0.0, %v5868
    %v5870 = vpop.f32.mrf.mxu0
    %5871 = vmatprep.mubr.bf16.mxu0 0
    %5872 = vmatmul.mubr.bf16.gmra.mxu0 %v5801
    %v5873 = vpop.f32.mrf.mxu0
    %v5874 = vadd.f32 0.0, %v5873
    %v5875 = vpop.f32.mrf.mxu0
    %v5876 = vpop.f32.mrf.mxu0
    %v5877 = vadd.f32 0.0, %v5876
    %v5878 = vpop.f32.mrf.mxu0
    %5879 = vmatprep.mubr.bf16.mxu0 0
    %5880 = vmatmul.mubr.bf16.gmra.mxu0 %v5804
    %v5881 = vpop.f32.mrf.mxu0
    %v5882 = vadd.f32 0.0, %v5881
    %v5883 = vpop.f32.mrf.mxu0
    %v5884 = vpop.f32.mrf.mxu0
    %v5885 = vadd.f32 0.0, %v5884
    %v5886 = vpop.f32.mrf.mxu0
    %5887 = vmatprep.mubr.bf16.mxu0 0
    %5888 = vmatmul.mubr.bf16.gmra.mxu0 %v5807
    %v5889 = vpop.f32.mrf.mxu0
    %v5890 = vadd.f32 0.0, %v5889
    %v5891 = vpop.f32.mrf.mxu0
    %v5892 = vpop.f32.mrf.mxu0
    %v5893 = vadd.f32 0.0, %v5892
    %v5894 = vpop.f32.mrf.mxu0
    %5895 = vmatprep.mubr.bf16.mxu0 0
    %5896 = vmatmul.mubr.bf16.gmra.mxu0 %v5810
    %v5897 = vpop.f32.mrf.mxu0
    %v5898 = vadd.f32 0.0, %v5897
    %v5899 = vpop.f32.mrf.mxu0
    %v5900 = vpop.f32.mrf.mxu0
    %v5901 = vadd.f32 0.0, %v5900
    %v5902 = vpop.f32.mrf.mxu0
    %5903 = vmatprep.mubr.bf16.mxu0 0
    %5904 = vmatmul.mubr.bf16.gmra.mxu0 %v5813
    %v5905 = vpop.f32.mrf.mxu0
    %v5906 = vadd.f32 0.0, %v5905
    %v5907 = vpop.f32.mrf.mxu0
    %v5908 = vpop.f32.mrf.mxu0
    %v5909 = vadd.f32 0.0, %v5908
    %v5910 = vpop.f32.mrf.mxu0
    %5911 = vdwg.mxu0
    %v5920 = vunpack.c.l.b16 %v5687
    %v5921 = vunpack.c.l.b16 %v5688
    %v5922 = vunpack.c.l.b16 %v5689
    %v5923 = vunpack.c.l.b16 %v5690
    %v5924 = vunpack.c.l.b16 %v5691
    %v5925 = vunpack.c.l.b16 %v5692
    %v5926 = vunpack.c.l.b16 %v5693
    %v5927 = vunpack.c.l.b16 %v5694
    %v5928 = vpack.c.b16 %v5921, %v5920
    %v5929 = vpack.c.b16 %v5923, %v5922
    %v5930 = vpack.c.b16 %v5925, %v5924
    %v5931 = vpack.c.b16 %v5927, %v5926
    %v5936 = vsel %vm5614, %v5679, 0
    %v5938 = vsel %vm5614, %v5680, 0
    %v5940 = vsel %vm5614, %v5681, 0
    %v5942 = vsel %vm5614, %v5682, 0
    %v5944 = vsel %vm5614, %v5683, 0
    %v5946 = vsel %vm5614, %v5684, 0
    %v5948 = vsel %vm5614, %v5685, 0
    %v5950 = vsel %vm5614, %v5686, 0
    %5952 = vmatprep.subr.bf16.mxu0 0
    %5953 = vmatpush1.bf16.msra.mxu0 0
    %5954 = vmatprep.subr.bf16.mxu0 0
    %5955 = vmatpush1.bf16.msra.mxu0 0
    %5956 = vmatprep.subr.bf16.mxu0 0
    %5957 = vmatpush1.bf16.msra.mxu0 0
    %5958 = vmatprep.subr.bf16.mxu0 0
    %5959 = vmatpush1.bf16.msra.mxu0 0
    %5960 = vmatprep.subr.bf16.mxu0 0
    %5961 = vmatpush1.bf16.msra.mxu0 %v5931
    %5962 = vmatprep.subr.bf16.mxu0 0
    %5963 = vmatpush1.bf16.msra.mxu0 %v5930
    %5964 = vmatprep.subr.bf16.mxu0 0
    %5965 = vmatpush1.bf16.msra.mxu0 %v5929
    %5966 = vmatprep.subr.bf16.mxu0 0
    %5967 = vmatpush1.bf16.msra.mxu0 %v5928
    %5968 = vmatprep.subr.bf16.mxu0 0
    %5969 = vmatpush2.bf16.msra.mxu0 0
    %5970 = vmatprep.subr.bf16.mxu0 0
    %5971 = vmatpush2.bf16.msra.mxu0 0
    %5972 = vmatprep.subr.bf16.mxu0 0
    %5973 = vmatpush2.bf16.msra.mxu0 0
    %5974 = vmatprep.subr.bf16.mxu0 0
    %5975 = vmatpush2.bf16.msra.mxu0 0
    %5976 = vmatprep.subr.bf16.mxu0 0
    %5977 = vmatpush2.bf16.msra.mxu0 0
    %5978 = vmatprep.subr.bf16.mxu0 0
    %5979 = vmatpush2.bf16.msra.mxu0 0
    %5980 = vmatprep.subr.bf16.mxu0 0
    %5981 = vmatpush2.bf16.msra.mxu0 0
    %5982 = vmatprep.subr.bf16.mxu0 0
    %5983 = vmatpush2.bf16.msra.mxu0 0
    %5984 = vmatprep.mubr.bf16.mxu0 0
    %5985 = vmatmul.mubr.bf16.gmra.mxu0 %v5936
    %v5986 = vpop.f32.mrf.mxu0
    %v5987 = vadd.f32 %v5850, %v5986
    %v5988 = vpop.f32.mrf.mxu0
    %v5989 = vpop.f32.mrf.mxu0
    %v5990 = vadd.f32 %v5853, %v5989
    %v5991 = vpop.f32.mrf.mxu0
    %5992 = vmatprep.mubr.bf16.mxu0 0
    %5993 = vmatmul.mubr.bf16.gmra.mxu0 %v5938
    %v5994 = vpop.f32.mrf.mxu0
    %v5995 = vadd.f32 %v5858, %v5994
    %v5996 = vpop.f32.mrf.mxu0
    %v5997 = vpop.f32.mrf.mxu0
    %v5998 = vadd.f32 %v5861, %v5997
    %v5999 = vpop.f32.mrf.mxu0
    %6000 = vmatprep.mubr.bf16.mxu0 0
    %6001 = vmatmul.mubr.bf16.gmra.mxu0 %v5940
    %v6002 = vpop.f32.mrf.mxu0
    %v6003 = vadd.f32 %v5866, %v6002
    %v6004 = vpop.f32.mrf.mxu0
    %v6005 = vpop.f32.mrf.mxu0
    %v6006 = vadd.f32 %v5869, %v6005
    %v6007 = vpop.f32.mrf.mxu0
    %6008 = vmatprep.mubr.bf16.mxu0 0
    %6009 = vmatmul.mubr.bf16.gmra.mxu0 %v5942
    %v6010 = vpop.f32.mrf.mxu0
    %v6011 = vadd.f32 %v5874, %v6010
    %v6012 = vpop.f32.mrf.mxu0
    %v6013 = vpop.f32.mrf.mxu0
    %v6014 = vadd.f32 %v5877, %v6013
    %v6015 = vpop.f32.mrf.mxu0
    %6016 = vmatprep.mubr.bf16.mxu0 0
    %6017 = vmatmul.mubr.bf16.gmra.mxu0 %v5944
    %v6018 = vpop.f32.mrf.mxu0
    %v6019 = vadd.f32 %v5882, %v6018
    %v6020 = vpop.f32.mrf.mxu0
    %v6021 = vpop.f32.mrf.mxu0
    %v6022 = vadd.f32 %v5885, %v6021
    %v6023 = vpop.f32.mrf.mxu0
    %6024 = vmatprep.mubr.bf16.mxu0 0
    %6025 = vmatmul.mubr.bf16.gmra.mxu0 %v5946
    %v6026 = vpop.f32.mrf.mxu0
    %v6027 = vadd.f32 %v5890, %v6026
    %v6028 = vpop.f32.mrf.mxu0
    %v6029 = vpop.f32.mrf.mxu0
    %v6030 = vadd.f32 %v5893, %v6029
    %v6031 = vpop.f32.mrf.mxu0
    %6032 = vmatprep.mubr.bf16.mxu0 0
    %6033 = vmatmul.mubr.bf16.gmra.mxu0 %v5948
    %v6034 = vpop.f32.mrf.mxu0
    %v6035 = vadd.f32 %v5898, %v6034
    %v6036 = vpop.f32.mrf.mxu0
    %v6037 = vpop.f32.mrf.mxu0
    %v6038 = vadd.f32 %v5901, %v6037
    %v6039 = vpop.f32.mrf.mxu0
    %6040 = vmatprep.mubr.bf16.mxu0 0
    %6041 = vmatmul.mubr.bf16.gmra.mxu0 %v5950
    %v6042 = vpop.f32.mrf.mxu0
    %v6043 = vadd.f32 %v5906, %v6042
    %v6044 = vpop.f32.mrf.mxu0
    %v6045 = vpop.f32.mrf.mxu0
    %v6046 = vadd.f32 %v5909, %v6045
    %v6047 = vpop.f32.mrf.mxu0
    %6048 = vdwg.mxu0
    %v6049 = vld [vmem:[%s11] sm:$0x1]
    %v6051 = vlaneseq
    %v6052 = vshrl.u32 %v6051, 7
    %v6053 = vsub.s32 0, %v6052
    %v6054 = vrot.slane %v6049, %v6053
    %v6056 = vadd.f32 %v5987, %v6054
    %v6057 = vadd.f32 %v5990, %v6054
    %v6058 = vadd.f32 %v5995, %v6054
    %v6059 = vadd.f32 %v5998, %v6054
    %v6060 = vadd.f32 %v6003, %v6054
    %v6061 = vadd.f32 %v6006, %v6054
    %v6062 = vadd.f32 %v6011, %v6054
    %v6063 = vadd.f32 %v6014, %v6054
    %v6064 = vadd.f32 %v6019, %v6054
    %v6065 = vadd.f32 %v6022, %v6054
    %v6066 = vadd.f32 %v6027, %v6054
    %v6067 = vadd.f32 %v6030, %v6054
    %v6068 = vadd.f32 %v6035, %v6054
    %v6069 = vadd.f32 %v6038, %v6054
    %v6070 = vadd.f32 %v6043, %v6054
    %v6071 = vadd.f32 %v6046, %v6054
    %v6072 = vpack.c.bf16 %v6057, %v6056
    %v6073 = vpack.c.bf16 %v6059, %v6058
    %v6074 = vpack.c.bf16 %v6061, %v6060
    %v6075 = vpack.c.bf16 %v6063, %v6062
    %v6076 = vpack.c.bf16 %v6065, %v6064
    %v6077 = vpack.c.bf16 %v6067, %v6066
    %v6078 = vpack.c.bf16 %v6069, %v6068
    %v6079 = vpack.c.bf16 %v6071, %v6070
    %v6080 = vld [vmem:[#allocation12] sm:$0xf]
    %v6081 = vld [vmem:[#allocation12 + $0x4] sm:$0xf]
    %v6082 = vld [vmem:[#allocation12 + $0x8] sm:$0xf]
    %v6083 = vld [vmem:[#allocation12 + $0xc] sm:$0xf]
    %v6084 = vld [vmem:[#allocation12 + $0x10] sm:$0xf]
    %v6085 = vld [vmem:[#allocation12 + $0x14] sm:$0xf]
    %v6086 = vld [vmem:[%s12] sm:$0x1]
    %v6088 = vlaneseq
    %v6089 = vshrl.u32 %v6088, 7
    %v6090 = vsub.s32 0, %v6089
    %v6091 = vrot.slane %v6086, %v6090
    %v6099 = vunpack.c.l.b16 %v6080
    %v6100 = vunpack.c.l.b16 %v6081
    %v6101 = vunpack.c.l.b16 %v6082
    %v6102 = vunpack.c.l.b16 %v6083
    %v6103 = vunpack.c.l.b16 %v6084
    %v6104 = vunpack.c.l.b16 %v6085
    %v6105 = vpack.c.b16 %v6100, %v6099
    %v6106 = vpack.c.b16 %v6102, %v6101
    %v6107 = vpack.c.b16 %v6104, %v6103
    %vm6111 = vcmask 392192
    %v6113 = vsel %vm6111, %v6072, 0
    %v6116 = vsel %vm6111, %v6073, 0
    %v6119 = vsel %vm6111, %v6074, 0
    %v6122 = vsel %vm6111, %v6075, 0
    %v6125 = vsel %vm6111, %v6076, 0
    %v6128 = vsel %vm6111, %v6077, 0
    %v6131 = vsel %vm6111, %v6078, 0
    %v6134 = vsel %vm6111, %v6079, 0
    %6136 = vmatprep.subr.bf16.mxu0 0
    %6137 = vmatpush1.bf16.msra.mxu0 0
    %6138 = vmatprep.subr.bf16.mxu0 0
    %6139 = vmatpush1.bf16.msra.mxu0 0
    %6140 = vmatprep.subr.bf16.mxu0 0
    %6141 = vmatpush1.bf16.msra.mxu0 0
    %6142 = vmatprep.subr.bf16.mxu0 0
    %6143 = vmatpush1.bf16.msra.mxu0 0
    %6144 = vmatprep.subr.bf16.mxu0 0
    %6145 = vmatpush1.bf16.msra.mxu0 0
    %6146 = vmatprep.subr.bf16.mxu0 0
    %6147 = vmatpush1.bf16.msra.mxu0 %v6107
    %6148 = vmatprep.subr.bf16.mxu0 0
    %6149 = vmatpush1.bf16.msra.mxu0 %v6106
    %6150 = vmatprep.subr.bf16.mxu0 0
    %6151 = vmatpush1.bf16.msra.mxu0 %v6105
    %6152 = vmatprep.subr.bf16.mxu0 0
    %6153 = vmatpush2.bf16.msra.mxu0 0
    %6154 = vmatprep.subr.bf16.mxu0 0
    %6155 = vmatpush2.bf16.msra.mxu0 0
    %6156 = vmatprep.subr.bf16.mxu0 0
    %6157 = vmatpush2.bf16.msra.mxu0 0
    %6158 = vmatprep.subr.bf16.mxu0 0
    %6159 = vmatpush2.bf16.msra.mxu0 0
    %6160 = vmatprep.subr.bf16.mxu0 0
    %6161 = vmatpush2.bf16.msra.mxu0 0
    %6162 = vmatprep.subr.bf16.mxu0 0
    %6163 = vmatpush2.bf16.msra.mxu0 0
    %6164 = vmatprep.subr.bf16.mxu0 0
    %6165 = vmatpush2.bf16.msra.mxu0 0
    %6166 = vmatprep.subr.bf16.mxu0 0
    %6167 = vmatpush2.bf16.msra.mxu0 0
    %6168 = vmatprep.mubr.bf16.mxu0 0
    %6169 = vmatmul.mubr.bf16.gmra.mxu0 %v6113
    %v6170 = vpop.f32.mrf.mxu0
    %v6171 = vadd.f32 %v6091, %v6170
    %v6172 = vpop.f32.mrf.mxu0
    %v6173 = vpop.f32.mrf.mxu0
    %v6174 = vadd.f32 %v6091, %v6173
    %v6175 = vpop.f32.mrf.mxu0
    %6176 = vmatprep.mubr.bf16.mxu0 0
    %6177 = vmatmul.mubr.bf16.gmra.mxu0 %v6116
    %v6178 = vpop.f32.mrf.mxu0
    %v6179 = vadd.f32 %v6091, %v6178
    %v6180 = vpop.f32.mrf.mxu0
    %v6181 = vpop.f32.mrf.mxu0
    %v6182 = vadd.f32 %v6091, %v6181
    %v6183 = vpop.f32.mrf.mxu0
    %6184 = vmatprep.mubr.bf16.mxu0 0
    %6185 = vmatmul.mubr.bf16.gmra.mxu0 %v6119
    %v6186 = vpop.f32.mrf.mxu0
    %v6187 = vadd.f32 %v6091, %v6186
    %v6188 = vpop.f32.mrf.mxu0
    %v6189 = vpop.f32.mrf.mxu0
    %v6190 = vadd.f32 %v6091, %v6189
    %v6191 = vpop.f32.mrf.mxu0
    %6192 = vmatprep.mubr.bf16.mxu0 0
    %6193 = vmatmul.mubr.bf16.gmra.mxu0 %v6122
    %v6194 = vpop.f32.mrf.mxu0
    %v6195 = vadd.f32 %v6091, %v6194
    %v6196 = vpop.f32.mrf.mxu0
    %v6197 = vpop.f32.mrf.mxu0
    %v6198 = vadd.f32 %v6091, %v6197
    %v6199 = vpop.f32.mrf.mxu0
    %6200 = vmatprep.mubr.bf16.mxu0 0
    %6201 = vmatmul.mubr.bf16.gmra.mxu0 %v6125
    %v6202 = vpop.f32.mrf.mxu0
    %v6203 = vadd.f32 %v6091, %v6202
    %v6204 = vpop.f32.mrf.mxu0
    %v6205 = vpop.f32.mrf.mxu0
    %v6206 = vadd.f32 %v6091, %v6205
    %v6207 = vpop.f32.mrf.mxu0
    %6208 = vmatprep.mubr.bf16.mxu0 0
    %6209 = vmatmul.mubr.bf16.gmra.mxu0 %v6128
    %v6210 = vpop.f32.mrf.mxu0
    %v6211 = vadd.f32 %v6091, %v6210
    %v6212 = vpop.f32.mrf.mxu0
    %v6213 = vpop.f32.mrf.mxu0
    %v6214 = vadd.f32 %v6091, %v6213
    %v6215 = vpop.f32.mrf.mxu0
    %6216 = vmatprep.mubr.bf16.mxu0 0
    %6217 = vmatmul.mubr.bf16.gmra.mxu0 %v6131
    %v6218 = vpop.f32.mrf.mxu0
    %v6219 = vadd.f32 %v6091, %v6218
    %v6220 = vpop.f32.mrf.mxu0
    %v6221 = vpop.f32.mrf.mxu0
    %v6222 = vadd.f32 %v6091, %v6221
    %v6223 = vpop.f32.mrf.mxu0
    %6224 = vmatprep.mubr.bf16.mxu0 0
    %6225 = vmatmul.mubr.bf16.gmra.mxu0 %v6134
    %v6226 = vpop.f32.mrf.mxu0
    %v6227 = vadd.f32 %v6091, %v6226
    %v6228 = vpop.f32.mrf.mxu0
    %v6229 = vpop.f32.mrf.mxu0
    %v6230 = vadd.f32 %v6091, %v6229
    %v6231 = vpop.f32.mrf.mxu0
    %6232 = vdwg.mxu0
    %v6233 = vmax.f32 %v6171, 0.0
    %v6234 = vmax.f32 %v6174, 0.0
    %v6235 = vmax.f32 %v6179, 0.0
    %v6236 = vmax.f32 %v6182, 0.0
    %v6237 = vmax.f32 %v6187, 0.0
    %v6238 = vmax.f32 %v6190, 0.0
    %v6239 = vmax.f32 %v6195, 0.0
    %v6240 = vmax.f32 %v6198, 0.0
    %v6241 = vmax.f32 %v6203, 0.0
    %v6242 = vmax.f32 %v6206, 0.0
    %v6243 = vmax.f32 %v6211, 0.0
    %v6244 = vmax.f32 %v6214, 0.0
    %v6245 = vmax.f32 %v6219, 0.0
    %v6246 = vmax.f32 %v6222, 0.0
    %v6247 = vmax.f32 %v6227, 0.0
    %v6248 = vmax.f32 %v6230, 0.0
    %vm6249 = vcmask 457728
    %v6250 = vsel %vm6249, %v6233, 0.0
    %v6251 = vsel %vm6249, %v6234, 0.0
    %v6252 = vadd.f32 %v6250, %v6251
    %v6253 = vsel %vm6249, %v6235, 0.0
    %v6254 = vadd.f32 %v6252, %v6253
    %v6255 = vsel %vm6249, %v6236, 0.0
    %v6256 = vadd.f32 %v6254, %v6255
    %v6257 = vsel %vm6249, %v6237, 0.0
    %v6258 = vadd.f32 %v6256, %v6257
    %v6259 = vsel %vm6249, %v6238, 0.0
    %v6260 = vadd.f32 %v6258, %v6259
    %v6261 = vsel %vm6249, %v6239, 0.0
    %v6262 = vadd.f32 %v6260, %v6261
    %vm6263 = vcmask 454656
    %v6264 = vsel %vm6263, %v6240, 0.0
    %v6265 = vadd.f32 %v6262, %v6264
    %v6266 = vrot.slane %v6265, 4
    %v6267 = vadd.f32 %v6265, %v6266
    %v6268 = vrot.slane %v6267, 2
    %v6269 = vadd.f32 %v6267, %v6268
    %v6270 = vrot.slane %v6269, 1
    %v6271 = vadd.f32 %v6269, %v6270
    %v6272 = vadd.f32 %v6271, 0.0
    %v6273 = vsel %vm6249, %v6241, 0.0
    %v6274 = vsel %vm6249, %v6242, 0.0
    %v6275 = vadd.f32 %v6273, %v6274
    %v6276 = vsel %vm6249, %v6243, 0.0
    %v6277 = vadd.f32 %v6275, %v6276
    %v6278 = vsel %vm6249, %v6244, 0.0
    %v6279 = vadd.f32 %v6277, %v6278
    %v6280 = vsel %vm6249, %v6245, 0.0
    %v6281 = vadd.f32 %v6279, %v6280
    %v6282 = vsel %vm6249, %v6246, 0.0
    %v6283 = vadd.f32 %v6281, %v6282
    %v6284 = vsel %vm6249, %v6247, 0.0
    %v6285 = vadd.f32 %v6283, %v6284
    %v6286 = vsel %vm6263, %v6248, 0.0
    %v6287 = vadd.f32 %v6285, %v6286
    %v6288 = vrot.slane %v6287, 4
    %v6289 = vadd.f32 %v6287, %v6288
    %v6290 = vrot.slane %v6289, 2
    %v6291 = vadd.f32 %v6289, %v6290
    %v6292 = vrot.slane %v6291, 1
    %v6293 = vadd.f32 %v6291, %v6292
    %v6294 = vadd.f32 %v6272, %v6293
    %v6295 = vmul.f32 %v6294, 0.008196721
    %v6296 = vsub.f32 %v6233, %v6295
    %v6297 = vsub.f32 %v6234, %v6295
    %v6298 = vsub.f32 %v6235, %v6295
    %v6299 = vsub.f32 %v6236, %v6295
    %v6300 = vsub.f32 %v6237, %v6295
    %v6301 = vsub.f32 %v6238, %v6295
    %v6302 = vsub.f32 %v6239, %v6295
    %v6303 = vsub.f32 %v6240, %v6295
    %v6304 = vsub.f32 %v6241, %v6295
    %v6305 = vsub.f32 %v6242, %v6295
    %v6306 = vsub.f32 %v6243, %v6295
    %v6307 = vsub.f32 %v6244, %v6295
    %v6308 = vsub.f32 %v6245, %v6295
    %v6309 = vsub.f32 %v6246, %v6295
    %v6310 = vsub.f32 %v6247, %v6295
    %v6311 = vsub.f32 %v6248, %v6295
    %v6312 = vmul.f32 %v6296, %v6296
    %v6313 = vmul.f32 %v6297, %v6297
    %v6314 = vmul.f32 %v6298, %v6298
    %v6315 = vmul.f32 %v6299, %v6299
    %v6316 = vmul.f32 %v6300, %v6300
    %v6317 = vmul.f32 %v6301, %v6301
    %v6318 = vmul.f32 %v6302, %v6302
    %v6319 = vmul.f32 %v6303, %v6303
    %v6320 = vsel %vm6249, %v6312, 0.0
    %v6321 = vsel %vm6249, %v6313, 0.0
    %v6322 = vadd.f32 %v6320, %v6321
    %v6323 = vsel %vm6249, %v6314, 0.0
    %v6324 = vadd.f32 %v6322, %v6323
    %v6325 = vsel %vm6249, %v6315, 0.0
    %v6326 = vadd.f32 %v6324, %v6325
    %v6327 = vsel %vm6249, %v6316, 0.0
    %v6328 = vadd.f32 %v6326, %v6327
    %v6329 = vsel %vm6249, %v6317, 0.0
    %v6330 = vadd.f32 %v6328, %v6329
    %v6331 = vsel %vm6249, %v6318, 0.0
    %v6332 = vadd.f32 %v6330, %v6331
    %v6333 = vsel %vm6263, %v6319, 0.0
    %v6334 = vadd.f32 %v6332, %v6333
    %v6335 = vrot.slane %v6334, 4
    %v6336 = vadd.f32 %v6334, %v6335
    %v6337 = vrot.slane %v6336, 2
    %v6338 = vadd.f32 %v6336, %v6337
    %v6339 = vrot.slane %v6338, 1
    %v6340 = vadd.f32 %v6338, %v6339
    %v6341 = vadd.f32 %v6340, 0.0
    %v6342 = vmul.f32 %v6304, %v6304
    %v6343 = vmul.f32 %v6305, %v6305
    %v6344 = vmul.f32 %v6306, %v6306
    %v6345 = vmul.f32 %v6307, %v6307
    %v6346 = vmul.f32 %v6308, %v6308
    %v6347 = vmul.f32 %v6309, %v6309
    %v6348 = vmul.f32 %v6310, %v6310
    %v6349 = vmul.f32 %v6311, %v6311
    %v6350 = vsel %vm6249, %v6342, 0.0
    %v6351 = vsel %vm6249, %v6343, 0.0
    %v6352 = vadd.f32 %v6350, %v6351
    %v6353 = vsel %vm6249, %v6344, 0.0
    %v6354 = vadd.f32 %v6352, %v6353
    %v6355 = vsel %vm6249, %v6345, 0.0
    %v6356 = vadd.f32 %v6354, %v6355
    %v6357 = vsel %vm6249, %v6346, 0.0
    %v6358 = vadd.f32 %v6356, %v6357
    %v6359 = vsel %vm6249, %v6347, 0.0
    %v6360 = vadd.f32 %v6358, %v6359
    %v6361 = vsel %vm6249, %v6348, 0.0
    %v6362 = vadd.f32 %v6360, %v6361
    %v6363 = vsel %vm6263, %v6349, 0.0
    %v6364 = vadd.f32 %v6362, %v6363
    %v6365 = vrot.slane %v6364, 4
    %v6366 = vadd.f32 %v6364, %v6365
    %v6367 = vrot.slane %v6366, 2
    %v6368 = vadd.f32 %v6366, %v6367
    %v6369 = vrot.slane %v6368, 1
    %v6370 = vadd.f32 %v6368, %v6369
    %v6371 = vadd.f32 %v6341, %v6370
    %v6372 = vmul.f32 %v6371, 0.008196721
    %v6373 = vadd.f32 %v6372, 1e-05
    %v6374 = vrsqrt.pop %v6373
    %v6375 = vld [vmem:[%s13] sm:$0x1]
    %v6376 = vmul.f32 %v6374, %v6375
    %v6377 = vld [vmem:[%s14] sm:$0x1]
    %v6378 = vlaneseq
    %v6379 = vshrl.u32 %v6378, 7
    %v6380 = vsub.s32 0, %v6379
    %v6381 = vrot.slane %v6376, %v6380
    %v6382 = vmul.f32 %v6296, %v6381
    %v6383 = vmul.f32 %v6297, %v6381
    %v6384 = vmul.f32 %v6298, %v6381
    %v6385 = vmul.f32 %v6299, %v6381
    %v6386 = vmul.f32 %v6300, %v6381
    %v6387 = vmul.f32 %v6301, %v6381
    %v6388 = vmul.f32 %v6302, %v6381
    %v6389 = vmul.f32 %v6303, %v6381
    %v6391 = vlaneseq
    %v6392 = vshrl.u32 %v6391, 7
    %v6393 = vsub.s32 0, %v6392
    %v6394 = vrot.slane %v6377, %v6393
    %v6396 = vadd.f32 %v6382, %v6394
    %v6397 = vadd.f32 %v6383, %v6394
    %v6398 = vadd.f32 %v6384, %v6394
    %v6399 = vadd.f32 %v6385, %v6394
    %v6400 = vadd.f32 %v6386, %v6394
    %v6401 = vadd.f32 %v6387, %v6394
    %v6402 = vadd.f32 %v6388, %v6394
    %v6403 = vadd.f32 %v6389, %v6394
    %6404 = vst.msk [vmem:[%s15] sm:$0xff] %vm6249, %v6396
    %6405 = vst.msk [vmem:[%s15 + $0x8] sm:$0xff] %vm6249, %v6397
    %6406 = vst.msk [vmem:[%s15 + $0x10] sm:$0xff] %vm6249, %v6398
    %6407 = vst.msk [vmem:[%s15 + $0x18] sm:$0xff] %vm6249, %v6399
    %6408 = vst.msk [vmem:[%s15 + $0x20] sm:$0xff] %vm6249, %v6400
    %6409 = vst.msk [vmem:[%s15 + $0x28] sm:$0xff] %vm6249, %v6401
    %6410 = vst.msk [vmem:[%s15 + $0x30] sm:$0xff] %vm6249, %v6402
    %6411 = vst.msk [vmem:[%s15 + $0x38] sm:$0x1f] %vm6263, %v6403
    %v6412 = vmul.f32 %v6304, %v6381
    %v6413 = vmul.f32 %v6305, %v6381
    %v6414 = vmul.f32 %v6306, %v6381
    %v6415 = vmul.f32 %v6307, %v6381
    %v6416 = vmul.f32 %v6308, %v6381
    %v6417 = vmul.f32 %v6309, %v6381
    %v6418 = vmul.f32 %v6310, %v6381
    %v6419 = vmul.f32 %v6311, %v6381
    %v6420 = vadd.f32 %v6412, %v6394
    %v6421 = vadd.f32 %v6413, %v6394
    %v6422 = vadd.f32 %v6414, %v6394
    %v6423 = vadd.f32 %v6415, %v6394
    %v6424 = vadd.f32 %v6416, %v6394
    %v6425 = vadd.f32 %v6417, %v6394
    %v6426 = vadd.f32 %v6418, %v6394
    %v6427 = vadd.f32 %v6419, %v6394
    %s6428 = scalar_lea.vmem %s15, 64
    %6429 = vst.msk [vmem:[%s6428] sm:$0xff] %vm6249, %v6420
    %6430 = vst.msk [vmem:[%s6428 + $0x8] sm:$0xff] %vm6249, %v6421
    %6431 = vst.msk [vmem:[%s6428 + $0x10] sm:$0xff] %vm6249, %v6422
    %6432 = vst.msk [vmem:[%s6428 + $0x18] sm:$0xff] %vm6249, %v6423
    %6433 = vst.msk [vmem:[%s6428 + $0x20] sm:$0xff] %vm6249, %v6424
    %6434 = vst.msk [vmem:[%s6428 + $0x28] sm:$0xff] %vm6249, %v6425
    %6435 = vst.msk [vmem:[%s6428 + $0x30] sm:$0xff] %vm6249, %v6426
    %6436 = vst.msk [vmem:[%s6428 + $0x38] sm:$0x1f] %vm6263, %v6427
    // Predicated region
    $region86: #{_lambda_.2} parent=1 // pred_check
      _
    $region87: #{_lambda_.2} parent=1 // pred_check_branch
      %6438 = sbr.rel (0) target = $region89
    $region88: #{_lambda_.2} parent=1 // pred_region
      _
    $region89: #{_lambda_.2} parent=1 // pred_fallthru
      _
    // Predicated region
    $region90: #{_lambda_.2} parent=1 // pred_check
      _
    $region91: #{_lambda_.2} parent=1 // pred_check_branch
      %6440 = sbr.rel (0) target = $region93
    $region92: #{_lambda_.2} parent=1 // pred_region
      _
    $region93: #{_lambda_.2} parent=1 // pred_fallthru
      _
    %6441 = vsyncpa [#allocation5], 1
    %6442 = vsyncpa [#allocation7], 1
    %6443 = vsyncpa [#allocation10], 1
    %6444 = vsyncpa [#allocation13], 1

</llo_original>
